<compile_context>
chip_gen: v5e
topology: v5e:2x2
jax: 0.10.0
libtpu: 0.0.40
codegen_flags: <defaults>
</compile_context>

<pallas_src>
import functools

import jax
import jax.numpy as jnp
from jax.experimental import pallas as pl
from jax.experimental.pallas import tpu as pltpu

N_GROUPS = 32          # nn.GroupNorm(32, n_channels)
EPS = 1e-5             # PyTorch GroupNorm default eps
LANE = 128             # TPU lane width


def _const_spec(shape):
    zero = (0,) * len(shape)
    return pl.BlockSpec(shape, lambda b, zero=zero: zero)


# --------------------------------------------------------------------------
# Fused MiddleBlock kernel: one batch element per grid step.
# --------------------------------------------------------------------------
def _middle_kernel(x_ref, temb_ref, vec_ref, convw_ref, wqkv_ref, bqkv_ref,
                   wo_ref, o_ref, *, H, W, C, cg, scale):
    N = H * W
    Cp = x_ref.shape[-1]
    inv_gn = 1.0 / float(cg * N)

    # ---- static iota vectors / masks (built once, live in vregs) ----------
    lane = jax.lax.broadcasted_iota(jnp.int32, (1, Cp), 1)
    lead_real = ((lane % cg) == 0) & (lane < C)       # real group-leader lanes

    n_idx = jax.lax.broadcasted_iota(jnp.int32, (N, 1), 0)
    col = n_idx % W

    def _tap_mask(kh, kw):
        m = None
        if kh == -1:
            m = n_idx >= W                            # needs input row r-1
        elif kh == 1:
            m = n_idx < N - W                         # needs input row r+1
        if kw == -1:
            cm = col >= 1
            m = cm if m is None else (m & cm)
        elif kw == 1:
            cm = col <= W - 2
            m = cm if m is None else (m & cm)
        return m

    masks = {(kh, kw): _tap_mask(kh, kw)
             for kh in (-1, 0, 1) for kw in (-1, 0, 1)}

    # ---- GroupNorm group reduce: lane rolls on the XLU, no M=1 MXU work ---
    def group_reduce(s):                              # s: (1, Cp) f32
        t = s
        if cg > 1:                                    # forward window sums
            if cg & (cg - 1) == 0:
                k = 1
                while k < cg:
                    t = t + pltpu.roll(t, (-k) % Cp, 1)   # t[i] += t[i+k]
                    k *= 2
            else:
                acc = s
                for j in range(1, cg):
                    acc = acc + pltpu.roll(s, (-j) % Cp, 1)
                t = acc
        t = jnp.where(lead_real, t, 0.0)              # keep only real leaders
        if cg > 1:                                    # broadcast leader -> group
            if cg & (cg - 1) == 0:
                k = 1
                while k < cg:
                    t = t + pltpu.roll(t, k, 1)       # t[i] += t[i-k]
                    k *= 2
            else:
                acc = t
                for j in range(1, cg):
                    acc = acc + pltpu.roll(t, j, 1)
                t = acc
        return t

    def gn_swish(v, gamma, beta):
        # Two-pass GroupNorm in f32 (mean, then var of centered values) to
        # avoid E[x^2]-mean^2 cancellation.  Padded lanes stay exactly 0
        # because gamma/beta are zero there.
        mean = group_reduce(jnp.sum(v, axis=0, keepdims=True)) * inv_gn
        d = v - mean
        var = group_reduce(jnp.sum(d * d, axis=0, keepdims=True)) * inv_gn
        y = d * jax.lax.rsqrt(var + EPS) * gamma + beta
        return y * jax.nn.sigmoid(y)                  # Swish

    # ---- 3x3 'same' conv: 9 rolled taps, one K-stacked bf16 MXU matmul ----
    def conv3x3(v, w_idx, bias):
        taps = []
        for kh in (-1, 0, 1):
            for kw in (-1, 0, 1):
                d = kh * W + kw                       # flat source offset
                t = v if d == 0 else pltpu.roll(v, (-d) % N, 0)
                m = masks[(kh, kw)]
                if m is not None:
                    t = jnp.where(m, t, 0.0)          # zero out-of-image taps
                taps.append(t.astype(jnp.bfloat16))
        patch = jnp.concatenate(taps, axis=-1)        # (N, 9*Cp) bf16
        acc = jnp.dot(patch, convw_ref[w_idx],        # (9*Cp, Cp) bf16
                      preferred_element_type=jnp.float32)
        return acc + bias

    def vec(i):
        return vec_ref[i:i + 1, :]                    # (1, Cp) f32 row

    def res_block(h_in, vb, w0, w1, temb_row):
        # h = conv1(swish(norm1(x))) + time_emb(t); h = conv2(swish(norm2(h)))
        # out = h + x  (in_channels == out_channels -> identity shortcut)
        h = conv3x3(gn_swish(h_in, vec(vb + 0), vec(vb + 1)), w0, vec(vb + 2))
        h = h + temb_row
        h = conv3x3(gn_swish(h, vec(vb + 3), vec(vb + 4)), w1, vec(vb + 5))
        return h + h_in

    def attention(h_in):
        xb = h_in.astype(jnp.bfloat16)
        qkv = jnp.dot(xb, wqkv_ref[...],
                      preferred_element_type=jnp.float32) + bqkv_ref[...]
        q = (qkv[:, :Cp] * scale).astype(jnp.bfloat16)    # scale folded into q
        k = qkv[:, Cp:2 * Cp].astype(jnp.bfloat16)
        v = qkv[:, 2 * Cp:].astype(jnp.bfloat16)
        # s[i, j] = <q_i, k_j>
        s = jax.lax.dot_general(q, k, (((1,), (1,)), ((), ())),
                                preferred_element_type=jnp.float32)
        # softmax over axis 0 (query axis) -- matches attn.softmax(dim=1)
        m = jnp.max(s, axis=0, keepdims=True)
        e = jnp.exp(s - m)
        p = e * pl.reciprocal(jnp.sum(e, axis=0, keepdims=True), approx=True)
        r = jnp.dot(p.astype(jnp.bfloat16), v,
                    preferred_element_type=jnp.float32)
        out = jnp.dot(r.astype(jnp.bfloat16), wo_ref[...],
                      preferred_element_type=jnp.float32) + vec_ref[12:13, :]
        return out + h_in                             # residual

    x = x_ref[0]                                      # (N, Cp) f32
    temb = temb_ref[0]                                # (2, Cp) f32
    h = res_block(x, 0, 0, 1, temb[0:1, :])           # res1
    h = attention(h)                                  # attn
    h = res_block(h, 6, 2, 3, temb[1:2, :])           # res2
    o_ref[0] = h


def _middle_call(x_bnc, temb, params, *, H, W, C, cg):
    B, N, Cp = x_bnc.shape
    kernel = functools.partial(_middle_kernel, H=H, W=W, C=C, cg=cg,
                               scale=float(C) ** -0.5)
    return pl.pallas_call(
        kernel,
        out_shape=jax.ShapeDtypeStruct((B, N, Cp), jnp.float32),
        grid=(B,),
        in_specs=[
            pl.BlockSpec((1, N, Cp), lambda b: (b, 0, 0)),     # x
            pl.BlockSpec((1, 2, Cp), lambda b: (b, 0, 0)),     # temb (res1,res2)
            _const_spec((13, Cp)),                             # packed vectors
            _const_spec((4, 9 * Cp, Cp)),                      # 4 conv weights
            _const_spec((Cp, 3 * Cp)),                         # wqkv
            _const_spec((1, 3 * Cp)),                          # bqkv
            _const_spec((Cp, Cp)),                             # wo
        ],
        out_specs=pl.BlockSpec((1, N, Cp), lambda b: (b, 0, 0)),
        compiler_params=pltpu.CompilerParams(
            dimension_semantics=("parallel",)),
    )(x_bnc, temb, params['vecs'], params['convw'], params['wqkv'],
      params['bqkv'], params['wo'])


# --------------------------------------------------------------------------
# MiddleBlock forward.  x is NCHW like the PyTorch module.
# --------------------------------------------------------------------------
@jax.jit
def middle_block(x_nchw, t, params):
    B, C, H, W = x_nchw.shape
    Cp = params['wo'].shape[0]
    N = H * W
    cg = C // N_GROUPS

    # channels-last, flatten spatial, pad channels to a full 128-lane width
    # (XLA fuses these with the dots below under jit).
    x = jnp.transpose(x_nchw, (0, 2, 3, 1)).reshape(B, N, C)
    x = jnp.pad(x, ((0, 0), (0, 0), (0, Cp - C)))

    # tiny time-embedding Linears: left to XLA on purpose
    temb1 = jnp.dot(t, params['wt1']) + params['bt1']          # (B, Cp)
    temb2 = jnp.dot(t, params['wt2']) + params['bt2']
    temb = jnp.stack([temb1, temb2], axis=1)                   # (B, 2, Cp)

    h = _middle_call(x, temb, params, H=H, W=W, C=C, cg=cg)

    out = h[..., :C].reshape(B, H, W, C)
    return jnp.transpose(out, (0, 3, 1, 2))                    # back to NCHW


# --------------------------------------------------------------------------
# Deterministic parameter construction (synthetic weights, not a checkpoint),
# plus one-time padding / packing / bf16 casting of the MXU weights.
# --------------------------------------------------------------------------
def init_params(key, C, Tc):
    keys = iter(jax.random.split(key, 24))

    def nrm(shape, s=0.05):
        return jax.random.normal(next(keys), shape, jnp.float32) * s

    def res():
        return dict(
            g1=jnp.ones((C,), jnp.float32), be1=jnp.zeros((C,), jnp.float32),
            cw1=nrm((3, 3, C, C)), cb1=nrm((C,)),       # (kh, kw, cin, cout)
            g2=jnp.ones((C,), jnp.float32), be2=jnp.zeros((C,), jnp.float32),
            cw2=nrm((3, 3, C, C)), cb2=nrm((C,)),
            wt=nrm((Tc, C)), bt=nrm((C,)),
        )

    attn = dict(wq=nrm((C, C)), bq=nrm((C,)), wk=nrm((C, C)), bk=nrm((C,)),
                wv=nrm((C, C)), bv=nrm((C,)), wo=nrm((C, C)), bo=nrm((C,)))
    return dict(res1=res(), attn=attn, res2=res())


def pack_params(p, C, Cp):
    dc = Cp - C

    def row(v):                         # (C,) -> (1, Cp) f32
        return jnp.pad(v, (0, dc)).reshape(1, Cp)

    def mat_bf16(w):                    # (C, C) -> (Cp, Cp) bf16
        return jnp.pad(w, ((0, dc), (0, dc))).astype(jnp.bfloat16)

    def conv_w(w):                      # (3,3,C,C) -> (9*Cp, Cp) bf16
        w = jnp.pad(w, ((0, 0), (0, 0), (0, dc), (0, dc)))
        return w.reshape(9 * Cp, Cp).astype(jnp.bfloat16)

    r1, r2, a = p['res1'], p['res2'], p['attn']
    vecs = jnp.concatenate(
        [row(r1['g1']), row(r1['be1']), row(r1['cb1']),
         row(r1['g2']), row(r1['be2']), row(r1['cb2']),
         row(r2['g1']), row(r2['be1']), row(r2['cb1']),
         row(r2['g2']), row(r2['be2']), row(r2['cb2']),
         row(a['bo'])], axis=0)                                # (13, Cp)
    convw = jnp.stack([conv_w(r1['cw1']), conv_w(r1['cw2']),
                       conv_w(r2['cw1']), conv_w(r2['cw2'])], axis=0)
    wqkv = jnp.concatenate([mat_bf16(a['wq']), mat_bf16(a['wk']),
                            mat_bf16(a['wv'])], axis=1)        # (Cp, 3Cp)
    bqkv = jnp.concatenate([row(a['bq']), row(a['bk']), row(a['bv'])], axis=1)
    return dict(
        vecs=vecs, convw=convw, wqkv=wqkv, bqkv=bqkv, wo=mat_bf16(a['wo']),
        wt1=jnp.pad(r1['wt'], ((0, 0), (0, dc))), bt1=jnp.pad(r1['bt'], (0, dc)),
        wt2=jnp.pad(r2['wt'], ((0, 0), (0, dc))), bt2=jnp.pad(r2['bt'], (0, dc)),
    )


if __name__ == "__main__":
    B, C, H, W, TC = 2, 64, 8, 8, 32    # n_channels must be divisible by 32
    assert C % N_GROUPS == 0
    Cp = max(LANE, ((C + LANE - 1) // LANE) * LANE)

    key = jax.random.PRNGKey(0)
    kx, kt, kp = jax.random.split(key, 3)
    x = jax.random.normal(kx, (B, C, H, W), jnp.float32)   # NCHW like the spec
    t = jax.random.normal(kt, (B, TC), jnp.float32)
    params = pack_params(init_params(kp, C, TC), C, Cp)

    out = middle_block(x, t, params)
    jax.block_until_ready(out)
    assert out.shape == (B, C, H, W)
    assert bool(jnp.all(jnp.isfinite(out)))
    print("KERNEL_OK")
</pallas_src>

<mosaic_0001>
module attributes {stable_mosaic.version = 11 : i64} {
  func.func @_middle_kernel(%arg0: i32, %arg1: memref<1x64x128xf32, #tpu.memory_space<vmem>>, %arg2: memref<1x2x128xf32, #tpu.memory_space<vmem>>, %arg3: memref<13x128xf32, #tpu.memory_space<vmem>>, %arg4: memref<4x1152x128xbf16, #tpu.memory_space<vmem>>, %arg5: memref<128x384xbf16, #tpu.memory_space<vmem>>, %arg6: memref<1x384xf32, #tpu.memory_space<vmem>>, %arg7: memref<128x128xbf16, #tpu.memory_space<vmem>>, %arg8: memref<1x64x128xf32, #tpu.memory_space<vmem>>) attributes {dimension_semantics = [#tpu.dimension_semantics<parallel>], iteration_bounds = array<i64: 2>, scalar_prefetch = 0 : i64, scratch_operands = 0 : i64, tpu.core_type = #tpu.core_type<tc>, window_params = [{transform_indices = @transform_0, window_bounds = array<i64: 1, 64, 128>}, {transform_indices = @transform_1, window_bounds = array<i64: 1, 2, 128>}, {pipeline_mode = #tpu.pipeline_mode<synchronous>, transform_indices = @transform_2, window_bounds = array<i64: 13, 128>}, {pipeline_mode = #tpu.pipeline_mode<synchronous>, transform_indices = @transform_3, window_bounds = array<i64: 4, 1152, 128>}, {pipeline_mode = #tpu.pipeline_mode<synchronous>, transform_indices = @transform_4, window_bounds = array<i64: 128, 384>}, {pipeline_mode = #tpu.pipeline_mode<synchronous>, transform_indices = @transform_5, window_bounds = array<i64: 1, 384>}, {pipeline_mode = #tpu.pipeline_mode<synchronous>, transform_indices = @transform_6, window_bounds = array<i64: 128, 128>}, {transform_indices = @transform_7, window_bounds = array<i64: 1, 64, 128>}]} {
    %0 = tpu.iota {dimensions = array<i32: 1>} : vector<1x128xi32>
    %c2_i32 = arith.constant 2 : i32
    %c0_i32 = arith.constant 0 : i32
    %1 = arith.cmpi eq, %c2_i32, %c0_i32 : i32
    %c1_i32 = arith.constant 1 : i32
    %2 = arith.select %1, %c1_i32, %c2_i32 : i32
    %3 = vector.broadcast %2 : i32 to vector<1x128xi32>
    %4 = arith.remsi %0, %3 : vector<1x128xi32>
    %c0_i32_0 = arith.constant 0 : i32
    %5 = vector.broadcast %c0_i32_0 : i32 to vector<1x128xi32>
    %6 = arith.cmpi ne, %4, %5 : vector<1x128xi32>
    %c0_i32_1 = arith.constant 0 : i32
    %7 = vector.broadcast %c0_i32_1 : i32 to vector<1x128xi32>
    %8 = arith.cmpi slt, %4, %7 : vector<1x128xi32>
    %c0_i32_2 = arith.constant 0 : i32
    %9 = arith.cmpi slt, %2, %c0_i32_2 : i32
    %10 = vector.broadcast %9 : i1 to vector<1x128xi1>
    %11 = vector.broadcast %10 : vector<1x128xi1> to vector<1x128xi1>
    %12 = arith.xori %8, %11 : vector<1x128xi1>
    %13 = arith.andi %12, %6 : vector<1x128xi1>
    %14 = vector.broadcast %2 : i32 to vector<1x128xi32>
    %15 = arith.addi %4, %14 : vector<1x128xi32>
    %16 = arith.select %13, %15, %4 : vector<1x128xi1>, vector<1x128xi32>
    %c0_i32_3 = arith.constant 0 : i32
    %17 = vector.broadcast %c0_i32_3 : i32 to vector<1x128xi32>
    %18 = arith.cmpi eq, %16, %17 : vector<1x128xi32>
    %c64_i32 = arith.constant 64 : i32
    %19 = vector.broadcast %c64_i32 : i32 to vector<1x128xi32>
    %20 = arith.cmpi slt, %0, %19 : vector<1x128xi32>
    %21 = arith.andi %18, %20 : vector<1x128xi1>
    %22 = tpu.iota {dimensions = array<i32: 0>} : vector<64x1xi32>
    %c8_i32 = arith.constant 8 : i32
    %c0_i32_4 = arith.constant 0 : i32
    %23 = arith.cmpi eq, %c8_i32, %c0_i32_4 : i32
    %c1_i32_5 = arith.constant 1 : i32
    %24 = arith.select %23, %c1_i32_5, %c8_i32 : i32
    %25 = vector.broadcast %24 : i32 to vector<64x1xi32>
    %26 = arith.remsi %22, %25 : vector<64x1xi32>
    %c0_i32_6 = arith.constant 0 : i32
    %27 = vector.broadcast %c0_i32_6 : i32 to vector<64x1xi32>
    %28 = arith.cmpi ne, %26, %27 : vector<64x1xi32>
    %c0_i32_7 = arith.constant 0 : i32
    %29 = vector.broadcast %c0_i32_7 : i32 to vector<64x1xi32>
    %30 = arith.cmpi slt, %26, %29 : vector<64x1xi32>
    %c0_i32_8 = arith.constant 0 : i32
    %31 = arith.cmpi slt, %24, %c0_i32_8 : i32
    %32 = vector.broadcast %31 : i1 to vector<64x1xi1>
    %33 = vector.broadcast %32 : vector<64x1xi1> to vector<64x1xi1>
    %34 = arith.xori %30, %33 : vector<64x1xi1>
    %35 = arith.andi %34, %28 : vector<64x1xi1>
    %36 = vector.broadcast %24 : i32 to vector<64x1xi32>
    %37 = arith.addi %26, %36 : vector<64x1xi32>
    %38 = arith.select %35, %37, %26 : vector<64x1xi1>, vector<64x1xi32>
    %c8_i32_9 = arith.constant 8 : i32
    %39 = vector.broadcast %c8_i32_9 : i32 to vector<64x1xi32>
    %40 = arith.cmpi sge, %22, %39 : vector<64x1xi32>
    %c1_i32_10 = arith.constant 1 : i32
    %41 = vector.broadcast %c1_i32_10 : i32 to vector<64x1xi32>
    %42 = arith.cmpi sge, %38, %41 : vector<64x1xi32>
    %43 = arith.andi %40, %42 : vector<64x1xi1>
    %c8_i32_11 = arith.constant 8 : i32
    %44 = vector.broadcast %c8_i32_11 : i32 to vector<64x1xi32>
    %45 = arith.cmpi sge, %22, %44 : vector<64x1xi32>
    %c8_i32_12 = arith.constant 8 : i32
    %46 = vector.broadcast %c8_i32_12 : i32 to vector<64x1xi32>
    %47 = arith.cmpi sge, %22, %46 : vector<64x1xi32>
    %c6_i32 = arith.constant 6 : i32
    %48 = vector.broadcast %c6_i32 : i32 to vector<64x1xi32>
    %49 = arith.cmpi sle, %38, %48 : vector<64x1xi32>
    %50 = arith.andi %47, %49 : vector<64x1xi1>
    %c1_i32_13 = arith.constant 1 : i32
    %51 = vector.broadcast %c1_i32_13 : i32 to vector<64x1xi32>
    %52 = arith.cmpi sge, %38, %51 : vector<64x1xi32>
    %c6_i32_14 = arith.constant 6 : i32
    %53 = vector.broadcast %c6_i32_14 : i32 to vector<64x1xi32>
    %54 = arith.cmpi sle, %38, %53 : vector<64x1xi32>
    %c56_i32 = arith.constant 56 : i32
    %55 = vector.broadcast %c56_i32 : i32 to vector<64x1xi32>
    %56 = arith.cmpi slt, %22, %55 : vector<64x1xi32>
    %c1_i32_15 = arith.constant 1 : i32
    %57 = vector.broadcast %c1_i32_15 : i32 to vector<64x1xi32>
    %58 = arith.cmpi sge, %38, %57 : vector<64x1xi32>
    %59 = arith.andi %56, %58 : vector<64x1xi1>
    %c56_i32_16 = arith.constant 56 : i32
    %60 = vector.broadcast %c56_i32_16 : i32 to vector<64x1xi32>
    %61 = arith.cmpi slt, %22, %60 : vector<64x1xi32>
    %c56_i32_17 = arith.constant 56 : i32
    %62 = vector.broadcast %c56_i32_17 : i32 to vector<64x1xi32>
    %63 = arith.cmpi slt, %22, %62 : vector<64x1xi32>
    %c6_i32_18 = arith.constant 6 : i32
    %64 = vector.broadcast %c6_i32_18 : i32 to vector<64x1xi32>
    %65 = arith.cmpi sle, %38, %64 : vector<64x1xi32>
    %66 = arith.andi %63, %65 : vector<64x1xi1>
    %c0 = arith.constant 0 : index
    %c0_19 = arith.constant 0 : index
    %c0_20 = arith.constant 0 : index
    %67 = vector.load %arg1[%c0, %c0_19, %c0_20] : memref<1x64x128xf32, #tpu.memory_space<vmem>>, vector<1x64x128xf32>
    %68 = vector.shape_cast %67 : vector<1x64x128xf32> to vector<64x128xf32>
    %c0_21 = arith.constant 0 : index
    %c0_22 = arith.constant 0 : index
    %c0_23 = arith.constant 0 : index
    %69 = vector.load %arg2[%c0_21, %c0_22, %c0_23] : memref<1x2x128xf32, #tpu.memory_space<vmem>>, vector<1x2x128xf32>
    %70 = vector.shape_cast %69 : vector<1x2x128xf32> to vector<2x128xf32>
    %71 = vector.extract_strided_slice %70 {offsets = [0, 0], sizes = [1, 128], strides = [1, 1]} : vector<2x128xf32> to vector<1x128xf32>
    %c0_24 = arith.constant 0 : index
    %c0_25 = arith.constant 0 : index
    %72 = vector.load %arg3[%c0_24, %c0_25] : memref<13x128xf32, #tpu.memory_space<vmem>>, vector<1x128xf32>
    %c1 = arith.constant 1 : index
    %c0_26 = arith.constant 0 : index
    %73 = vector.load %arg3[%c1, %c0_26] : memref<13x128xf32, #tpu.memory_space<vmem>>, vector<1x128xf32>
    %cst = arith.constant dense<0.000000e+00> : vector<128xf32>
    %74 = vector.multi_reduction <add>, %68, %cst [0] : vector<64x128xf32> to vector<128xf32>
    %75 = vector.shape_cast %74 : vector<128xf32> to vector<1x128xf32>
    %c127_i32 = arith.constant 127 : i32
    %76 = tpu.dynamic_rotate %75 by %c127_i32 dim 1 : vector<1x128xf32>, i32 -> vector<1x128xf32>
    %77 = arith.addf %75, %76 : vector<1x128xf32>
    %cst_27 = arith.constant 0.000000e+00 : f32
    %78 = vector.broadcast %cst_27 : f32 to vector<1x128xf32>
    %79 = arith.select %21, %77, %78 : vector<1x128xi1>, vector<1x128xf32>
    %c1_i32_28 = arith.constant 1 : i32
    %80 = tpu.dynamic_rotate %79 by %c1_i32_28 dim 1 : vector<1x128xf32>, i32 -> vector<1x128xf32>
    %81 = arith.addf %79, %80 : vector<1x128xf32>
    %cst_29 = arith.constant 7.812500e-03 : f32
    %82 = vector.broadcast %cst_29 : f32 to vector<1x128xf32>
    %83 = arith.mulf %81, %82 : vector<1x128xf32>
    %84 = vector.broadcast %83 : vector<1x128xf32> to vector<64x128xf32>
    %85 = arith.subf %68, %84 : vector<64x128xf32>
    %86 = arith.mulf %85, %85 : vector<64x128xf32>
    %cst_30 = arith.constant dense<0.000000e+00> : vector<128xf32>
    %87 = vector.multi_reduction <add>, %86, %cst_30 [0] : vector<64x128xf32> to vector<128xf32>
    %88 = vector.shape_cast %87 : vector<128xf32> to vector<1x128xf32>
    %c127_i32_31 = arith.constant 127 : i32
    %89 = tpu.dynamic_rotate %88 by %c127_i32_31 dim 1 : vector<1x128xf32>, i32 -> vector<1x128xf32>
    %90 = arith.addf %88, %89 : vector<1x128xf32>
    %cst_32 = arith.constant 0.000000e+00 : f32
    %91 = vector.broadcast %cst_32 : f32 to vector<1x128xf32>
    %92 = arith.select %21, %90, %91 : vector<1x128xi1>, vector<1x128xf32>
    %c1_i32_33 = arith.constant 1 : i32
    %93 = tpu.dynamic_rotate %92 by %c1_i32_33 dim 1 : vector<1x128xf32>, i32 -> vector<1x128xf32>
    %94 = arith.addf %92, %93 : vector<1x128xf32>
    %cst_34 = arith.constant 7.812500e-03 : f32
    %95 = vector.broadcast %cst_34 : f32 to vector<1x128xf32>
    %96 = arith.mulf %94, %95 : vector<1x128xf32>
    %cst_35 = arith.constant 9.99999974E-6 : f32
    %97 = vector.broadcast %cst_35 : f32 to vector<1x128xf32>
    %98 = arith.addf %96, %97 : vector<1x128xf32>
    %99 = math.rsqrt %98 : vector<1x128xf32>
    %100 = vector.broadcast %99 : vector<1x128xf32> to vector<64x128xf32>
    %101 = arith.mulf %85, %100 : vector<64x128xf32>
    %102 = vector.broadcast %72 : vector<1x128xf32> to vector<64x128xf32>
    %103 = arith.mulf %101, %102 : vector<64x128xf32>
    %104 = vector.broadcast %73 : vector<1x128xf32> to vector<64x128xf32>
    %105 = arith.addf %103, %104 : vector<64x128xf32>
    %106 = arith.negf %105 : vector<64x128xf32>
    %107 = math.exp %106 : vector<64x128xf32>
    %cst_36 = arith.constant 1.000000e+00 : f32
    %108 = vector.broadcast %cst_36 : f32 to vector<64x128xf32>
    %109 = arith.addf %108, %107 : vector<64x128xf32>
    %110 = arith.divf %108, %109 : vector<64x128xf32>
    %111 = arith.mulf %105, %110 : vector<64x128xf32>
    %c2 = arith.constant 2 : index
    %c0_37 = arith.constant 0 : index
    %112 = vector.load %arg3[%c2, %c0_37] : memref<13x128xf32, #tpu.memory_space<vmem>>, vector<1x128xf32>
    %c9_i32 = arith.constant 9 : i32
    %113 = tpu.dynamic_rotate %111 by %c9_i32 dim 0 : vector<64x128xf32>, i32 -> vector<64x128xf32>
    %cst_38 = arith.constant 0.000000e+00 : f32
    %114 = vector.shape_cast %43 : vector<64x1xi1> to vector<64x1xi1>
    %115 = vector.broadcast %114 : vector<64x1xi1> to vector<64x128xi1>
    %116 = vector.broadcast %cst_38 : f32 to vector<64x128xf32>
    %117 = arith.select %115, %113, %116 : vector<64x128xi1>, vector<64x128xf32>
    %118 = arith.truncf %117 : vector<64x128xf32> to vector<64x128xbf16>
    %c8_i32_39 = arith.constant 8 : i32
    %119 = tpu.dynamic_rotate %111 by %c8_i32_39 dim 0 : vector<64x128xf32>, i32 -> vector<64x128xf32>
    %cst_40 = arith.constant 0.000000e+00 : f32
    %120 = vector.shape_cast %45 : vector<64x1xi1> to vector<64x1xi1>
    %121 = vector.broadcast %120 : vector<64x1xi1> to vector<64x128xi1>
    %122 = vector.broadcast %cst_40 : f32 to vector<64x128xf32>
    %123 = arith.select %121, %119, %122 : vector<64x128xi1>, vector<64x128xf32>
    %124 = arith.truncf %123 : vector<64x128xf32> to vector<64x128xbf16>
    %c7_i32 = arith.constant 7 : i32
    %125 = tpu.dynamic_rotate %111 by %c7_i32 dim 0 : vector<64x128xf32>, i32 -> vector<64x128xf32>
    %cst_41 = arith.constant 0.000000e+00 : f32
    %126 = vector.shape_cast %50 : vector<64x1xi1> to vector<64x1xi1>
    %127 = vector.broadcast %126 : vector<64x1xi1> to vector<64x128xi1>
    %128 = vector.broadcast %cst_41 : f32 to vector<64x128xf32>
    %129 = arith.select %127, %125, %128 : vector<64x128xi1>, vector<64x128xf32>
    %130 = arith.truncf %129 : vector<64x128xf32> to vector<64x128xbf16>
    %c1_i32_42 = arith.constant 1 : i32
    %131 = tpu.dynamic_rotate %111 by %c1_i32_42 dim 0 : vector<64x128xf32>, i32 -> vector<64x128xf32>
    %cst_43 = arith.constant 0.000000e+00 : f32
    %132 = vector.shape_cast %52 : vector<64x1xi1> to vector<64x1xi1>
    %133 = vector.broadcast %132 : vector<64x1xi1> to vector<64x128xi1>
    %134 = vector.broadcast %cst_43 : f32 to vector<64x128xf32>
    %135 = arith.select %133, %131, %134 : vector<64x128xi1>, vector<64x128xf32>
    %136 = arith.truncf %135 : vector<64x128xf32> to vector<64x128xbf16>
    %137 = arith.truncf %111 : vector<64x128xf32> to vector<64x128xbf16>
    %c63_i32 = arith.constant 63 : i32
    %138 = tpu.dynamic_rotate %111 by %c63_i32 dim 0 : vector<64x128xf32>, i32 -> vector<64x128xf32>
    %cst_44 = arith.constant 0.000000e+00 : f32
    %139 = vector.shape_cast %54 : vector<64x1xi1> to vector<64x1xi1>
    %140 = vector.broadcast %139 : vector<64x1xi1> to vector<64x128xi1>
    %141 = vector.broadcast %cst_44 : f32 to vector<64x128xf32>
    %142 = arith.select %140, %138, %141 : vector<64x128xi1>, vector<64x128xf32>
    %143 = arith.truncf %142 : vector<64x128xf32> to vector<64x128xbf16>
    %c57_i32 = arith.constant 57 : i32
    %144 = tpu.dynamic_rotate %111 by %c57_i32 dim 0 : vector<64x128xf32>, i32 -> vector<64x128xf32>
    %cst_45 = arith.constant 0.000000e+00 : f32
    %145 = vector.shape_cast %59 : vector<64x1xi1> to vector<64x1xi1>
    %146 = vector.broadcast %145 : vector<64x1xi1> to vector<64x128xi1>
    %147 = vector.broadcast %cst_45 : f32 to vector<64x128xf32>
    %148 = arith.select %146, %144, %147 : vector<64x128xi1>, vector<64x128xf32>
    %149 = arith.truncf %148 : vector<64x128xf32> to vector<64x128xbf16>
    %c56_i32_46 = arith.constant 56 : i32
    %150 = tpu.dynamic_rotate %111 by %c56_i32_46 dim 0 : vector<64x128xf32>, i32 -> vector<64x128xf32>
    %cst_47 = arith.constant 0.000000e+00 : f32
    %151 = vector.shape_cast %61 : vector<64x1xi1> to vector<64x1xi1>
    %152 = vector.broadcast %151 : vector<64x1xi1> to vector<64x128xi1>
    %153 = vector.broadcast %cst_47 : f32 to vector<64x128xf32>
    %154 = arith.select %152, %150, %153 : vector<64x128xi1>, vector<64x128xf32>
    %155 = arith.truncf %154 : vector<64x128xf32> to vector<64x128xbf16>
    %c55_i32 = arith.constant 55 : i32
    %156 = tpu.dynamic_rotate %111 by %c55_i32 dim 0 : vector<64x128xf32>, i32 -> vector<64x128xf32>
    %cst_48 = arith.constant 0.000000e+00 : f32
    %157 = vector.shape_cast %66 : vector<64x1xi1> to vector<64x1xi1>
    %158 = vector.broadcast %157 : vector<64x1xi1> to vector<64x128xi1>
    %159 = vector.broadcast %cst_48 : f32 to vector<64x128xf32>
    %160 = arith.select %158, %156, %159 : vector<64x128xi1>, vector<64x128xf32>
    %161 = arith.truncf %160 : vector<64x128xf32> to vector<64x128xbf16>
    %162 = tpu.concatenate %118, %124, %130, %136, %137, %143, %149, %155, %161 in 1 : vector<64x128xbf16>, vector<64x128xbf16>, vector<64x128xbf16>, vector<64x128xbf16>, vector<64x128xbf16>, vector<64x128xbf16>, vector<64x128xbf16>, vector<64x128xbf16>, vector<64x128xbf16> -> vector<64x1152xbf16>
    %c0_49 = arith.constant 0 : index
    %c0_50 = arith.constant 0 : index
    %c0_51 = arith.constant 0 : index
    %163 = vector.load %arg4[%c0_49, %c0_50, %c0_51] : memref<4x1152x128xbf16, #tpu.memory_space<vmem>>, vector<1x1152x128xbf16>
    %164 = vector.shape_cast %163 : vector<1x1152x128xbf16> to vector<1152x128xbf16>
    %cst_52 = arith.constant dense<0.000000e+00> : vector<64x128xf32>
    %165 = tpu.matmul %162, %164, %cst_52 {dimension_numbers = #tpu.dot_dimension_numbers<[1], [0], [0], [1], [0, 0, 1, 1], [], []>} : vector<64x1152xbf16>, vector<1152x128xbf16>, vector<64x128xf32> -> vector<64x128xf32>
    %166 = vector.broadcast %112 : vector<1x128xf32> to vector<64x128xf32>
    %167 = arith.addf %165, %166 : vector<64x128xf32>
    %168 = vector.broadcast %71 : vector<1x128xf32> to vector<64x128xf32>
    %169 = arith.addf %167, %168 : vector<64x128xf32>
    %c3 = arith.constant 3 : index
    %c0_53 = arith.constant 0 : index
    %170 = vector.load %arg3[%c3, %c0_53] : memref<13x128xf32, #tpu.memory_space<vmem>>, vector<1x128xf32>
    %c4 = arith.constant 4 : index
    %c0_54 = arith.constant 0 : index
    %171 = vector.load %arg3[%c4, %c0_54] : memref<13x128xf32, #tpu.memory_space<vmem>>, vector<1x128xf32>
    %cst_55 = arith.constant dense<0.000000e+00> : vector<128xf32>
    %172 = vector.multi_reduction <add>, %169, %cst_55 [0] : vector<64x128xf32> to vector<128xf32>
    %173 = vector.shape_cast %172 : vector<128xf32> to vector<1x128xf32>
    %c127_i32_56 = arith.constant 127 : i32
    %174 = tpu.dynamic_rotate %173 by %c127_i32_56 dim 1 : vector<1x128xf32>, i32 -> vector<1x128xf32>
    %175 = arith.addf %173, %174 : vector<1x128xf32>
    %cst_57 = arith.constant 0.000000e+00 : f32
    %176 = vector.broadcast %cst_57 : f32 to vector<1x128xf32>
    %177 = arith.select %21, %175, %176 : vector<1x128xi1>, vector<1x128xf32>
    %c1_i32_58 = arith.constant 1 : i32
    %178 = tpu.dynamic_rotate %177 by %c1_i32_58 dim 1 : vector<1x128xf32>, i32 -> vector<1x128xf32>
    %179 = arith.addf %177, %178 : vector<1x128xf32>
    %cst_59 = arith.constant 7.812500e-03 : f32
    %180 = vector.broadcast %cst_59 : f32 to vector<1x128xf32>
    %181 = arith.mulf %179, %180 : vector<1x128xf32>
    %182 = vector.broadcast %181 : vector<1x128xf32> to vector<64x128xf32>
    %183 = arith.subf %169, %182 : vector<64x128xf32>
    %184 = arith.mulf %183, %183 : vector<64x128xf32>
    %cst_60 = arith.constant dense<0.000000e+00> : vector<128xf32>
    %185 = vector.multi_reduction <add>, %184, %cst_60 [0] : vector<64x128xf32> to vector<128xf32>
    %186 = vector.shape_cast %185 : vector<128xf32> to vector<1x128xf32>
    %c127_i32_61 = arith.constant 127 : i32
    %187 = tpu.dynamic_rotate %186 by %c127_i32_61 dim 1 : vector<1x128xf32>, i32 -> vector<1x128xf32>
    %188 = arith.addf %186, %187 : vector<1x128xf32>
    %cst_62 = arith.constant 0.000000e+00 : f32
    %189 = vector.broadcast %cst_62 : f32 to vector<1x128xf32>
    %190 = arith.select %21, %188, %189 : vector<1x128xi1>, vector<1x128xf32>
    %c1_i32_63 = arith.constant 1 : i32
    %191 = tpu.dynamic_rotate %190 by %c1_i32_63 dim 1 : vector<1x128xf32>, i32 -> vector<1x128xf32>
    %192 = arith.addf %190, %191 : vector<1x128xf32>
    %cst_64 = arith.constant 7.812500e-03 : f32
    %193 = vector.broadcast %cst_64 : f32 to vector<1x128xf32>
    %194 = arith.mulf %192, %193 : vector<1x128xf32>
    %cst_65 = arith.constant 9.99999974E-6 : f32
    %195 = vector.broadcast %cst_65 : f32 to vector<1x128xf32>
    %196 = arith.addf %194, %195 : vector<1x128xf32>
    %197 = math.rsqrt %196 : vector<1x128xf32>
    %198 = vector.broadcast %197 : vector<1x128xf32> to vector<64x128xf32>
    %199 = arith.mulf %183, %198 : vector<64x128xf32>
    %200 = vector.broadcast %170 : vector<1x128xf32> to vector<64x128xf32>
    %201 = arith.mulf %199, %200 : vector<64x128xf32>
    %202 = vector.broadcast %171 : vector<1x128xf32> to vector<64x128xf32>
    %203 = arith.addf %201, %202 : vector<64x128xf32>
    %204 = arith.negf %203 : vector<64x128xf32>
    %205 = math.exp %204 : vector<64x128xf32>
    %cst_66 = arith.constant 1.000000e+00 : f32
    %206 = vector.broadcast %cst_66 : f32 to vector<64x128xf32>
    %207 = arith.addf %206, %205 : vector<64x128xf32>
    %208 = arith.divf %206, %207 : vector<64x128xf32>
    %209 = arith.mulf %203, %208 : vector<64x128xf32>
    %c5 = arith.constant 5 : index
    %c0_67 = arith.constant 0 : index
    %210 = vector.load %arg3[%c5, %c0_67] : memref<13x128xf32, #tpu.memory_space<vmem>>, vector<1x128xf32>
    %c9_i32_68 = arith.constant 9 : i32
    %211 = tpu.dynamic_rotate %209 by %c9_i32_68 dim 0 : vector<64x128xf32>, i32 -> vector<64x128xf32>
    %cst_69 = arith.constant 0.000000e+00 : f32
    %212 = vector.shape_cast %43 : vector<64x1xi1> to vector<64x1xi1>
    %213 = vector.broadcast %212 : vector<64x1xi1> to vector<64x128xi1>
    %214 = vector.broadcast %cst_69 : f32 to vector<64x128xf32>
    %215 = arith.select %213, %211, %214 : vector<64x128xi1>, vector<64x128xf32>
    %216 = arith.truncf %215 : vector<64x128xf32> to vector<64x128xbf16>
    %c8_i32_70 = arith.constant 8 : i32
    %217 = tpu.dynamic_rotate %209 by %c8_i32_70 dim 0 : vector<64x128xf32>, i32 -> vector<64x128xf32>
    %cst_71 = arith.constant 0.000000e+00 : f32
    %218 = vector.shape_cast %45 : vector<64x1xi1> to vector<64x1xi1>
    %219 = vector.broadcast %218 : vector<64x1xi1> to vector<64x128xi1>
    %220 = vector.broadcast %cst_71 : f32 to vector<64x128xf32>
    %221 = arith.select %219, %217, %220 : vector<64x128xi1>, vector<64x128xf32>
    %222 = arith.truncf %221 : vector<64x128xf32> to vector<64x128xbf16>
    %c7_i32_72 = arith.constant 7 : i32
    %223 = tpu.dynamic_rotate %209 by %c7_i32_72 dim 0 : vector<64x128xf32>, i32 -> vector<64x128xf32>
    %cst_73 = arith.constant 0.000000e+00 : f32
    %224 = vector.shape_cast %50 : vector<64x1xi1> to vector<64x1xi1>
    %225 = vector.broadcast %224 : vector<64x1xi1> to vector<64x128xi1>
    %226 = vector.broadcast %cst_73 : f32 to vector<64x128xf32>
    %227 = arith.select %225, %223, %226 : vector<64x128xi1>, vector<64x128xf32>
    %228 = arith.truncf %227 : vector<64x128xf32> to vector<64x128xbf16>
    %c1_i32_74 = arith.constant 1 : i32
    %229 = tpu.dynamic_rotate %209 by %c1_i32_74 dim 0 : vector<64x128xf32>, i32 -> vector<64x128xf32>
    %cst_75 = arith.constant 0.000000e+00 : f32
    %230 = vector.shape_cast %52 : vector<64x1xi1> to vector<64x1xi1>
    %231 = vector.broadcast %230 : vector<64x1xi1> to vector<64x128xi1>
    %232 = vector.broadcast %cst_75 : f32 to vector<64x128xf32>
    %233 = arith.select %231, %229, %232 : vector<64x128xi1>, vector<64x128xf32>
    %234 = arith.truncf %233 : vector<64x128xf32> to vector<64x128xbf16>
    %235 = arith.truncf %209 : vector<64x128xf32> to vector<64x128xbf16>
    %c63_i32_76 = arith.constant 63 : i32
    %236 = tpu.dynamic_rotate %209 by %c63_i32_76 dim 0 : vector<64x128xf32>, i32 -> vector<64x128xf32>
    %cst_77 = arith.constant 0.000000e+00 : f32
    %237 = vector.shape_cast %54 : vector<64x1xi1> to vector<64x1xi1>
    %238 = vector.broadcast %237 : vector<64x1xi1> to vector<64x128xi1>
    %239 = vector.broadcast %cst_77 : f32 to vector<64x128xf32>
    %240 = arith.select %238, %236, %239 : vector<64x128xi1>, vector<64x128xf32>
    %241 = arith.truncf %240 : vector<64x128xf32> to vector<64x128xbf16>
    %c57_i32_78 = arith.constant 57 : i32
    %242 = tpu.dynamic_rotate %209 by %c57_i32_78 dim 0 : vector<64x128xf32>, i32 -> vector<64x128xf32>
    %cst_79 = arith.constant 0.000000e+00 : f32
    %243 = vector.shape_cast %59 : vector<64x1xi1> to vector<64x1xi1>
    %244 = vector.broadcast %243 : vector<64x1xi1> to vector<64x128xi1>
    %245 = vector.broadcast %cst_79 : f32 to vector<64x128xf32>
    %246 = arith.select %244, %242, %245 : vector<64x128xi1>, vector<64x128xf32>
    %247 = arith.truncf %246 : vector<64x128xf32> to vector<64x128xbf16>
    %c56_i32_80 = arith.constant 56 : i32
    %248 = tpu.dynamic_rotate %209 by %c56_i32_80 dim 0 : vector<64x128xf32>, i32 -> vector<64x128xf32>
    %cst_81 = arith.constant 0.000000e+00 : f32
    %249 = vector.shape_cast %61 : vector<64x1xi1> to vector<64x1xi1>
    %250 = vector.broadcast %249 : vector<64x1xi1> to vector<64x128xi1>
    %251 = vector.broadcast %cst_81 : f32 to vector<64x128xf32>
    %252 = arith.select %250, %248, %251 : vector<64x128xi1>, vector<64x128xf32>
    %253 = arith.truncf %252 : vector<64x128xf32> to vector<64x128xbf16>
    %c55_i32_82 = arith.constant 55 : i32
    %254 = tpu.dynamic_rotate %209 by %c55_i32_82 dim 0 : vector<64x128xf32>, i32 -> vector<64x128xf32>
    %cst_83 = arith.constant 0.000000e+00 : f32
    %255 = vector.shape_cast %66 : vector<64x1xi1> to vector<64x1xi1>
    %256 = vector.broadcast %255 : vector<64x1xi1> to vector<64x128xi1>
    %257 = vector.broadcast %cst_83 : f32 to vector<64x128xf32>
    %258 = arith.select %256, %254, %257 : vector<64x128xi1>, vector<64x128xf32>
    %259 = arith.truncf %258 : vector<64x128xf32> to vector<64x128xbf16>
    %260 = tpu.concatenate %216, %222, %228, %234, %235, %241, %247, %253, %259 in 1 : vector<64x128xbf16>, vector<64x128xbf16>, vector<64x128xbf16>, vector<64x128xbf16>, vector<64x128xbf16>, vector<64x128xbf16>, vector<64x128xbf16>, vector<64x128xbf16>, vector<64x128xbf16> -> vector<64x1152xbf16>
    %c1_84 = arith.constant 1 : index
    %c0_85 = arith.constant 0 : index
    %c0_86 = arith.constant 0 : index
    %261 = vector.load %arg4[%c1_84, %c0_85, %c0_86] : memref<4x1152x128xbf16, #tpu.memory_space<vmem>>, vector<1x1152x128xbf16>
    %262 = vector.shape_cast %261 : vector<1x1152x128xbf16> to vector<1152x128xbf16>
    %cst_87 = arith.constant dense<0.000000e+00> : vector<64x128xf32>
    %263 = tpu.matmul %260, %262, %cst_87 {dimension_numbers = #tpu.dot_dimension_numbers<[1], [0], [0], [1], [0, 0, 1, 1], [], []>} : vector<64x1152xbf16>, vector<1152x128xbf16>, vector<64x128xf32> -> vector<64x128xf32>
    %264 = vector.broadcast %210 : vector<1x128xf32> to vector<64x128xf32>
    %265 = arith.addf %263, %264 : vector<64x128xf32>
    %266 = arith.addf %265, %68 : vector<64x128xf32>
    %267 = arith.truncf %266 : vector<64x128xf32> to vector<64x128xbf16>
    %c0_88 = arith.constant 0 : index
    %c0_89 = arith.constant 0 : index
    %268 = vector.load %arg5[%c0_88, %c0_89] : memref<128x384xbf16, #tpu.memory_space<vmem>>, vector<128x384xbf16>
    %cst_90 = arith.constant dense<0.000000e+00> : vector<64x384xf32>
    %269 = tpu.matmul %267, %268, %cst_90 {dimension_numbers = #tpu.dot_dimension_numbers<[1], [0], [0], [1], [0, 0, 1, 1], [], []>} : vector<64x128xbf16>, vector<128x384xbf16>, vector<64x384xf32> -> vector<64x384xf32>
    %c0_91 = arith.constant 0 : index
    %c0_92 = arith.constant 0 : index
    %270 = vector.load %arg6[%c0_91, %c0_92] : memref<1x384xf32, #tpu.memory_space<vmem>>, vector<1x384xf32>
    %271 = vector.broadcast %270 : vector<1x384xf32> to vector<64x384xf32>
    %272 = arith.addf %269, %271 : vector<64x384xf32>
    %273 = vector.extract_strided_slice %272 {offsets = [0, 0], sizes = [64, 128], strides = [1, 1]} : vector<64x384xf32> to vector<64x128xf32>
    %cst_93 = arith.constant 1.250000e-01 : f32
    %274 = vector.broadcast %cst_93 : f32 to vector<64x128xf32>
    %275 = arith.mulf %273, %274 : vector<64x128xf32>
    %276 = arith.truncf %275 : vector<64x128xf32> to vector<64x128xbf16>
    %277 = vector.extract_strided_slice %272 {offsets = [0, 128], sizes = [64, 128], strides = [1, 1]} : vector<64x384xf32> to vector<64x128xf32>
    %278 = arith.truncf %277 : vector<64x128xf32> to vector<64x128xbf16>
    %279 = vector.extract_strided_slice %272 {offsets = [0, 256], sizes = [64, 128], strides = [1, 1]} : vector<64x384xf32> to vector<64x128xf32>
    %280 = arith.truncf %279 : vector<64x128xf32> to vector<64x128xbf16>
    %cst_94 = arith.constant dense<0.000000e+00> : vector<64x64xf32>
    %281 = tpu.matmul %276, %278, %cst_94 {dimension_numbers = #tpu.dot_dimension_numbers<[1], [1], [0], [0], [0, 0, 1, 0], [], []>} : vector<64x128xbf16>, vector<64x128xbf16>, vector<64x64xf32> -> vector<64x64xf32>
    %cst_95 = arith.constant dense<0xFF800000> : vector<64xf32>
    %282 = vector.multi_reduction <maximumf>, %281, %cst_95 [0] : vector<64x64xf32> to vector<64xf32>
    %283 = vector.shape_cast %282 : vector<64xf32> to vector<1x64xf32>
    %284 = vector.broadcast %283 : vector<1x64xf32> to vector<64x64xf32>
    %285 = arith.subf %281, %284 : vector<64x64xf32>
    %286 = math.exp %285 : vector<64x64xf32>
    %cst_96 = arith.constant dense<0.000000e+00> : vector<64xf32>
    %287 = vector.multi_reduction <add>, %286, %cst_96 [0] : vector<64x64xf32> to vector<64xf32>
    %288 = vector.shape_cast %287 : vector<64xf32> to vector<1x64xf32>
    %289 = tpu.reciprocal %288 {approx = true} : vector<1x64xf32> -> vector<1x64xf32>
    %290 = vector.broadcast %289 : vector<1x64xf32> to vector<64x64xf32>
    %291 = arith.mulf %286, %290 : vector<64x64xf32>
    %292 = arith.truncf %291 : vector<64x64xf32> to vector<64x64xbf16>
    %cst_97 = arith.constant dense<0.000000e+00> : vector<64x128xf32>
    %293 = tpu.matmul %292, %280, %cst_97 {dimension_numbers = #tpu.dot_dimension_numbers<[1], [0], [0], [1], [0, 0, 1, 1], [], []>} : vector<64x64xbf16>, vector<64x128xbf16>, vector<64x128xf32> -> vector<64x128xf32>
    %294 = arith.truncf %293 : vector<64x128xf32> to vector<64x128xbf16>
    %c0_98 = arith.constant 0 : index
    %c0_99 = arith.constant 0 : index
    %295 = vector.load %arg7[%c0_98, %c0_99] : memref<128x128xbf16, #tpu.memory_space<vmem>>, vector<128x128xbf16>
    %cst_100 = arith.constant dense<0.000000e+00> : vector<64x128xf32>
    %296 = tpu.matmul %294, %295, %cst_100 {dimension_numbers = #tpu.dot_dimension_numbers<[1], [0], [0], [1], [0, 0, 1, 1], [], []>} : vector<64x128xbf16>, vector<128x128xbf16>, vector<64x128xf32> -> vector<64x128xf32>
    %c12 = arith.constant 12 : index
    %c0_101 = arith.constant 0 : index
    %297 = vector.load %arg3[%c12, %c0_101] : memref<13x128xf32, #tpu.memory_space<vmem>>, vector<1x128xf32>
    %298 = vector.broadcast %297 : vector<1x128xf32> to vector<64x128xf32>
    %299 = arith.addf %296, %298 : vector<64x128xf32>
    %300 = arith.addf %299, %266 : vector<64x128xf32>
    %301 = vector.extract_strided_slice %70 {offsets = [1, 0], sizes = [1, 128], strides = [1, 1]} : vector<2x128xf32> to vector<1x128xf32>
    %c6 = arith.constant 6 : index
    %c0_102 = arith.constant 0 : index
    %302 = vector.load %arg3[%c6, %c0_102] : memref<13x128xf32, #tpu.memory_space<vmem>>, vector<1x128xf32>
    %c7 = arith.constant 7 : index
    %c0_103 = arith.constant 0 : index
    %303 = vector.load %arg3[%c7, %c0_103] : memref<13x128xf32, #tpu.memory_space<vmem>>, vector<1x128xf32>
    %cst_104 = arith.constant dense<0.000000e+00> : vector<128xf32>
    %304 = vector.multi_reduction <add>, %300, %cst_104 [0] : vector<64x128xf32> to vector<128xf32>
    %305 = vector.shape_cast %304 : vector<128xf32> to vector<1x128xf32>
    %c127_i32_105 = arith.constant 127 : i32
    %306 = tpu.dynamic_rotate %305 by %c127_i32_105 dim 1 : vector<1x128xf32>, i32 -> vector<1x128xf32>
    %307 = arith.addf %305, %306 : vector<1x128xf32>
    %cst_106 = arith.constant 0.000000e+00 : f32
    %308 = vector.broadcast %cst_106 : f32 to vector<1x128xf32>
    %309 = arith.select %21, %307, %308 : vector<1x128xi1>, vector<1x128xf32>
    %c1_i32_107 = arith.constant 1 : i32
    %310 = tpu.dynamic_rotate %309 by %c1_i32_107 dim 1 : vector<1x128xf32>, i32 -> vector<1x128xf32>
    %311 = arith.addf %309, %310 : vector<1x128xf32>
    %cst_108 = arith.constant 7.812500e-03 : f32
    %312 = vector.broadcast %cst_108 : f32 to vector<1x128xf32>
    %313 = arith.mulf %311, %312 : vector<1x128xf32>
    %314 = vector.broadcast %313 : vector<1x128xf32> to vector<64x128xf32>
    %315 = arith.subf %300, %314 : vector<64x128xf32>
    %316 = arith.mulf %315, %315 : vector<64x128xf32>
    %cst_109 = arith.constant dense<0.000000e+00> : vector<128xf32>
    %317 = vector.multi_reduction <add>, %316, %cst_109 [0] : vector<64x128xf32> to vector<128xf32>
    %318 = vector.shape_cast %317 : vector<128xf32> to vector<1x128xf32>
    %c127_i32_110 = arith.constant 127 : i32
    %319 = tpu.dynamic_rotate %318 by %c127_i32_110 dim 1 : vector<1x128xf32>, i32 -> vector<1x128xf32>
    %320 = arith.addf %318, %319 : vector<1x128xf32>
    %cst_111 = arith.constant 0.000000e+00 : f32
    %321 = vector.broadcast %cst_111 : f32 to vector<1x128xf32>
    %322 = arith.select %21, %320, %321 : vector<1x128xi1>, vector<1x128xf32>
    %c1_i32_112 = arith.constant 1 : i32
    %323 = tpu.dynamic_rotate %322 by %c1_i32_112 dim 1 : vector<1x128xf32>, i32 -> vector<1x128xf32>
    %324 = arith.addf %322, %323 : vector<1x128xf32>
    %cst_113 = arith.constant 7.812500e-03 : f32
    %325 = vector.broadcast %cst_113 : f32 to vector<1x128xf32>
    %326 = arith.mulf %324, %325 : vector<1x128xf32>
    %cst_114 = arith.constant 9.99999974E-6 : f32
    %327 = vector.broadcast %cst_114 : f32 to vector<1x128xf32>
    %328 = arith.addf %326, %327 : vector<1x128xf32>
    %329 = math.rsqrt %328 : vector<1x128xf32>
    %330 = vector.broadcast %329 : vector<1x128xf32> to vector<64x128xf32>
    %331 = arith.mulf %315, %330 : vector<64x128xf32>
    %332 = vector.broadcast %302 : vector<1x128xf32> to vector<64x128xf32>
    %333 = arith.mulf %331, %332 : vector<64x128xf32>
    %334 = vector.broadcast %303 : vector<1x128xf32> to vector<64x128xf32>
    %335 = arith.addf %333, %334 : vector<64x128xf32>
    %336 = arith.negf %335 : vector<64x128xf32>
    %337 = math.exp %336 : vector<64x128xf32>
    %cst_115 = arith.constant 1.000000e+00 : f32
    %338 = vector.broadcast %cst_115 : f32 to vector<64x128xf32>
    %339 = arith.addf %338, %337 : vector<64x128xf32>
    %340 = arith.divf %338, %339 : vector<64x128xf32>
    %341 = arith.mulf %335, %340 : vector<64x128xf32>
    %c8 = arith.constant 8 : index
    %c0_116 = arith.constant 0 : index
    %342 = vector.load %arg3[%c8, %c0_116] : memref<13x128xf32, #tpu.memory_space<vmem>>, vector<1x128xf32>
    %c9_i32_117 = arith.constant 9 : i32
    %343 = tpu.dynamic_rotate %341 by %c9_i32_117 dim 0 : vector<64x128xf32>, i32 -> vector<64x128xf32>
    %cst_118 = arith.constant 0.000000e+00 : f32
    %344 = vector.shape_cast %43 : vector<64x1xi1> to vector<64x1xi1>
    %345 = vector.broadcast %344 : vector<64x1xi1> to vector<64x128xi1>
    %346 = vector.broadcast %cst_118 : f32 to vector<64x128xf32>
    %347 = arith.select %345, %343, %346 : vector<64x128xi1>, vector<64x128xf32>
    %348 = arith.truncf %347 : vector<64x128xf32> to vector<64x128xbf16>
    %c8_i32_119 = arith.constant 8 : i32
    %349 = tpu.dynamic_rotate %341 by %c8_i32_119 dim 0 : vector<64x128xf32>, i32 -> vector<64x128xf32>
    %cst_120 = arith.constant 0.000000e+00 : f32
    %350 = vector.shape_cast %45 : vector<64x1xi1> to vector<64x1xi1>
    %351 = vector.broadcast %350 : vector<64x1xi1> to vector<64x128xi1>
    %352 = vector.broadcast %cst_120 : f32 to vector<64x128xf32>
    %353 = arith.select %351, %349, %352 : vector<64x128xi1>, vector<64x128xf32>
    %354 = arith.truncf %353 : vector<64x128xf32> to vector<64x128xbf16>
    %c7_i32_121 = arith.constant 7 : i32
    %355 = tpu.dynamic_rotate %341 by %c7_i32_121 dim 0 : vector<64x128xf32>, i32 -> vector<64x128xf32>
    %cst_122 = arith.constant 0.000000e+00 : f32
    %356 = vector.shape_cast %50 : vector<64x1xi1> to vector<64x1xi1>
    %357 = vector.broadcast %356 : vector<64x1xi1> to vector<64x128xi1>
    %358 = vector.broadcast %cst_122 : f32 to vector<64x128xf32>
    %359 = arith.select %357, %355, %358 : vector<64x128xi1>, vector<64x128xf32>
    %360 = arith.truncf %359 : vector<64x128xf32> to vector<64x128xbf16>
    %c1_i32_123 = arith.constant 1 : i32
    %361 = tpu.dynamic_rotate %341 by %c1_i32_123 dim 0 : vector<64x128xf32>, i32 -> vector<64x128xf32>
    %cst_124 = arith.constant 0.000000e+00 : f32
    %362 = vector.shape_cast %52 : vector<64x1xi1> to vector<64x1xi1>
    %363 = vector.broadcast %362 : vector<64x1xi1> to vector<64x128xi1>
    %364 = vector.broadcast %cst_124 : f32 to vector<64x128xf32>
    %365 = arith.select %363, %361, %364 : vector<64x128xi1>, vector<64x128xf32>
    %366 = arith.truncf %365 : vector<64x128xf32> to vector<64x128xbf16>
    %367 = arith.truncf %341 : vector<64x128xf32> to vector<64x128xbf16>
    %c63_i32_125 = arith.constant 63 : i32
    %368 = tpu.dynamic_rotate %341 by %c63_i32_125 dim 0 : vector<64x128xf32>, i32 -> vector<64x128xf32>
    %cst_126 = arith.constant 0.000000e+00 : f32
    %369 = vector.shape_cast %54 : vector<64x1xi1> to vector<64x1xi1>
    %370 = vector.broadcast %369 : vector<64x1xi1> to vector<64x128xi1>
    %371 = vector.broadcast %cst_126 : f32 to vector<64x128xf32>
    %372 = arith.select %370, %368, %371 : vector<64x128xi1>, vector<64x128xf32>
    %373 = arith.truncf %372 : vector<64x128xf32> to vector<64x128xbf16>
    %c57_i32_127 = arith.constant 57 : i32
    %374 = tpu.dynamic_rotate %341 by %c57_i32_127 dim 0 : vector<64x128xf32>, i32 -> vector<64x128xf32>
    %cst_128 = arith.constant 0.000000e+00 : f32
    %375 = vector.shape_cast %59 : vector<64x1xi1> to vector<64x1xi1>
    %376 = vector.broadcast %375 : vector<64x1xi1> to vector<64x128xi1>
    %377 = vector.broadcast %cst_128 : f32 to vector<64x128xf32>
    %378 = arith.select %376, %374, %377 : vector<64x128xi1>, vector<64x128xf32>
    %379 = arith.truncf %378 : vector<64x128xf32> to vector<64x128xbf16>
    %c56_i32_129 = arith.constant 56 : i32
    %380 = tpu.dynamic_rotate %341 by %c56_i32_129 dim 0 : vector<64x128xf32>, i32 -> vector<64x128xf32>
    %cst_130 = arith.constant 0.000000e+00 : f32
    %381 = vector.shape_cast %61 : vector<64x1xi1> to vector<64x1xi1>
    %382 = vector.broadcast %381 : vector<64x1xi1> to vector<64x128xi1>
    %383 = vector.broadcast %cst_130 : f32 to vector<64x128xf32>
    %384 = arith.select %382, %380, %383 : vector<64x128xi1>, vector<64x128xf32>
    %385 = arith.truncf %384 : vector<64x128xf32> to vector<64x128xbf16>
    %c55_i32_131 = arith.constant 55 : i32
    %386 = tpu.dynamic_rotate %341 by %c55_i32_131 dim 0 : vector<64x128xf32>, i32 -> vector<64x128xf32>
    %cst_132 = arith.constant 0.000000e+00 : f32
    %387 = vector.shape_cast %66 : vector<64x1xi1> to vector<64x1xi1>
    %388 = vector.broadcast %387 : vector<64x1xi1> to vector<64x128xi1>
    %389 = vector.broadcast %cst_132 : f32 to vector<64x128xf32>
    %390 = arith.select %388, %386, %389 : vector<64x128xi1>, vector<64x128xf32>
    %391 = arith.truncf %390 : vector<64x128xf32> to vector<64x128xbf16>
    %392 = tpu.concatenate %348, %354, %360, %366, %367, %373, %379, %385, %391 in 1 : vector<64x128xbf16>, vector<64x128xbf16>, vector<64x128xbf16>, vector<64x128xbf16>, vector<64x128xbf16>, vector<64x128xbf16>, vector<64x128xbf16>, vector<64x128xbf16>, vector<64x128xbf16> -> vector<64x1152xbf16>
    %c2_133 = arith.constant 2 : index
    %c0_134 = arith.constant 0 : index
    %c0_135 = arith.constant 0 : index
    %393 = vector.load %arg4[%c2_133, %c0_134, %c0_135] : memref<4x1152x128xbf16, #tpu.memory_space<vmem>>, vector<1x1152x128xbf16>
    %394 = vector.shape_cast %393 : vector<1x1152x128xbf16> to vector<1152x128xbf16>
    %cst_136 = arith.constant dense<0.000000e+00> : vector<64x128xf32>
    %395 = tpu.matmul %392, %394, %cst_136 {dimension_numbers = #tpu.dot_dimension_numbers<[1], [0], [0], [1], [0, 0, 1, 1], [], []>} : vector<64x1152xbf16>, vector<1152x128xbf16>, vector<64x128xf32> -> vector<64x128xf32>
    %396 = vector.broadcast %342 : vector<1x128xf32> to vector<64x128xf32>
    %397 = arith.addf %395, %396 : vector<64x128xf32>
    %398 = vector.broadcast %301 : vector<1x128xf32> to vector<64x128xf32>
    %399 = arith.addf %397, %398 : vector<64x128xf32>
    %c9 = arith.constant 9 : index
    %c0_137 = arith.constant 0 : index
    %400 = vector.load %arg3[%c9, %c0_137] : memref<13x128xf32, #tpu.memory_space<vmem>>, vector<1x128xf32>
    %c10 = arith.constant 10 : index
    %c0_138 = arith.constant 0 : index
    %401 = vector.load %arg3[%c10, %c0_138] : memref<13x128xf32, #tpu.memory_space<vmem>>, vector<1x128xf32>
    %cst_139 = arith.constant dense<0.000000e+00> : vector<128xf32>
    %402 = vector.multi_reduction <add>, %399, %cst_139 [0] : vector<64x128xf32> to vector<128xf32>
    %403 = vector.shape_cast %402 : vector<128xf32> to vector<1x128xf32>
    %c127_i32_140 = arith.constant 127 : i32
    %404 = tpu.dynamic_rotate %403 by %c127_i32_140 dim 1 : vector<1x128xf32>, i32 -> vector<1x128xf32>
    %405 = arith.addf %403, %404 : vector<1x128xf32>
    %cst_141 = arith.constant 0.000000e+00 : f32
    %406 = vector.broadcast %cst_141 : f32 to vector<1x128xf32>
    %407 = arith.select %21, %405, %406 : vector<1x128xi1>, vector<1x128xf32>
    %c1_i32_142 = arith.constant 1 : i32
    %408 = tpu.dynamic_rotate %407 by %c1_i32_142 dim 1 : vector<1x128xf32>, i32 -> vector<1x128xf32>
    %409 = arith.addf %407, %408 : vector<1x128xf32>
    %cst_143 = arith.constant 7.812500e-03 : f32
    %410 = vector.broadcast %cst_143 : f32 to vector<1x128xf32>
    %411 = arith.mulf %409, %410 : vector<1x128xf32>
    %412 = vector.broadcast %411 : vector<1x128xf32> to vector<64x128xf32>
    %413 = arith.subf %399, %412 : vector<64x128xf32>
    %414 = arith.mulf %413, %413 : vector<64x128xf32>
    %cst_144 = arith.constant dense<0.000000e+00> : vector<128xf32>
    %415 = vector.multi_reduction <add>, %414, %cst_144 [0] : vector<64x128xf32> to vector<128xf32>
    %416 = vector.shape_cast %415 : vector<128xf32> to vector<1x128xf32>
    %c127_i32_145 = arith.constant 127 : i32
    %417 = tpu.dynamic_rotate %416 by %c127_i32_145 dim 1 : vector<1x128xf32>, i32 -> vector<1x128xf32>
    %418 = arith.addf %416, %417 : vector<1x128xf32>
    %cst_146 = arith.constant 0.000000e+00 : f32
    %419 = vector.broadcast %cst_146 : f32 to vector<1x128xf32>
    %420 = arith.select %21, %418, %419 : vector<1x128xi1>, vector<1x128xf32>
    %c1_i32_147 = arith.constant 1 : i32
    %421 = tpu.dynamic_rotate %420 by %c1_i32_147 dim 1 : vector<1x128xf32>, i32 -> vector<1x128xf32>
    %422 = arith.addf %420, %421 : vector<1x128xf32>
    %cst_148 = arith.constant 7.812500e-03 : f32
    %423 = vector.broadcast %cst_148 : f32 to vector<1x128xf32>
    %424 = arith.mulf %422, %423 : vector<1x128xf32>
    %cst_149 = arith.constant 9.99999974E-6 : f32
    %425 = vector.broadcast %cst_149 : f32 to vector<1x128xf32>
    %426 = arith.addf %424, %425 : vector<1x128xf32>
    %427 = math.rsqrt %426 : vector<1x128xf32>
    %428 = vector.broadcast %427 : vector<1x128xf32> to vector<64x128xf32>
    %429 = arith.mulf %413, %428 : vector<64x128xf32>
    %430 = vector.broadcast %400 : vector<1x128xf32> to vector<64x128xf32>
    %431 = arith.mulf %429, %430 : vector<64x128xf32>
    %432 = vector.broadcast %401 : vector<1x128xf32> to vector<64x128xf32>
    %433 = arith.addf %431, %432 : vector<64x128xf32>
    %434 = arith.negf %433 : vector<64x128xf32>
    %435 = math.exp %434 : vector<64x128xf32>
    %cst_150 = arith.constant 1.000000e+00 : f32
    %436 = vector.broadcast %cst_150 : f32 to vector<64x128xf32>
    %437 = arith.addf %436, %435 : vector<64x128xf32>
    %438 = arith.divf %436, %437 : vector<64x128xf32>
    %439 = arith.mulf %433, %438 : vector<64x128xf32>
    %c11 = arith.constant 11 : index
    %c0_151 = arith.constant 0 : index
    %440 = vector.load %arg3[%c11, %c0_151] : memref<13x128xf32, #tpu.memory_space<vmem>>, vector<1x128xf32>
    %c9_i32_152 = arith.constant 9 : i32
    %441 = tpu.dynamic_rotate %439 by %c9_i32_152 dim 0 : vector<64x128xf32>, i32 -> vector<64x128xf32>
    %cst_153 = arith.constant 0.000000e+00 : f32
    %442 = vector.shape_cast %43 : vector<64x1xi1> to vector<64x1xi1>
    %443 = vector.broadcast %442 : vector<64x1xi1> to vector<64x128xi1>
    %444 = vector.broadcast %cst_153 : f32 to vector<64x128xf32>
    %445 = arith.select %443, %441, %444 : vector<64x128xi1>, vector<64x128xf32>
    %446 = arith.truncf %445 : vector<64x128xf32> to vector<64x128xbf16>
    %c8_i32_154 = arith.constant 8 : i32
    %447 = tpu.dynamic_rotate %439 by %c8_i32_154 dim 0 : vector<64x128xf32>, i32 -> vector<64x128xf32>
    %cst_155 = arith.constant 0.000000e+00 : f32
    %448 = vector.shape_cast %45 : vector<64x1xi1> to vector<64x1xi1>
    %449 = vector.broadcast %448 : vector<64x1xi1> to vector<64x128xi1>
    %450 = vector.broadcast %cst_155 : f32 to vector<64x128xf32>
    %451 = arith.select %449, %447, %450 : vector<64x128xi1>, vector<64x128xf32>
    %452 = arith.truncf %451 : vector<64x128xf32> to vector<64x128xbf16>
    %c7_i32_156 = arith.constant 7 : i32
    %453 = tpu.dynamic_rotate %439 by %c7_i32_156 dim 0 : vector<64x128xf32>, i32 -> vector<64x128xf32>
    %cst_157 = arith.constant 0.000000e+00 : f32
    %454 = vector.shape_cast %50 : vector<64x1xi1> to vector<64x1xi1>
    %455 = vector.broadcast %454 : vector<64x1xi1> to vector<64x128xi1>
    %456 = vector.broadcast %cst_157 : f32 to vector<64x128xf32>
    %457 = arith.select %455, %453, %456 : vector<64x128xi1>, vector<64x128xf32>
    %458 = arith.truncf %457 : vector<64x128xf32> to vector<64x128xbf16>
    %c1_i32_158 = arith.constant 1 : i32
    %459 = tpu.dynamic_rotate %439 by %c1_i32_158 dim 0 : vector<64x128xf32>, i32 -> vector<64x128xf32>
    %cst_159 = arith.constant 0.000000e+00 : f32
    %460 = vector.shape_cast %52 : vector<64x1xi1> to vector<64x1xi1>
    %461 = vector.broadcast %460 : vector<64x1xi1> to vector<64x128xi1>
    %462 = vector.broadcast %cst_159 : f32 to vector<64x128xf32>
    %463 = arith.select %461, %459, %462 : vector<64x128xi1>, vector<64x128xf32>
    %464 = arith.truncf %463 : vector<64x128xf32> to vector<64x128xbf16>
    %465 = arith.truncf %439 : vector<64x128xf32> to vector<64x128xbf16>
    %c63_i32_160 = arith.constant 63 : i32
    %466 = tpu.dynamic_rotate %439 by %c63_i32_160 dim 0 : vector<64x128xf32>, i32 -> vector<64x128xf32>
    %cst_161 = arith.constant 0.000000e+00 : f32
    %467 = vector.shape_cast %54 : vector<64x1xi1> to vector<64x1xi1>
    %468 = vector.broadcast %467 : vector<64x1xi1> to vector<64x128xi1>
    %469 = vector.broadcast %cst_161 : f32 to vector<64x128xf32>
    %470 = arith.select %468, %466, %469 : vector<64x128xi1>, vector<64x128xf32>
    %471 = arith.truncf %470 : vector<64x128xf32> to vector<64x128xbf16>
    %c57_i32_162 = arith.constant 57 : i32
    %472 = tpu.dynamic_rotate %439 by %c57_i32_162 dim 0 : vector<64x128xf32>, i32 -> vector<64x128xf32>
    %cst_163 = arith.constant 0.000000e+00 : f32
    %473 = vector.shape_cast %59 : vector<64x1xi1> to vector<64x1xi1>
    %474 = vector.broadcast %473 : vector<64x1xi1> to vector<64x128xi1>
    %475 = vector.broadcast %cst_163 : f32 to vector<64x128xf32>
    %476 = arith.select %474, %472, %475 : vector<64x128xi1>, vector<64x128xf32>
    %477 = arith.truncf %476 : vector<64x128xf32> to vector<64x128xbf16>
    %c56_i32_164 = arith.constant 56 : i32
    %478 = tpu.dynamic_rotate %439 by %c56_i32_164 dim 0 : vector<64x128xf32>, i32 -> vector<64x128xf32>
    %cst_165 = arith.constant 0.000000e+00 : f32
    %479 = vector.shape_cast %61 : vector<64x1xi1> to vector<64x1xi1>
    %480 = vector.broadcast %479 : vector<64x1xi1> to vector<64x128xi1>
    %481 = vector.broadcast %cst_165 : f32 to vector<64x128xf32>
    %482 = arith.select %480, %478, %481 : vector<64x128xi1>, vector<64x128xf32>
    %483 = arith.truncf %482 : vector<64x128xf32> to vector<64x128xbf16>
    %c55_i32_166 = arith.constant 55 : i32
    %484 = tpu.dynamic_rotate %439 by %c55_i32_166 dim 0 : vector<64x128xf32>, i32 -> vector<64x128xf32>
    %cst_167 = arith.constant 0.000000e+00 : f32
    %485 = vector.shape_cast %66 : vector<64x1xi1> to vector<64x1xi1>
    %486 = vector.broadcast %485 : vector<64x1xi1> to vector<64x128xi1>
    %487 = vector.broadcast %cst_167 : f32 to vector<64x128xf32>
    %488 = arith.select %486, %484, %487 : vector<64x128xi1>, vector<64x128xf32>
    %489 = arith.truncf %488 : vector<64x128xf32> to vector<64x128xbf16>
    %490 = tpu.concatenate %446, %452, %458, %464, %465, %471, %477, %483, %489 in 1 : vector<64x128xbf16>, vector<64x128xbf16>, vector<64x128xbf16>, vector<64x128xbf16>, vector<64x128xbf16>, vector<64x128xbf16>, vector<64x128xbf16>, vector<64x128xbf16>, vector<64x128xbf16> -> vector<64x1152xbf16>
    %c3_168 = arith.constant 3 : index
    %c0_169 = arith.constant 0 : index
    %c0_170 = arith.constant 0 : index
    %491 = vector.load %arg4[%c3_168, %c0_169, %c0_170] : memref<4x1152x128xbf16, #tpu.memory_space<vmem>>, vector<1x1152x128xbf16>
    %492 = vector.shape_cast %491 : vector<1x1152x128xbf16> to vector<1152x128xbf16>
    %cst_171 = arith.constant dense<0.000000e+00> : vector<64x128xf32>
    %493 = tpu.matmul %490, %492, %cst_171 {dimension_numbers = #tpu.dot_dimension_numbers<[1], [0], [0], [1], [0, 0, 1, 1], [], []>} : vector<64x1152xbf16>, vector<1152x128xbf16>, vector<64x128xf32> -> vector<64x128xf32>
    %494 = vector.broadcast %440 : vector<1x128xf32> to vector<64x128xf32>
    %495 = arith.addf %493, %494 : vector<64x128xf32>
    %496 = arith.addf %495, %300 : vector<64x128xf32>
    %c0_172 = arith.constant 0 : index
    %c0_173 = arith.constant 0 : index
    %c0_174 = arith.constant 0 : index
    %497 = vector.load %arg8[%c0_172, %c0_173, %c0_174] : memref<1x64x128xf32, #tpu.memory_space<vmem>>, vector<1x64x128xf32>
    %498 = vector.shape_cast %497 : vector<1x64x128xf32> to vector<64x128xf32>
    %499 = vector.shape_cast %496 : vector<64x128xf32> to vector<1x64x128xf32>
    tpu.vector_store %arg8[%c0_172, %c0_173, %c0_174], %499 {strides = array<i32>} : memref<1x64x128xf32, #tpu.memory_space<vmem>>, vector<1x64x128xf32>,
    return
  }
  func.func @transform_0(%arg0: i32) -> (i32, i32, i32) {
    %c0_i32 = arith.constant 0 : i32
    %c0_i32_0 = arith.constant 0 : i32
    %c0_i32_1 = arith.constant 0 : i32
    return %arg0, %c0_i32, %c0_i32_0 : i32, i32, i32
  }
  func.func @transform_1(%arg0: i32) -> (i32, i32, i32) {
    %c0_i32 = arith.constant 0 : i32
    %c0_i32_0 = arith.constant 0 : i32
    %c0_i32_1 = arith.constant 0 : i32
    return %arg0, %c0_i32, %c0_i32_0 : i32, i32, i32
  }
  func.func @transform_2(%arg0: i32) -> (i32, i32) {
    %c0_i32 = arith.constant 0 : i32
    %c0_i32_0 = arith.constant 0 : i32
    %c0_i32_1 = arith.constant 0 : i32
    return %c0_i32, %c0_i32_0 : i32, i32
  }
  func.func @transform_3(%arg0: i32) -> (i32, i32, i32) {
    %c0_i32 = arith.constant 0 : i32
    %c0_i32_0 = arith.constant 0 : i32
    %c0_i32_1 = arith.constant 0 : i32
    %c0_i32_2 = arith.constant 0 : i32
    return %c0_i32, %c0_i32_0, %c0_i32_1 : i32, i32, i32
  }
  func.func @transform_4(%arg0: i32) -> (i32, i32) {
    %c0_i32 = arith.constant 0 : i32
    %c0_i32_0 = arith.constant 0 : i32
    %c0_i32_1 = arith.constant 0 : i32
    return %c0_i32, %c0_i32_0 : i32, i32
  }
  func.func @transform_5(%arg0: i32) -> (i32, i32) {
    %c0_i32 = arith.constant 0 : i32
    %c0_i32_0 = arith.constant 0 : i32
    %c0_i32_1 = arith.constant 0 : i32
    return %c0_i32, %c0_i32_0 : i32, i32
  }
  func.func @transform_6(%arg0: i32) -> (i32, i32) {
    %c0_i32 = arith.constant 0 : i32
    %c0_i32_0 = arith.constant 0 : i32
    %c0_i32_1 = arith.constant 0 : i32
    return %c0_i32, %c0_i32_0 : i32, i32
  }
  func.func @transform_7(%arg0: i32) -> (i32, i32, i32) {
    %c0_i32 = arith.constant 0 : i32
    %c0_i32_0 = arith.constant 0 : i32
    %c0_i32_1 = arith.constant 0 : i32
    return %arg0, %c0_i32, %c0_i32_0 : i32, i32, i32
  }
}

</mosaic_0001>

<llo_original>
// kernel: middle_block.1
$region0: #{middle_block.1}
  #allocation0 [shape = 'u32[]', space=smem, size = 0x4, offset = 0x4, fixed_abs, tag = 'smem constant byte address 0x4 - core index']
  #allocation1 [shape = 'u32[72,128]{1,0:T(1,128)}', space=vmem, size = 0x9000, scoped, tag = 'internal scratch']
  %s0 = inlined_call_operand.vmem [shape: f32[2,64,128], index: 0, kind: input, shape index: {}]
  %s1 = inlined_call_operand.vmem [shape: f32[2,2,128], index: 1, kind: input, shape index: {}]
  %s2 = inlined_call_operand.hbm [shape: f32[13,128], index: 2, kind: input, shape index: {}]
  %s3 = inlined_call_operand.hbm [shape: bf16[4,1152,128], index: 3, kind: input, shape index: {}]
  %s4 = inlined_call_operand.hbm [shape: bf16[128,384], index: 4, kind: input, shape index: {}]
  %s5 = inlined_call_operand.hbm [shape: f32[1,384], index: 5, kind: input, shape index: {}]
  %s6 = inlined_call_operand.hbm [shape: bf16[128,128], index: 6, kind: input, shape index: {}]
  %s7 = inlined_call_operand.vmem [shape: f32[2,64,128], index: 7, kind: output, shape index: {}]
  %s8 = sld [smem:[#allocation0]]
  $region81: #{middle_block.1} parent=0
    _
  %s10 = ssub.s32 1, %s8
  %s11 = scalar_select 0, %s10, %s8
  $region1: #{middle_block.1} parent=0
    #allocation2 [shape = 'u8[8192]{0}', space=vmem, size = 0x2000, scoped, tag = 'input window, operand 2, single buffered']
    #allocation3 [shape = 's32[2]{0}', space=sflag, size = 0x8, scoped, tag = 'scoped memory for middle_block.1']
    #allocation4 [shape = 'u8[1179648]{0}', space=vmem, size = 0x120000, scoped, tag = 'input window, operand 3, single buffered']
    #allocation5 [shape = 's32[1]{0}', space=sflag, size = 0x4, scoped, tag = 'scoped memory for middle_block.1']
    #allocation6 [shape = 'u8[98304]{0}', space=vmem, size = 0x18000, scoped, tag = 'input window, operand 4, single buffered']
    #allocation7 [shape = 'u8[1536]{0}', space=vmem, size = 0x800, scoped, tag = 'input window, operand 5, single buffered']
    #allocation8 [shape = 's32[1]{0}', space=sflag, size = 0x4, scoped, tag = 'scoped memory for middle_block.1']
    #allocation9 [shape = 'u8[32768]{0}', space=vmem, size = 0x8000, scoped, tag = 'input window, operand 6, single buffered']
    %12 = vsyncpa [#allocation3], 0
    %13 = vsyncpa [#allocation5], 0
    %14 = vsyncpa [#allocation8], 0
    loop: start=0, step=1, limit=4
    $region2: #{middle_block.1} parent=1 // loop_pre_header
      _
    $region3: #{middle_block.1} parent=1 // loop_header
      %s16 = sphi 0, %s20
      %p17 = scmp.ge.s32.totalorder %s16, 4
      %s26 = sphi 0, %s28
      %s29 = sphi 0, %s26
      %s30 = sphi 0, %s29
      %s46 = sphi 0, %s30
      %s52 = sphi 0, %s54
      %s55 = sphi 0, %s52
      %s56 = sphi 0, %s55
      %s72 = sphi 0, %s56
      %s76 = sphi 0, %s76
      %s78 = sphi 0, %s76
      %s79 = sphi 0, %s78
      %s93 = sphi 0, %s79
      %s97 = sphi 0, %s97
      %s99 = sphi 0, %s97
      %s100 = sphi 0, %s99
      %s114 = sphi 0, %s100
      %s118 = sphi 0, %s118
      %s120 = sphi 0, %s118
      %s121 = sphi 0, %s120
      %s135 = sphi 0, %s121
      %s139 = sphi 0, %s139
      %s141 = sphi 0, %s139
      %s142 = sphi 0, %s141
      %s156 = sphi 0, %s142
      %s160 = sphi 0, %s160
      %s162 = sphi 0, %s160
      %s163 = sphi 0, %s162
      %s177 = sphi 0, %s163
      %s183 = sphi 0, %s185
      %s186 = sphi 0, %s183
      %s187 = sphi 0, %s186
      %s203 = sphi 0, %s187
    $region4: #{middle_block.1} parent=1 // loop_header_branch
      %19 = sbr.rel (%p17) target = $region8
    $region5: #{middle_block.1} parent=1 // loop_body
      %s21 = ssub.s32 %s16, 1
      %s22 = ssub.s32 %s16, 2
      %s23 = sadd.s32 %s16, 1
      %s24 = ssub.s32 %s16, %s23
      %p25 = scmp.eq.s32.totalorder %s24, 0
      %s27 = sadd.s32 %s26, 1
      %s28 = scalar_select %p25, %s26, %s27
      %p31 = pneg %p25
      %p32 = scmp.eq.s32.totalorder %s16, 1
      %p33 = por %p31, %p32
      %p34 = scmp.ne.s32.totalorder %s26, %s29
      %p35 = scmp.eq.s32.totalorder %s16, 0
      %p36 = por %p34, %p35
      %p37 = scmp.ne.s32.totalorder %s26, %s29
      %p38 = scmp.eq.s32.totalorder %s21, 1
      %p39 = por %p37, %p38
      %p40 = scmp.ne.s32.totalorder %s29, %s30
      %p41 = scmp.eq.s32.totalorder %s21, 0
      %p42 = por %p40, %p41
      %p43 = scmp.ne.s32.totalorder %s29, %s30
      %p44 = scmp.eq.s32.totalorder %s22, 1
      %p45 = por %p43, %p44
      %p47 = scmp.ne.s32.totalorder %s30, %s46
      %p48 = scmp.eq.s32.totalorder %s22, 0
      %p49 = por %p47, %p48
      %s50 = ssub.s32 %s16, %s23
      %p51 = scmp.eq.s32.totalorder %s50, 0
      %s53 = sadd.s32 %s52, 1
      %s54 = scalar_select %p51, %s52, %s53
      %p57 = pneg %p51
      %p58 = scmp.eq.s32.totalorder %s16, 1
      %p59 = por %p57, %p58
      %p60 = scmp.ne.s32.totalorder %s52, %s55
      %p61 = scmp.eq.s32.totalorder %s16, 0
      %p62 = por %p60, %p61
      %p63 = scmp.ne.s32.totalorder %s52, %s55
      %p64 = scmp.eq.s32.totalorder %s21, 1
      %p65 = por %p63, %p64
      %p66 = scmp.ne.s32.totalorder %s55, %s56
      %p67 = scmp.eq.s32.totalorder %s21, 0
      %p68 = por %p66, %p67
      %p69 = scmp.ne.s32.totalorder %s55, %s56
      %p70 = scmp.eq.s32.totalorder %s22, 1
      %p71 = por %p69, %p70
      %p73 = scmp.ne.s32.totalorder %s56, %s72
      %p74 = scmp.eq.s32.totalorder %s22, 0
      %p75 = por %p73, %p74
      %s77 = sadd.s32 %s76, 1
      %p80 = scmp.eq.s32.totalorder %s16, 1
      %p81 = scmp.ne.s32.totalorder %s76, %s78
      %p82 = scmp.eq.s32.totalorder %s16, 0
      %p83 = por %p81, %p82
      %p84 = scmp.ne.s32.totalorder %s76, %s78
      %p85 = scmp.eq.s32.totalorder %s21, 1
      %p86 = por %p84, %p85
      %p87 = scmp.ne.s32.totalorder %s78, %s79
      %p88 = scmp.eq.s32.totalorder %s21, 0
      %p89 = por %p87, %p88
      %p90 = scmp.ne.s32.totalorder %s78, %s79
      %p91 = scmp.eq.s32.totalorder %s22, 1
      %p92 = por %p90, %p91
      %p94 = scmp.ne.s32.totalorder %s79, %s93
      %p95 = scmp.eq.s32.totalorder %s22, 0
      %p96 = por %p94, %p95
      %s98 = sadd.s32 %s97, 1
      %p101 = scmp.eq.s32.totalorder %s16, 1
      %p102 = scmp.ne.s32.totalorder %s97, %s99
      %p103 = scmp.eq.s32.totalorder %s16, 0
      %p104 = por %p102, %p103
      %p105 = scmp.ne.s32.totalorder %s97, %s99
      %p106 = scmp.eq.s32.totalorder %s21, 1
      %p107 = por %p105, %p106
      %p108 = scmp.ne.s32.totalorder %s99, %s100
      %p109 = scmp.eq.s32.totalorder %s21, 0
      %p110 = por %p108, %p109
      %p111 = scmp.ne.s32.totalorder %s99, %s100
      %p112 = scmp.eq.s32.totalorder %s22, 1
      %p113 = por %p111, %p112
      %p115 = scmp.ne.s32.totalorder %s100, %s114
      %p116 = scmp.eq.s32.totalorder %s22, 0
      %p117 = por %p115, %p116
      %s119 = sadd.s32 %s118, 1
      %p122 = scmp.eq.s32.totalorder %s16, 1
      %p123 = scmp.ne.s32.totalorder %s118, %s120
      %p124 = scmp.eq.s32.totalorder %s16, 0
      %p125 = por %p123, %p124
      %p126 = scmp.ne.s32.totalorder %s118, %s120
      %p127 = scmp.eq.s32.totalorder %s21, 1
      %p128 = por %p126, %p127
      %p129 = scmp.ne.s32.totalorder %s120, %s121
      %p130 = scmp.eq.s32.totalorder %s21, 0
      %p131 = por %p129, %p130
      %p132 = scmp.ne.s32.totalorder %s120, %s121
      %p133 = scmp.eq.s32.totalorder %s22, 1
      %p134 = por %p132, %p133
      %p136 = scmp.ne.s32.totalorder %s121, %s135
      %p137 = scmp.eq.s32.totalorder %s22, 0
      %p138 = por %p136, %p137
      %s140 = sadd.s32 %s139, 1
      %p143 = scmp.eq.s32.totalorder %s16, 1
      %p144 = scmp.ne.s32.totalorder %s139, %s141
      %p145 = scmp.eq.s32.totalorder %s16, 0
      %p146 = por %p144, %p145
      %p147 = scmp.ne.s32.totalorder %s139, %s141
      %p148 = scmp.eq.s32.totalorder %s21, 1
      %p149 = por %p147, %p148
      %p150 = scmp.ne.s32.totalorder %s141, %s142
      %p151 = scmp.eq.s32.totalorder %s21, 0
      %p152 = por %p150, %p151
      %p153 = scmp.ne.s32.totalorder %s141, %s142
      %p154 = scmp.eq.s32.totalorder %s22, 1
      %p155 = por %p153, %p154
      %p157 = scmp.ne.s32.totalorder %s142, %s156
      %p158 = scmp.eq.s32.totalorder %s22, 0
      %p159 = por %p157, %p158
      %s161 = sadd.s32 %s160, 1
      %p164 = scmp.eq.s32.totalorder %s16, 1
      %p165 = scmp.ne.s32.totalorder %s160, %s162
      %p166 = scmp.eq.s32.totalorder %s16, 0
      %p167 = por %p165, %p166
      %p168 = scmp.ne.s32.totalorder %s160, %s162
      %p169 = scmp.eq.s32.totalorder %s21, 1
      %p170 = por %p168, %p169
      %p171 = scmp.ne.s32.totalorder %s162, %s163
      %p172 = scmp.eq.s32.totalorder %s21, 0
      %p173 = por %p171, %p172
      %p174 = scmp.ne.s32.totalorder %s162, %s163
      %p175 = scmp.eq.s32.totalorder %s22, 1
      %p176 = por %p174, %p175
      %p178 = scmp.ne.s32.totalorder %s163, %s177
      %p179 = scmp.eq.s32.totalorder %s22, 0
      %p180 = por %p178, %p179
      %s181 = ssub.s32 %s16, %s23
      %p182 = scmp.eq.s32.totalorder %s181, 0
      %s184 = sadd.s32 %s183, 1
      %s185 = scalar_select %p182, %s183, %s184
      %p188 = pneg %p182
      %p189 = scmp.eq.s32.totalorder %s16, 1
      %p190 = por %p188, %p189
      %p191 = scmp.ne.s32.totalorder %s183, %s186
      %p192 = scmp.eq.s32.totalorder %s16, 0
      %p193 = por %p191, %p192
      %p194 = scmp.ne.s32.totalorder %s183, %s186
      %p195 = scmp.eq.s32.totalorder %s21, 1
      %p196 = por %p194, %p195
      %p197 = scmp.ne.s32.totalorder %s186, %s187
      %p198 = scmp.eq.s32.totalorder %s21, 0
      %p199 = por %p197, %p198
      %p200 = scmp.ne.s32.totalorder %s186, %s187
      %p201 = scmp.eq.s32.totalorder %s22, 1
      %p202 = por %p200, %p201
      %p204 = scmp.ne.s32.totalorder %s187, %s203
      %p205 = scmp.eq.s32.totalorder %s22, 0
      %p206 = por %p204, %p205
      %p207 = scmp.le.s32.totalorder 1, %s16
      %p208 = scmp.lt.s32.totalorder %s16, 3
      %p209 = pnand %p207, %p208
      %p210 = pneg %p209
      // Predicated region
      $region9: #{middle_block.1} parent=5 // pred_check
        _
      $region10: #{middle_block.1} parent=5 // pred_check_branch
        %212 = sbr.rel (%p209) target = $region12
      $region11: #{middle_block.1} parent=5 // pred_region
        %s213 = ssub.s32 %s16, 1
        // Predicated region
        $region13: #{middle_block.1} parent=11 // pred_check
          %p214 = pneg %p89
        $region14: #{middle_block.1} parent=11 // pred_check_branch
          %216 = sbr.rel (%p214) target = $region16
        $region15: #{middle_block.1} parent=11 // pred_region
          %218 = vsyncadd [#allocation3], 0
          %s219 = sshll.u32 %s2, 4
          %s220 = int_to_ptr.hbm [resolvable:$true] %s219
          %s221 = sshll.u32 [#allocation2], 4
          %s222 = int_to_ptr.vmem [resolvable:$true] %s221
          %227 = dma.hbm_to_vmem [thread:$0]  %s220, 256, %s222, [#allocation3], 128, 128, 8
        $region16: #{middle_block.1} parent=11 // pred_fallthru
          _
        // Predicated region
        $region17: #{middle_block.1} parent=11 // pred_check
          %p228 = pneg %p110
        $region18: #{middle_block.1} parent=11 // pred_check_branch
          %230 = sbr.rel (%p228) target = $region20
        $region19: #{middle_block.1} parent=11 // pred_region
          %232 = vsyncadd [#allocation5], 0
          %s233 = sshll.u32 %s3, 4
          %s234 = int_to_ptr.hbm [resolvable:$true] %s233
          %s235 = sshll.u32 [#allocation4], 4
          %s236 = int_to_ptr.vmem [resolvable:$true] %s235
          %241 = dma.hbm_to_vmem [thread:$0]  %s234, 36864, %s236, [#allocation5], 64, 64, 4
        $region20: #{middle_block.1} parent=11 // pred_fallthru
          _
        // Predicated region
        $region21: #{middle_block.1} parent=11 // pred_check
          %p242 = pneg %p131
        $region22: #{middle_block.1} parent=11 // pred_check_branch
          %244 = sbr.rel (%p242) target = $region24
        $region23: #{middle_block.1} parent=11 // pred_region
          %246 = vsyncadd [#allocation5], 0
          %s247 = sshll.u32 %s4, 4
          %s248 = int_to_ptr.hbm [resolvable:$true] %s247
          %s249 = sshll.u32 [#allocation6], 4
          %s250 = int_to_ptr.vmem [resolvable:$true] %s249
          %255 = dma.hbm_to_vmem [thread:$0]  %s248, 3072, %s250, [#allocation5], 192, 192, 12
        $region24: #{middle_block.1} parent=11 // pred_fallthru
          _
        // Predicated region
        $region25: #{middle_block.1} parent=11 // pred_check
          %p256 = pneg %p152
        $region26: #{middle_block.1} parent=11 // pred_check_branch
          %258 = sbr.rel (%p256) target = $region28
        $region27: #{middle_block.1} parent=11 // pred_region
          %260 = vsyncadd [#allocation8], 0
          %s262 = sshll.u32 %s5, 4
          %s263 = int_to_ptr.hbm [resolvable:$true] %s262
          %s264 = sshll.u32 [#allocation7], 4
          %s265 = int_to_ptr.vmem [resolvable:$true] %s264
          %267 = dma.hbm_to_vmem [thread:$0]  %s263, 48, %s265, [#allocation8]
        $region28: #{middle_block.1} parent=11 // pred_fallthru
          _
        // Predicated region
        $region29: #{middle_block.1} parent=11 // pred_check
          %p268 = pneg %p173
        $region30: #{middle_block.1} parent=11 // pred_check_branch
          %270 = sbr.rel (%p268) target = $region32
        $region31: #{middle_block.1} parent=11 // pred_region
          %272 = vsyncadd [#allocation8], 0
          %s273 = sshll.u32 %s6, 4
          %s274 = int_to_ptr.hbm [resolvable:$true] %s273
          %s275 = sshll.u32 [#allocation9], 4
          %s276 = int_to_ptr.vmem [resolvable:$true] %s275
          %281 = dma.hbm_to_vmem [thread:$0]  %s274, 1024, %s276, [#allocation8], 64, 64, 4
        $region32: #{middle_block.1} parent=11 // pred_fallthru
          _
      $region12: #{middle_block.1} parent=5 // pred_fallthru
        _
      %p282 = scmp.lt.s32.totalorder %s16, 2
      // Predicated region
      $region33: #{middle_block.1} parent=5 // pred_check
        %p283 = pneg %p282
      $region34: #{middle_block.1} parent=5 // pred_check_branch
        %285 = sbr.rel (%p283) target = $region36
      $region35: #{middle_block.1} parent=5 // pred_region
        // Predicated region
        $region37: #{middle_block.1} parent=35 // pred_check
          %p286 = pneg %p36
        $region38: #{middle_block.1} parent=35 // pred_check_branch
          %288 = sbr.rel (%p286) target = $region40
        $region39: #{middle_block.1} parent=35 // pred_region
          %p289 = scmp.lt.s32.totalorder %s16, 1
          %s290 = scalar_select %p289, %s16, 1
          %s291 = smul.addr %s290, 8
          %s292 = smul.addr %s291, 8
          %s293 = scalar_lea.vmem %s0, %s292
        $region40: #{middle_block.1} parent=35 // pred_fallthru
          _
        // Predicated region
        $region41: #{middle_block.1} parent=35 // pred_check
          %p294 = pneg %p62
        $region42: #{middle_block.1} parent=35 // pred_check_branch
          %296 = sbr.rel (%p294) target = $region44
        $region43: #{middle_block.1} parent=35 // pred_region
          %p297 = scmp.lt.s32.totalorder %s16, 1
          %s298 = scalar_select %p297, %s16, 1
          %s299 = smul.addr %s298, 2
          %s300 = scalar_lea.vmem %s1, %s299
        $region44: #{middle_block.1} parent=35 // pred_fallthru
          _
      $region36: #{middle_block.1} parent=5 // pred_fallthru
        _
      %p301 = scmp.le.s32.totalorder 1, %s16
      %p302 = scmp.lt.s32.totalorder %s16, 3
      %p303 = pnand %p301, %p302
      %p304 = pneg %p303
      // Predicated region
      $region45: #{middle_block.1} parent=5 // pred_check
        _
      $region46: #{middle_block.1} parent=5 // pred_check_branch
        %306 = sbr.rel (%p303) target = $region48
      $region47: #{middle_block.1} parent=5 // pred_region
        %s307 = ssub.s32 %s16, 1
        // Predicated region
        $region49: #{middle_block.1} parent=47 // pred_check
          %p308 = pneg %p89
        $region50: #{middle_block.1} parent=47 // pred_check_branch
          %310 = sbr.rel (%p308) target = $region52
        $region51: #{middle_block.1} parent=47 // pred_region
          %312 = dma.done [#allocation3], 256
        $region52: #{middle_block.1} parent=47 // pred_fallthru
          _
        // Predicated region
        $region53: #{middle_block.1} parent=47 // pred_check
          %p313 = pneg %p110
        $region54: #{middle_block.1} parent=47 // pred_check_branch
          %315 = sbr.rel (%p313) target = $region56
        $region55: #{middle_block.1} parent=47 // pred_region
          %317 = dma.done [#allocation5], 36864
        $region56: #{middle_block.1} parent=47 // pred_fallthru
          _
        // Predicated region
        $region57: #{middle_block.1} parent=47 // pred_check
          %p318 = pneg %p131
        $region58: #{middle_block.1} parent=47 // pred_check_branch
          %320 = sbr.rel (%p318) target = $region60
        $region59: #{middle_block.1} parent=47 // pred_region
          %322 = dma.done [#allocation5], 3072
        $region60: #{middle_block.1} parent=47 // pred_fallthru
          _
        // Predicated region
        $region61: #{middle_block.1} parent=47 // pred_check
          %p323 = pneg %p152
        $region62: #{middle_block.1} parent=47 // pred_check_branch
          %325 = sbr.rel (%p323) target = $region64
        $region63: #{middle_block.1} parent=47 // pred_region
          %327 = dma.done [#allocation8], 48
        $region64: #{middle_block.1} parent=47 // pred_fallthru
          _
        // Predicated region
        $region65: #{middle_block.1} parent=47 // pred_check
          %p328 = pneg %p173
        $region66: #{middle_block.1} parent=47 // pred_check_branch
          %330 = sbr.rel (%p328) target = $region68
        $region67: #{middle_block.1} parent=47 // pred_region
          %332 = dma.done [#allocation8], 1024
        $region68: #{middle_block.1} parent=47 // pred_fallthru
          _
        %p333 = scmp.lt.s32.totalorder %s21, 1
        %s334 = scalar_select %p333, %s21, 1
        %s335 = smul.addr %s334, 8
        %s336 = smul.addr %s335, 8
        %s337 = scalar_lea.vmem %s0, %s336
        %p338 = pneg %p42
        %p339 = pneg %p39
        %p340 = scmp.lt.s32.totalorder %s21, 1
        %s341 = scalar_select %p340, %s21, 1
        %s342 = smul.addr %s341, 2
        %s343 = scalar_lea.vmem %s1, %s342
        %p344 = pneg %p68
        %p345 = pneg %p65
        %p346 = pneg %p89
        %p347 = pneg %p86
        %p348 = pneg %p110
        %p349 = pneg %p107
        %p350 = pneg %p131
        %p351 = pneg %p128
        %p352 = pneg %p152
        %p353 = pneg %p149
        %p354 = pneg %p173
        %p355 = pneg %p170
        %p356 = pneg %p199
        %p357 = pneg %p196
        %p358 = scmp.lt.s32.totalorder %s21, 1
        %s359 = scalar_select %p358, %s21, 1
        %s360 = smul.addr %s359, 8
        %s361 = smul.addr %s360, 8
        %s362 = scalar_lea.vmem %s7, %s361
        %p363 = scmp.lt.s32.totalorder %s21, 1
        %s364 = scalar_select %p363, %s21, 1
        %s365 = smul.addr %s364, 8
        %s366 = smul.addr %s365, 8
        %s367 = scalar_lea.vmem %s0, %s366
        %p368 = scmp.lt.s32.totalorder %s21, 1
        %s369 = scalar_select %p368, %s21, 1
        %s370 = smul.addr %s369, 2
        %s371 = scalar_lea.vmem %s1, %s370
        %p372 = scmp.lt.s32.totalorder %s21, 1
        %s373 = scalar_select %p372, %s21, 1
        %s374 = smul.addr %s373, 8
        %s375 = smul.addr %s374, 8
        %s376 = scalar_lea.vmem %s7, %s375
        %v378 = vlaneseq
        %v379 = vand.u32 %v378, 127
        %vm380 = vcmp.lt.s32.totalorder %v379, 0
        %v381 = vsub.s32 0, %v379
        %v382 = vsel %vm380, %v381, %v379
        %v383 = vshrl.u32 %v382, 1
        %v384 = vand.u32 %v382, 1
        %v385 = vsub.s32 0, %v384
        %v386 = vsel %vm380, %v385, %v384
        %vm387 = vcmp.ne.s32.totalorder %v386, 0
        %vm388 = vcmp.lt.s32.totalorder %v386, 0
        %vm389 = vmand %vm388, %vm387
        %v390 = vadd.s32 %v386, 2
        %v391 = vsel %vm389, %v390, %v386
        %vm392 = vcmp.eq.s32.totalorder %v391, 0
        %vm393 = vcmp.lt.s32.totalorder %v379, 64
        %vm394 = vmand %vm392, %vm393
        %v395 = vlaneseq
        %v396 = vshrl.u32 %v395, 7
        %v397 = vadd.s32 %v396, 8
        %v398 = vadd.s32 %v396, 16
        %v399 = vadd.s32 %v396, 24
        %v400 = vadd.s32 %v396, 32
        %v401 = vadd.s32 %v396, 40
        %v402 = vadd.s32 %v396, 48
        %v403 = vadd.s32 %v396, 56
        %vm404 = vcmp.lt.s32.totalorder %v396, 0
        %v405 = vsub.s32 0, %v396
        %v406 = vsel %vm404, %v405, %v396
        %v407 = vshrl.u32 %v406, 3
        %v408 = vand.u32 %v406, 7
        %v409 = vsub.s32 0, %v408
        %v410 = vsel %vm404, %v409, %v408
        %vm411 = vcmp.lt.s32.totalorder %v397, 0
        %v412 = vsub.s32 0, %v397
        %v413 = vsel %vm411, %v412, %v397
        %v414 = vshrl.u32 %v413, 3
        %v415 = vand.u32 %v413, 7
        %v416 = vsub.s32 0, %v415
        %v417 = vsel %vm411, %v416, %v415
        %vm418 = vcmp.lt.s32.totalorder %v398, 0
        %v419 = vsub.s32 0, %v398
        %v420 = vsel %vm418, %v419, %v398
        %v421 = vshrl.u32 %v420, 3
        %v422 = vand.u32 %v420, 7
        %v423 = vsub.s32 0, %v422
        %v424 = vsel %vm418, %v423, %v422
        %vm425 = vcmp.lt.s32.totalorder %v399, 0
        %v426 = vsub.s32 0, %v399
        %v427 = vsel %vm425, %v426, %v399
        %v428 = vshrl.u32 %v427, 3
        %v429 = vand.u32 %v427, 7
        %v430 = vsub.s32 0, %v429
        %v431 = vsel %vm425, %v430, %v429
        %vm432 = vcmp.lt.s32.totalorder %v400, 0
        %v433 = vsub.s32 0, %v400
        %v434 = vsel %vm432, %v433, %v400
        %v435 = vshrl.u32 %v434, 3
        %v436 = vand.u32 %v434, 7
        %v437 = vsub.s32 0, %v436
        %v438 = vsel %vm432, %v437, %v436
        %vm439 = vcmp.lt.s32.totalorder %v401, 0
        %v440 = vsub.s32 0, %v401
        %v441 = vsel %vm439, %v440, %v401
        %v442 = vshrl.u32 %v441, 3
        %v443 = vand.u32 %v441, 7
        %v444 = vsub.s32 0, %v443
        %v445 = vsel %vm439, %v444, %v443
        %vm446 = vcmp.lt.s32.totalorder %v402, 0
        %v447 = vsub.s32 0, %v402
        %v448 = vsel %vm446, %v447, %v402
        %v449 = vshrl.u32 %v448, 3
        %v450 = vand.u32 %v448, 7
        %v451 = vsub.s32 0, %v450
        %v452 = vsel %vm446, %v451, %v450
        %vm453 = vcmp.lt.s32.totalorder %v403, 0
        %v454 = vsub.s32 0, %v403
        %v455 = vsel %vm453, %v454, %v403
        %v456 = vshrl.u32 %v455, 3
        %v457 = vand.u32 %v455, 7
        %v458 = vsub.s32 0, %v457
        %v459 = vsel %vm453, %v458, %v457
        %vm460 = vcmp.ne.s32.totalorder %v410, 0
        %vm461 = vcmp.ne.s32.totalorder %v417, 0
        %vm462 = vcmp.ne.s32.totalorder %v424, 0
        %vm463 = vcmp.ne.s32.totalorder %v431, 0
        %vm464 = vcmp.ne.s32.totalorder %v438, 0
        %vm465 = vcmp.ne.s32.totalorder %v445, 0
        %vm466 = vcmp.ne.s32.totalorder %v452, 0
        %vm467 = vcmp.ne.s32.totalorder %v459, 0
        %vm468 = vcmp.lt.s32.totalorder %v410, 0
        %vm469 = vcmp.lt.s32.totalorder %v417, 0
        %vm470 = vcmp.lt.s32.totalorder %v424, 0
        %vm471 = vcmp.lt.s32.totalorder %v431, 0
        %vm472 = vcmp.lt.s32.totalorder %v438, 0
        %vm473 = vcmp.lt.s32.totalorder %v445, 0
        %vm474 = vcmp.lt.s32.totalorder %v452, 0
        %vm475 = vcmp.lt.s32.totalorder %v459, 0
        %vm476 = vmand %vm468, %vm460
        %vm477 = vmand %vm469, %vm461
        %vm478 = vmand %vm470, %vm462
        %vm479 = vmand %vm471, %vm463
        %vm480 = vmand %vm472, %vm464
        %vm481 = vmand %vm473, %vm465
        %vm482 = vmand %vm474, %vm466
        %vm483 = vmand %vm475, %vm467
        %v484 = vadd.s32 %v410, 8
        %v485 = vadd.s32 %v417, 8
        %v486 = vadd.s32 %v424, 8
        %v487 = vadd.s32 %v431, 8
        %v488 = vadd.s32 %v438, 8
        %v489 = vadd.s32 %v445, 8
        %v490 = vadd.s32 %v452, 8
        %v491 = vadd.s32 %v459, 8
        %v492 = vsel %vm476, %v484, %v410
        %v493 = vsel %vm477, %v485, %v417
        %v494 = vsel %vm478, %v486, %v424
        %v495 = vsel %vm479, %v487, %v431
        %v496 = vsel %vm480, %v488, %v438
        %v497 = vsel %vm481, %v489, %v445
        %v498 = vsel %vm482, %v490, %v452
        %v499 = vsel %vm483, %v491, %v459
        %vm500 = vcmp.ge.s32.totalorder %v396, 8
        %vm501 = vcmp.ge.s32.totalorder %v397, 8
        %vm502 = vcmp.ge.s32.totalorder %v398, 8
        %vm503 = vcmp.ge.s32.totalorder %v399, 8
        %vm504 = vcmp.ge.s32.totalorder %v400, 8
        %vm505 = vcmp.ge.s32.totalorder %v401, 8
        %vm506 = vcmp.ge.s32.totalorder %v402, 8
        %vm507 = vcmp.ge.s32.totalorder %v403, 8
        %vm508 = vcmp.ge.s32.totalorder %v492, 1
        %vm509 = vcmp.ge.s32.totalorder %v493, 1
        %vm510 = vcmp.ge.s32.totalorder %v494, 1
        %vm511 = vcmp.ge.s32.totalorder %v495, 1
        %vm512 = vcmp.ge.s32.totalorder %v496, 1
        %vm513 = vcmp.ge.s32.totalorder %v497, 1
        %vm514 = vcmp.ge.s32.totalorder %v498, 1
        %vm515 = vcmp.ge.s32.totalorder %v499, 1
        %vm516 = vmand %vm500, %vm508
        %vm517 = vmand %vm501, %vm509
        %vm518 = vmand %vm502, %vm510
        %vm519 = vmand %vm503, %vm511
        %vm520 = vmand %vm504, %vm512
        %vm521 = vmand %vm505, %vm513
        %vm522 = vmand %vm506, %vm514
        %vm523 = vmand %vm507, %vm515
        %vm524 = vcmp.le.s32.totalorder %v492, 6
        %vm525 = vcmp.le.s32.totalorder %v493, 6
        %vm526 = vcmp.le.s32.totalorder %v494, 6
        %vm527 = vcmp.le.s32.totalorder %v495, 6
        %vm528 = vcmp.le.s32.totalorder %v496, 6
        %vm529 = vcmp.le.s32.totalorder %v497, 6
        %vm530 = vcmp.le.s32.totalorder %v498, 6
        %vm531 = vcmp.le.s32.totalorder %v499, 6
        %vm532 = vmand %vm500, %vm524
        %vm533 = vmand %vm501, %vm525
        %vm534 = vmand %vm502, %vm526
        %vm535 = vmand %vm503, %vm527
        %vm536 = vmand %vm504, %vm528
        %vm537 = vmand %vm505, %vm529
        %vm538 = vmand %vm506, %vm530
        %vm539 = vmand %vm507, %vm531
        %vm540 = vcmp.lt.s32.totalorder %v396, 56
        %vm541 = vcmp.lt.s32.totalorder %v397, 56
        %vm542 = vcmp.lt.s32.totalorder %v398, 56
        %vm543 = vcmp.lt.s32.totalorder %v399, 56
        %vm544 = vcmp.lt.s32.totalorder %v400, 56
        %vm545 = vcmp.lt.s32.totalorder %v401, 56
        %vm546 = vcmp.lt.s32.totalorder %v402, 56
        %vm547 = vcmp.lt.s32.totalorder %v403, 56
        %vm548 = vmand %vm540, %vm508
        %vm549 = vmand %vm541, %vm509
        %vm550 = vmand %vm542, %vm510
        %vm551 = vmand %vm543, %vm511
        %vm552 = vmand %vm544, %vm512
        %vm553 = vmand %vm545, %vm513
        %vm554 = vmand %vm546, %vm514
        %vm555 = vmand %vm547, %vm515
        %vm556 = vmand %vm540, %vm524
        %vm557 = vmand %vm541, %vm525
        %vm558 = vmand %vm542, %vm526
        %vm559 = vmand %vm543, %vm527
        %vm560 = vmand %vm544, %vm528
        %vm561 = vmand %vm545, %vm529
        %vm562 = vmand %vm546, %vm530
        %vm563 = vmand %vm547, %vm531
        %v564 = vld [vmem:[%s367] sm:$0xff]
        %v565 = vld [vmem:[%s367 + $0x8] sm:$0xff]
        %v566 = vld [vmem:[%s367 + $0x10] sm:$0xff]
        %v567 = vld [vmem:[%s367 + $0x18] sm:$0xff]
        %v568 = vld [vmem:[%s367 + $0x20] sm:$0xff]
        %v569 = vld [vmem:[%s367 + $0x28] sm:$0xff]
        %v570 = vld [vmem:[%s367 + $0x30] sm:$0xff]
        %v571 = vld [vmem:[%s367 + $0x38] sm:$0xff]
        %v572 = vld [vmem:[%s371] sm:$0x3]
        %v573 = vld [vmem:[#allocation2] sm:$0x1]
        %v574 = vld [vmem:[#allocation2 + $0x1] sm:$0x1]
        %v575 = vadd.f32 %v564, %v565
        %v576 = vadd.f32 %v575, %v566
        %v577 = vadd.f32 %v576, %v567
        %v578 = vadd.f32 %v577, %v568
        %v579 = vadd.f32 %v578, %v569
        %v580 = vadd.f32 %v579, %v570
        %v581 = vadd.f32 %v580, %v571
        %v582 = vrot.slane %v581, 4
        %v583 = vadd.f32 %v581, %v582
        %v584 = vrot.slane %v583, 2
        %v585 = vadd.f32 %v583, %v584
        %v586 = vrot.slane %v585, 1
        %v587 = vadd.f32 %v585, %v586
        %588 = vrot.lane.b32.xlu0 %v587, 127
        %v589 = vpop.permute.xlu0 %588
        %v590 = vadd.f32 %v587, %v589
        %v591 = vsel %vm394, %v590, 0.0
        %592 = vrot.lane.b32.xlu0 %v591, 1
        %v593 = vpop.permute.xlu0 %592
        %v594 = vadd.f32 %v591, %v593
        %v595 = vmul.f32 %v594, 0.0078125
        %v596 = vperm.slane %v595, 0
        %v597 = vsub.f32 %v564, %v596
        %v598 = vsub.f32 %v565, %v596
        %v599 = vsub.f32 %v566, %v596
        %v600 = vsub.f32 %v567, %v596
        %v601 = vsub.f32 %v568, %v596
        %v602 = vsub.f32 %v569, %v596
        %v603 = vsub.f32 %v570, %v596
        %v604 = vsub.f32 %v571, %v596
        %v605 = vmul.f32 %v597, %v597
        %v606 = vmul.f32 %v598, %v598
        %v607 = vmul.f32 %v599, %v599
        %v608 = vmul.f32 %v600, %v600
        %v609 = vmul.f32 %v601, %v601
        %v610 = vmul.f32 %v602, %v602
        %v611 = vmul.f32 %v603, %v603
        %v612 = vmul.f32 %v604, %v604
        %v613 = vadd.f32 %v605, %v606
        %v614 = vadd.f32 %v613, %v607
        %v615 = vadd.f32 %v614, %v608
        %v616 = vadd.f32 %v615, %v609
        %v617 = vadd.f32 %v616, %v610
        %v618 = vadd.f32 %v617, %v611
        %v619 = vadd.f32 %v618, %v612
        %v620 = vrot.slane %v619, 4
        %v621 = vadd.f32 %v619, %v620
        %v622 = vrot.slane %v621, 2
        %v623 = vadd.f32 %v621, %v622
        %v624 = vrot.slane %v623, 1
        %v625 = vadd.f32 %v623, %v624
        %626 = vrot.lane.b32.xlu0 %v625, 127
        %v627 = vpop.permute.xlu0 %626
        %v628 = vadd.f32 %v625, %v627
        %v629 = vsel %vm394, %v628, 0.0
        %630 = vrot.lane.b32.xlu0 %v629, 1
        %v631 = vpop.permute.xlu0 %630
        %v632 = vadd.f32 %v629, %v631
        %v633 = vmul.f32 %v632, 0.0078125
        %v634 = vadd.f32 %v633, 1e-05
        %v635 = vrsqrt.pop %v634
        %v636 = vmul.f32 %v635, %v634
        %v637 = vmul.f32 %v636, %v635
        %v638 = vmul.f32 0.5, %v637
        %v639 = vsub.f32 1.5, %v638
        %v640 = vmul.f32 %v635, %v639
        %vm641 = vweird.f32 %v634
        %vm642 = vweird.f32 %v635
        %vm643 = vmor %vm641, %vm642
        %v644 = vsel %vm643, %v635, %v640
        %v645 = vperm.slane %v644, 0
        %v646 = vmul.f32 %v597, %v645
        %v647 = vmul.f32 %v598, %v645
        %v648 = vmul.f32 %v599, %v645
        %v649 = vmul.f32 %v600, %v645
        %v650 = vmul.f32 %v601, %v645
        %v651 = vmul.f32 %v602, %v645
        %v652 = vmul.f32 %v603, %v645
        %v653 = vmul.f32 %v604, %v645
        %v654 = vperm.slane %v573, 0
        %v655 = vmul.f32 %v646, %v654
        %v656 = vmul.f32 %v647, %v654
        %v657 = vmul.f32 %v648, %v654
        %v658 = vmul.f32 %v649, %v654
        %v659 = vmul.f32 %v650, %v654
        %v660 = vmul.f32 %v651, %v654
        %v661 = vmul.f32 %v652, %v654
        %v662 = vmul.f32 %v653, %v654
        %v663 = vperm.slane %v574, 0
        %v664 = vadd.f32 %v655, %v663
        %v665 = vadd.f32 %v656, %v663
        %v666 = vadd.f32 %v657, %v663
        %v667 = vadd.f32 %v658, %v663
        %v668 = vadd.f32 %v659, %v663
        %v669 = vadd.f32 %v660, %v663
        %v670 = vadd.f32 %v661, %v663
        %v671 = vadd.f32 %v662, %v663
        %v672 = vxor.u32 %v664, 2147483648
        %v673 = vxor.u32 %v665, 2147483648
        %v674 = vxor.u32 %v666, 2147483648
        %v675 = vxor.u32 %v667, 2147483648
        %v676 = vxor.u32 %v668, 2147483648
        %v677 = vxor.u32 %v669, 2147483648
        %v678 = vxor.u32 %v670, 2147483648
        %v679 = vxor.u32 %v671, 2147483648
        %v680 = vmul.f32 %v672, 1.442695
        %v681 = vpow.pop %v680
        %v682 = vmul.f32 %v673, 1.442695
        %v683 = vpow.pop %v682
        %v684 = vmul.f32 %v674, 1.442695
        %v685 = vpow.pop %v684
        %v686 = vmul.f32 %v675, 1.442695
        %v687 = vpow.pop %v686
        %v688 = vmul.f32 %v676, 1.442695
        %v689 = vpow.pop %v688
        %v690 = vmul.f32 %v677, 1.442695
        %v691 = vpow.pop %v690
        %v692 = vmul.f32 %v678, 1.442695
        %v693 = vpow.pop %v692
        %v694 = vmul.f32 %v679, 1.442695
        %v695 = vpow.pop %v694
        %v696 = vadd.f32 %v681, 1.0
        %v697 = vadd.f32 %v683, 1.0
        %v698 = vadd.f32 %v685, 1.0
        %v699 = vadd.f32 %v687, 1.0
        %v700 = vadd.f32 %v689, 1.0
        %v701 = vadd.f32 %v691, 1.0
        %v702 = vadd.f32 %v693, 1.0
        %v703 = vadd.f32 %v695, 1.0
        %v704 = vrcp.pop %v696
        %v705 = vmul.f32 %v696, %v704
        %v706 = vsub.f32 1.0, %v705
        %v707 = vmul.f32 %v704, %v706
        %v708 = vadd.f32 %v704, %v707
        %vm709 = vweird.f32 %v696
        %vm710 = vweird.f32 %v704
        %vm711 = vmor %vm709, %vm710
        %v712 = vsel %vm711, %v704, %v708
        %v713 = vand.u32 2147483647, %v696
        %vm714 = vcmp.eq.f32.partialorder %v713, 8.507059e+37
        %v715 = vand.u32 %v696, 2147483648
        %v716 = vor.u32 1.1754944e-38, %v715
        %v717 = vsel %vm714, %v716, %v712
        %v718 = vmul.f32 1.0, %v717
        %v719 = vrcp.pop %v697
        %v720 = vmul.f32 %v697, %v719
        %v721 = vsub.f32 1.0, %v720
        %v722 = vmul.f32 %v719, %v721
        %v723 = vadd.f32 %v719, %v722
        %vm724 = vweird.f32 %v697
        %vm725 = vweird.f32 %v719
        %vm726 = vmor %vm724, %vm725
        %v727 = vsel %vm726, %v719, %v723
        %v728 = vand.u32 2147483647, %v697
        %vm729 = vcmp.eq.f32.partialorder %v728, 8.507059e+37
        %v730 = vand.u32 %v697, 2147483648
        %v731 = vor.u32 1.1754944e-38, %v730
        %v732 = vsel %vm729, %v731, %v727
        %v733 = vmul.f32 1.0, %v732
        %v734 = vrcp.pop %v698
        %v735 = vmul.f32 %v698, %v734
        %v736 = vsub.f32 1.0, %v735
        %v737 = vmul.f32 %v734, %v736
        %v738 = vadd.f32 %v734, %v737
        %vm739 = vweird.f32 %v698
        %vm740 = vweird.f32 %v734
        %vm741 = vmor %vm739, %vm740
        %v742 = vsel %vm741, %v734, %v738
        %v743 = vand.u32 2147483647, %v698
        %vm744 = vcmp.eq.f32.partialorder %v743, 8.507059e+37
        %v745 = vand.u32 %v698, 2147483648
        %v746 = vor.u32 1.1754944e-38, %v745
        %v747 = vsel %vm744, %v746, %v742
        %v748 = vmul.f32 1.0, %v747
        %v749 = vrcp.pop %v699
        %v750 = vmul.f32 %v699, %v749
        %v751 = vsub.f32 1.0, %v750
        %v752 = vmul.f32 %v749, %v751
        %v753 = vadd.f32 %v749, %v752
        %vm754 = vweird.f32 %v699
        %vm755 = vweird.f32 %v749
        %vm756 = vmor %vm754, %vm755
        %v757 = vsel %vm756, %v749, %v753
        %v758 = vand.u32 2147483647, %v699
        %vm759 = vcmp.eq.f32.partialorder %v758, 8.507059e+37
        %v760 = vand.u32 %v699, 2147483648
        %v761 = vor.u32 1.1754944e-38, %v760
        %v762 = vsel %vm759, %v761, %v757
        %v763 = vmul.f32 1.0, %v762
        %v764 = vrcp.pop %v700
        %v765 = vmul.f32 %v700, %v764
        %v766 = vsub.f32 1.0, %v765
        %v767 = vmul.f32 %v764, %v766
        %v768 = vadd.f32 %v764, %v767
        %vm769 = vweird.f32 %v700
        %vm770 = vweird.f32 %v764
        %vm771 = vmor %vm769, %vm770
        %v772 = vsel %vm771, %v764, %v768
        %v773 = vand.u32 2147483647, %v700
        %vm774 = vcmp.eq.f32.partialorder %v773, 8.507059e+37
        %v775 = vand.u32 %v700, 2147483648
        %v776 = vor.u32 1.1754944e-38, %v775
        %v777 = vsel %vm774, %v776, %v772
        %v778 = vmul.f32 1.0, %v777
        %v779 = vrcp.pop %v701
        %v780 = vmul.f32 %v701, %v779
        %v781 = vsub.f32 1.0, %v780
        %v782 = vmul.f32 %v779, %v781
        %v783 = vadd.f32 %v779, %v782
        %vm784 = vweird.f32 %v701
        %vm785 = vweird.f32 %v779
        %vm786 = vmor %vm784, %vm785
        %v787 = vsel %vm786, %v779, %v783
        %v788 = vand.u32 2147483647, %v701
        %vm789 = vcmp.eq.f32.partialorder %v788, 8.507059e+37
        %v790 = vand.u32 %v701, 2147483648
        %v791 = vor.u32 1.1754944e-38, %v790
        %v792 = vsel %vm789, %v791, %v787
        %v793 = vmul.f32 1.0, %v792
        %v794 = vrcp.pop %v702
        %v795 = vmul.f32 %v702, %v794
        %v796 = vsub.f32 1.0, %v795
        %v797 = vmul.f32 %v794, %v796
        %v798 = vadd.f32 %v794, %v797
        %vm799 = vweird.f32 %v702
        %vm800 = vweird.f32 %v794
        %vm801 = vmor %vm799, %vm800
        %v802 = vsel %vm801, %v794, %v798
        %v803 = vand.u32 2147483647, %v702
        %vm804 = vcmp.eq.f32.partialorder %v803, 8.507059e+37
        %v805 = vand.u32 %v702, 2147483648
        %v806 = vor.u32 1.1754944e-38, %v805
        %v807 = vsel %vm804, %v806, %v802
        %v808 = vmul.f32 1.0, %v807
        %v809 = vrcp.pop %v703
        %v810 = vmul.f32 %v703, %v809
        %v811 = vsub.f32 1.0, %v810
        %v812 = vmul.f32 %v809, %v811
        %v813 = vadd.f32 %v809, %v812
        %vm814 = vweird.f32 %v703
        %vm815 = vweird.f32 %v809
        %vm816 = vmor %vm814, %vm815
        %v817 = vsel %vm816, %v809, %v813
        %v818 = vand.u32 2147483647, %v703
        %vm819 = vcmp.eq.f32.partialorder %v818, 8.507059e+37
        %v820 = vand.u32 %v703, 2147483648
        %v821 = vor.u32 1.1754944e-38, %v820
        %v822 = vsel %vm819, %v821, %v817
        %v823 = vmul.f32 1.0, %v822
        %v824 = vmul.f32 %v664, %v718
        %v825 = vmul.f32 %v665, %v733
        %v826 = vmul.f32 %v666, %v748
        %v827 = vmul.f32 %v667, %v763
        %v828 = vmul.f32 %v668, %v778
        %v829 = vmul.f32 %v669, %v793
        %v830 = vmul.f32 %v670, %v808
        %v831 = vmul.f32 %v671, %v823
        %v832 = vld [vmem:[#allocation2 + $0x2] sm:$0x1]
        %v833 = vrot.slane %v824, 7
        %v834 = vrot.slane %v825, 7
        %v835 = vrot.slane %v826, 7
        %v836 = vrot.slane %v827, 7
        %v837 = vrot.slane %v828, 7
        %v838 = vrot.slane %v829, 7
        %v839 = vrot.slane %v830, 7
        %v840 = vrot.slane %v831, 7
        %vm841 = vcmp.lt.s32.totalorder %v396, 1
        %v842 = vsel %vm841, %v839, %v840
        %v843 = vsel %vm841, %v838, %v839
        %v844 = vsel %vm841, %v837, %v838
        %v845 = vsel %vm841, %v836, %v837
        %v846 = vsel %vm841, %v835, %v836
        %v847 = vsel %vm841, %v834, %v835
        %v848 = vsel %vm841, %v833, %v834
        %v849 = vsel %vm841, %v840, %v833
        %v850 = vsel %vm516, 1, 0
        %v851 = vsel %vm517, 1, 0
        %v852 = vsel %vm518, 1, 0
        %v853 = vsel %vm519, 1, 0
        %v854 = vsel %vm520, 1, 0
        %v855 = vsel %vm521, 1, 0
        %v856 = vsel %vm522, 1, 0
        %v857 = vsel %vm523, 1, 0
        %vm858 = vcmp.eq.s32.totalorder %v850, 1
        %vm859 = vcmp.eq.s32.totalorder %v851, 1
        %vm860 = vcmp.eq.s32.totalorder %v852, 1
        %vm861 = vcmp.eq.s32.totalorder %v853, 1
        %vm862 = vcmp.eq.s32.totalorder %v854, 1
        %vm863 = vcmp.eq.s32.totalorder %v855, 1
        %vm864 = vcmp.eq.s32.totalorder %v856, 1
        %vm865 = vcmp.eq.s32.totalorder %v857, 1
        %v866 = vsel %vm858, %v842, 0.0
        %v867 = vsel %vm859, %v849, 0.0
        %v868 = vsel %vm860, %v848, 0.0
        %v869 = vsel %vm861, %v847, 0.0
        %v870 = vsel %vm862, %v846, 0.0
        %v871 = vsel %vm863, %v845, 0.0
        %v872 = vsel %vm864, %v844, 0.0
        %v873 = vsel %vm865, %v843, 0.0
        %v874 = vpack.c.bf16 %v866, %v866
        %v875 = vpack.c.bf16 %v867, %v867
        %v876 = vpack.c.bf16 %v868, %v868
        %v877 = vpack.c.bf16 %v869, %v869
        %v878 = vpack.c.bf16 %v870, %v870
        %v879 = vpack.c.bf16 %v871, %v871
        %v880 = vpack.c.bf16 %v872, %v872
        %v881 = vpack.c.bf16 %v873, %v873
        %v882 = vsel %vm500, 1, 0
        %v883 = vsel %vm501, 1, 0
        %v884 = vsel %vm502, 1, 0
        %v885 = vsel %vm503, 1, 0
        %v886 = vsel %vm504, 1, 0
        %v887 = vsel %vm505, 1, 0
        %v888 = vsel %vm506, 1, 0
        %v889 = vsel %vm507, 1, 0
        %vm890 = vcmp.eq.s32.totalorder %v882, 1
        %vm891 = vcmp.eq.s32.totalorder %v883, 1
        %vm892 = vcmp.eq.s32.totalorder %v884, 1
        %vm893 = vcmp.eq.s32.totalorder %v885, 1
        %vm894 = vcmp.eq.s32.totalorder %v886, 1
        %vm895 = vcmp.eq.s32.totalorder %v887, 1
        %vm896 = vcmp.eq.s32.totalorder %v888, 1
        %vm897 = vcmp.eq.s32.totalorder %v889, 1
        %v898 = vsel %vm890, %v831, 0.0
        %v899 = vsel %vm891, %v824, 0.0
        %v900 = vsel %vm892, %v825, 0.0
        %v901 = vsel %vm893, %v826, 0.0
        %v902 = vsel %vm894, %v827, 0.0
        %v903 = vsel %vm895, %v828, 0.0
        %v904 = vsel %vm896, %v829, 0.0
        %v905 = vsel %vm897, %v830, 0.0
        %v906 = vpack.c.bf16 %v898, %v898
        %v907 = vpack.c.bf16 %v899, %v899
        %v908 = vpack.c.bf16 %v900, %v900
        %v909 = vpack.c.bf16 %v901, %v901
        %v910 = vpack.c.bf16 %v902, %v902
        %v911 = vpack.c.bf16 %v903, %v903
        %v912 = vpack.c.bf16 %v904, %v904
        %v913 = vpack.c.bf16 %v905, %v905
        %v914 = vrot.slane %v824, 1
        %v915 = vrot.slane %v825, 1
        %v916 = vrot.slane %v826, 1
        %v917 = vrot.slane %v827, 1
        %v918 = vrot.slane %v828, 1
        %v919 = vrot.slane %v829, 1
        %v920 = vrot.slane %v830, 1
        %v921 = vrot.slane %v831, 1
        %vm922 = vcmp.lt.s32.totalorder %v396, 7
        %v923 = vsel %vm922, %v920, %v921
        %v924 = vsel %vm922, %v919, %v920
        %v925 = vsel %vm922, %v918, %v919
        %v926 = vsel %vm922, %v917, %v918
        %v927 = vsel %vm922, %v916, %v917
        %v928 = vsel %vm922, %v915, %v916
        %v929 = vsel %vm922, %v914, %v915
        %v930 = vsel %vm922, %v921, %v914
        %v931 = vsel %vm532, 1, 0
        %v932 = vsel %vm533, 1, 0
        %v933 = vsel %vm534, 1, 0
        %v934 = vsel %vm535, 1, 0
        %v935 = vsel %vm536, 1, 0
        %v936 = vsel %vm537, 1, 0
        %v937 = vsel %vm538, 1, 0
        %v938 = vsel %vm539, 1, 0
        %vm939 = vcmp.eq.s32.totalorder %v931, 1
        %vm940 = vcmp.eq.s32.totalorder %v932, 1
        %vm941 = vcmp.eq.s32.totalorder %v933, 1
        %vm942 = vcmp.eq.s32.totalorder %v934, 1
        %vm943 = vcmp.eq.s32.totalorder %v935, 1
        %vm944 = vcmp.eq.s32.totalorder %v936, 1
        %vm945 = vcmp.eq.s32.totalorder %v937, 1
        %vm946 = vcmp.eq.s32.totalorder %v938, 1
        %v947 = vsel %vm939, %v930, 0.0
        %v948 = vsel %vm940, %v929, 0.0
        %v949 = vsel %vm941, %v928, 0.0
        %v950 = vsel %vm942, %v927, 0.0
        %v951 = vsel %vm943, %v926, 0.0
        %v952 = vsel %vm944, %v925, 0.0
        %v953 = vsel %vm945, %v924, 0.0
        %v954 = vsel %vm946, %v923, 0.0
        %v955 = vpack.c.bf16 %v947, %v947
        %v956 = vpack.c.bf16 %v948, %v948
        %v957 = vpack.c.bf16 %v949, %v949
        %v958 = vpack.c.bf16 %v950, %v950
        %v959 = vpack.c.bf16 %v951, %v951
        %v960 = vpack.c.bf16 %v952, %v952
        %v961 = vpack.c.bf16 %v953, %v953
        %v962 = vpack.c.bf16 %v954, %v954
        %v963 = vsel %vm508, 1, 0
        %v964 = vsel %vm509, 1, 0
        %v965 = vsel %vm510, 1, 0
        %v966 = vsel %vm511, 1, 0
        %v967 = vsel %vm512, 1, 0
        %v968 = vsel %vm513, 1, 0
        %v969 = vsel %vm514, 1, 0
        %v970 = vsel %vm515, 1, 0
        %vm971 = vcmp.eq.s32.totalorder %v963, 1
        %vm972 = vcmp.eq.s32.totalorder %v964, 1
        %vm973 = vcmp.eq.s32.totalorder %v965, 1
        %vm974 = vcmp.eq.s32.totalorder %v966, 1
        %vm975 = vcmp.eq.s32.totalorder %v967, 1
        %vm976 = vcmp.eq.s32.totalorder %v968, 1
        %vm977 = vcmp.eq.s32.totalorder %v969, 1
        %vm978 = vcmp.eq.s32.totalorder %v970, 1
        %v979 = vsel %vm971, %v849, 0.0
        %v980 = vsel %vm972, %v848, 0.0
        %v981 = vsel %vm973, %v847, 0.0
        %v982 = vsel %vm974, %v846, 0.0
        %v983 = vsel %vm975, %v845, 0.0
        %v984 = vsel %vm976, %v844, 0.0
        %v985 = vsel %vm977, %v843, 0.0
        %v986 = vsel %vm978, %v842, 0.0
        %v987 = vpack.c.bf16 %v979, %v979
        %v988 = vpack.c.bf16 %v980, %v980
        %v989 = vpack.c.bf16 %v981, %v981
        %v990 = vpack.c.bf16 %v982, %v982
        %v991 = vpack.c.bf16 %v983, %v983
        %v992 = vpack.c.bf16 %v984, %v984
        %v993 = vpack.c.bf16 %v985, %v985
        %v994 = vpack.c.bf16 %v986, %v986
        %v995 = vpack.c.bf16 %v824, %v824
        %v996 = vpack.c.bf16 %v825, %v825
        %v997 = vpack.c.bf16 %v826, %v826
        %v998 = vpack.c.bf16 %v827, %v827
        %v999 = vpack.c.bf16 %v828, %v828
        %v1000 = vpack.c.bf16 %v829, %v829
        %v1001 = vpack.c.bf16 %v830, %v830
        %v1002 = vpack.c.bf16 %v831, %v831
        %v1003 = vsel %vm524, 1, 0
        %v1004 = vsel %vm525, 1, 0
        %v1005 = vsel %vm526, 1, 0
        %v1006 = vsel %vm527, 1, 0
        %v1007 = vsel %vm528, 1, 0
        %v1008 = vsel %vm529, 1, 0
        %v1009 = vsel %vm530, 1, 0
        %v1010 = vsel %vm531, 1, 0
        %vm1011 = vcmp.eq.s32.totalorder %v1003, 1
        %vm1012 = vcmp.eq.s32.totalorder %v1004, 1
        %vm1013 = vcmp.eq.s32.totalorder %v1005, 1
        %vm1014 = vcmp.eq.s32.totalorder %v1006, 1
        %vm1015 = vcmp.eq.s32.totalorder %v1007, 1
        %vm1016 = vcmp.eq.s32.totalorder %v1008, 1
        %vm1017 = vcmp.eq.s32.totalorder %v1009, 1
        %vm1018 = vcmp.eq.s32.totalorder %v1010, 1
        %v1019 = vsel %vm1011, %v929, 0.0
        %v1020 = vsel %vm1012, %v928, 0.0
        %v1021 = vsel %vm1013, %v927, 0.0
        %v1022 = vsel %vm1014, %v926, 0.0
        %v1023 = vsel %vm1015, %v925, 0.0
        %v1024 = vsel %vm1016, %v924, 0.0
        %v1025 = vsel %vm1017, %v923, 0.0
        %v1026 = vsel %vm1018, %v930, 0.0
        %v1027 = vpack.c.bf16 %v1019, %v1019
        %v1028 = vpack.c.bf16 %v1020, %v1020
        %v1029 = vpack.c.bf16 %v1021, %v1021
        %v1030 = vpack.c.bf16 %v1022, %v1022
        %v1031 = vpack.c.bf16 %v1023, %v1023
        %v1032 = vpack.c.bf16 %v1024, %v1024
        %v1033 = vpack.c.bf16 %v1025, %v1025
        %v1034 = vpack.c.bf16 %v1026, %v1026
        %v1035 = vsel %vm548, 1, 0
        %v1036 = vsel %vm549, 1, 0
        %v1037 = vsel %vm550, 1, 0
        %v1038 = vsel %vm551, 1, 0
        %v1039 = vsel %vm552, 1, 0
        %v1040 = vsel %vm553, 1, 0
        %v1041 = vsel %vm554, 1, 0
        %v1042 = vsel %vm555, 1, 0
        %vm1043 = vcmp.eq.s32.totalorder %v1035, 1
        %vm1044 = vcmp.eq.s32.totalorder %v1036, 1
        %vm1045 = vcmp.eq.s32.totalorder %v1037, 1
        %vm1046 = vcmp.eq.s32.totalorder %v1038, 1
        %vm1047 = vcmp.eq.s32.totalorder %v1039, 1
        %vm1048 = vcmp.eq.s32.totalorder %v1040, 1
        %vm1049 = vcmp.eq.s32.totalorder %v1041, 1
        %vm1050 = vcmp.eq.s32.totalorder %v1042, 1
        %v1051 = vsel %vm1043, %v848, 0.0
        %v1052 = vsel %vm1044, %v847, 0.0
        %v1053 = vsel %vm1045, %v846, 0.0
        %v1054 = vsel %vm1046, %v845, 0.0
        %v1055 = vsel %vm1047, %v844, 0.0
        %v1056 = vsel %vm1048, %v843, 0.0
        %v1057 = vsel %vm1049, %v842, 0.0
        %v1058 = vsel %vm1050, %v849, 0.0
        %v1059 = vpack.c.bf16 %v1051, %v1051
        %v1060 = vpack.c.bf16 %v1052, %v1052
        %v1061 = vpack.c.bf16 %v1053, %v1053
        %v1062 = vpack.c.bf16 %v1054, %v1054
        %v1063 = vpack.c.bf16 %v1055, %v1055
        %v1064 = vpack.c.bf16 %v1056, %v1056
        %v1065 = vpack.c.bf16 %v1057, %v1057
        %v1066 = vpack.c.bf16 %v1058, %v1058
        %v1067 = vsel %vm540, 1, 0
        %v1068 = vsel %vm541, 1, 0
        %v1069 = vsel %vm542, 1, 0
        %v1070 = vsel %vm543, 1, 0
        %v1071 = vsel %vm544, 1, 0
        %v1072 = vsel %vm545, 1, 0
        %v1073 = vsel %vm546, 1, 0
        %v1074 = vsel %vm547, 1, 0
        %vm1075 = vcmp.eq.s32.totalorder %v1067, 1
        %vm1076 = vcmp.eq.s32.totalorder %v1068, 1
        %vm1077 = vcmp.eq.s32.totalorder %v1069, 1
        %vm1078 = vcmp.eq.s32.totalorder %v1070, 1
        %vm1079 = vcmp.eq.s32.totalorder %v1071, 1
        %vm1080 = vcmp.eq.s32.totalorder %v1072, 1
        %vm1081 = vcmp.eq.s32.totalorder %v1073, 1
        %vm1082 = vcmp.eq.s32.totalorder %v1074, 1
        %v1083 = vsel %vm1075, %v825, 0.0
        %v1084 = vsel %vm1076, %v826, 0.0
        %v1085 = vsel %vm1077, %v827, 0.0
        %v1086 = vsel %vm1078, %v828, 0.0
        %v1087 = vsel %vm1079, %v829, 0.0
        %v1088 = vsel %vm1080, %v830, 0.0
        %v1089 = vsel %vm1081, %v831, 0.0
        %v1090 = vsel %vm1082, %v824, 0.0
        %v1091 = vpack.c.bf16 %v1083, %v1083
        %v1092 = vpack.c.bf16 %v1084, %v1084
        %v1093 = vpack.c.bf16 %v1085, %v1085
        %v1094 = vpack.c.bf16 %v1086, %v1086
        %v1095 = vpack.c.bf16 %v1087, %v1087
        %v1096 = vpack.c.bf16 %v1088, %v1088
        %v1097 = vpack.c.bf16 %v1089, %v1089
        %v1098 = vpack.c.bf16 %v1090, %v1090
        %v1099 = vsel %vm556, 1, 0
        %v1100 = vsel %vm557, 1, 0
        %v1101 = vsel %vm558, 1, 0
        %v1102 = vsel %vm559, 1, 0
        %v1103 = vsel %vm560, 1, 0
        %v1104 = vsel %vm561, 1, 0
        %v1105 = vsel %vm562, 1, 0
        %v1106 = vsel %vm563, 1, 0
        %vm1107 = vcmp.eq.s32.totalorder %v1099, 1
        %vm1108 = vcmp.eq.s32.totalorder %v1100, 1
        %vm1109 = vcmp.eq.s32.totalorder %v1101, 1
        %vm1110 = vcmp.eq.s32.totalorder %v1102, 1
        %vm1111 = vcmp.eq.s32.totalorder %v1103, 1
        %vm1112 = vcmp.eq.s32.totalorder %v1104, 1
        %vm1113 = vcmp.eq.s32.totalorder %v1105, 1
        %vm1114 = vcmp.eq.s32.totalorder %v1106, 1
        %v1115 = vsel %vm1107, %v928, 0.0
        %v1116 = vsel %vm1108, %v927, 0.0
        %v1117 = vsel %vm1109, %v926, 0.0
        %v1118 = vsel %vm1110, %v925, 0.0
        %v1119 = vsel %vm1111, %v924, 0.0
        %v1120 = vsel %vm1112, %v923, 0.0
        %v1121 = vsel %vm1113, %v930, 0.0
        %v1122 = vsel %vm1114, %v929, 0.0
        %v1123 = vpack.c.bf16 %v1115, %v1115
        %v1124 = vpack.c.bf16 %v1116, %v1116
        %v1125 = vpack.c.bf16 %v1117, %v1117
        %v1126 = vpack.c.bf16 %v1118, %v1118
        %v1127 = vpack.c.bf16 %v1119, %v1119
        %v1128 = vpack.c.bf16 %v1120, %v1120
        %v1129 = vpack.c.bf16 %v1121, %v1121
        %v1130 = vpack.c.bf16 %v1122, %v1122
        %v1139 = vunpack.c.l.b16 %v874
        %v1140 = vunpack.c.l.b16 %v875
        %v1141 = vunpack.c.l.b16 %v876
        %v1142 = vunpack.c.l.b16 %v877
        %v1143 = vunpack.c.l.b16 %v878
        %v1144 = vunpack.c.l.b16 %v879
        %v1145 = vunpack.c.l.b16 %v880
        %v1146 = vunpack.c.l.b16 %v881
        %v1147 = vpack.c.b16 %v1140, %v1139
        %v1148 = vpack.c.b16 %v1142, %v1141
        %v1149 = vpack.c.b16 %v1144, %v1143
        %v1150 = vpack.c.b16 %v1146, %v1145
        %v1163 = vunpack.c.l.b16 %v906
        %v1164 = vunpack.c.l.b16 %v907
        %v1165 = vunpack.c.l.b16 %v908
        %v1166 = vunpack.c.l.b16 %v909
        %v1167 = vunpack.c.l.b16 %v910
        %v1168 = vunpack.c.l.b16 %v911
        %v1169 = vunpack.c.l.b16 %v912
        %v1170 = vunpack.c.l.b16 %v913
        %v1171 = vpack.c.b16 %v1164, %v1163
        %v1172 = vpack.c.b16 %v1166, %v1165
        %v1173 = vpack.c.b16 %v1168, %v1167
        %v1174 = vpack.c.b16 %v1170, %v1169
        %v1187 = vunpack.c.l.b16 %v955
        %v1188 = vunpack.c.l.b16 %v956
        %v1189 = vunpack.c.l.b16 %v957
        %v1190 = vunpack.c.l.b16 %v958
        %v1191 = vunpack.c.l.b16 %v959
        %v1192 = vunpack.c.l.b16 %v960
        %v1193 = vunpack.c.l.b16 %v961
        %v1194 = vunpack.c.l.b16 %v962
        %v1195 = vpack.c.b16 %v1188, %v1187
        %v1196 = vpack.c.b16 %v1190, %v1189
        %v1197 = vpack.c.b16 %v1192, %v1191
        %v1198 = vpack.c.b16 %v1194, %v1193
        %v1211 = vunpack.c.l.b16 %v987
        %v1212 = vunpack.c.l.b16 %v988
        %v1213 = vunpack.c.l.b16 %v989
        %v1214 = vunpack.c.l.b16 %v990
        %v1215 = vunpack.c.l.b16 %v991
        %v1216 = vunpack.c.l.b16 %v992
        %v1217 = vunpack.c.l.b16 %v993
        %v1218 = vunpack.c.l.b16 %v994
        %v1219 = vpack.c.b16 %v1212, %v1211
        %v1220 = vpack.c.b16 %v1214, %v1213
        %v1221 = vpack.c.b16 %v1216, %v1215
        %v1222 = vpack.c.b16 %v1218, %v1217
        %v1235 = vunpack.c.l.b16 %v995
        %v1236 = vunpack.c.l.b16 %v996
        %v1237 = vunpack.c.l.b16 %v997
        %v1238 = vunpack.c.l.b16 %v998
        %v1239 = vunpack.c.l.b16 %v999
        %v1240 = vunpack.c.l.b16 %v1000
        %v1241 = vunpack.c.l.b16 %v1001
        %v1242 = vunpack.c.l.b16 %v1002
        %v1243 = vpack.c.b16 %v1236, %v1235
        %v1244 = vpack.c.b16 %v1238, %v1237
        %v1245 = vpack.c.b16 %v1240, %v1239
        %v1246 = vpack.c.b16 %v1242, %v1241
        %v1259 = vunpack.c.l.b16 %v1027
        %v1260 = vunpack.c.l.b16 %v1028
        %v1261 = vunpack.c.l.b16 %v1029
        %v1262 = vunpack.c.l.b16 %v1030
        %v1263 = vunpack.c.l.b16 %v1031
        %v1264 = vunpack.c.l.b16 %v1032
        %v1265 = vunpack.c.l.b16 %v1033
        %v1266 = vunpack.c.l.b16 %v1034
        %v1267 = vpack.c.b16 %v1260, %v1259
        %v1268 = vpack.c.b16 %v1262, %v1261
        %v1269 = vpack.c.b16 %v1264, %v1263
        %v1270 = vpack.c.b16 %v1266, %v1265
        %v1283 = vunpack.c.l.b16 %v1059
        %v1284 = vunpack.c.l.b16 %v1060
        %v1285 = vunpack.c.l.b16 %v1061
        %v1286 = vunpack.c.l.b16 %v1062
        %v1287 = vunpack.c.l.b16 %v1063
        %v1288 = vunpack.c.l.b16 %v1064
        %v1289 = vunpack.c.l.b16 %v1065
        %v1290 = vunpack.c.l.b16 %v1066
        %v1291 = vpack.c.b16 %v1284, %v1283
        %v1292 = vpack.c.b16 %v1286, %v1285
        %v1293 = vpack.c.b16 %v1288, %v1287
        %v1294 = vpack.c.b16 %v1290, %v1289
        %v1307 = vunpack.c.l.b16 %v1091
        %v1308 = vunpack.c.l.b16 %v1092
        %v1309 = vunpack.c.l.b16 %v1093
        %v1310 = vunpack.c.l.b16 %v1094
        %v1311 = vunpack.c.l.b16 %v1095
        %v1312 = vunpack.c.l.b16 %v1096
        %v1313 = vunpack.c.l.b16 %v1097
        %v1314 = vunpack.c.l.b16 %v1098
        %v1315 = vpack.c.b16 %v1308, %v1307
        %v1316 = vpack.c.b16 %v1310, %v1309
        %v1317 = vpack.c.b16 %v1312, %v1311
        %v1318 = vpack.c.b16 %v1314, %v1313
        %v1331 = vunpack.c.l.b16 %v1123
        %v1332 = vunpack.c.l.b16 %v1124
        %v1333 = vunpack.c.l.b16 %v1125
        %v1334 = vunpack.c.l.b16 %v1126
        %v1335 = vunpack.c.l.b16 %v1127
        %v1336 = vunpack.c.l.b16 %v1128
        %v1337 = vunpack.c.l.b16 %v1129
        %v1338 = vunpack.c.l.b16 %v1130
        %v1339 = vpack.c.b16 %v1332, %v1331
        %v1340 = vpack.c.b16 %v1334, %v1333
        %v1341 = vpack.c.b16 %v1336, %v1335
        %v1342 = vpack.c.b16 %v1338, %v1337
        %v1347 = vld [vmem:[#allocation4] sm:$0xf]
        %v1348 = vld [vmem:[#allocation4 + $0x4] sm:$0xf]
        %v1349 = vld [vmem:[#allocation4 + $0x8] sm:$0xf]
        %v1350 = vld [vmem:[#allocation4 + $0xc] sm:$0xf]
        %v1351 = vld [vmem:[#allocation4 + $0x10] sm:$0xf]
        %v1352 = vld [vmem:[#allocation4 + $0x14] sm:$0xf]
        %v1353 = vld [vmem:[#allocation4 + $0x18] sm:$0xf]
        %v1354 = vld [vmem:[#allocation4 + $0x1c] sm:$0xf]
        %v1355 = vld [vmem:[#allocation4 + $0x20] sm:$0xf]
        %v1356 = vld [vmem:[#allocation4 + $0x24] sm:$0xf]
        %v1357 = vld [vmem:[#allocation4 + $0x28] sm:$0xf]
        %v1358 = vld [vmem:[#allocation4 + $0x2c] sm:$0xf]
        %v1359 = vld [vmem:[#allocation4 + $0x30] sm:$0xf]
        %v1360 = vld [vmem:[#allocation4 + $0x34] sm:$0xf]
        %v1361 = vld [vmem:[#allocation4 + $0x38] sm:$0xf]
        %v1362 = vld [vmem:[#allocation4 + $0x3c] sm:$0xf]
        %v1363 = vld [vmem:[#allocation4 + $0x40] sm:$0xf]
        %v1364 = vld [vmem:[#allocation4 + $0x44] sm:$0xf]
        %v1365 = vld [vmem:[#allocation4 + $0x48] sm:$0xf]
        %v1366 = vld [vmem:[#allocation4 + $0x4c] sm:$0xf]
        %v1367 = vld [vmem:[#allocation4 + $0x50] sm:$0xf]
        %v1368 = vld [vmem:[#allocation4 + $0x54] sm:$0xf]
        %v1369 = vld [vmem:[#allocation4 + $0x58] sm:$0xf]
        %v1370 = vld [vmem:[#allocation4 + $0x5c] sm:$0xf]
        %v1371 = vld [vmem:[#allocation4 + $0x60] sm:$0xf]
        %v1372 = vld [vmem:[#allocation4 + $0x64] sm:$0xf]
        %v1373 = vld [vmem:[#allocation4 + $0x68] sm:$0xf]
        %v1374 = vld [vmem:[#allocation4 + $0x6c] sm:$0xf]
        %v1375 = vld [vmem:[#allocation4 + $0x70] sm:$0xf]
        %v1376 = vld [vmem:[#allocation4 + $0x74] sm:$0xf]
        %v1377 = vld [vmem:[#allocation4 + $0x78] sm:$0xf]
        %v1378 = vld [vmem:[#allocation4 + $0x7c] sm:$0xf]
        %v1379 = vld [vmem:[#allocation4 + $0x80] sm:$0xf]
        %v1380 = vld [vmem:[#allocation4 + $0x84] sm:$0xf]
        %v1381 = vld [vmem:[#allocation4 + $0x88] sm:$0xf]
        %v1382 = vld [vmem:[#allocation4 + $0x8c] sm:$0xf]
        %v1383 = vld [vmem:[#allocation4 + $0x90] sm:$0xf]
        %v1384 = vld [vmem:[#allocation4 + $0x94] sm:$0xf]
        %v1385 = vld [vmem:[#allocation4 + $0x98] sm:$0xf]
        %v1386 = vld [vmem:[#allocation4 + $0x9c] sm:$0xf]
        %v1387 = vld [vmem:[#allocation4 + $0xa0] sm:$0xf]
        %v1388 = vld [vmem:[#allocation4 + $0xa4] sm:$0xf]
        %v1389 = vld [vmem:[#allocation4 + $0xa8] sm:$0xf]
        %v1390 = vld [vmem:[#allocation4 + $0xac] sm:$0xf]
        %v1391 = vld [vmem:[#allocation4 + $0xb0] sm:$0xf]
        %v1392 = vld [vmem:[#allocation4 + $0xb4] sm:$0xf]
        %v1393 = vld [vmem:[#allocation4 + $0xb8] sm:$0xf]
        %v1394 = vld [vmem:[#allocation4 + $0xbc] sm:$0xf]
        %v1395 = vld [vmem:[#allocation4 + $0xc0] sm:$0xf]
        %v1396 = vld [vmem:[#allocation4 + $0xc4] sm:$0xf]
        %v1397 = vld [vmem:[#allocation4 + $0xc8] sm:$0xf]
        %v1398 = vld [vmem:[#allocation4 + $0xcc] sm:$0xf]
        %v1399 = vld [vmem:[#allocation4 + $0xd0] sm:$0xf]
        %v1400 = vld [vmem:[#allocation4 + $0xd4] sm:$0xf]
        %v1401 = vld [vmem:[#allocation4 + $0xd8] sm:$0xf]
        %v1402 = vld [vmem:[#allocation4 + $0xdc] sm:$0xf]
        %v1403 = vld [vmem:[#allocation4 + $0xe0] sm:$0xf]
        %v1404 = vld [vmem:[#allocation4 + $0xe4] sm:$0xf]
        %v1405 = vld [vmem:[#allocation4 + $0xe8] sm:$0xf]
        %v1406 = vld [vmem:[#allocation4 + $0xec] sm:$0xf]
        %v1407 = vld [vmem:[#allocation4 + $0xf0] sm:$0xf]
        %v1408 = vld [vmem:[#allocation4 + $0xf4] sm:$0xf]
        %v1409 = vld [vmem:[#allocation4 + $0xf8] sm:$0xf]
        %v1410 = vld [vmem:[#allocation4 + $0xfc] sm:$0xf]
        %v1411 = vld [vmem:[#allocation4 + $0x100] sm:$0xf]
        %v1412 = vld [vmem:[#allocation4 + $0x104] sm:$0xf]
        %v1413 = vld [vmem:[#allocation4 + $0x108] sm:$0xf]
        %v1414 = vld [vmem:[#allocation4 + $0x10c] sm:$0xf]
        %v1415 = vld [vmem:[#allocation4 + $0x110] sm:$0xf]
        %v1416 = vld [vmem:[#allocation4 + $0x114] sm:$0xf]
        %v1417 = vld [vmem:[#allocation4 + $0x118] sm:$0xf]
        %v1418 = vld [vmem:[#allocation4 + $0x11c] sm:$0xf]
        %v1419 = vld [vmem:[#allocation4 + $0x120] sm:$0xf]
        %v1420 = vld [vmem:[#allocation4 + $0x124] sm:$0xf]
        %v1421 = vld [vmem:[#allocation4 + $0x128] sm:$0xf]
        %v1422 = vld [vmem:[#allocation4 + $0x12c] sm:$0xf]
        %v1423 = vld [vmem:[#allocation4 + $0x130] sm:$0xf]
        %v1424 = vld [vmem:[#allocation4 + $0x134] sm:$0xf]
        %v1425 = vld [vmem:[#allocation4 + $0x138] sm:$0xf]
        %v1426 = vld [vmem:[#allocation4 + $0x13c] sm:$0xf]
        %v1427 = vld [vmem:[#allocation4 + $0x140] sm:$0xf]
        %v1428 = vld [vmem:[#allocation4 + $0x144] sm:$0xf]
        %v1429 = vld [vmem:[#allocation4 + $0x148] sm:$0xf]
        %v1430 = vld [vmem:[#allocation4 + $0x14c] sm:$0xf]
        %v1431 = vld [vmem:[#allocation4 + $0x150] sm:$0xf]
        %v1432 = vld [vmem:[#allocation4 + $0x154] sm:$0xf]
        %v1433 = vld [vmem:[#allocation4 + $0x158] sm:$0xf]
        %v1434 = vld [vmem:[#allocation4 + $0x15c] sm:$0xf]
        %v1435 = vld [vmem:[#allocation4 + $0x160] sm:$0xf]
        %v1436 = vld [vmem:[#allocation4 + $0x164] sm:$0xf]
        %v1437 = vld [vmem:[#allocation4 + $0x168] sm:$0xf]
        %v1438 = vld [vmem:[#allocation4 + $0x16c] sm:$0xf]
        %v1439 = vld [vmem:[#allocation4 + $0x170] sm:$0xf]
        %v1440 = vld [vmem:[#allocation4 + $0x174] sm:$0xf]
        %v1441 = vld [vmem:[#allocation4 + $0x178] sm:$0xf]
        %v1442 = vld [vmem:[#allocation4 + $0x17c] sm:$0xf]
        %v1443 = vld [vmem:[#allocation4 + $0x180] sm:$0xf]
        %v1444 = vld [vmem:[#allocation4 + $0x184] sm:$0xf]
        %v1445 = vld [vmem:[#allocation4 + $0x188] sm:$0xf]
        %v1446 = vld [vmem:[#allocation4 + $0x18c] sm:$0xf]
        %v1447 = vld [vmem:[#allocation4 + $0x190] sm:$0xf]
        %v1448 = vld [vmem:[#allocation4 + $0x194] sm:$0xf]
        %v1449 = vld [vmem:[#allocation4 + $0x198] sm:$0xf]
        %v1450 = vld [vmem:[#allocation4 + $0x19c] sm:$0xf]
        %v1451 = vld [vmem:[#allocation4 + $0x1a0] sm:$0xf]
        %v1452 = vld [vmem:[#allocation4 + $0x1a4] sm:$0xf]
        %v1453 = vld [vmem:[#allocation4 + $0x1a8] sm:$0xf]
        %v1454 = vld [vmem:[#allocation4 + $0x1ac] sm:$0xf]
        %v1455 = vld [vmem:[#allocation4 + $0x1b0] sm:$0xf]
        %v1456 = vld [vmem:[#allocation4 + $0x1b4] sm:$0xf]
        %v1457 = vld [vmem:[#allocation4 + $0x1b8] sm:$0xf]
        %v1458 = vld [vmem:[#allocation4 + $0x1bc] sm:$0xf]
        %v1459 = vld [vmem:[#allocation4 + $0x1c0] sm:$0xf]
        %v1460 = vld [vmem:[#allocation4 + $0x1c4] sm:$0xf]
        %v1461 = vld [vmem:[#allocation4 + $0x1c8] sm:$0xf]
        %v1462 = vld [vmem:[#allocation4 + $0x1cc] sm:$0xf]
        %v1463 = vld [vmem:[#allocation4 + $0x1d0] sm:$0xf]
        %v1464 = vld [vmem:[#allocation4 + $0x1d4] sm:$0xf]
        %v1465 = vld [vmem:[#allocation4 + $0x1d8] sm:$0xf]
        %v1466 = vld [vmem:[#allocation4 + $0x1dc] sm:$0xf]
        %v1467 = vld [vmem:[#allocation4 + $0x1e0] sm:$0xf]
        %v1468 = vld [vmem:[#allocation4 + $0x1e4] sm:$0xf]
        %v1469 = vld [vmem:[#allocation4 + $0x1e8] sm:$0xf]
        %v1470 = vld [vmem:[#allocation4 + $0x1ec] sm:$0xf]
        %v1471 = vld [vmem:[#allocation4 + $0x1f0] sm:$0xf]
        %v1472 = vld [vmem:[#allocation4 + $0x1f4] sm:$0xf]
        %v1473 = vld [vmem:[#allocation4 + $0x1f8] sm:$0xf]
        %v1474 = vld [vmem:[#allocation4 + $0x1fc] sm:$0xf]
        %v1475 = vld [vmem:[#allocation4 + $0x200] sm:$0xf]
        %v1476 = vld [vmem:[#allocation4 + $0x204] sm:$0xf]
        %v1477 = vld [vmem:[#allocation4 + $0x208] sm:$0xf]
        %v1478 = vld [vmem:[#allocation4 + $0x20c] sm:$0xf]
        %v1479 = vld [vmem:[#allocation4 + $0x210] sm:$0xf]
        %v1480 = vld [vmem:[#allocation4 + $0x214] sm:$0xf]
        %v1481 = vld [vmem:[#allocation4 + $0x218] sm:$0xf]
        %v1482 = vld [vmem:[#allocation4 + $0x21c] sm:$0xf]
        %v1483 = vld [vmem:[#allocation4 + $0x220] sm:$0xf]
        %v1484 = vld [vmem:[#allocation4 + $0x224] sm:$0xf]
        %v1485 = vld [vmem:[#allocation4 + $0x228] sm:$0xf]
        %v1486 = vld [vmem:[#allocation4 + $0x22c] sm:$0xf]
        %v1487 = vld [vmem:[#allocation4 + $0x230] sm:$0xf]
        %v1488 = vld [vmem:[#allocation4 + $0x234] sm:$0xf]
        %v1489 = vld [vmem:[#allocation4 + $0x238] sm:$0xf]
        %v1490 = vld [vmem:[#allocation4 + $0x23c] sm:$0xf]
        %v1491 = vperm.slane %v832, 0
        %v1636 = vunpack.c.l.b16 %v1347
        %v1637 = vunpack.c.l.b16 %v1348
        %v1638 = vunpack.c.l.b16 %v1349
        %v1639 = vunpack.c.l.b16 %v1350
        %v1640 = vunpack.c.l.b16 %v1351
        %v1641 = vunpack.c.l.b16 %v1352
        %v1642 = vunpack.c.l.b16 %v1353
        %v1643 = vunpack.c.l.b16 %v1354
        %v1644 = vunpack.c.l.b16 %v1355
        %v1645 = vunpack.c.l.b16 %v1356
        %v1646 = vunpack.c.l.b16 %v1357
        %v1647 = vunpack.c.l.b16 %v1358
        %v1648 = vunpack.c.l.b16 %v1359
        %v1649 = vunpack.c.l.b16 %v1360
        %v1650 = vunpack.c.l.b16 %v1361
        %v1651 = vunpack.c.l.b16 %v1362
        %v1652 = vunpack.c.l.b16 %v1363
        %v1653 = vunpack.c.l.b16 %v1364
        %v1654 = vunpack.c.l.b16 %v1365
        %v1655 = vunpack.c.l.b16 %v1366
        %v1656 = vunpack.c.l.b16 %v1367
        %v1657 = vunpack.c.l.b16 %v1368
        %v1658 = vunpack.c.l.b16 %v1369
        %v1659 = vunpack.c.l.b16 %v1370
        %v1660 = vunpack.c.l.b16 %v1371
        %v1661 = vunpack.c.l.b16 %v1372
        %v1662 = vunpack.c.l.b16 %v1373
        %v1663 = vunpack.c.l.b16 %v1374
        %v1664 = vunpack.c.l.b16 %v1375
        %v1665 = vunpack.c.l.b16 %v1376
        %v1666 = vunpack.c.l.b16 %v1377
        %v1667 = vunpack.c.l.b16 %v1378
        %v1668 = vunpack.c.l.b16 %v1379
        %v1669 = vunpack.c.l.b16 %v1380
        %v1670 = vunpack.c.l.b16 %v1381
        %v1671 = vunpack.c.l.b16 %v1382
        %v1672 = vunpack.c.l.b16 %v1383
        %v1673 = vunpack.c.l.b16 %v1384
        %v1674 = vunpack.c.l.b16 %v1385
        %v1675 = vunpack.c.l.b16 %v1386
        %v1676 = vunpack.c.l.b16 %v1387
        %v1677 = vunpack.c.l.b16 %v1388
        %v1678 = vunpack.c.l.b16 %v1389
        %v1679 = vunpack.c.l.b16 %v1390
        %v1680 = vunpack.c.l.b16 %v1391
        %v1681 = vunpack.c.l.b16 %v1392
        %v1682 = vunpack.c.l.b16 %v1393
        %v1683 = vunpack.c.l.b16 %v1394
        %v1684 = vunpack.c.l.b16 %v1395
        %v1685 = vunpack.c.l.b16 %v1396
        %v1686 = vunpack.c.l.b16 %v1397
        %v1687 = vunpack.c.l.b16 %v1398
        %v1688 = vunpack.c.l.b16 %v1399
        %v1689 = vunpack.c.l.b16 %v1400
        %v1690 = vunpack.c.l.b16 %v1401
        %v1691 = vunpack.c.l.b16 %v1402
        %v1692 = vunpack.c.l.b16 %v1403
        %v1693 = vunpack.c.l.b16 %v1404
        %v1694 = vunpack.c.l.b16 %v1405
        %v1695 = vunpack.c.l.b16 %v1406
        %v1696 = vunpack.c.l.b16 %v1407
        %v1697 = vunpack.c.l.b16 %v1408
        %v1698 = vunpack.c.l.b16 %v1409
        %v1699 = vunpack.c.l.b16 %v1410
        %v1700 = vunpack.c.l.b16 %v1411
        %v1701 = vunpack.c.l.b16 %v1412
        %v1702 = vunpack.c.l.b16 %v1413
        %v1703 = vunpack.c.l.b16 %v1414
        %v1704 = vunpack.c.l.b16 %v1415
        %v1705 = vunpack.c.l.b16 %v1416
        %v1706 = vunpack.c.l.b16 %v1417
        %v1707 = vunpack.c.l.b16 %v1418
        %v1708 = vunpack.c.l.b16 %v1419
        %v1709 = vunpack.c.l.b16 %v1420
        %v1710 = vunpack.c.l.b16 %v1421
        %v1711 = vunpack.c.l.b16 %v1422
        %v1712 = vunpack.c.l.b16 %v1423
        %v1713 = vunpack.c.l.b16 %v1424
        %v1714 = vunpack.c.l.b16 %v1425
        %v1715 = vunpack.c.l.b16 %v1426
        %v1716 = vunpack.c.l.b16 %v1427
        %v1717 = vunpack.c.l.b16 %v1428
        %v1718 = vunpack.c.l.b16 %v1429
        %v1719 = vunpack.c.l.b16 %v1430
        %v1720 = vunpack.c.l.b16 %v1431
        %v1721 = vunpack.c.l.b16 %v1432
        %v1722 = vunpack.c.l.b16 %v1433
        %v1723 = vunpack.c.l.b16 %v1434
        %v1724 = vunpack.c.l.b16 %v1435
        %v1725 = vunpack.c.l.b16 %v1436
        %v1726 = vunpack.c.l.b16 %v1437
        %v1727 = vunpack.c.l.b16 %v1438
        %v1728 = vunpack.c.l.b16 %v1439
        %v1729 = vunpack.c.l.b16 %v1440
        %v1730 = vunpack.c.l.b16 %v1441
        %v1731 = vunpack.c.l.b16 %v1442
        %v1732 = vunpack.c.l.b16 %v1443
        %v1733 = vunpack.c.l.b16 %v1444
        %v1734 = vunpack.c.l.b16 %v1445
        %v1735 = vunpack.c.l.b16 %v1446
        %v1736 = vunpack.c.l.b16 %v1447
        %v1737 = vunpack.c.l.b16 %v1448
        %v1738 = vunpack.c.l.b16 %v1449
        %v1739 = vunpack.c.l.b16 %v1450
        %v1740 = vunpack.c.l.b16 %v1451
        %v1741 = vunpack.c.l.b16 %v1452
        %v1742 = vunpack.c.l.b16 %v1453
        %v1743 = vunpack.c.l.b16 %v1454
        %v1744 = vunpack.c.l.b16 %v1455
        %v1745 = vunpack.c.l.b16 %v1456
        %v1746 = vunpack.c.l.b16 %v1457
        %v1747 = vunpack.c.l.b16 %v1458
        %v1748 = vunpack.c.l.b16 %v1459
        %v1749 = vunpack.c.l.b16 %v1460
        %v1750 = vunpack.c.l.b16 %v1461
        %v1751 = vunpack.c.l.b16 %v1462
        %v1752 = vunpack.c.l.b16 %v1463
        %v1753 = vunpack.c.l.b16 %v1464
        %v1754 = vunpack.c.l.b16 %v1465
        %v1755 = vunpack.c.l.b16 %v1466
        %v1756 = vunpack.c.l.b16 %v1467
        %v1757 = vunpack.c.l.b16 %v1468
        %v1758 = vunpack.c.l.b16 %v1469
        %v1759 = vunpack.c.l.b16 %v1470
        %v1760 = vunpack.c.l.b16 %v1471
        %v1761 = vunpack.c.l.b16 %v1472
        %v1762 = vunpack.c.l.b16 %v1473
        %v1763 = vunpack.c.l.b16 %v1474
        %v1764 = vunpack.c.l.b16 %v1475
        %v1765 = vunpack.c.l.b16 %v1476
        %v1766 = vunpack.c.l.b16 %v1477
        %v1767 = vunpack.c.l.b16 %v1478
        %v1768 = vunpack.c.l.b16 %v1479
        %v1769 = vunpack.c.l.b16 %v1480
        %v1770 = vunpack.c.l.b16 %v1481
        %v1771 = vunpack.c.l.b16 %v1482
        %v1772 = vunpack.c.l.b16 %v1483
        %v1773 = vunpack.c.l.b16 %v1484
        %v1774 = vunpack.c.l.b16 %v1485
        %v1775 = vunpack.c.l.b16 %v1486
        %v1776 = vunpack.c.l.b16 %v1487
        %v1777 = vunpack.c.l.b16 %v1488
        %v1778 = vunpack.c.l.b16 %v1489
        %v1779 = vunpack.c.l.b16 %v1490
        %v1780 = vpack.c.b16 %v1637, %v1636
        %v1781 = vpack.c.b16 %v1639, %v1638
        %v1782 = vpack.c.b16 %v1641, %v1640
        %v1783 = vpack.c.b16 %v1643, %v1642
        %v1784 = vpack.c.b16 %v1645, %v1644
        %v1785 = vpack.c.b16 %v1647, %v1646
        %v1786 = vpack.c.b16 %v1649, %v1648
        %v1787 = vpack.c.b16 %v1651, %v1650
        %v1788 = vpack.c.b16 %v1653, %v1652
        %v1789 = vpack.c.b16 %v1655, %v1654
        %v1790 = vpack.c.b16 %v1657, %v1656
        %v1791 = vpack.c.b16 %v1659, %v1658
        %v1792 = vpack.c.b16 %v1661, %v1660
        %v1793 = vpack.c.b16 %v1663, %v1662
        %v1794 = vpack.c.b16 %v1665, %v1664
        %v1795 = vpack.c.b16 %v1667, %v1666
        %v1796 = vpack.c.b16 %v1669, %v1668
        %v1797 = vpack.c.b16 %v1671, %v1670
        %v1798 = vpack.c.b16 %v1673, %v1672
        %v1799 = vpack.c.b16 %v1675, %v1674
        %v1800 = vpack.c.b16 %v1677, %v1676
        %v1801 = vpack.c.b16 %v1679, %v1678
        %v1802 = vpack.c.b16 %v1681, %v1680
        %v1803 = vpack.c.b16 %v1683, %v1682
        %v1804 = vpack.c.b16 %v1685, %v1684
        %v1805 = vpack.c.b16 %v1687, %v1686
        %v1806 = vpack.c.b16 %v1689, %v1688
        %v1807 = vpack.c.b16 %v1691, %v1690
        %v1808 = vpack.c.b16 %v1693, %v1692
        %v1809 = vpack.c.b16 %v1695, %v1694
        %v1810 = vpack.c.b16 %v1697, %v1696
        %v1811 = vpack.c.b16 %v1699, %v1698
        %v1812 = vpack.c.b16 %v1701, %v1700
        %v1813 = vpack.c.b16 %v1703, %v1702
        %v1814 = vpack.c.b16 %v1705, %v1704
        %v1815 = vpack.c.b16 %v1707, %v1706
        %v1816 = vpack.c.b16 %v1709, %v1708
        %v1817 = vpack.c.b16 %v1711, %v1710
        %v1818 = vpack.c.b16 %v1713, %v1712
        %v1819 = vpack.c.b16 %v1715, %v1714
        %v1820 = vpack.c.b16 %v1717, %v1716
        %v1821 = vpack.c.b16 %v1719, %v1718
        %v1822 = vpack.c.b16 %v1721, %v1720
        %v1823 = vpack.c.b16 %v1723, %v1722
        %v1824 = vpack.c.b16 %v1725, %v1724
        %v1825 = vpack.c.b16 %v1727, %v1726
        %v1826 = vpack.c.b16 %v1729, %v1728
        %v1827 = vpack.c.b16 %v1731, %v1730
        %v1828 = vpack.c.b16 %v1733, %v1732
        %v1829 = vpack.c.b16 %v1735, %v1734
        %v1830 = vpack.c.b16 %v1737, %v1736
        %v1831 = vpack.c.b16 %v1739, %v1738
        %v1832 = vpack.c.b16 %v1741, %v1740
        %v1833 = vpack.c.b16 %v1743, %v1742
        %v1834 = vpack.c.b16 %v1745, %v1744
        %v1835 = vpack.c.b16 %v1747, %v1746
        %v1836 = vpack.c.b16 %v1749, %v1748
        %v1837 = vpack.c.b16 %v1751, %v1750
        %v1838 = vpack.c.b16 %v1753, %v1752
        %v1839 = vpack.c.b16 %v1755, %v1754
        %v1840 = vpack.c.b16 %v1757, %v1756
        %v1841 = vpack.c.b16 %v1759, %v1758
        %v1842 = vpack.c.b16 %v1761, %v1760
        %v1843 = vpack.c.b16 %v1763, %v1762
        %v1844 = vpack.c.b16 %v1765, %v1764
        %v1845 = vpack.c.b16 %v1767, %v1766
        %v1846 = vpack.c.b16 %v1769, %v1768
        %v1847 = vpack.c.b16 %v1771, %v1770
        %v1848 = vpack.c.b16 %v1773, %v1772
        %v1849 = vpack.c.b16 %v1775, %v1774
        %v1850 = vpack.c.b16 %v1777, %v1776
        %v1851 = vpack.c.b16 %v1779, %v1778
        %1924 = vmatpush.bf16.msra.mxu0 %v1787
        %1925 = vmatpush.bf16.msra.mxu0 %v1786
        %1926 = vmatpush.bf16.msra.mxu0 %v1785
        %1927 = vmatpush.bf16.msra.mxu0 %v1784
        %1928 = vmatpush.bf16.msra.mxu0 %v1783
        %1929 = vmatpush.bf16.msra.mxu0 %v1782
        %1930 = vmatpush.bf16.msra.mxu0 %v1781
        %1931 = vmatpush.bf16.msra.mxu0 %v1780
        %1932 = vmatmul.bf16.gmra.mxu0 %v1147
        %v1933 = vpop.f32.mrf.mxu0
        %v1934 = vadd.f32 %v1491, %v1933
        %v1935 = vpop.f32.mrf.mxu0
        %v1936 = vadd.f32 %v1491, %v1935
        %1937 = vmatmul.bf16.gmra.mxu0 %v1148
        %v1938 = vpop.f32.mrf.mxu0
        %v1939 = vadd.f32 %v1491, %v1938
        %v1940 = vpop.f32.mrf.mxu0
        %v1941 = vadd.f32 %v1491, %v1940
        %1942 = vmatmul.bf16.gmra.mxu0 %v1149
        %v1943 = vpop.f32.mrf.mxu0
        %v1944 = vadd.f32 %v1491, %v1943
        %v1945 = vpop.f32.mrf.mxu0
        %v1946 = vadd.f32 %v1491, %v1945
        %1947 = vmatmul.bf16.gmra.mxu0 %v1150
        %v1948 = vpop.f32.mrf.mxu0
        %v1949 = vadd.f32 %v1491, %v1948
        %v1950 = vpop.f32.mrf.mxu0
        %v1951 = vadd.f32 %v1491, %v1950
        %1952 = vdwg.mxu0
        %1953 = vmatpush.bf16.msra.mxu0 %v1795
        %1954 = vmatpush.bf16.msra.mxu0 %v1794
        %1955 = vmatpush.bf16.msra.mxu0 %v1793
        %1956 = vmatpush.bf16.msra.mxu0 %v1792
        %1957 = vmatpush.bf16.msra.mxu0 %v1791
        %1958 = vmatpush.bf16.msra.mxu0 %v1790
        %1959 = vmatpush.bf16.msra.mxu0 %v1789
        %1960 = vmatpush.bf16.msra.mxu0 %v1788
        %1961 = vmatmul.bf16.gmra.mxu0 %v1171
        %v1962 = vpop.f32.mrf.mxu0
        %v1963 = vadd.f32 %v1934, %v1962
        %v1964 = vpop.f32.mrf.mxu0
        %v1965 = vadd.f32 %v1936, %v1964
        %1966 = vmatmul.bf16.gmra.mxu0 %v1172
        %v1967 = vpop.f32.mrf.mxu0
        %v1968 = vadd.f32 %v1939, %v1967
        %v1969 = vpop.f32.mrf.mxu0
        %v1970 = vadd.f32 %v1941, %v1969
        %1971 = vmatmul.bf16.gmra.mxu0 %v1173
        %v1972 = vpop.f32.mrf.mxu0
        %v1973 = vadd.f32 %v1944, %v1972
        %v1974 = vpop.f32.mrf.mxu0
        %v1975 = vadd.f32 %v1946, %v1974
        %1976 = vmatmul.bf16.gmra.mxu0 %v1174
        %v1977 = vpop.f32.mrf.mxu0
        %v1978 = vadd.f32 %v1949, %v1977
        %v1979 = vpop.f32.mrf.mxu0
        %v1980 = vadd.f32 %v1951, %v1979
        %1981 = vdwg.mxu0
        %1982 = vmatpush.bf16.msra.mxu0 %v1803
        %1983 = vmatpush.bf16.msra.mxu0 %v1802
        %1984 = vmatpush.bf16.msra.mxu0 %v1801
        %1985 = vmatpush.bf16.msra.mxu0 %v1800
        %1986 = vmatpush.bf16.msra.mxu0 %v1799
        %1987 = vmatpush.bf16.msra.mxu0 %v1798
        %1988 = vmatpush.bf16.msra.mxu0 %v1797
        %1989 = vmatpush.bf16.msra.mxu0 %v1796
        %1990 = vmatmul.bf16.gmra.mxu0 %v1195
        %v1991 = vpop.f32.mrf.mxu0
        %v1992 = vadd.f32 %v1963, %v1991
        %v1993 = vpop.f32.mrf.mxu0
        %v1994 = vadd.f32 %v1965, %v1993
        %1995 = vmatmul.bf16.gmra.mxu0 %v1196
        %v1996 = vpop.f32.mrf.mxu0
        %v1997 = vadd.f32 %v1968, %v1996
        %v1998 = vpop.f32.mrf.mxu0
        %v1999 = vadd.f32 %v1970, %v1998
        %2000 = vmatmul.bf16.gmra.mxu0 %v1197
        %v2001 = vpop.f32.mrf.mxu0
        %v2002 = vadd.f32 %v1973, %v2001
        %v2003 = vpop.f32.mrf.mxu0
        %v2004 = vadd.f32 %v1975, %v2003
        %2005 = vmatmul.bf16.gmra.mxu0 %v1198
        %v2006 = vpop.f32.mrf.mxu0
        %v2007 = vadd.f32 %v1978, %v2006
        %v2008 = vpop.f32.mrf.mxu0
        %v2009 = vadd.f32 %v1980, %v2008
        %2010 = vdwg.mxu0
        %2011 = vmatpush.bf16.msra.mxu0 %v1811
        %2012 = vmatpush.bf16.msra.mxu0 %v1810
        %2013 = vmatpush.bf16.msra.mxu0 %v1809
        %2014 = vmatpush.bf16.msra.mxu0 %v1808
        %2015 = vmatpush.bf16.msra.mxu0 %v1807
        %2016 = vmatpush.bf16.msra.mxu0 %v1806
        %2017 = vmatpush.bf16.msra.mxu0 %v1805
        %2018 = vmatpush.bf16.msra.mxu0 %v1804
        %2019 = vmatmul.bf16.gmra.mxu0 %v1219
        %v2020 = vpop.f32.mrf.mxu0
        %v2021 = vadd.f32 %v1992, %v2020
        %v2022 = vpop.f32.mrf.mxu0
        %v2023 = vadd.f32 %v1994, %v2022
        %2024 = vmatmul.bf16.gmra.mxu0 %v1220
        %v2025 = vpop.f32.mrf.mxu0
        %v2026 = vadd.f32 %v1997, %v2025
        %v2027 = vpop.f32.mrf.mxu0
        %v2028 = vadd.f32 %v1999, %v2027
        %2029 = vmatmul.bf16.gmra.mxu0 %v1221
        %v2030 = vpop.f32.mrf.mxu0
        %v2031 = vadd.f32 %v2002, %v2030
        %v2032 = vpop.f32.mrf.mxu0
        %v2033 = vadd.f32 %v2004, %v2032
        %2034 = vmatmul.bf16.gmra.mxu0 %v1222
        %v2035 = vpop.f32.mrf.mxu0
        %v2036 = vadd.f32 %v2007, %v2035
        %v2037 = vpop.f32.mrf.mxu0
        %v2038 = vadd.f32 %v2009, %v2037
        %2039 = vdwg.mxu0
        %2040 = vmatpush.bf16.msra.mxu0 %v1819
        %2041 = vmatpush.bf16.msra.mxu0 %v1818
        %2042 = vmatpush.bf16.msra.mxu0 %v1817
        %2043 = vmatpush.bf16.msra.mxu0 %v1816
        %2044 = vmatpush.bf16.msra.mxu0 %v1815
        %2045 = vmatpush.bf16.msra.mxu0 %v1814
        %2046 = vmatpush.bf16.msra.mxu0 %v1813
        %2047 = vmatpush.bf16.msra.mxu0 %v1812
        %2048 = vmatmul.bf16.gmra.mxu0 %v1243
        %v2049 = vpop.f32.mrf.mxu0
        %v2050 = vadd.f32 %v2021, %v2049
        %v2051 = vpop.f32.mrf.mxu0
        %v2052 = vadd.f32 %v2023, %v2051
        %2053 = vmatmul.bf16.gmra.mxu0 %v1244
        %v2054 = vpop.f32.mrf.mxu0
        %v2055 = vadd.f32 %v2026, %v2054
        %v2056 = vpop.f32.mrf.mxu0
        %v2057 = vadd.f32 %v2028, %v2056
        %2058 = vmatmul.bf16.gmra.mxu0 %v1245
        %v2059 = vpop.f32.mrf.mxu0
        %v2060 = vadd.f32 %v2031, %v2059
        %v2061 = vpop.f32.mrf.mxu0
        %v2062 = vadd.f32 %v2033, %v2061
        %2063 = vmatmul.bf16.gmra.mxu0 %v1246
        %v2064 = vpop.f32.mrf.mxu0
        %v2065 = vadd.f32 %v2036, %v2064
        %v2066 = vpop.f32.mrf.mxu0
        %v2067 = vadd.f32 %v2038, %v2066
        %2068 = vdwg.mxu0
        %2069 = vmatpush.bf16.msra.mxu0 %v1827
        %2070 = vmatpush.bf16.msra.mxu0 %v1826
        %2071 = vmatpush.bf16.msra.mxu0 %v1825
        %2072 = vmatpush.bf16.msra.mxu0 %v1824
        %2073 = vmatpush.bf16.msra.mxu0 %v1823
        %2074 = vmatpush.bf16.msra.mxu0 %v1822
        %2075 = vmatpush.bf16.msra.mxu0 %v1821
        %2076 = vmatpush.bf16.msra.mxu0 %v1820
        %2077 = vmatmul.bf16.gmra.mxu0 %v1267
        %v2078 = vpop.f32.mrf.mxu0
        %v2079 = vadd.f32 %v2050, %v2078
        %v2080 = vpop.f32.mrf.mxu0
        %v2081 = vadd.f32 %v2052, %v2080
        %2082 = vmatmul.bf16.gmra.mxu0 %v1268
        %v2083 = vpop.f32.mrf.mxu0
        %v2084 = vadd.f32 %v2055, %v2083
        %v2085 = vpop.f32.mrf.mxu0
        %v2086 = vadd.f32 %v2057, %v2085
        %2087 = vmatmul.bf16.gmra.mxu0 %v1269
        %v2088 = vpop.f32.mrf.mxu0
        %v2089 = vadd.f32 %v2060, %v2088
        %v2090 = vpop.f32.mrf.mxu0
        %v2091 = vadd.f32 %v2062, %v2090
        %2092 = vmatmul.bf16.gmra.mxu0 %v1270
        %v2093 = vpop.f32.mrf.mxu0
        %v2094 = vadd.f32 %v2065, %v2093
        %v2095 = vpop.f32.mrf.mxu0
        %v2096 = vadd.f32 %v2067, %v2095
        %2097 = vdwg.mxu0
        %2098 = vmatpush.bf16.msra.mxu0 %v1835
        %2099 = vmatpush.bf16.msra.mxu0 %v1834
        %2100 = vmatpush.bf16.msra.mxu0 %v1833
        %2101 = vmatpush.bf16.msra.mxu0 %v1832
        %2102 = vmatpush.bf16.msra.mxu0 %v1831
        %2103 = vmatpush.bf16.msra.mxu0 %v1830
        %2104 = vmatpush.bf16.msra.mxu0 %v1829
        %2105 = vmatpush.bf16.msra.mxu0 %v1828
        %2106 = vmatmul.bf16.gmra.mxu0 %v1291
        %v2107 = vpop.f32.mrf.mxu0
        %v2108 = vadd.f32 %v2079, %v2107
        %v2109 = vpop.f32.mrf.mxu0
        %v2110 = vadd.f32 %v2081, %v2109
        %2111 = vmatmul.bf16.gmra.mxu0 %v1292
        %v2112 = vpop.f32.mrf.mxu0
        %v2113 = vadd.f32 %v2084, %v2112
        %v2114 = vpop.f32.mrf.mxu0
        %v2115 = vadd.f32 %v2086, %v2114
        %2116 = vmatmul.bf16.gmra.mxu0 %v1293
        %v2117 = vpop.f32.mrf.mxu0
        %v2118 = vadd.f32 %v2089, %v2117
        %v2119 = vpop.f32.mrf.mxu0
        %v2120 = vadd.f32 %v2091, %v2119
        %2121 = vmatmul.bf16.gmra.mxu0 %v1294
        %v2122 = vpop.f32.mrf.mxu0
        %v2123 = vadd.f32 %v2094, %v2122
        %v2124 = vpop.f32.mrf.mxu0
        %v2125 = vadd.f32 %v2096, %v2124
        %2126 = vdwg.mxu0
        %2127 = vmatpush.bf16.msra.mxu0 %v1843
        %2128 = vmatpush.bf16.msra.mxu0 %v1842
        %2129 = vmatpush.bf16.msra.mxu0 %v1841
        %2130 = vmatpush.bf16.msra.mxu0 %v1840
        %2131 = vmatpush.bf16.msra.mxu0 %v1839
        %2132 = vmatpush.bf16.msra.mxu0 %v1838
        %2133 = vmatpush.bf16.msra.mxu0 %v1837
        %2134 = vmatpush.bf16.msra.mxu0 %v1836
        %2135 = vmatmul.bf16.gmra.mxu0 %v1315
        %v2136 = vpop.f32.mrf.mxu0
        %v2137 = vadd.f32 %v2108, %v2136
        %v2138 = vpop.f32.mrf.mxu0
        %v2139 = vadd.f32 %v2110, %v2138
        %2140 = vmatmul.bf16.gmra.mxu0 %v1316
        %v2141 = vpop.f32.mrf.mxu0
        %v2142 = vadd.f32 %v2113, %v2141
        %v2143 = vpop.f32.mrf.mxu0
        %v2144 = vadd.f32 %v2115, %v2143
        %2145 = vmatmul.bf16.gmra.mxu0 %v1317
        %v2146 = vpop.f32.mrf.mxu0
        %v2147 = vadd.f32 %v2118, %v2146
        %v2148 = vpop.f32.mrf.mxu0
        %v2149 = vadd.f32 %v2120, %v2148
        %2150 = vmatmul.bf16.gmra.mxu0 %v1318
        %v2151 = vpop.f32.mrf.mxu0
        %v2152 = vadd.f32 %v2123, %v2151
        %v2153 = vpop.f32.mrf.mxu0
        %v2154 = vadd.f32 %v2125, %v2153
        %2155 = vdwg.mxu0
        %2156 = vmatpush.bf16.msra.mxu0 %v1851
        %2157 = vmatpush.bf16.msra.mxu0 %v1850
        %2158 = vmatpush.bf16.msra.mxu0 %v1849
        %2159 = vmatpush.bf16.msra.mxu0 %v1848
        %2160 = vmatpush.bf16.msra.mxu0 %v1847
        %2161 = vmatpush.bf16.msra.mxu0 %v1846
        %2162 = vmatpush.bf16.msra.mxu0 %v1845
        %2163 = vmatpush.bf16.msra.mxu0 %v1844
        %2164 = vmatmul.bf16.gmra.mxu0 %v1339
        %v2165 = vpop.f32.mrf.mxu0
        %v2166 = vadd.f32 %v2137, %v2165
        %v2167 = vpop.f32.mrf.mxu0
        %v2168 = vadd.f32 %v2139, %v2167
        %2169 = vmatmul.bf16.gmra.mxu0 %v1340
        %v2170 = vpop.f32.mrf.mxu0
        %v2171 = vadd.f32 %v2142, %v2170
        %v2172 = vpop.f32.mrf.mxu0
        %v2173 = vadd.f32 %v2144, %v2172
        %2174 = vmatmul.bf16.gmra.mxu0 %v1341
        %v2175 = vpop.f32.mrf.mxu0
        %v2176 = vadd.f32 %v2147, %v2175
        %v2177 = vpop.f32.mrf.mxu0
        %v2178 = vadd.f32 %v2149, %v2177
        %2179 = vmatmul.bf16.gmra.mxu0 %v1342
        %v2180 = vpop.f32.mrf.mxu0
        %v2181 = vadd.f32 %v2152, %v2180
        %v2182 = vpop.f32.mrf.mxu0
        %v2183 = vadd.f32 %v2154, %v2182
        %2184 = vdwg.mxu0
        %v2185 = vperm.slane %v572, 0
        %v2186 = vadd.f32 %v2166, %v2185
        %v2187 = vadd.f32 %v2168, %v2185
        %v2188 = vadd.f32 %v2171, %v2185
        %v2189 = vadd.f32 %v2173, %v2185
        %v2190 = vadd.f32 %v2176, %v2185
        %v2191 = vadd.f32 %v2178, %v2185
        %v2192 = vadd.f32 %v2181, %v2185
        %v2193 = vadd.f32 %v2183, %v2185
        %v2194 = vld [vmem:[#allocation2 + $0x3] sm:$0x1]
        %v2195 = vld [vmem:[#allocation2 + $0x4] sm:$0x1]
        %v2196 = vadd.f32 %v2186, %v2187
        %v2197 = vadd.f32 %v2196, %v2188
        %v2198 = vadd.f32 %v2197, %v2189
        %v2199 = vadd.f32 %v2198, %v2190
        %v2200 = vadd.f32 %v2199, %v2191
        %v2201 = vadd.f32 %v2200, %v2192
        %v2202 = vadd.f32 %v2201, %v2193
        %v2203 = vrot.slane %v2202, 4
        %v2204 = vadd.f32 %v2202, %v2203
        %v2205 = vrot.slane %v2204, 2
        %v2206 = vadd.f32 %v2204, %v2205
        %v2207 = vrot.slane %v2206, 1
        %v2208 = vadd.f32 %v2206, %v2207
        %2209 = vrot.lane.b32.xlu0 %v2208, 127
        %v2210 = vpop.permute.xlu0 %2209
        %v2211 = vadd.f32 %v2208, %v2210
        %v2212 = vsel %vm394, %v2211, 0.0
        %2213 = vrot.lane.b32.xlu0 %v2212, 1
        %v2214 = vpop.permute.xlu0 %2213
        %v2215 = vadd.f32 %v2212, %v2214
        %v2216 = vmul.f32 %v2215, 0.0078125
        %v2217 = vperm.slane %v2216, 0
        %v2218 = vsub.f32 %v2186, %v2217
        %v2219 = vsub.f32 %v2187, %v2217
        %v2220 = vsub.f32 %v2188, %v2217
        %v2221 = vsub.f32 %v2189, %v2217
        %v2222 = vsub.f32 %v2190, %v2217
        %v2223 = vsub.f32 %v2191, %v2217
        %v2224 = vsub.f32 %v2192, %v2217
        %v2225 = vsub.f32 %v2193, %v2217
        %v2226 = vmul.f32 %v2218, %v2218
        %v2227 = vmul.f32 %v2219, %v2219
        %v2228 = vmul.f32 %v2220, %v2220
        %v2229 = vmul.f32 %v2221, %v2221
        %v2230 = vmul.f32 %v2222, %v2222
        %v2231 = vmul.f32 %v2223, %v2223
        %v2232 = vmul.f32 %v2224, %v2224
        %v2233 = vmul.f32 %v2225, %v2225
        %v2234 = vadd.f32 %v2226, %v2227
        %v2235 = vadd.f32 %v2234, %v2228
        %v2236 = vadd.f32 %v2235, %v2229
        %v2237 = vadd.f32 %v2236, %v2230
        %v2238 = vadd.f32 %v2237, %v2231
        %v2239 = vadd.f32 %v2238, %v2232
        %v2240 = vadd.f32 %v2239, %v2233
        %v2241 = vrot.slane %v2240, 4
        %v2242 = vadd.f32 %v2240, %v2241
        %v2243 = vrot.slane %v2242, 2
        %v2244 = vadd.f32 %v2242, %v2243
        %v2245 = vrot.slane %v2244, 1
        %v2246 = vadd.f32 %v2244, %v2245
        %2247 = vrot.lane.b32.xlu0 %v2246, 127
        %v2248 = vpop.permute.xlu0 %2247
        %v2249 = vadd.f32 %v2246, %v2248
        %v2250 = vsel %vm394, %v2249, 0.0
        %2251 = vrot.lane.b32.xlu0 %v2250, 1
        %v2252 = vpop.permute.xlu0 %2251
        %v2253 = vadd.f32 %v2250, %v2252
        %v2254 = vmul.f32 %v2253, 0.0078125
        %v2255 = vadd.f32 %v2254, 1e-05
        %v2256 = vrsqrt.pop %v2255
        %v2257 = vmul.f32 %v2256, %v2255
        %v2258 = vmul.f32 %v2257, %v2256
        %v2259 = vmul.f32 0.5, %v2258
        %v2260 = vsub.f32 1.5, %v2259
        %v2261 = vmul.f32 %v2256, %v2260
        %vm2262 = vweird.f32 %v2255
        %vm2263 = vweird.f32 %v2256
        %vm2264 = vmor %vm2262, %vm2263
        %v2265 = vsel %vm2264, %v2256, %v2261
        %v2266 = vperm.slane %v2265, 0
        %v2267 = vmul.f32 %v2218, %v2266
        %v2268 = vmul.f32 %v2219, %v2266
        %v2269 = vmul.f32 %v2220, %v2266
        %v2270 = vmul.f32 %v2221, %v2266
        %v2271 = vmul.f32 %v2222, %v2266
        %v2272 = vmul.f32 %v2223, %v2266
        %v2273 = vmul.f32 %v2224, %v2266
        %v2274 = vmul.f32 %v2225, %v2266
        %v2275 = vperm.slane %v2194, 0
        %v2276 = vmul.f32 %v2267, %v2275
        %v2277 = vmul.f32 %v2268, %v2275
        %v2278 = vmul.f32 %v2269, %v2275
        %v2279 = vmul.f32 %v2270, %v2275
        %v2280 = vmul.f32 %v2271, %v2275
        %v2281 = vmul.f32 %v2272, %v2275
        %v2282 = vmul.f32 %v2273, %v2275
        %v2283 = vmul.f32 %v2274, %v2275
        %v2284 = vperm.slane %v2195, 0
        %v2285 = vadd.f32 %v2276, %v2284
        %v2286 = vadd.f32 %v2277, %v2284
        %v2287 = vadd.f32 %v2278, %v2284
        %v2288 = vadd.f32 %v2279, %v2284
        %v2289 = vadd.f32 %v2280, %v2284
        %v2290 = vadd.f32 %v2281, %v2284
        %v2291 = vadd.f32 %v2282, %v2284
        %v2292 = vadd.f32 %v2283, %v2284
        %v2293 = vxor.u32 %v2285, 2147483648
        %v2294 = vxor.u32 %v2286, 2147483648
        %v2295 = vxor.u32 %v2287, 2147483648
        %v2296 = vxor.u32 %v2288, 2147483648
        %v2297 = vxor.u32 %v2289, 2147483648
        %v2298 = vxor.u32 %v2290, 2147483648
        %v2299 = vxor.u32 %v2291, 2147483648
        %v2300 = vxor.u32 %v2292, 2147483648
        %v2301 = vmul.f32 %v2293, 1.442695
        %v2302 = vpow.pop %v2301
        %v2303 = vmul.f32 %v2294, 1.442695
        %v2304 = vpow.pop %v2303
        %v2305 = vmul.f32 %v2295, 1.442695
        %v2306 = vpow.pop %v2305
        %v2307 = vmul.f32 %v2296, 1.442695
        %v2308 = vpow.pop %v2307
        %v2309 = vmul.f32 %v2297, 1.442695
        %v2310 = vpow.pop %v2309
        %v2311 = vmul.f32 %v2298, 1.442695
        %v2312 = vpow.pop %v2311
        %v2313 = vmul.f32 %v2299, 1.442695
        %v2314 = vpow.pop %v2313
        %v2315 = vmul.f32 %v2300, 1.442695
        %v2316 = vpow.pop %v2315
        %v2317 = vadd.f32 %v2302, 1.0
        %v2318 = vadd.f32 %v2304, 1.0
        %v2319 = vadd.f32 %v2306, 1.0
        %v2320 = vadd.f32 %v2308, 1.0
        %v2321 = vadd.f32 %v2310, 1.0
        %v2322 = vadd.f32 %v2312, 1.0
        %v2323 = vadd.f32 %v2314, 1.0
        %v2324 = vadd.f32 %v2316, 1.0
        %v2325 = vrcp.pop %v2317
        %v2326 = vmul.f32 %v2317, %v2325
        %v2327 = vsub.f32 1.0, %v2326
        %v2328 = vmul.f32 %v2325, %v2327
        %v2329 = vadd.f32 %v2325, %v2328
        %vm2330 = vweird.f32 %v2317
        %vm2331 = vweird.f32 %v2325
        %vm2332 = vmor %vm2330, %vm2331
        %v2333 = vsel %vm2332, %v2325, %v2329
        %v2334 = vand.u32 2147483647, %v2317
        %vm2335 = vcmp.eq.f32.partialorder %v2334, 8.507059e+37
        %v2336 = vand.u32 %v2317, 2147483648
        %v2337 = vor.u32 1.1754944e-38, %v2336
        %v2338 = vsel %vm2335, %v2337, %v2333
        %v2339 = vmul.f32 1.0, %v2338
        %v2340 = vrcp.pop %v2318
        %v2341 = vmul.f32 %v2318, %v2340
        %v2342 = vsub.f32 1.0, %v2341
        %v2343 = vmul.f32 %v2340, %v2342
        %v2344 = vadd.f32 %v2340, %v2343
        %vm2345 = vweird.f32 %v2318
        %vm2346 = vweird.f32 %v2340
        %vm2347 = vmor %vm2345, %vm2346
        %v2348 = vsel %vm2347, %v2340, %v2344
        %v2349 = vand.u32 2147483647, %v2318
        %vm2350 = vcmp.eq.f32.partialorder %v2349, 8.507059e+37
        %v2351 = vand.u32 %v2318, 2147483648
        %v2352 = vor.u32 1.1754944e-38, %v2351
        %v2353 = vsel %vm2350, %v2352, %v2348
        %v2354 = vmul.f32 1.0, %v2353
        %v2355 = vrcp.pop %v2319
        %v2356 = vmul.f32 %v2319, %v2355
        %v2357 = vsub.f32 1.0, %v2356
        %v2358 = vmul.f32 %v2355, %v2357
        %v2359 = vadd.f32 %v2355, %v2358
        %vm2360 = vweird.f32 %v2319
        %vm2361 = vweird.f32 %v2355
        %vm2362 = vmor %vm2360, %vm2361
        %v2363 = vsel %vm2362, %v2355, %v2359
        %v2364 = vand.u32 2147483647, %v2319
        %vm2365 = vcmp.eq.f32.partialorder %v2364, 8.507059e+37
        %v2366 = vand.u32 %v2319, 2147483648
        %v2367 = vor.u32 1.1754944e-38, %v2366
        %v2368 = vsel %vm2365, %v2367, %v2363
        %v2369 = vmul.f32 1.0, %v2368
        %v2370 = vrcp.pop %v2320
        %v2371 = vmul.f32 %v2320, %v2370
        %v2372 = vsub.f32 1.0, %v2371
        %v2373 = vmul.f32 %v2370, %v2372
        %v2374 = vadd.f32 %v2370, %v2373
        %vm2375 = vweird.f32 %v2320
        %vm2376 = vweird.f32 %v2370
        %vm2377 = vmor %vm2375, %vm2376
        %v2378 = vsel %vm2377, %v2370, %v2374
        %v2379 = vand.u32 2147483647, %v2320
        %vm2380 = vcmp.eq.f32.partialorder %v2379, 8.507059e+37
        %v2381 = vand.u32 %v2320, 2147483648
        %v2382 = vor.u32 1.1754944e-38, %v2381
        %v2383 = vsel %vm2380, %v2382, %v2378
        %v2384 = vmul.f32 1.0, %v2383
        %v2385 = vrcp.pop %v2321
        %v2386 = vmul.f32 %v2321, %v2385
        %v2387 = vsub.f32 1.0, %v2386
        %v2388 = vmul.f32 %v2385, %v2387
        %v2389 = vadd.f32 %v2385, %v2388
        %vm2390 = vweird.f32 %v2321
        %vm2391 = vweird.f32 %v2385
        %vm2392 = vmor %vm2390, %vm2391
        %v2393 = vsel %vm2392, %v2385, %v2389
        %v2394 = vand.u32 2147483647, %v2321
        %vm2395 = vcmp.eq.f32.partialorder %v2394, 8.507059e+37
        %v2396 = vand.u32 %v2321, 2147483648
        %v2397 = vor.u32 1.1754944e-38, %v2396
        %v2398 = vsel %vm2395, %v2397, %v2393
        %v2399 = vmul.f32 1.0, %v2398
        %v2400 = vrcp.pop %v2322
        %v2401 = vmul.f32 %v2322, %v2400
        %v2402 = vsub.f32 1.0, %v2401
        %v2403 = vmul.f32 %v2400, %v2402
        %v2404 = vadd.f32 %v2400, %v2403
        %vm2405 = vweird.f32 %v2322
        %vm2406 = vweird.f32 %v2400
        %vm2407 = vmor %vm2405, %vm2406
        %v2408 = vsel %vm2407, %v2400, %v2404
        %v2409 = vand.u32 2147483647, %v2322
        %vm2410 = vcmp.eq.f32.partialorder %v2409, 8.507059e+37
        %v2411 = vand.u32 %v2322, 2147483648
        %v2412 = vor.u32 1.1754944e-38, %v2411
        %v2413 = vsel %vm2410, %v2412, %v2408
        %v2414 = vmul.f32 1.0, %v2413
        %v2415 = vrcp.pop %v2323
        %v2416 = vmul.f32 %v2323, %v2415
        %v2417 = vsub.f32 1.0, %v2416
        %v2418 = vmul.f32 %v2415, %v2417
        %v2419 = vadd.f32 %v2415, %v2418
        %vm2420 = vweird.f32 %v2323
        %vm2421 = vweird.f32 %v2415
        %vm2422 = vmor %vm2420, %vm2421
        %v2423 = vsel %vm2422, %v2415, %v2419
        %v2424 = vand.u32 2147483647, %v2323
        %vm2425 = vcmp.eq.f32.partialorder %v2424, 8.507059e+37
        %v2426 = vand.u32 %v2323, 2147483648
        %v2427 = vor.u32 1.1754944e-38, %v2426
        %v2428 = vsel %vm2425, %v2427, %v2423
        %v2429 = vmul.f32 1.0, %v2428
        %v2430 = vrcp.pop %v2324
        %v2431 = vmul.f32 %v2324, %v2430
        %v2432 = vsub.f32 1.0, %v2431
        %v2433 = vmul.f32 %v2430, %v2432
        %v2434 = vadd.f32 %v2430, %v2433
        %vm2435 = vweird.f32 %v2324
        %vm2436 = vweird.f32 %v2430
        %vm2437 = vmor %vm2435, %vm2436
        %v2438 = vsel %vm2437, %v2430, %v2434
        %v2439 = vand.u32 2147483647, %v2324
        %vm2440 = vcmp.eq.f32.partialorder %v2439, 8.507059e+37
        %v2441 = vand.u32 %v2324, 2147483648
        %v2442 = vor.u32 1.1754944e-38, %v2441
        %v2443 = vsel %vm2440, %v2442, %v2438
        %v2444 = vmul.f32 1.0, %v2443
        %v2445 = vmul.f32 %v2285, %v2339
        %v2446 = vmul.f32 %v2286, %v2354
        %v2447 = vmul.f32 %v2287, %v2369
        %v2448 = vmul.f32 %v2288, %v2384
        %v2449 = vmul.f32 %v2289, %v2399
        %v2450 = vmul.f32 %v2290, %v2414
        %v2451 = vmul.f32 %v2291, %v2429
        %v2452 = vmul.f32 %v2292, %v2444
        %v2453 = vld [vmem:[#allocation2 + $0x5] sm:$0x1]
        %v2454 = vrot.slane %v2445, 7
        %v2455 = vrot.slane %v2446, 7
        %v2456 = vrot.slane %v2447, 7
        %v2457 = vrot.slane %v2448, 7
        %v2458 = vrot.slane %v2449, 7
        %v2459 = vrot.slane %v2450, 7
        %v2460 = vrot.slane %v2451, 7
        %v2461 = vrot.slane %v2452, 7
        %v2462 = vsel %vm841, %v2460, %v2461
        %v2463 = vsel %vm841, %v2459, %v2460
        %v2464 = vsel %vm841, %v2458, %v2459
        %v2465 = vsel %vm841, %v2457, %v2458
        %v2466 = vsel %vm841, %v2456, %v2457
        %v2467 = vsel %vm841, %v2455, %v2456
        %v2468 = vsel %vm841, %v2454, %v2455
        %v2469 = vsel %vm841, %v2461, %v2454
        %v2470 = vsel %vm858, %v2462, 0.0
        %v2471 = vsel %vm859, %v2469, 0.0
        %v2472 = vsel %vm860, %v2468, 0.0
        %v2473 = vsel %vm861, %v2467, 0.0
        %v2474 = vsel %vm862, %v2466, 0.0
        %v2475 = vsel %vm863, %v2465, 0.0
        %v2476 = vsel %vm864, %v2464, 0.0
        %v2477 = vsel %vm865, %v2463, 0.0
        %v2478 = vpack.c.bf16 %v2470, %v2470
        %v2479 = vpack.c.bf16 %v2471, %v2471
        %v2480 = vpack.c.bf16 %v2472, %v2472
        %v2481 = vpack.c.bf16 %v2473, %v2473
        %v2482 = vpack.c.bf16 %v2474, %v2474
        %v2483 = vpack.c.bf16 %v2475, %v2475
        %v2484 = vpack.c.bf16 %v2476, %v2476
        %v2485 = vpack.c.bf16 %v2477, %v2477
        %v2486 = vsel %vm890, %v2452, 0.0
        %v2487 = vsel %vm891, %v2445, 0.0
        %v2488 = vsel %vm892, %v2446, 0.0
        %v2489 = vsel %vm893, %v2447, 0.0
        %v2490 = vsel %vm894, %v2448, 0.0
        %v2491 = vsel %vm895, %v2449, 0.0
        %v2492 = vsel %vm896, %v2450, 0.0
        %v2493 = vsel %vm897, %v2451, 0.0
        %v2494 = vpack.c.bf16 %v2486, %v2486
        %v2495 = vpack.c.bf16 %v2487, %v2487
        %v2496 = vpack.c.bf16 %v2488, %v2488
        %v2497 = vpack.c.bf16 %v2489, %v2489
        %v2498 = vpack.c.bf16 %v2490, %v2490
        %v2499 = vpack.c.bf16 %v2491, %v2491
        %v2500 = vpack.c.bf16 %v2492, %v2492
        %v2501 = vpack.c.bf16 %v2493, %v2493
        %v2502 = vrot.slane %v2445, 1
        %v2503 = vrot.slane %v2446, 1
        %v2504 = vrot.slane %v2447, 1
        %v2505 = vrot.slane %v2448, 1
        %v2506 = vrot.slane %v2449, 1
        %v2507 = vrot.slane %v2450, 1
        %v2508 = vrot.slane %v2451, 1
        %v2509 = vrot.slane %v2452, 1
        %v2510 = vsel %vm922, %v2508, %v2509
        %v2511 = vsel %vm922, %v2507, %v2508
        %v2512 = vsel %vm922, %v2506, %v2507
        %v2513 = vsel %vm922, %v2505, %v2506
        %v2514 = vsel %vm922, %v2504, %v2505
        %v2515 = vsel %vm922, %v2503, %v2504
        %v2516 = vsel %vm922, %v2502, %v2503
        %v2517 = vsel %vm922, %v2509, %v2502
        %v2518 = vsel %vm939, %v2517, 0.0
        %v2519 = vsel %vm940, %v2516, 0.0
        %v2520 = vsel %vm941, %v2515, 0.0
        %v2521 = vsel %vm942, %v2514, 0.0
        %v2522 = vsel %vm943, %v2513, 0.0
        %v2523 = vsel %vm944, %v2512, 0.0
        %v2524 = vsel %vm945, %v2511, 0.0
        %v2525 = vsel %vm946, %v2510, 0.0
        %v2526 = vpack.c.bf16 %v2518, %v2518
        %v2527 = vpack.c.bf16 %v2519, %v2519
        %v2528 = vpack.c.bf16 %v2520, %v2520
        %v2529 = vpack.c.bf16 %v2521, %v2521
        %v2530 = vpack.c.bf16 %v2522, %v2522
        %v2531 = vpack.c.bf16 %v2523, %v2523
        %v2532 = vpack.c.bf16 %v2524, %v2524
        %v2533 = vpack.c.bf16 %v2525, %v2525
        %v2534 = vsel %vm971, %v2469, 0.0
        %v2535 = vsel %vm972, %v2468, 0.0
        %v2536 = vsel %vm973, %v2467, 0.0
        %v2537 = vsel %vm974, %v2466, 0.0
        %v2538 = vsel %vm975, %v2465, 0.0
        %v2539 = vsel %vm976, %v2464, 0.0
        %v2540 = vsel %vm977, %v2463, 0.0
        %v2541 = vsel %vm978, %v2462, 0.0
        %v2542 = vpack.c.bf16 %v2534, %v2534
        %v2543 = vpack.c.bf16 %v2535, %v2535
        %v2544 = vpack.c.bf16 %v2536, %v2536
        %v2545 = vpack.c.bf16 %v2537, %v2537
        %v2546 = vpack.c.bf16 %v2538, %v2538
        %v2547 = vpack.c.bf16 %v2539, %v2539
        %v2548 = vpack.c.bf16 %v2540, %v2540
        %v2549 = vpack.c.bf16 %v2541, %v2541
        %v2550 = vpack.c.bf16 %v2445, %v2445
        %v2551 = vpack.c.bf16 %v2446, %v2446
        %v2552 = vpack.c.bf16 %v2447, %v2447
        %v2553 = vpack.c.bf16 %v2448, %v2448
        %v2554 = vpack.c.bf16 %v2449, %v2449
        %v2555 = vpack.c.bf16 %v2450, %v2450
        %v2556 = vpack.c.bf16 %v2451, %v2451
        %v2557 = vpack.c.bf16 %v2452, %v2452
        %v2558 = vsel %vm1011, %v2516, 0.0
        %v2559 = vsel %vm1012, %v2515, 0.0
        %v2560 = vsel %vm1013, %v2514, 0.0
        %v2561 = vsel %vm1014, %v2513, 0.0
        %v2562 = vsel %vm1015, %v2512, 0.0
        %v2563 = vsel %vm1016, %v2511, 0.0
        %v2564 = vsel %vm1017, %v2510, 0.0
        %v2565 = vsel %vm1018, %v2517, 0.0
        %v2566 = vpack.c.bf16 %v2558, %v2558
        %v2567 = vpack.c.bf16 %v2559, %v2559
        %v2568 = vpack.c.bf16 %v2560, %v2560
        %v2569 = vpack.c.bf16 %v2561, %v2561
        %v2570 = vpack.c.bf16 %v2562, %v2562
        %v2571 = vpack.c.bf16 %v2563, %v2563
        %v2572 = vpack.c.bf16 %v2564, %v2564
        %v2573 = vpack.c.bf16 %v2565, %v2565
        %v2574 = vsel %vm1043, %v2468, 0.0
        %v2575 = vsel %vm1044, %v2467, 0.0
        %v2576 = vsel %vm1045, %v2466, 0.0
        %v2577 = vsel %vm1046, %v2465, 0.0
        %v2578 = vsel %vm1047, %v2464, 0.0
        %v2579 = vsel %vm1048, %v2463, 0.0
        %v2580 = vsel %vm1049, %v2462, 0.0
        %v2581 = vsel %vm1050, %v2469, 0.0
        %v2582 = vpack.c.bf16 %v2574, %v2574
        %v2583 = vpack.c.bf16 %v2575, %v2575
        %v2584 = vpack.c.bf16 %v2576, %v2576
        %v2585 = vpack.c.bf16 %v2577, %v2577
        %v2586 = vpack.c.bf16 %v2578, %v2578
        %v2587 = vpack.c.bf16 %v2579, %v2579
        %v2588 = vpack.c.bf16 %v2580, %v2580
        %v2589 = vpack.c.bf16 %v2581, %v2581
        %v2590 = vsel %vm1075, %v2446, 0.0
        %v2591 = vsel %vm1076, %v2447, 0.0
        %v2592 = vsel %vm1077, %v2448, 0.0
        %v2593 = vsel %vm1078, %v2449, 0.0
        %v2594 = vsel %vm1079, %v2450, 0.0
        %v2595 = vsel %vm1080, %v2451, 0.0
        %v2596 = vsel %vm1081, %v2452, 0.0
        %v2597 = vsel %vm1082, %v2445, 0.0
        %v2598 = vpack.c.bf16 %v2590, %v2590
        %v2599 = vpack.c.bf16 %v2591, %v2591
        %v2600 = vpack.c.bf16 %v2592, %v2592
        %v2601 = vpack.c.bf16 %v2593, %v2593
        %v2602 = vpack.c.bf16 %v2594, %v2594
        %v2603 = vpack.c.bf16 %v2595, %v2595
        %v2604 = vpack.c.bf16 %v2596, %v2596
        %v2605 = vpack.c.bf16 %v2597, %v2597
        %v2606 = vsel %vm1107, %v2515, 0.0
        %v2607 = vsel %vm1108, %v2514, 0.0
        %v2608 = vsel %vm1109, %v2513, 0.0
        %v2609 = vsel %vm1110, %v2512, 0.0
        %v2610 = vsel %vm1111, %v2511, 0.0
        %v2611 = vsel %vm1112, %v2510, 0.0
        %v2612 = vsel %vm1113, %v2517, 0.0
        %v2613 = vsel %vm1114, %v2516, 0.0
        %v2614 = vpack.c.bf16 %v2606, %v2606
        %v2615 = vpack.c.bf16 %v2607, %v2607
        %v2616 = vpack.c.bf16 %v2608, %v2608
        %v2617 = vpack.c.bf16 %v2609, %v2609
        %v2618 = vpack.c.bf16 %v2610, %v2610
        %v2619 = vpack.c.bf16 %v2611, %v2611
        %v2620 = vpack.c.bf16 %v2612, %v2612
        %v2621 = vpack.c.bf16 %v2613, %v2613
        %v2630 = vunpack.c.l.b16 %v2478
        %v2631 = vunpack.c.l.b16 %v2479
        %v2632 = vunpack.c.l.b16 %v2480
        %v2633 = vunpack.c.l.b16 %v2481
        %v2634 = vunpack.c.l.b16 %v2482
        %v2635 = vunpack.c.l.b16 %v2483
        %v2636 = vunpack.c.l.b16 %v2484
        %v2637 = vunpack.c.l.b16 %v2485
        %v2638 = vpack.c.b16 %v2631, %v2630
        %v2639 = vpack.c.b16 %v2633, %v2632
        %v2640 = vpack.c.b16 %v2635, %v2634
        %v2641 = vpack.c.b16 %v2637, %v2636
        %v2654 = vunpack.c.l.b16 %v2494
        %v2655 = vunpack.c.l.b16 %v2495
        %v2656 = vunpack.c.l.b16 %v2496
        %v2657 = vunpack.c.l.b16 %v2497
        %v2658 = vunpack.c.l.b16 %v2498
        %v2659 = vunpack.c.l.b16 %v2499
        %v2660 = vunpack.c.l.b16 %v2500
        %v2661 = vunpack.c.l.b16 %v2501
        %v2662 = vpack.c.b16 %v2655, %v2654
        %v2663 = vpack.c.b16 %v2657, %v2656
        %v2664 = vpack.c.b16 %v2659, %v2658
        %v2665 = vpack.c.b16 %v2661, %v2660
        %v2678 = vunpack.c.l.b16 %v2526
        %v2679 = vunpack.c.l.b16 %v2527
        %v2680 = vunpack.c.l.b16 %v2528
        %v2681 = vunpack.c.l.b16 %v2529
        %v2682 = vunpack.c.l.b16 %v2530
        %v2683 = vunpack.c.l.b16 %v2531
        %v2684 = vunpack.c.l.b16 %v2532
        %v2685 = vunpack.c.l.b16 %v2533
        %v2686 = vpack.c.b16 %v2679, %v2678
        %v2687 = vpack.c.b16 %v2681, %v2680
        %v2688 = vpack.c.b16 %v2683, %v2682
        %v2689 = vpack.c.b16 %v2685, %v2684
        %v2702 = vunpack.c.l.b16 %v2542
        %v2703 = vunpack.c.l.b16 %v2543
        %v2704 = vunpack.c.l.b16 %v2544
        %v2705 = vunpack.c.l.b16 %v2545
        %v2706 = vunpack.c.l.b16 %v2546
        %v2707 = vunpack.c.l.b16 %v2547
        %v2708 = vunpack.c.l.b16 %v2548
        %v2709 = vunpack.c.l.b16 %v2549
        %v2710 = vpack.c.b16 %v2703, %v2702
        %v2711 = vpack.c.b16 %v2705, %v2704
        %v2712 = vpack.c.b16 %v2707, %v2706
        %v2713 = vpack.c.b16 %v2709, %v2708
        %v2726 = vunpack.c.l.b16 %v2550
        %v2727 = vunpack.c.l.b16 %v2551
        %v2728 = vunpack.c.l.b16 %v2552
        %v2729 = vunpack.c.l.b16 %v2553
        %v2730 = vunpack.c.l.b16 %v2554
        %v2731 = vunpack.c.l.b16 %v2555
        %v2732 = vunpack.c.l.b16 %v2556
        %v2733 = vunpack.c.l.b16 %v2557
        %v2734 = vpack.c.b16 %v2727, %v2726
        %v2735 = vpack.c.b16 %v2729, %v2728
        %v2736 = vpack.c.b16 %v2731, %v2730
        %v2737 = vpack.c.b16 %v2733, %v2732
        %v2750 = vunpack.c.l.b16 %v2566
        %v2751 = vunpack.c.l.b16 %v2567
        %v2752 = vunpack.c.l.b16 %v2568
        %v2753 = vunpack.c.l.b16 %v2569
        %v2754 = vunpack.c.l.b16 %v2570
        %v2755 = vunpack.c.l.b16 %v2571
        %v2756 = vunpack.c.l.b16 %v2572
        %v2757 = vunpack.c.l.b16 %v2573
        %v2758 = vpack.c.b16 %v2751, %v2750
        %v2759 = vpack.c.b16 %v2753, %v2752
        %v2760 = vpack.c.b16 %v2755, %v2754
        %v2761 = vpack.c.b16 %v2757, %v2756
        %v2774 = vunpack.c.l.b16 %v2582
        %v2775 = vunpack.c.l.b16 %v2583
        %v2776 = vunpack.c.l.b16 %v2584
        %v2777 = vunpack.c.l.b16 %v2585
        %v2778 = vunpack.c.l.b16 %v2586
        %v2779 = vunpack.c.l.b16 %v2587
        %v2780 = vunpack.c.l.b16 %v2588
        %v2781 = vunpack.c.l.b16 %v2589
        %v2782 = vpack.c.b16 %v2775, %v2774
        %v2783 = vpack.c.b16 %v2777, %v2776
        %v2784 = vpack.c.b16 %v2779, %v2778
        %v2785 = vpack.c.b16 %v2781, %v2780
        %v2798 = vunpack.c.l.b16 %v2598
        %v2799 = vunpack.c.l.b16 %v2599
        %v2800 = vunpack.c.l.b16 %v2600
        %v2801 = vunpack.c.l.b16 %v2601
        %v2802 = vunpack.c.l.b16 %v2602
        %v2803 = vunpack.c.l.b16 %v2603
        %v2804 = vunpack.c.l.b16 %v2604
        %v2805 = vunpack.c.l.b16 %v2605
        %v2806 = vpack.c.b16 %v2799, %v2798
        %v2807 = vpack.c.b16 %v2801, %v2800
        %v2808 = vpack.c.b16 %v2803, %v2802
        %v2809 = vpack.c.b16 %v2805, %v2804
        %v2822 = vunpack.c.l.b16 %v2614
        %v2823 = vunpack.c.l.b16 %v2615
        %v2824 = vunpack.c.l.b16 %v2616
        %v2825 = vunpack.c.l.b16 %v2617
        %v2826 = vunpack.c.l.b16 %v2618
        %v2827 = vunpack.c.l.b16 %v2619
        %v2828 = vunpack.c.l.b16 %v2620
        %v2829 = vunpack.c.l.b16 %v2621
        %v2830 = vpack.c.b16 %v2823, %v2822
        %v2831 = vpack.c.b16 %v2825, %v2824
        %v2832 = vpack.c.b16 %v2827, %v2826
        %v2833 = vpack.c.b16 %v2829, %v2828
        %s2838 = scalar_lea.vmem [#allocation4], 576
        %v2839 = vld [vmem:[%s2838] sm:$0xf]
        %v2840 = vld [vmem:[%s2838 + $0x4] sm:$0xf]
        %v2841 = vld [vmem:[%s2838 + $0x8] sm:$0xf]
        %v2842 = vld [vmem:[%s2838 + $0xc] sm:$0xf]
        %v2843 = vld [vmem:[%s2838 + $0x10] sm:$0xf]
        %v2844 = vld [vmem:[%s2838 + $0x14] sm:$0xf]
        %v2845 = vld [vmem:[%s2838 + $0x18] sm:$0xf]
        %v2846 = vld [vmem:[%s2838 + $0x1c] sm:$0xf]
        %v2847 = vld [vmem:[%s2838 + $0x20] sm:$0xf]
        %v2848 = vld [vmem:[%s2838 + $0x24] sm:$0xf]
        %v2849 = vld [vmem:[%s2838 + $0x28] sm:$0xf]
        %v2850 = vld [vmem:[%s2838 + $0x2c] sm:$0xf]
        %v2851 = vld [vmem:[%s2838 + $0x30] sm:$0xf]
        %v2852 = vld [vmem:[%s2838 + $0x34] sm:$0xf]
        %v2853 = vld [vmem:[%s2838 + $0x38] sm:$0xf]
        %v2854 = vld [vmem:[%s2838 + $0x3c] sm:$0xf]
        %v2855 = vld [vmem:[%s2838 + $0x40] sm:$0xf]
        %v2856 = vld [vmem:[%s2838 + $0x44] sm:$0xf]
        %v2857 = vld [vmem:[%s2838 + $0x48] sm:$0xf]
        %v2858 = vld [vmem:[%s2838 + $0x4c] sm:$0xf]
        %v2859 = vld [vmem:[%s2838 + $0x50] sm:$0xf]
        %v2860 = vld [vmem:[%s2838 + $0x54] sm:$0xf]
        %v2861 = vld [vmem:[%s2838 + $0x58] sm:$0xf]
        %v2862 = vld [vmem:[%s2838 + $0x5c] sm:$0xf]
        %v2863 = vld [vmem:[%s2838 + $0x60] sm:$0xf]
        %v2864 = vld [vmem:[%s2838 + $0x64] sm:$0xf]
        %v2865 = vld [vmem:[%s2838 + $0x68] sm:$0xf]
        %v2866 = vld [vmem:[%s2838 + $0x6c] sm:$0xf]
        %v2867 = vld [vmem:[%s2838 + $0x70] sm:$0xf]
        %v2868 = vld [vmem:[%s2838 + $0x74] sm:$0xf]
        %v2869 = vld [vmem:[%s2838 + $0x78] sm:$0xf]
        %v2870 = vld [vmem:[%s2838 + $0x7c] sm:$0xf]
        %v2871 = vld [vmem:[%s2838 + $0x80] sm:$0xf]
        %v2872 = vld [vmem:[%s2838 + $0x84] sm:$0xf]
        %v2873 = vld [vmem:[%s2838 + $0x88] sm:$0xf]
        %v2874 = vld [vmem:[%s2838 + $0x8c] sm:$0xf]
        %v2875 = vld [vmem:[%s2838 + $0x90] sm:$0xf]
        %v2876 = vld [vmem:[%s2838 + $0x94] sm:$0xf]
        %v2877 = vld [vmem:[%s2838 + $0x98] sm:$0xf]
        %v2878 = vld [vmem:[%s2838 + $0x9c] sm:$0xf]
        %v2879 = vld [vmem:[%s2838 + $0xa0] sm:$0xf]
        %v2880 = vld [vmem:[%s2838 + $0xa4] sm:$0xf]
        %v2881 = vld [vmem:[%s2838 + $0xa8] sm:$0xf]
        %v2882 = vld [vmem:[%s2838 + $0xac] sm:$0xf]
        %v2883 = vld [vmem:[%s2838 + $0xb0] sm:$0xf]
        %v2884 = vld [vmem:[%s2838 + $0xb4] sm:$0xf]
        %v2885 = vld [vmem:[%s2838 + $0xb8] sm:$0xf]
        %v2886 = vld [vmem:[%s2838 + $0xbc] sm:$0xf]
        %v2887 = vld [vmem:[%s2838 + $0xc0] sm:$0xf]
        %v2888 = vld [vmem:[%s2838 + $0xc4] sm:$0xf]
        %v2889 = vld [vmem:[%s2838 + $0xc8] sm:$0xf]
        %v2890 = vld [vmem:[%s2838 + $0xcc] sm:$0xf]
        %v2891 = vld [vmem:[%s2838 + $0xd0] sm:$0xf]
        %v2892 = vld [vmem:[%s2838 + $0xd4] sm:$0xf]
        %v2893 = vld [vmem:[%s2838 + $0xd8] sm:$0xf]
        %v2894 = vld [vmem:[%s2838 + $0xdc] sm:$0xf]
        %v2895 = vld [vmem:[%s2838 + $0xe0] sm:$0xf]
        %v2896 = vld [vmem:[%s2838 + $0xe4] sm:$0xf]
        %v2897 = vld [vmem:[%s2838 + $0xe8] sm:$0xf]
        %v2898 = vld [vmem:[%s2838 + $0xec] sm:$0xf]
        %v2899 = vld [vmem:[%s2838 + $0xf0] sm:$0xf]
        %v2900 = vld [vmem:[%s2838 + $0xf4] sm:$0xf]
        %v2901 = vld [vmem:[%s2838 + $0xf8] sm:$0xf]
        %v2902 = vld [vmem:[%s2838 + $0xfc] sm:$0xf]
        %v2903 = vld [vmem:[%s2838 + $0x100] sm:$0xf]
        %v2904 = vld [vmem:[%s2838 + $0x104] sm:$0xf]
        %v2905 = vld [vmem:[%s2838 + $0x108] sm:$0xf]
        %v2906 = vld [vmem:[%s2838 + $0x10c] sm:$0xf]
        %v2907 = vld [vmem:[%s2838 + $0x110] sm:$0xf]
        %v2908 = vld [vmem:[%s2838 + $0x114] sm:$0xf]
        %v2909 = vld [vmem:[%s2838 + $0x118] sm:$0xf]
        %v2910 = vld [vmem:[%s2838 + $0x11c] sm:$0xf]
        %v2911 = vld [vmem:[%s2838 + $0x120] sm:$0xf]
        %v2912 = vld [vmem:[%s2838 + $0x124] sm:$0xf]
        %v2913 = vld [vmem:[%s2838 + $0x128] sm:$0xf]
        %v2914 = vld [vmem:[%s2838 + $0x12c] sm:$0xf]
        %v2915 = vld [vmem:[%s2838 + $0x130] sm:$0xf]
        %v2916 = vld [vmem:[%s2838 + $0x134] sm:$0xf]
        %v2917 = vld [vmem:[%s2838 + $0x138] sm:$0xf]
        %v2918 = vld [vmem:[%s2838 + $0x13c] sm:$0xf]
        %v2919 = vld [vmem:[%s2838 + $0x140] sm:$0xf]
        %v2920 = vld [vmem:[%s2838 + $0x144] sm:$0xf]
        %v2921 = vld [vmem:[%s2838 + $0x148] sm:$0xf]
        %v2922 = vld [vmem:[%s2838 + $0x14c] sm:$0xf]
        %v2923 = vld [vmem:[%s2838 + $0x150] sm:$0xf]
        %v2924 = vld [vmem:[%s2838 + $0x154] sm:$0xf]
        %v2925 = vld [vmem:[%s2838 + $0x158] sm:$0xf]
        %v2926 = vld [vmem:[%s2838 + $0x15c] sm:$0xf]
        %v2927 = vld [vmem:[%s2838 + $0x160] sm:$0xf]
        %v2928 = vld [vmem:[%s2838 + $0x164] sm:$0xf]
        %v2929 = vld [vmem:[%s2838 + $0x168] sm:$0xf]
        %v2930 = vld [vmem:[%s2838 + $0x16c] sm:$0xf]
        %v2931 = vld [vmem:[%s2838 + $0x170] sm:$0xf]
        %v2932 = vld [vmem:[%s2838 + $0x174] sm:$0xf]
        %v2933 = vld [vmem:[%s2838 + $0x178] sm:$0xf]
        %v2934 = vld [vmem:[%s2838 + $0x17c] sm:$0xf]
        %v2935 = vld [vmem:[%s2838 + $0x180] sm:$0xf]
        %v2936 = vld [vmem:[%s2838 + $0x184] sm:$0xf]
        %v2937 = vld [vmem:[%s2838 + $0x188] sm:$0xf]
        %v2938 = vld [vmem:[%s2838 + $0x18c] sm:$0xf]
        %v2939 = vld [vmem:[%s2838 + $0x190] sm:$0xf]
        %v2940 = vld [vmem:[%s2838 + $0x194] sm:$0xf]
        %v2941 = vld [vmem:[%s2838 + $0x198] sm:$0xf]
        %v2942 = vld [vmem:[%s2838 + $0x19c] sm:$0xf]
        %v2943 = vld [vmem:[%s2838 + $0x1a0] sm:$0xf]
        %v2944 = vld [vmem:[%s2838 + $0x1a4] sm:$0xf]
        %v2945 = vld [vmem:[%s2838 + $0x1a8] sm:$0xf]
        %v2946 = vld [vmem:[%s2838 + $0x1ac] sm:$0xf]
        %v2947 = vld [vmem:[%s2838 + $0x1b0] sm:$0xf]
        %v2948 = vld [vmem:[%s2838 + $0x1b4] sm:$0xf]
        %v2949 = vld [vmem:[%s2838 + $0x1b8] sm:$0xf]
        %v2950 = vld [vmem:[%s2838 + $0x1bc] sm:$0xf]
        %v2951 = vld [vmem:[%s2838 + $0x1c0] sm:$0xf]
        %v2952 = vld [vmem:[%s2838 + $0x1c4] sm:$0xf]
        %v2953 = vld [vmem:[%s2838 + $0x1c8] sm:$0xf]
        %v2954 = vld [vmem:[%s2838 + $0x1cc] sm:$0xf]
        %v2955 = vld [vmem:[%s2838 + $0x1d0] sm:$0xf]
        %v2956 = vld [vmem:[%s2838 + $0x1d4] sm:$0xf]
        %v2957 = vld [vmem:[%s2838 + $0x1d8] sm:$0xf]
        %v2958 = vld [vmem:[%s2838 + $0x1dc] sm:$0xf]
        %v2959 = vld [vmem:[%s2838 + $0x1e0] sm:$0xf]
        %v2960 = vld [vmem:[%s2838 + $0x1e4] sm:$0xf]
        %v2961 = vld [vmem:[%s2838 + $0x1e8] sm:$0xf]
        %v2962 = vld [vmem:[%s2838 + $0x1ec] sm:$0xf]
        %v2963 = vld [vmem:[%s2838 + $0x1f0] sm:$0xf]
        %v2964 = vld [vmem:[%s2838 + $0x1f4] sm:$0xf]
        %v2965 = vld [vmem:[%s2838 + $0x1f8] sm:$0xf]
        %v2966 = vld [vmem:[%s2838 + $0x1fc] sm:$0xf]
        %v2967 = vld [vmem:[%s2838 + $0x200] sm:$0xf]
        %v2968 = vld [vmem:[%s2838 + $0x204] sm:$0xf]
        %v2969 = vld [vmem:[%s2838 + $0x208] sm:$0xf]
        %v2970 = vld [vmem:[%s2838 + $0x20c] sm:$0xf]
        %v2971 = vld [vmem:[%s2838 + $0x210] sm:$0xf]
        %v2972 = vld [vmem:[%s2838 + $0x214] sm:$0xf]
        %v2973 = vld [vmem:[%s2838 + $0x218] sm:$0xf]
        %v2974 = vld [vmem:[%s2838 + $0x21c] sm:$0xf]
        %v2975 = vld [vmem:[%s2838 + $0x220] sm:$0xf]
        %v2976 = vld [vmem:[%s2838 + $0x224] sm:$0xf]
        %v2977 = vld [vmem:[%s2838 + $0x228] sm:$0xf]
        %v2978 = vld [vmem:[%s2838 + $0x22c] sm:$0xf]
        %v2979 = vld [vmem:[%s2838 + $0x230] sm:$0xf]
        %v2980 = vld [vmem:[%s2838 + $0x234] sm:$0xf]
        %v2981 = vld [vmem:[%s2838 + $0x238] sm:$0xf]
        %v2982 = vld [vmem:[%s2838 + $0x23c] sm:$0xf]
        %v2983 = vperm.slane %v2453, 0
        %v3128 = vunpack.c.l.b16 %v2839
        %v3129 = vunpack.c.l.b16 %v2840
        %v3130 = vunpack.c.l.b16 %v2841
        %v3131 = vunpack.c.l.b16 %v2842
        %v3132 = vunpack.c.l.b16 %v2843
        %v3133 = vunpack.c.l.b16 %v2844
        %v3134 = vunpack.c.l.b16 %v2845
        %v3135 = vunpack.c.l.b16 %v2846
        %v3136 = vunpack.c.l.b16 %v2847
        %v3137 = vunpack.c.l.b16 %v2848
        %v3138 = vunpack.c.l.b16 %v2849
        %v3139 = vunpack.c.l.b16 %v2850
        %v3140 = vunpack.c.l.b16 %v2851
        %v3141 = vunpack.c.l.b16 %v2852
        %v3142 = vunpack.c.l.b16 %v2853
        %v3143 = vunpack.c.l.b16 %v2854
        %v3144 = vunpack.c.l.b16 %v2855
        %v3145 = vunpack.c.l.b16 %v2856
        %v3146 = vunpack.c.l.b16 %v2857
        %v3147 = vunpack.c.l.b16 %v2858
        %v3148 = vunpack.c.l.b16 %v2859
        %v3149 = vunpack.c.l.b16 %v2860
        %v3150 = vunpack.c.l.b16 %v2861
        %v3151 = vunpack.c.l.b16 %v2862
        %v3152 = vunpack.c.l.b16 %v2863
        %v3153 = vunpack.c.l.b16 %v2864
        %v3154 = vunpack.c.l.b16 %v2865
        %v3155 = vunpack.c.l.b16 %v2866
        %v3156 = vunpack.c.l.b16 %v2867
        %v3157 = vunpack.c.l.b16 %v2868
        %v3158 = vunpack.c.l.b16 %v2869
        %v3159 = vunpack.c.l.b16 %v2870
        %v3160 = vunpack.c.l.b16 %v2871
        %v3161 = vunpack.c.l.b16 %v2872
        %v3162 = vunpack.c.l.b16 %v2873
        %v3163 = vunpack.c.l.b16 %v2874
        %v3164 = vunpack.c.l.b16 %v2875
        %v3165 = vunpack.c.l.b16 %v2876
        %v3166 = vunpack.c.l.b16 %v2877
        %v3167 = vunpack.c.l.b16 %v2878
        %v3168 = vunpack.c.l.b16 %v2879
        %v3169 = vunpack.c.l.b16 %v2880
        %v3170 = vunpack.c.l.b16 %v2881
        %v3171 = vunpack.c.l.b16 %v2882
        %v3172 = vunpack.c.l.b16 %v2883
        %v3173 = vunpack.c.l.b16 %v2884
        %v3174 = vunpack.c.l.b16 %v2885
        %v3175 = vunpack.c.l.b16 %v2886
        %v3176 = vunpack.c.l.b16 %v2887
        %v3177 = vunpack.c.l.b16 %v2888
        %v3178 = vunpack.c.l.b16 %v2889
        %v3179 = vunpack.c.l.b16 %v2890
        %v3180 = vunpack.c.l.b16 %v2891
        %v3181 = vunpack.c.l.b16 %v2892
        %v3182 = vunpack.c.l.b16 %v2893
        %v3183 = vunpack.c.l.b16 %v2894
        %v3184 = vunpack.c.l.b16 %v2895
        %v3185 = vunpack.c.l.b16 %v2896
        %v3186 = vunpack.c.l.b16 %v2897
        %v3187 = vunpack.c.l.b16 %v2898
        %v3188 = vunpack.c.l.b16 %v2899
        %v3189 = vunpack.c.l.b16 %v2900
        %v3190 = vunpack.c.l.b16 %v2901
        %v3191 = vunpack.c.l.b16 %v2902
        %v3192 = vunpack.c.l.b16 %v2903
        %v3193 = vunpack.c.l.b16 %v2904
        %v3194 = vunpack.c.l.b16 %v2905
        %v3195 = vunpack.c.l.b16 %v2906
        %v3196 = vunpack.c.l.b16 %v2907
        %v3197 = vunpack.c.l.b16 %v2908
        %v3198 = vunpack.c.l.b16 %v2909
        %v3199 = vunpack.c.l.b16 %v2910
        %v3200 = vunpack.c.l.b16 %v2911
        %v3201 = vunpack.c.l.b16 %v2912
        %v3202 = vunpack.c.l.b16 %v2913
        %v3203 = vunpack.c.l.b16 %v2914
        %v3204 = vunpack.c.l.b16 %v2915
        %v3205 = vunpack.c.l.b16 %v2916
        %v3206 = vunpack.c.l.b16 %v2917
        %v3207 = vunpack.c.l.b16 %v2918
        %v3208 = vunpack.c.l.b16 %v2919
        %v3209 = vunpack.c.l.b16 %v2920
        %v3210 = vunpack.c.l.b16 %v2921
        %v3211 = vunpack.c.l.b16 %v2922
        %v3212 = vunpack.c.l.b16 %v2923
        %v3213 = vunpack.c.l.b16 %v2924
        %v3214 = vunpack.c.l.b16 %v2925
        %v3215 = vunpack.c.l.b16 %v2926
        %v3216 = vunpack.c.l.b16 %v2927
        %v3217 = vunpack.c.l.b16 %v2928
        %v3218 = vunpack.c.l.b16 %v2929
        %v3219 = vunpack.c.l.b16 %v2930
        %v3220 = vunpack.c.l.b16 %v2931
        %v3221 = vunpack.c.l.b16 %v2932
        %v3222 = vunpack.c.l.b16 %v2933
        %v3223 = vunpack.c.l.b16 %v2934
        %v3224 = vunpack.c.l.b16 %v2935
        %v3225 = vunpack.c.l.b16 %v2936
        %v3226 = vunpack.c.l.b16 %v2937
        %v3227 = vunpack.c.l.b16 %v2938
        %v3228 = vunpack.c.l.b16 %v2939
        %v3229 = vunpack.c.l.b16 %v2940
        %v3230 = vunpack.c.l.b16 %v2941
        %v3231 = vunpack.c.l.b16 %v2942
        %v3232 = vunpack.c.l.b16 %v2943
        %v3233 = vunpack.c.l.b16 %v2944
        %v3234 = vunpack.c.l.b16 %v2945
        %v3235 = vunpack.c.l.b16 %v2946
        %v3236 = vunpack.c.l.b16 %v2947
        %v3237 = vunpack.c.l.b16 %v2948
        %v3238 = vunpack.c.l.b16 %v2949
        %v3239 = vunpack.c.l.b16 %v2950
        %v3240 = vunpack.c.l.b16 %v2951
        %v3241 = vunpack.c.l.b16 %v2952
        %v3242 = vunpack.c.l.b16 %v2953
        %v3243 = vunpack.c.l.b16 %v2954
        %v3244 = vunpack.c.l.b16 %v2955
        %v3245 = vunpack.c.l.b16 %v2956
        %v3246 = vunpack.c.l.b16 %v2957
        %v3247 = vunpack.c.l.b16 %v2958
        %v3248 = vunpack.c.l.b16 %v2959
        %v3249 = vunpack.c.l.b16 %v2960
        %v3250 = vunpack.c.l.b16 %v2961
        %v3251 = vunpack.c.l.b16 %v2962
        %v3252 = vunpack.c.l.b16 %v2963
        %v3253 = vunpack.c.l.b16 %v2964
        %v3254 = vunpack.c.l.b16 %v2965
        %v3255 = vunpack.c.l.b16 %v2966
        %v3256 = vunpack.c.l.b16 %v2967
        %v3257 = vunpack.c.l.b16 %v2968
        %v3258 = vunpack.c.l.b16 %v2969
        %v3259 = vunpack.c.l.b16 %v2970
        %v3260 = vunpack.c.l.b16 %v2971
        %v3261 = vunpack.c.l.b16 %v2972
        %v3262 = vunpack.c.l.b16 %v2973
        %v3263 = vunpack.c.l.b16 %v2974
        %v3264 = vunpack.c.l.b16 %v2975
        %v3265 = vunpack.c.l.b16 %v2976
        %v3266 = vunpack.c.l.b16 %v2977
        %v3267 = vunpack.c.l.b16 %v2978
        %v3268 = vunpack.c.l.b16 %v2979
        %v3269 = vunpack.c.l.b16 %v2980
        %v3270 = vunpack.c.l.b16 %v2981
        %v3271 = vunpack.c.l.b16 %v2982
        %v3272 = vpack.c.b16 %v3129, %v3128
        %v3273 = vpack.c.b16 %v3131, %v3130
        %v3274 = vpack.c.b16 %v3133, %v3132
        %v3275 = vpack.c.b16 %v3135, %v3134
        %v3276 = vpack.c.b16 %v3137, %v3136
        %v3277 = vpack.c.b16 %v3139, %v3138
        %v3278 = vpack.c.b16 %v3141, %v3140
        %v3279 = vpack.c.b16 %v3143, %v3142
        %v3280 = vpack.c.b16 %v3145, %v3144
        %v3281 = vpack.c.b16 %v3147, %v3146
        %v3282 = vpack.c.b16 %v3149, %v3148
        %v3283 = vpack.c.b16 %v3151, %v3150
        %v3284 = vpack.c.b16 %v3153, %v3152
        %v3285 = vpack.c.b16 %v3155, %v3154
        %v3286 = vpack.c.b16 %v3157, %v3156
        %v3287 = vpack.c.b16 %v3159, %v3158
        %v3288 = vpack.c.b16 %v3161, %v3160
        %v3289 = vpack.c.b16 %v3163, %v3162
        %v3290 = vpack.c.b16 %v3165, %v3164
        %v3291 = vpack.c.b16 %v3167, %v3166
        %v3292 = vpack.c.b16 %v3169, %v3168
        %v3293 = vpack.c.b16 %v3171, %v3170
        %v3294 = vpack.c.b16 %v3173, %v3172
        %v3295 = vpack.c.b16 %v3175, %v3174
        %v3296 = vpack.c.b16 %v3177, %v3176
        %v3297 = vpack.c.b16 %v3179, %v3178
        %v3298 = vpack.c.b16 %v3181, %v3180
        %v3299 = vpack.c.b16 %v3183, %v3182
        %v3300 = vpack.c.b16 %v3185, %v3184
        %v3301 = vpack.c.b16 %v3187, %v3186
        %v3302 = vpack.c.b16 %v3189, %v3188
        %v3303 = vpack.c.b16 %v3191, %v3190
        %v3304 = vpack.c.b16 %v3193, %v3192
        %v3305 = vpack.c.b16 %v3195, %v3194
        %v3306 = vpack.c.b16 %v3197, %v3196
        %v3307 = vpack.c.b16 %v3199, %v3198
        %v3308 = vpack.c.b16 %v3201, %v3200
        %v3309 = vpack.c.b16 %v3203, %v3202
        %v3310 = vpack.c.b16 %v3205, %v3204
        %v3311 = vpack.c.b16 %v3207, %v3206
        %v3312 = vpack.c.b16 %v3209, %v3208
        %v3313 = vpack.c.b16 %v3211, %v3210
        %v3314 = vpack.c.b16 %v3213, %v3212
        %v3315 = vpack.c.b16 %v3215, %v3214
        %v3316 = vpack.c.b16 %v3217, %v3216
        %v3317 = vpack.c.b16 %v3219, %v3218
        %v3318 = vpack.c.b16 %v3221, %v3220
        %v3319 = vpack.c.b16 %v3223, %v3222
        %v3320 = vpack.c.b16 %v3225, %v3224
        %v3321 = vpack.c.b16 %v3227, %v3226
        %v3322 = vpack.c.b16 %v3229, %v3228
        %v3323 = vpack.c.b16 %v3231, %v3230
        %v3324 = vpack.c.b16 %v3233, %v3232
        %v3325 = vpack.c.b16 %v3235, %v3234
        %v3326 = vpack.c.b16 %v3237, %v3236
        %v3327 = vpack.c.b16 %v3239, %v3238
        %v3328 = vpack.c.b16 %v3241, %v3240
        %v3329 = vpack.c.b16 %v3243, %v3242
        %v3330 = vpack.c.b16 %v3245, %v3244
        %v3331 = vpack.c.b16 %v3247, %v3246
        %v3332 = vpack.c.b16 %v3249, %v3248
        %v3333 = vpack.c.b16 %v3251, %v3250
        %v3334 = vpack.c.b16 %v3253, %v3252
        %v3335 = vpack.c.b16 %v3255, %v3254
        %v3336 = vpack.c.b16 %v3257, %v3256
        %v3337 = vpack.c.b16 %v3259, %v3258
        %v3338 = vpack.c.b16 %v3261, %v3260
        %v3339 = vpack.c.b16 %v3263, %v3262
        %v3340 = vpack.c.b16 %v3265, %v3264
        %v3341 = vpack.c.b16 %v3267, %v3266
        %v3342 = vpack.c.b16 %v3269, %v3268
        %v3343 = vpack.c.b16 %v3271, %v3270
        %3416 = vmatpush.bf16.msra.mxu0 %v3279
        %3417 = vmatpush.bf16.msra.mxu0 %v3278
        %3418 = vmatpush.bf16.msra.mxu0 %v3277
        %3419 = vmatpush.bf16.msra.mxu0 %v3276
        %3420 = vmatpush.bf16.msra.mxu0 %v3275
        %3421 = vmatpush.bf16.msra.mxu0 %v3274
        %3422 = vmatpush.bf16.msra.mxu0 %v3273
        %3423 = vmatpush.bf16.msra.mxu0 %v3272
        %3424 = vmatmul.bf16.gmra.mxu0 %v2638
        %v3425 = vpop.f32.mrf.mxu0
        %v3426 = vadd.f32 %v2983, %v3425
        %v3427 = vpop.f32.mrf.mxu0
        %v3428 = vadd.f32 %v2983, %v3427
        %3429 = vmatmul.bf16.gmra.mxu0 %v2639
        %v3430 = vpop.f32.mrf.mxu0
        %v3431 = vadd.f32 %v2983, %v3430
        %v3432 = vpop.f32.mrf.mxu0
        %v3433 = vadd.f32 %v2983, %v3432
        %3434 = vmatmul.bf16.gmra.mxu0 %v2640
        %v3435 = vpop.f32.mrf.mxu0
        %v3436 = vadd.f32 %v2983, %v3435
        %v3437 = vpop.f32.mrf.mxu0
        %v3438 = vadd.f32 %v2983, %v3437
        %3439 = vmatmul.bf16.gmra.mxu0 %v2641
        %v3440 = vpop.f32.mrf.mxu0
        %v3441 = vadd.f32 %v2983, %v3440
        %v3442 = vpop.f32.mrf.mxu0
        %v3443 = vadd.f32 %v2983, %v3442
        %3444 = vdwg.mxu0
        %3445 = vmatpush.bf16.msra.mxu0 %v3287
        %3446 = vmatpush.bf16.msra.mxu0 %v3286
        %3447 = vmatpush.bf16.msra.mxu0 %v3285
        %3448 = vmatpush.bf16.msra.mxu0 %v3284
        %3449 = vmatpush.bf16.msra.mxu0 %v3283
        %3450 = vmatpush.bf16.msra.mxu0 %v3282
        %3451 = vmatpush.bf16.msra.mxu0 %v3281
        %3452 = vmatpush.bf16.msra.mxu0 %v3280
        %3453 = vmatmul.bf16.gmra.mxu0 %v2662
        %v3454 = vpop.f32.mrf.mxu0
        %v3455 = vadd.f32 %v3426, %v3454
        %v3456 = vpop.f32.mrf.mxu0
        %v3457 = vadd.f32 %v3428, %v3456
        %3458 = vmatmul.bf16.gmra.mxu0 %v2663
        %v3459 = vpop.f32.mrf.mxu0
        %v3460 = vadd.f32 %v3431, %v3459
        %v3461 = vpop.f32.mrf.mxu0
        %v3462 = vadd.f32 %v3433, %v3461
        %3463 = vmatmul.bf16.gmra.mxu0 %v2664
        %v3464 = vpop.f32.mrf.mxu0
        %v3465 = vadd.f32 %v3436, %v3464
        %v3466 = vpop.f32.mrf.mxu0
        %v3467 = vadd.f32 %v3438, %v3466
        %3468 = vmatmul.bf16.gmra.mxu0 %v2665
        %v3469 = vpop.f32.mrf.mxu0
        %v3470 = vadd.f32 %v3441, %v3469
        %v3471 = vpop.f32.mrf.mxu0
        %v3472 = vadd.f32 %v3443, %v3471
        %3473 = vdwg.mxu0
        %3474 = vmatpush.bf16.msra.mxu0 %v3295
        %3475 = vmatpush.bf16.msra.mxu0 %v3294
        %3476 = vmatpush.bf16.msra.mxu0 %v3293
        %3477 = vmatpush.bf16.msra.mxu0 %v3292
        %3478 = vmatpush.bf16.msra.mxu0 %v3291
        %3479 = vmatpush.bf16.msra.mxu0 %v3290
        %3480 = vmatpush.bf16.msra.mxu0 %v3289
        %3481 = vmatpush.bf16.msra.mxu0 %v3288
        %3482 = vmatmul.bf16.gmra.mxu0 %v2686
        %v3483 = vpop.f32.mrf.mxu0
        %v3484 = vadd.f32 %v3455, %v3483
        %v3485 = vpop.f32.mrf.mxu0
        %v3486 = vadd.f32 %v3457, %v3485
        %3487 = vmatmul.bf16.gmra.mxu0 %v2687
        %v3488 = vpop.f32.mrf.mxu0
        %v3489 = vadd.f32 %v3460, %v3488
        %v3490 = vpop.f32.mrf.mxu0
        %v3491 = vadd.f32 %v3462, %v3490
        %3492 = vmatmul.bf16.gmra.mxu0 %v2688
        %v3493 = vpop.f32.mrf.mxu0
        %v3494 = vadd.f32 %v3465, %v3493
        %v3495 = vpop.f32.mrf.mxu0
        %v3496 = vadd.f32 %v3467, %v3495
        %3497 = vmatmul.bf16.gmra.mxu0 %v2689
        %v3498 = vpop.f32.mrf.mxu0
        %v3499 = vadd.f32 %v3470, %v3498
        %v3500 = vpop.f32.mrf.mxu0
        %v3501 = vadd.f32 %v3472, %v3500
        %3502 = vdwg.mxu0
        %3503 = vmatpush.bf16.msra.mxu0 %v3303
        %3504 = vmatpush.bf16.msra.mxu0 %v3302
        %3505 = vmatpush.bf16.msra.mxu0 %v3301
        %3506 = vmatpush.bf16.msra.mxu0 %v3300
        %3507 = vmatpush.bf16.msra.mxu0 %v3299
        %3508 = vmatpush.bf16.msra.mxu0 %v3298
        %3509 = vmatpush.bf16.msra.mxu0 %v3297
        %3510 = vmatpush.bf16.msra.mxu0 %v3296
        %3511 = vmatmul.bf16.gmra.mxu0 %v2710
        %v3512 = vpop.f32.mrf.mxu0
        %v3513 = vadd.f32 %v3484, %v3512
        %v3514 = vpop.f32.mrf.mxu0
        %v3515 = vadd.f32 %v3486, %v3514
        %3516 = vmatmul.bf16.gmra.mxu0 %v2711
        %v3517 = vpop.f32.mrf.mxu0
        %v3518 = vadd.f32 %v3489, %v3517
        %v3519 = vpop.f32.mrf.mxu0
        %v3520 = vadd.f32 %v3491, %v3519
        %3521 = vmatmul.bf16.gmra.mxu0 %v2712
        %v3522 = vpop.f32.mrf.mxu0
        %v3523 = vadd.f32 %v3494, %v3522
        %v3524 = vpop.f32.mrf.mxu0
        %v3525 = vadd.f32 %v3496, %v3524
        %3526 = vmatmul.bf16.gmra.mxu0 %v2713
        %v3527 = vpop.f32.mrf.mxu0
        %v3528 = vadd.f32 %v3499, %v3527
        %v3529 = vpop.f32.mrf.mxu0
        %v3530 = vadd.f32 %v3501, %v3529
        %3531 = vdwg.mxu0
        %3532 = vmatpush.bf16.msra.mxu0 %v3311
        %3533 = vmatpush.bf16.msra.mxu0 %v3310
        %3534 = vmatpush.bf16.msra.mxu0 %v3309
        %3535 = vmatpush.bf16.msra.mxu0 %v3308
        %3536 = vmatpush.bf16.msra.mxu0 %v3307
        %3537 = vmatpush.bf16.msra.mxu0 %v3306
        %3538 = vmatpush.bf16.msra.mxu0 %v3305
        %3539 = vmatpush.bf16.msra.mxu0 %v3304
        %3540 = vmatmul.bf16.gmra.mxu0 %v2734
        %v3541 = vpop.f32.mrf.mxu0
        %v3542 = vadd.f32 %v3513, %v3541
        %v3543 = vpop.f32.mrf.mxu0
        %v3544 = vadd.f32 %v3515, %v3543
        %3545 = vmatmul.bf16.gmra.mxu0 %v2735
        %v3546 = vpop.f32.mrf.mxu0
        %v3547 = vadd.f32 %v3518, %v3546
        %v3548 = vpop.f32.mrf.mxu0
        %v3549 = vadd.f32 %v3520, %v3548
        %3550 = vmatmul.bf16.gmra.mxu0 %v2736
        %v3551 = vpop.f32.mrf.mxu0
        %v3552 = vadd.f32 %v3523, %v3551
        %v3553 = vpop.f32.mrf.mxu0
        %v3554 = vadd.f32 %v3525, %v3553
        %3555 = vmatmul.bf16.gmra.mxu0 %v2737
        %v3556 = vpop.f32.mrf.mxu0
        %v3557 = vadd.f32 %v3528, %v3556
        %v3558 = vpop.f32.mrf.mxu0
        %v3559 = vadd.f32 %v3530, %v3558
        %3560 = vdwg.mxu0
        %3561 = vmatpush.bf16.msra.mxu0 %v3319
        %3562 = vmatpush.bf16.msra.mxu0 %v3318
        %3563 = vmatpush.bf16.msra.mxu0 %v3317
        %3564 = vmatpush.bf16.msra.mxu0 %v3316
        %3565 = vmatpush.bf16.msra.mxu0 %v3315
        %3566 = vmatpush.bf16.msra.mxu0 %v3314
        %3567 = vmatpush.bf16.msra.mxu0 %v3313
        %3568 = vmatpush.bf16.msra.mxu0 %v3312
        %3569 = vmatmul.bf16.gmra.mxu0 %v2758
        %v3570 = vpop.f32.mrf.mxu0
        %v3571 = vadd.f32 %v3542, %v3570
        %v3572 = vpop.f32.mrf.mxu0
        %v3573 = vadd.f32 %v3544, %v3572
        %3574 = vmatmul.bf16.gmra.mxu0 %v2759
        %v3575 = vpop.f32.mrf.mxu0
        %v3576 = vadd.f32 %v3547, %v3575
        %v3577 = vpop.f32.mrf.mxu0
        %v3578 = vadd.f32 %v3549, %v3577
        %3579 = vmatmul.bf16.gmra.mxu0 %v2760
        %v3580 = vpop.f32.mrf.mxu0
        %v3581 = vadd.f32 %v3552, %v3580
        %v3582 = vpop.f32.mrf.mxu0
        %v3583 = vadd.f32 %v3554, %v3582
        %3584 = vmatmul.bf16.gmra.mxu0 %v2761
        %v3585 = vpop.f32.mrf.mxu0
        %v3586 = vadd.f32 %v3557, %v3585
        %v3587 = vpop.f32.mrf.mxu0
        %v3588 = vadd.f32 %v3559, %v3587
        %3589 = vdwg.mxu0
        %3590 = vmatpush.bf16.msra.mxu0 %v3327
        %3591 = vmatpush.bf16.msra.mxu0 %v3326
        %3592 = vmatpush.bf16.msra.mxu0 %v3325
        %3593 = vmatpush.bf16.msra.mxu0 %v3324
        %3594 = vmatpush.bf16.msra.mxu0 %v3323
        %3595 = vmatpush.bf16.msra.mxu0 %v3322
        %3596 = vmatpush.bf16.msra.mxu0 %v3321
        %3597 = vmatpush.bf16.msra.mxu0 %v3320
        %3598 = vmatmul.bf16.gmra.mxu0 %v2782
        %v3599 = vpop.f32.mrf.mxu0
        %v3600 = vadd.f32 %v3571, %v3599
        %v3601 = vpop.f32.mrf.mxu0
        %v3602 = vadd.f32 %v3573, %v3601
        %3603 = vmatmul.bf16.gmra.mxu0 %v2783
        %v3604 = vpop.f32.mrf.mxu0
        %v3605 = vadd.f32 %v3576, %v3604
        %v3606 = vpop.f32.mrf.mxu0
        %v3607 = vadd.f32 %v3578, %v3606
        %3608 = vmatmul.bf16.gmra.mxu0 %v2784
        %v3609 = vpop.f32.mrf.mxu0
        %v3610 = vadd.f32 %v3581, %v3609
        %v3611 = vpop.f32.mrf.mxu0
        %v3612 = vadd.f32 %v3583, %v3611
        %3613 = vmatmul.bf16.gmra.mxu0 %v2785
        %v3614 = vpop.f32.mrf.mxu0
        %v3615 = vadd.f32 %v3586, %v3614
        %v3616 = vpop.f32.mrf.mxu0
        %v3617 = vadd.f32 %v3588, %v3616
        %3618 = vdwg.mxu0
        %3619 = vmatpush.bf16.msra.mxu0 %v3335
        %3620 = vmatpush.bf16.msra.mxu0 %v3334
        %3621 = vmatpush.bf16.msra.mxu0 %v3333
        %3622 = vmatpush.bf16.msra.mxu0 %v3332
        %3623 = vmatpush.bf16.msra.mxu0 %v3331
        %3624 = vmatpush.bf16.msra.mxu0 %v3330
        %3625 = vmatpush.bf16.msra.mxu0 %v3329
        %3626 = vmatpush.bf16.msra.mxu0 %v3328
        %3627 = vmatmul.bf16.gmra.mxu0 %v2806
        %v3628 = vpop.f32.mrf.mxu0
        %v3629 = vadd.f32 %v3600, %v3628
        %v3630 = vpop.f32.mrf.mxu0
        %v3631 = vadd.f32 %v3602, %v3630
        %3632 = vmatmul.bf16.gmra.mxu0 %v2807
        %v3633 = vpop.f32.mrf.mxu0
        %v3634 = vadd.f32 %v3605, %v3633
        %v3635 = vpop.f32.mrf.mxu0
        %v3636 = vadd.f32 %v3607, %v3635
        %3637 = vmatmul.bf16.gmra.mxu0 %v2808
        %v3638 = vpop.f32.mrf.mxu0
        %v3639 = vadd.f32 %v3610, %v3638
        %v3640 = vpop.f32.mrf.mxu0
        %v3641 = vadd.f32 %v3612, %v3640
        %3642 = vmatmul.bf16.gmra.mxu0 %v2809
        %v3643 = vpop.f32.mrf.mxu0
        %v3644 = vadd.f32 %v3615, %v3643
        %v3645 = vpop.f32.mrf.mxu0
        %v3646 = vadd.f32 %v3617, %v3645
        %3647 = vdwg.mxu0
        %3648 = vmatpush.bf16.msra.mxu0 %v3343
        %3649 = vmatpush.bf16.msra.mxu0 %v3342
        %3650 = vmatpush.bf16.msra.mxu0 %v3341
        %3651 = vmatpush.bf16.msra.mxu0 %v3340
        %3652 = vmatpush.bf16.msra.mxu0 %v3339
        %3653 = vmatpush.bf16.msra.mxu0 %v3338
        %3654 = vmatpush.bf16.msra.mxu0 %v3337
        %3655 = vmatpush.bf16.msra.mxu0 %v3336
        %3656 = vmatmul.bf16.gmra.mxu0 %v2830
        %v3657 = vpop.f32.mrf.mxu0
        %v3658 = vadd.f32 %v3629, %v3657
        %v3659 = vpop.f32.mrf.mxu0
        %v3660 = vadd.f32 %v3631, %v3659
        %3661 = vmatmul.bf16.gmra.mxu0 %v2831
        %v3662 = vpop.f32.mrf.mxu0
        %v3663 = vadd.f32 %v3634, %v3662
        %v3664 = vpop.f32.mrf.mxu0
        %v3665 = vadd.f32 %v3636, %v3664
        %3666 = vmatmul.bf16.gmra.mxu0 %v2832
        %v3667 = vpop.f32.mrf.mxu0
        %v3668 = vadd.f32 %v3639, %v3667
        %v3669 = vpop.f32.mrf.mxu0
        %v3670 = vadd.f32 %v3641, %v3669
        %3671 = vmatmul.bf16.gmra.mxu0 %v2833
        %v3672 = vpop.f32.mrf.mxu0
        %v3673 = vadd.f32 %v3644, %v3672
        %v3674 = vpop.f32.mrf.mxu0
        %v3675 = vadd.f32 %v3646, %v3674
        %3676 = vdwg.mxu0
        %v3677 = vadd.f32 %v3658, %v564
        %v3678 = vadd.f32 %v3660, %v565
        %v3679 = vadd.f32 %v3663, %v566
        %v3680 = vadd.f32 %v3665, %v567
        %v3681 = vadd.f32 %v3668, %v568
        %v3682 = vadd.f32 %v3670, %v569
        %v3683 = vadd.f32 %v3673, %v570
        %v3684 = vadd.f32 %v3675, %v571
        %v3685 = vpack.c.bf16 %v3678, %v3677
        %v3686 = vpack.c.bf16 %v3680, %v3679
        %v3687 = vpack.c.bf16 %v3682, %v3681
        %v3688 = vpack.c.bf16 %v3684, %v3683
        %v3689 = vld [vmem:[#allocation6] sm:$0xff]
        %v3690 = vld [vmem:[#allocation6 + $0x8] sm:$0xf]
        %v3691 = vld [vmem:[#allocation6 + $0xc] sm:$0xff]
        %v3692 = vld [vmem:[#allocation6 + $0x14] sm:$0xf]
        %v3693 = vld [vmem:[#allocation6 + $0x18] sm:$0xff]
        %v3694 = vld [vmem:[#allocation6 + $0x20] sm:$0xf]
        %v3695 = vld [vmem:[#allocation6 + $0x24] sm:$0xff]
        %v3696 = vld [vmem:[#allocation6 + $0x2c] sm:$0xf]
        %v3697 = vld [vmem:[#allocation6 + $0x30] sm:$0xff]
        %v3698 = vld [vmem:[#allocation6 + $0x38] sm:$0xf]
        %v3699 = vld [vmem:[#allocation6 + $0x3c] sm:$0xff]
        %v3700 = vld [vmem:[#allocation6 + $0x44] sm:$0xf]
        %v3701 = vld [vmem:[#allocation6 + $0x48] sm:$0xff]
        %v3702 = vld [vmem:[#allocation6 + $0x50] sm:$0xf]
        %v3703 = vld [vmem:[#allocation6 + $0x54] sm:$0xff]
        %v3704 = vld [vmem:[#allocation6 + $0x5c] sm:$0xf]
        %v3705 = vld [vmem:[#allocation6 + $0x60] sm:$0xff]
        %v3706 = vld [vmem:[#allocation6 + $0x68] sm:$0xf]
        %v3707 = vld [vmem:[#allocation6 + $0x6c] sm:$0xff]
        %v3708 = vld [vmem:[#allocation6 + $0x74] sm:$0xf]
        %v3709 = vld [vmem:[#allocation6 + $0x78] sm:$0xff]
        %v3710 = vld [vmem:[#allocation6 + $0x80] sm:$0xf]
        %v3711 = vld [vmem:[#allocation6 + $0x84] sm:$0xff]
        %v3712 = vld [vmem:[#allocation6 + $0x8c] sm:$0xf]
        %v3713 = vld [vmem:[#allocation6 + $0x90] sm:$0xff]
        %v3714 = vld [vmem:[#allocation6 + $0x98] sm:$0xf]
        %v3715 = vld [vmem:[#allocation6 + $0x9c] sm:$0xff]
        %v3716 = vld [vmem:[#allocation6 + $0xa4] sm:$0xf]
        %v3717 = vld [vmem:[#allocation6 + $0xa8] sm:$0xff]
        %v3718 = vld [vmem:[#allocation6 + $0xb0] sm:$0xf]
        %v3719 = vld [vmem:[#allocation6 + $0xb4] sm:$0xff]
        %v3720 = vld [vmem:[#allocation6 + $0xbc] sm:$0xf]
        %v3721 = vld [vmem:[#allocation7] sm:$0x7]
        %v3723 = vperm.slane %v3721, 0
        %v3724 = vperm.slane %v3721, 1
        %v3725 = vperm.slane %v3721, 2
        %v3761 = vunpack.c.l.b16 %v3689
        %v3762 = vunpack.c.h.b16 %v3689
        %v3763 = vunpack.c.l.b16 %v3690
        %v3764 = vunpack.c.l.b16 %v3691
        %v3765 = vunpack.c.h.b16 %v3691
        %v3766 = vunpack.c.l.b16 %v3692
        %v3767 = vunpack.c.l.b16 %v3693
        %v3768 = vunpack.c.h.b16 %v3693
        %v3769 = vunpack.c.l.b16 %v3694
        %v3770 = vunpack.c.l.b16 %v3695
        %v3771 = vunpack.c.h.b16 %v3695
        %v3772 = vunpack.c.l.b16 %v3696
        %v3773 = vunpack.c.l.b16 %v3697
        %v3774 = vunpack.c.h.b16 %v3697
        %v3775 = vunpack.c.l.b16 %v3698
        %v3776 = vunpack.c.l.b16 %v3699
        %v3777 = vunpack.c.h.b16 %v3699
        %v3778 = vunpack.c.l.b16 %v3700
        %v3779 = vunpack.c.l.b16 %v3701
        %v3780 = vunpack.c.h.b16 %v3701
        %v3781 = vunpack.c.l.b16 %v3702
        %v3782 = vunpack.c.l.b16 %v3703
        %v3783 = vunpack.c.h.b16 %v3703
        %v3784 = vunpack.c.l.b16 %v3704
        %v3785 = vunpack.c.l.b16 %v3705
        %v3786 = vunpack.c.h.b16 %v3705
        %v3787 = vunpack.c.l.b16 %v3706
        %v3788 = vunpack.c.l.b16 %v3707
        %v3789 = vunpack.c.h.b16 %v3707
        %v3790 = vunpack.c.l.b16 %v3708
        %v3791 = vunpack.c.l.b16 %v3709
        %v3792 = vunpack.c.h.b16 %v3709
        %v3793 = vunpack.c.l.b16 %v3710
        %v3794 = vunpack.c.l.b16 %v3711
        %v3795 = vunpack.c.h.b16 %v3711
        %v3796 = vunpack.c.l.b16 %v3712
        %v3797 = vunpack.c.l.b16 %v3713
        %v3798 = vunpack.c.h.b16 %v3713
        %v3799 = vunpack.c.l.b16 %v3714
        %v3800 = vunpack.c.l.b16 %v3715
        %v3801 = vunpack.c.h.b16 %v3715
        %v3802 = vunpack.c.l.b16 %v3716
        %v3803 = vunpack.c.l.b16 %v3717
        %v3804 = vunpack.c.h.b16 %v3717
        %v3805 = vunpack.c.l.b16 %v3718
        %v3806 = vunpack.c.l.b16 %v3719
        %v3807 = vunpack.c.h.b16 %v3719
        %v3808 = vunpack.c.l.b16 %v3720
        %v3809 = vpack.c.b16 %v3764, %v3761
        %v3810 = vpack.c.b16 %v3765, %v3762
        %v3811 = vpack.c.b16 %v3766, %v3763
        %v3812 = vpack.c.b16 %v3770, %v3767
        %v3813 = vpack.c.b16 %v3771, %v3768
        %v3814 = vpack.c.b16 %v3772, %v3769
        %v3815 = vpack.c.b16 %v3776, %v3773
        %v3816 = vpack.c.b16 %v3777, %v3774
        %v3817 = vpack.c.b16 %v3778, %v3775
        %v3818 = vpack.c.b16 %v3782, %v3779
        %v3819 = vpack.c.b16 %v3783, %v3780
        %v3820 = vpack.c.b16 %v3784, %v3781
        %v3821 = vpack.c.b16 %v3788, %v3785
        %v3822 = vpack.c.b16 %v3789, %v3786
        %v3823 = vpack.c.b16 %v3790, %v3787
        %v3824 = vpack.c.b16 %v3794, %v3791
        %v3825 = vpack.c.b16 %v3795, %v3792
        %v3826 = vpack.c.b16 %v3796, %v3793
        %v3827 = vpack.c.b16 %v3800, %v3797
        %v3828 = vpack.c.b16 %v3801, %v3798
        %v3829 = vpack.c.b16 %v3802, %v3799
        %v3830 = vpack.c.b16 %v3806, %v3803
        %v3831 = vpack.c.b16 %v3807, %v3804
        %v3832 = vpack.c.b16 %v3808, %v3805
        %3857 = vmatpush.bf16.msra.mxu0 %v3830
        %3858 = vmatpush.bf16.msra.mxu0 %v3827
        %3859 = vmatpush.bf16.msra.mxu0 %v3824
        %3860 = vmatpush.bf16.msra.mxu0 %v3821
        %3861 = vmatpush.bf16.msra.mxu0 %v3818
        %3862 = vmatpush.bf16.msra.mxu0 %v3815
        %3863 = vmatpush.bf16.msra.mxu0 %v3812
        %3864 = vmatpush.bf16.msra.mxu0 %v3809
        %3865 = vmatmul.bf16.gmra.mxu0 %v3685
        %v3866 = vpop.f32.mrf.mxu0
        %v3867 = vadd.f32 %v3723, %v3866
        %v3868 = vpop.f32.mrf.mxu0
        %v3869 = vadd.f32 %v3723, %v3868
        %3870 = vmatmul.bf16.gmra.mxu0 %v3686
        %v3871 = vpop.f32.mrf.mxu0
        %v3872 = vadd.f32 %v3723, %v3871
        %v3873 = vpop.f32.mrf.mxu0
        %v3874 = vadd.f32 %v3723, %v3873
        %3875 = vmatmul.bf16.gmra.mxu0 %v3687
        %v3876 = vpop.f32.mrf.mxu0
        %v3877 = vadd.f32 %v3723, %v3876
        %v3878 = vpop.f32.mrf.mxu0
        %v3879 = vadd.f32 %v3723, %v3878
        %3880 = vmatmul.bf16.gmra.mxu0 %v3688
        %v3881 = vpop.f32.mrf.mxu0
        %v3882 = vadd.f32 %v3723, %v3881
        %v3883 = vpop.f32.mrf.mxu0
        %v3884 = vadd.f32 %v3723, %v3883
        %3885 = vdwg.mxu0
        %3886 = vmatpush.bf16.msra.mxu0 %v3831
        %3887 = vmatpush.bf16.msra.mxu0 %v3828
        %3888 = vmatpush.bf16.msra.mxu0 %v3825
        %3889 = vmatpush.bf16.msra.mxu0 %v3822
        %3890 = vmatpush.bf16.msra.mxu0 %v3819
        %3891 = vmatpush.bf16.msra.mxu0 %v3816
        %3892 = vmatpush.bf16.msra.mxu0 %v3813
        %3893 = vmatpush.bf16.msra.mxu0 %v3810
        %3894 = vmatmul.bf16.gmra.mxu0 %v3685
        %v3895 = vpop.f32.mrf.mxu0
        %v3896 = vadd.f32 %v3724, %v3895
        %v3897 = vpop.f32.mrf.mxu0
        %v3898 = vadd.f32 %v3724, %v3897
        %3899 = vmatmul.bf16.gmra.mxu0 %v3686
        %v3900 = vpop.f32.mrf.mxu0
        %v3901 = vadd.f32 %v3724, %v3900
        %v3902 = vpop.f32.mrf.mxu0
        %v3903 = vadd.f32 %v3724, %v3902
        %3904 = vmatmul.bf16.gmra.mxu0 %v3687
        %v3905 = vpop.f32.mrf.mxu0
        %v3906 = vadd.f32 %v3724, %v3905
        %v3907 = vpop.f32.mrf.mxu0
        %v3908 = vadd.f32 %v3724, %v3907
        %3909 = vmatmul.bf16.gmra.mxu0 %v3688
        %v3910 = vpop.f32.mrf.mxu0
        %v3911 = vadd.f32 %v3724, %v3910
        %v3912 = vpop.f32.mrf.mxu0
        %v3913 = vadd.f32 %v3724, %v3912
        %3914 = vdwg.mxu0
        %3915 = vmatpush.bf16.msra.mxu0 %v3832
        %3916 = vmatpush.bf16.msra.mxu0 %v3829
        %3917 = vmatpush.bf16.msra.mxu0 %v3826
        %3918 = vmatpush.bf16.msra.mxu0 %v3823
        %3919 = vmatpush.bf16.msra.mxu0 %v3820
        %3920 = vmatpush.bf16.msra.mxu0 %v3817
        %3921 = vmatpush.bf16.msra.mxu0 %v3814
        %3922 = vmatpush.bf16.msra.mxu0 %v3811
        %3923 = vmatmul.bf16.gmra.mxu0 %v3685
        %v3924 = vpop.f32.mrf.mxu0
        %v3925 = vadd.f32 %v3725, %v3924
        %v3926 = vpop.f32.mrf.mxu0
        %v3927 = vadd.f32 %v3725, %v3926
        %3928 = vmatmul.bf16.gmra.mxu0 %v3686
        %v3929 = vpop.f32.mrf.mxu0
        %v3930 = vadd.f32 %v3725, %v3929
        %v3931 = vpop.f32.mrf.mxu0
        %v3932 = vadd.f32 %v3725, %v3931
        %3933 = vmatmul.bf16.gmra.mxu0 %v3687
        %v3934 = vpop.f32.mrf.mxu0
        %v3935 = vadd.f32 %v3725, %v3934
        %v3936 = vpop.f32.mrf.mxu0
        %v3937 = vadd.f32 %v3725, %v3936
        %3938 = vmatmul.bf16.gmra.mxu0 %v3688
        %v3939 = vpop.f32.mrf.mxu0
        %v3940 = vadd.f32 %v3725, %v3939
        %v3941 = vpop.f32.mrf.mxu0
        %v3942 = vadd.f32 %v3725, %v3941
        %3943 = vdwg.mxu0
        %v3944 = vmul.f32 %v3867, 0.125
        %v3945 = vmul.f32 %v3869, 0.125
        %v3946 = vmul.f32 %v3872, 0.125
        %v3947 = vmul.f32 %v3874, 0.125
        %v3948 = vmul.f32 %v3877, 0.125
        %v3949 = vmul.f32 %v3879, 0.125
        %v3950 = vmul.f32 %v3882, 0.125
        %v3951 = vmul.f32 %v3884, 0.125
        %v3952 = vpack.c.bf16 %v3945, %v3944
        %v3953 = vpack.c.bf16 %v3947, %v3946
        %v3954 = vpack.c.bf16 %v3949, %v3948
        %v3955 = vpack.c.bf16 %v3951, %v3950
        %v3956 = vpack.c.bf16 %v3898, %v3896
        %v3957 = vpack.c.bf16 %v3903, %v3901
        %v3958 = vpack.c.bf16 %v3908, %v3906
        %v3959 = vpack.c.bf16 %v3913, %v3911
        %v3960 = vpack.c.bf16 %v3927, %v3925
        %v3961 = vpack.c.bf16 %v3932, %v3930
        %v3962 = vpack.c.bf16 %v3937, %v3935
        %v3963 = vpack.c.bf16 %v3942, %v3940
        %3964 = vmatpush.bf16.xpose.msra.mxu0 0
        %3965 = vmatpush.bf16.xpose.msra.mxu0 0
        %3966 = vmatpush.bf16.xpose.msra.mxu0 0
        %3967 = vmatpush.bf16.xpose.msra.mxu0 0
        %3968 = vmatpush.bf16.xpose.msra.mxu0 %v3959
        %3969 = vmatpush.bf16.xpose.msra.mxu0 %v3958
        %3970 = vmatpush.bf16.xpose.msra.mxu0 %v3957
        %3971 = vmatpush.bf16.xpose.msra.mxu0 %v3956
        %3972 = vmatmul.bf16.gmra.mxu0 %v3952
        %v3973 = vpop.f32.mrf.mxu0
        %v3974 = vadd.f32 0.0, %v3973
        %v3975 = vpop.f32.mrf.mxu0
        %v3976 = vadd.f32 0.0, %v3975
        %3977 = vmatmul.bf16.gmra.mxu0 %v3953
        %v3978 = vpop.f32.mrf.mxu0
        %v3979 = vadd.f32 0.0, %v3978
        %v3980 = vpop.f32.mrf.mxu0
        %v3981 = vadd.f32 0.0, %v3980
        %3982 = vmatmul.bf16.gmra.mxu0 %v3954
        %v3983 = vpop.f32.mrf.mxu0
        %v3984 = vadd.f32 0.0, %v3983
        %v3985 = vpop.f32.mrf.mxu0
        %v3986 = vadd.f32 0.0, %v3985
        %3987 = vmatmul.bf16.gmra.mxu0 %v3955
        %v3988 = vpop.f32.mrf.mxu0
        %v3989 = vadd.f32 0.0, %v3988
        %v3990 = vpop.f32.mrf.mxu0
        %v3991 = vadd.f32 0.0, %v3990
        %3992 = vdwg.mxu0
        %vm3993 = vcmask 523264
        %v3994 = vsel %vm3993, %v3974, -inf
        %v3995 = vsel %vm3993, %v3976, -inf
        %v3996 = vsel %vm3993, %v3979, -inf
        %v3997 = vsel %vm3993, %v3981, -inf
        %v3998 = vsel %vm3993, %v3984, -inf
        %v3999 = vmax.f32 %v3994, %v3998
        %v4000 = vsel %vm3993, %v3986, -inf
        %v4001 = vmax.f32 %v3995, %v4000
        %v4002 = vsel %vm3993, %v3989, -inf
        %v4003 = vmax.f32 %v3996, %v4002
        %v4004 = vsel %vm3993, %v3991, -inf
        %v4005 = vmax.f32 %v3997, %v4004
        %v4006 = vmax.f32 %v3999, %v4001
        %v4007 = vmax.f32 %v4003, %v4005
        %v4008 = vmax.f32 %v4006, %v4007
        %v4009 = vrot.slane %v4008, 4
        %v4010 = vmax.f32 %v4008, %v4009
        %v4011 = vrot.slane %v4010, 2
        %v4012 = vmax.f32 %v4010, %v4011
        %v4013 = vrot.slane %v4012, 1
        %v4014 = vmax.f32 %v4012, %v4013
        %v4015 = vsub.f32 %v3974, %v4014
        %v4016 = vsub.f32 %v3976, %v4014
        %v4017 = vsub.f32 %v3979, %v4014
        %v4018 = vsub.f32 %v3981, %v4014
        %v4019 = vsub.f32 %v3984, %v4014
        %v4020 = vsub.f32 %v3986, %v4014
        %v4021 = vsub.f32 %v3989, %v4014
        %v4022 = vsub.f32 %v3991, %v4014
        %v4023 = vmul.f32 %v4015, 1.442695
        %v4024 = vpow.pop %v4023
        %v4025 = vmul.f32 %v4016, 1.442695
        %v4026 = vpow.pop %v4025
        %v4027 = vmul.f32 %v4017, 1.442695
        %v4028 = vpow.pop %v4027
        %v4029 = vmul.f32 %v4018, 1.442695
        %v4030 = vpow.pop %v4029
        %v4031 = vmul.f32 %v4019, 1.442695
        %v4032 = vpow.pop %v4031
        %v4033 = vmul.f32 %v4020, 1.442695
        %v4034 = vpow.pop %v4033
        %v4035 = vmul.f32 %v4021, 1.442695
        %v4036 = vpow.pop %v4035
        %v4037 = vmul.f32 %v4022, 1.442695
        %v4038 = vpow.pop %v4037
        %v4039 = vsel %vm3993, %v4024, 0.0
        %v4040 = vsel %vm3993, %v4026, 0.0
        %v4041 = vadd.f32 %v4039, %v4040
        %v4042 = vsel %vm3993, %v4028, 0.0
        %v4043 = vadd.f32 %v4041, %v4042
        %v4044 = vsel %vm3993, %v4030, 0.0
        %v4045 = vadd.f32 %v4043, %v4044
        %v4046 = vsel %vm3993, %v4032, 0.0
        %v4047 = vadd.f32 %v4045, %v4046
        %v4048 = vsel %vm3993, %v4034, 0.0
        %v4049 = vadd.f32 %v4047, %v4048
        %v4050 = vsel %vm3993, %v4036, 0.0
        %v4051 = vadd.f32 %v4049, %v4050
        %v4052 = vsel %vm3993, %v4038, 0.0
        %v4053 = vadd.f32 %v4051, %v4052
        %v4054 = vrot.slane %v4053, 4
        %v4055 = vadd.f32 %v4053, %v4054
        %v4056 = vrot.slane %v4055, 2
        %v4057 = vadd.f32 %v4055, %v4056
        %v4058 = vrot.slane %v4057, 1
        %v4059 = vadd.f32 %v4057, %v4058
        %v4060 = vrcp.pop %v4059
        %v4061 = vmul.f32 %v4024, %v4060
        %v4062 = vmul.f32 %v4026, %v4060
        %v4063 = vmul.f32 %v4028, %v4060
        %v4064 = vmul.f32 %v4030, %v4060
        %v4065 = vmul.f32 %v4032, %v4060
        %v4066 = vmul.f32 %v4034, %v4060
        %v4067 = vmul.f32 %v4036, %v4060
        %v4068 = vmul.f32 %v4038, %v4060
        %v4069 = vpack.c.bf16 %v4062, %v4061
        %v4070 = vpack.c.bf16 %v4064, %v4063
        %v4071 = vpack.c.bf16 %v4066, %v4065
        %v4072 = vpack.c.bf16 %v4068, %v4067
        %v4074 = vsel %vm3993, %v4069, 0
        %v4077 = vsel %vm3993, %v4070, 0
        %v4080 = vsel %vm3993, %v4071, 0
        %v4083 = vsel %vm3993, %v4072, 0
        %4085 = vmatpush.bf16.msra.mxu0 0
        %4086 = vmatpush.bf16.msra.mxu0 0
        %4087 = vmatpush.bf16.msra.mxu0 0
        %4088 = vmatpush.bf16.msra.mxu0 0
        %4089 = vmatpush.bf16.msra.mxu0 %v3963
        %4090 = vmatpush.bf16.msra.mxu0 %v3962
        %4091 = vmatpush.bf16.msra.mxu0 %v3961
        %4092 = vmatpush.bf16.msra.mxu0 %v3960
        %4093 = vmatmul.bf16.gmra.mxu0 %v4074
        %v4094 = vpop.f32.mrf.mxu0
        %v4095 = vadd.f32 0.0, %v4094
        %v4096 = vpop.f32.mrf.mxu0
        %v4097 = vadd.f32 0.0, %v4096
        %4098 = vmatmul.bf16.gmra.mxu0 %v4077
        %v4099 = vpop.f32.mrf.mxu0
        %v4100 = vadd.f32 0.0, %v4099
        %v4101 = vpop.f32.mrf.mxu0
        %v4102 = vadd.f32 0.0, %v4101
        %4103 = vmatmul.bf16.gmra.mxu0 %v4080
        %v4104 = vpop.f32.mrf.mxu0
        %v4105 = vadd.f32 0.0, %v4104
        %v4106 = vpop.f32.mrf.mxu0
        %v4107 = vadd.f32 0.0, %v4106
        %4108 = vmatmul.bf16.gmra.mxu0 %v4083
        %v4109 = vpop.f32.mrf.mxu0
        %v4110 = vadd.f32 0.0, %v4109
        %v4111 = vpop.f32.mrf.mxu0
        %v4112 = vadd.f32 0.0, %v4111
        %4113 = vdwg.mxu0
        %v4114 = vpack.c.bf16 %v4097, %v4095
        %v4115 = vpack.c.bf16 %v4102, %v4100
        %v4116 = vpack.c.bf16 %v4107, %v4105
        %v4117 = vpack.c.bf16 %v4112, %v4110
        %v4118 = vld [vmem:[#allocation9] sm:$0xf]
        %v4119 = vld [vmem:[#allocation9 + $0x4] sm:$0xf]
        %v4120 = vld [vmem:[#allocation9 + $0x8] sm:$0xf]
        %v4121 = vld [vmem:[#allocation9 + $0xc] sm:$0xf]
        %v4122 = vld [vmem:[#allocation9 + $0x10] sm:$0xf]
        %v4123 = vld [vmem:[#allocation9 + $0x14] sm:$0xf]
        %v4124 = vld [vmem:[#allocation9 + $0x18] sm:$0xf]
        %v4125 = vld [vmem:[#allocation9 + $0x1c] sm:$0xf]
        %v4126 = vld [vmem:[#allocation9 + $0x20] sm:$0xf]
        %v4127 = vld [vmem:[#allocation9 + $0x24] sm:$0xf]
        %v4128 = vld [vmem:[#allocation9 + $0x28] sm:$0xf]
        %v4129 = vld [vmem:[#allocation9 + $0x2c] sm:$0xf]
        %v4130 = vld [vmem:[#allocation9 + $0x30] sm:$0xf]
        %v4131 = vld [vmem:[#allocation9 + $0x34] sm:$0xf]
        %v4132 = vld [vmem:[#allocation9 + $0x38] sm:$0xf]
        %v4133 = vld [vmem:[#allocation9 + $0x3c] sm:$0xf]
        %v4134 = vld [vmem:[#allocation2 + $0xc] sm:$0x1]
        %v4135 = vperm.slane %v4134, 0
        %v4152 = vunpack.c.l.b16 %v4118
        %v4153 = vunpack.c.l.b16 %v4119
        %v4154 = vunpack.c.l.b16 %v4120
        %v4155 = vunpack.c.l.b16 %v4121
        %v4156 = vunpack.c.l.b16 %v4122
        %v4157 = vunpack.c.l.b16 %v4123
        %v4158 = vunpack.c.l.b16 %v4124
        %v4159 = vunpack.c.l.b16 %v4125
        %v4160 = vunpack.c.l.b16 %v4126
        %v4161 = vunpack.c.l.b16 %v4127
        %v4162 = vunpack.c.l.b16 %v4128
        %v4163 = vunpack.c.l.b16 %v4129
        %v4164 = vunpack.c.l.b16 %v4130
        %v4165 = vunpack.c.l.b16 %v4131
        %v4166 = vunpack.c.l.b16 %v4132
        %v4167 = vunpack.c.l.b16 %v4133
        %v4168 = vpack.c.b16 %v4153, %v4152
        %v4169 = vpack.c.b16 %v4155, %v4154
        %v4170 = vpack.c.b16 %v4157, %v4156
        %v4171 = vpack.c.b16 %v4159, %v4158
        %v4172 = vpack.c.b16 %v4161, %v4160
        %v4173 = vpack.c.b16 %v4163, %v4162
        %v4174 = vpack.c.b16 %v4165, %v4164
        %v4175 = vpack.c.b16 %v4167, %v4166
        %4184 = vmatpush.bf16.msra.mxu0 %v4175
        %4185 = vmatpush.bf16.msra.mxu0 %v4174
        %4186 = vmatpush.bf16.msra.mxu0 %v4173
        %4187 = vmatpush.bf16.msra.mxu0 %v4172
        %4188 = vmatpush.bf16.msra.mxu0 %v4171
        %4189 = vmatpush.bf16.msra.mxu0 %v4170
        %4190 = vmatpush.bf16.msra.mxu0 %v4169
        %4191 = vmatpush.bf16.msra.mxu0 %v4168
        %4192 = vmatmul.bf16.gmra.mxu0 %v4114
        %v4193 = vpop.f32.mrf.mxu0
        %v4194 = vadd.f32 %v4135, %v4193
        %v4195 = vpop.f32.mrf.mxu0
        %v4196 = vadd.f32 %v4135, %v4195
        %4197 = vmatmul.bf16.gmra.mxu0 %v4115
        %v4198 = vpop.f32.mrf.mxu0
        %v4199 = vadd.f32 %v4135, %v4198
        %v4200 = vpop.f32.mrf.mxu0
        %v4201 = vadd.f32 %v4135, %v4200
        %4202 = vmatmul.bf16.gmra.mxu0 %v4116
        %v4203 = vpop.f32.mrf.mxu0
        %v4204 = vadd.f32 %v4135, %v4203
        %v4205 = vpop.f32.mrf.mxu0
        %v4206 = vadd.f32 %v4135, %v4205
        %4207 = vmatmul.bf16.gmra.mxu0 %v4117
        %v4208 = vpop.f32.mrf.mxu0
        %v4209 = vadd.f32 %v4135, %v4208
        %v4210 = vpop.f32.mrf.mxu0
        %v4211 = vadd.f32 %v4135, %v4210
        %4212 = vdwg.mxu0
        %v4213 = vadd.f32 %v4194, %v3677
        %v4214 = vadd.f32 %v4196, %v3678
        %v4215 = vadd.f32 %v4199, %v3679
        %v4216 = vadd.f32 %v4201, %v3680
        %v4217 = vadd.f32 %v4204, %v3681
        %v4218 = vadd.f32 %v4206, %v3682
        %v4219 = vadd.f32 %v4209, %v3683
        %v4220 = vadd.f32 %v4211, %v3684
        %v4221 = vld [vmem:[#allocation2 + $0x6] sm:$0x1]
        %v4222 = vld [vmem:[#allocation2 + $0x7] sm:$0x1]
        %v4223 = vadd.f32 %v4213, %v4214
        %v4224 = vadd.f32 %v4223, %v4215
        %v4225 = vadd.f32 %v4224, %v4216
        %v4226 = vadd.f32 %v4225, %v4217
        %v4227 = vadd.f32 %v4226, %v4218
        %v4228 = vadd.f32 %v4227, %v4219
        %v4229 = vadd.f32 %v4228, %v4220
        %v4230 = vrot.slane %v4229, 4
        %v4231 = vadd.f32 %v4229, %v4230
        %v4232 = vrot.slane %v4231, 2
        %v4233 = vadd.f32 %v4231, %v4232
        %v4234 = vrot.slane %v4233, 1
        %v4235 = vadd.f32 %v4233, %v4234
        %4236 = vrot.lane.b32.xlu0 %v4235, 127
        %v4237 = vpop.permute.xlu0 %4236
        %v4238 = vadd.f32 %v4235, %v4237
        %v4239 = vsel %vm394, %v4238, 0.0
        %4240 = vrot.lane.b32.xlu0 %v4239, 1
        %v4241 = vpop.permute.xlu0 %4240
        %v4242 = vadd.f32 %v4239, %v4241
        %v4243 = vmul.f32 %v4242, 0.0078125
        %v4244 = vperm.slane %v4243, 0
        %v4245 = vsub.f32 %v4213, %v4244
        %v4246 = vsub.f32 %v4214, %v4244
        %v4247 = vsub.f32 %v4215, %v4244
        %v4248 = vsub.f32 %v4216, %v4244
        %v4249 = vsub.f32 %v4217, %v4244
        %v4250 = vsub.f32 %v4218, %v4244
        %v4251 = vsub.f32 %v4219, %v4244
        %v4252 = vsub.f32 %v4220, %v4244
        %v4253 = vmul.f32 %v4245, %v4245
        %v4254 = vmul.f32 %v4246, %v4246
        %v4255 = vmul.f32 %v4247, %v4247
        %v4256 = vmul.f32 %v4248, %v4248
        %v4257 = vmul.f32 %v4249, %v4249
        %v4258 = vmul.f32 %v4250, %v4250
        %v4259 = vmul.f32 %v4251, %v4251
        %v4260 = vmul.f32 %v4252, %v4252
        %v4261 = vadd.f32 %v4253, %v4254
        %v4262 = vadd.f32 %v4261, %v4255
        %v4263 = vadd.f32 %v4262, %v4256
        %v4264 = vadd.f32 %v4263, %v4257
        %v4265 = vadd.f32 %v4264, %v4258
        %v4266 = vadd.f32 %v4265, %v4259
        %v4267 = vadd.f32 %v4266, %v4260
        %v4268 = vrot.slane %v4267, 4
        %v4269 = vadd.f32 %v4267, %v4268
        %v4270 = vrot.slane %v4269, 2
        %v4271 = vadd.f32 %v4269, %v4270
        %v4272 = vrot.slane %v4271, 1
        %v4273 = vadd.f32 %v4271, %v4272
        %4274 = vrot.lane.b32.xlu0 %v4273, 127
        %v4275 = vpop.permute.xlu0 %4274
        %v4276 = vadd.f32 %v4273, %v4275
        %v4277 = vsel %vm394, %v4276, 0.0
        %4278 = vrot.lane.b32.xlu0 %v4277, 1
        %v4279 = vpop.permute.xlu0 %4278
        %v4280 = vadd.f32 %v4277, %v4279
        %v4281 = vmul.f32 %v4280, 0.0078125
        %v4282 = vadd.f32 %v4281, 1e-05
        %v4283 = vrsqrt.pop %v4282
        %v4284 = vmul.f32 %v4283, %v4282
        %v4285 = vmul.f32 %v4284, %v4283
        %v4286 = vmul.f32 0.5, %v4285
        %v4287 = vsub.f32 1.5, %v4286
        %v4288 = vmul.f32 %v4283, %v4287
        %vm4289 = vweird.f32 %v4282
        %vm4290 = vweird.f32 %v4283
        %vm4291 = vmor %vm4289, %vm4290
        %v4292 = vsel %vm4291, %v4283, %v4288
        %v4293 = vperm.slane %v4292, 0
        %v4294 = vmul.f32 %v4245, %v4293
        %v4295 = vmul.f32 %v4246, %v4293
        %v4296 = vmul.f32 %v4247, %v4293
        %v4297 = vmul.f32 %v4248, %v4293
        %v4298 = vmul.f32 %v4249, %v4293
        %v4299 = vmul.f32 %v4250, %v4293
        %v4300 = vmul.f32 %v4251, %v4293
        %v4301 = vmul.f32 %v4252, %v4293
        %v4302 = vperm.slane %v4221, 0
        %v4303 = vmul.f32 %v4294, %v4302
        %v4304 = vmul.f32 %v4295, %v4302
        %v4305 = vmul.f32 %v4296, %v4302
        %v4306 = vmul.f32 %v4297, %v4302
        %v4307 = vmul.f32 %v4298, %v4302
        %v4308 = vmul.f32 %v4299, %v4302
        %v4309 = vmul.f32 %v4300, %v4302
        %v4310 = vmul.f32 %v4301, %v4302
        %v4311 = vperm.slane %v4222, 0
        %v4312 = vadd.f32 %v4303, %v4311
        %v4313 = vadd.f32 %v4304, %v4311
        %v4314 = vadd.f32 %v4305, %v4311
        %v4315 = vadd.f32 %v4306, %v4311
        %v4316 = vadd.f32 %v4307, %v4311
        %v4317 = vadd.f32 %v4308, %v4311
        %v4318 = vadd.f32 %v4309, %v4311
        %v4319 = vadd.f32 %v4310, %v4311
        %v4320 = vxor.u32 %v4312, 2147483648
        %v4321 = vxor.u32 %v4313, 2147483648
        %v4322 = vxor.u32 %v4314, 2147483648
        %v4323 = vxor.u32 %v4315, 2147483648
        %v4324 = vxor.u32 %v4316, 2147483648
        %v4325 = vxor.u32 %v4317, 2147483648
        %v4326 = vxor.u32 %v4318, 2147483648
        %v4327 = vxor.u32 %v4319, 2147483648
        %v4328 = vmul.f32 %v4320, 1.442695
        %v4329 = vpow.pop %v4328
        %v4330 = vmul.f32 %v4321, 1.442695
        %v4331 = vpow.pop %v4330
        %v4332 = vmul.f32 %v4322, 1.442695
        %v4333 = vpow.pop %v4332
        %v4334 = vmul.f32 %v4323, 1.442695
        %v4335 = vpow.pop %v4334
        %v4336 = vmul.f32 %v4324, 1.442695
        %v4337 = vpow.pop %v4336
        %v4338 = vmul.f32 %v4325, 1.442695
        %v4339 = vpow.pop %v4338
        %v4340 = vmul.f32 %v4326, 1.442695
        %v4341 = vpow.pop %v4340
        %v4342 = vmul.f32 %v4327, 1.442695
        %v4343 = vpow.pop %v4342
        %v4344 = vadd.f32 %v4329, 1.0
        %v4345 = vadd.f32 %v4331, 1.0
        %v4346 = vadd.f32 %v4333, 1.0
        %v4347 = vadd.f32 %v4335, 1.0
        %v4348 = vadd.f32 %v4337, 1.0
        %v4349 = vadd.f32 %v4339, 1.0
        %v4350 = vadd.f32 %v4341, 1.0
        %v4351 = vadd.f32 %v4343, 1.0
        %v4352 = vrcp.pop %v4344
        %v4353 = vmul.f32 %v4344, %v4352
        %v4354 = vsub.f32 1.0, %v4353
        %v4355 = vmul.f32 %v4352, %v4354
        %v4356 = vadd.f32 %v4352, %v4355
        %vm4357 = vweird.f32 %v4344
        %vm4358 = vweird.f32 %v4352
        %vm4359 = vmor %vm4357, %vm4358
        %v4360 = vsel %vm4359, %v4352, %v4356
        %v4361 = vand.u32 2147483647, %v4344
        %vm4362 = vcmp.eq.f32.partialorder %v4361, 8.507059e+37
        %v4363 = vand.u32 %v4344, 2147483648
        %v4364 = vor.u32 1.1754944e-38, %v4363
        %v4365 = vsel %vm4362, %v4364, %v4360
        %v4366 = vmul.f32 1.0, %v4365
        %v4367 = vrcp.pop %v4345
        %v4368 = vmul.f32 %v4345, %v4367
        %v4369 = vsub.f32 1.0, %v4368
        %v4370 = vmul.f32 %v4367, %v4369
        %v4371 = vadd.f32 %v4367, %v4370
        %vm4372 = vweird.f32 %v4345
        %vm4373 = vweird.f32 %v4367
        %vm4374 = vmor %vm4372, %vm4373
        %v4375 = vsel %vm4374, %v4367, %v4371
        %v4376 = vand.u32 2147483647, %v4345
        %vm4377 = vcmp.eq.f32.partialorder %v4376, 8.507059e+37
        %v4378 = vand.u32 %v4345, 2147483648
        %v4379 = vor.u32 1.1754944e-38, %v4378
        %v4380 = vsel %vm4377, %v4379, %v4375
        %v4381 = vmul.f32 1.0, %v4380
        %v4382 = vrcp.pop %v4346
        %v4383 = vmul.f32 %v4346, %v4382
        %v4384 = vsub.f32 1.0, %v4383
        %v4385 = vmul.f32 %v4382, %v4384
        %v4386 = vadd.f32 %v4382, %v4385
        %vm4387 = vweird.f32 %v4346
        %vm4388 = vweird.f32 %v4382
        %vm4389 = vmor %vm4387, %vm4388
        %v4390 = vsel %vm4389, %v4382, %v4386
        %v4391 = vand.u32 2147483647, %v4346
        %vm4392 = vcmp.eq.f32.partialorder %v4391, 8.507059e+37
        %v4393 = vand.u32 %v4346, 2147483648
        %v4394 = vor.u32 1.1754944e-38, %v4393
        %v4395 = vsel %vm4392, %v4394, %v4390
        %v4396 = vmul.f32 1.0, %v4395
        %v4397 = vrcp.pop %v4347
        %v4398 = vmul.f32 %v4347, %v4397
        %v4399 = vsub.f32 1.0, %v4398
        %v4400 = vmul.f32 %v4397, %v4399
        %v4401 = vadd.f32 %v4397, %v4400
        %vm4402 = vweird.f32 %v4347
        %vm4403 = vweird.f32 %v4397
        %vm4404 = vmor %vm4402, %vm4403
        %v4405 = vsel %vm4404, %v4397, %v4401
        %v4406 = vand.u32 2147483647, %v4347
        %vm4407 = vcmp.eq.f32.partialorder %v4406, 8.507059e+37
        %v4408 = vand.u32 %v4347, 2147483648
        %v4409 = vor.u32 1.1754944e-38, %v4408
        %v4410 = vsel %vm4407, %v4409, %v4405
        %v4411 = vmul.f32 1.0, %v4410
        %v4412 = vrcp.pop %v4348
        %v4413 = vmul.f32 %v4348, %v4412
        %v4414 = vsub.f32 1.0, %v4413
        %v4415 = vmul.f32 %v4412, %v4414
        %v4416 = vadd.f32 %v4412, %v4415
        %vm4417 = vweird.f32 %v4348
        %vm4418 = vweird.f32 %v4412
        %vm4419 = vmor %vm4417, %vm4418
        %v4420 = vsel %vm4419, %v4412, %v4416
        %v4421 = vand.u32 2147483647, %v4348
        %vm4422 = vcmp.eq.f32.partialorder %v4421, 8.507059e+37
        %v4423 = vand.u32 %v4348, 2147483648
        %v4424 = vor.u32 1.1754944e-38, %v4423
        %v4425 = vsel %vm4422, %v4424, %v4420
        %v4426 = vmul.f32 1.0, %v4425
        %v4427 = vrcp.pop %v4349
        %v4428 = vmul.f32 %v4349, %v4427
        %v4429 = vsub.f32 1.0, %v4428
        %v4430 = vmul.f32 %v4427, %v4429
        %v4431 = vadd.f32 %v4427, %v4430
        %vm4432 = vweird.f32 %v4349
        %vm4433 = vweird.f32 %v4427
        %vm4434 = vmor %vm4432, %vm4433
        %v4435 = vsel %vm4434, %v4427, %v4431
        %v4436 = vand.u32 2147483647, %v4349
        %vm4437 = vcmp.eq.f32.partialorder %v4436, 8.507059e+37
        %v4438 = vand.u32 %v4349, 2147483648
        %v4439 = vor.u32 1.1754944e-38, %v4438
        %v4440 = vsel %vm4437, %v4439, %v4435
        %v4441 = vmul.f32 1.0, %v4440
        %v4442 = vrcp.pop %v4350
        %v4443 = vmul.f32 %v4350, %v4442
        %v4444 = vsub.f32 1.0, %v4443
        %v4445 = vmul.f32 %v4442, %v4444
        %v4446 = vadd.f32 %v4442, %v4445
        %vm4447 = vweird.f32 %v4350
        %vm4448 = vweird.f32 %v4442
        %vm4449 = vmor %vm4447, %vm4448
        %v4450 = vsel %vm4449, %v4442, %v4446
        %v4451 = vand.u32 2147483647, %v4350
        %vm4452 = vcmp.eq.f32.partialorder %v4451, 8.507059e+37
        %v4453 = vand.u32 %v4350, 2147483648
        %v4454 = vor.u32 1.1754944e-38, %v4453
        %v4455 = vsel %vm4452, %v4454, %v4450
        %v4456 = vmul.f32 1.0, %v4455
        %v4457 = vrcp.pop %v4351
        %v4458 = vmul.f32 %v4351, %v4457
        %v4459 = vsub.f32 1.0, %v4458
        %v4460 = vmul.f32 %v4457, %v4459
        %v4461 = vadd.f32 %v4457, %v4460
        %vm4462 = vweird.f32 %v4351
        %vm4463 = vweird.f32 %v4457
        %vm4464 = vmor %vm4462, %vm4463
        %v4465 = vsel %vm4464, %v4457, %v4461
        %v4466 = vand.u32 2147483647, %v4351
        %vm4467 = vcmp.eq.f32.partialorder %v4466, 8.507059e+37
        %v4468 = vand.u32 %v4351, 2147483648
        %v4469 = vor.u32 1.1754944e-38, %v4468
        %v4470 = vsel %vm4467, %v4469, %v4465
        %v4471 = vmul.f32 1.0, %v4470
        %v4472 = vmul.f32 %v4312, %v4366
        %v4473 = vmul.f32 %v4313, %v4381
        %v4474 = vmul.f32 %v4314, %v4396
        %v4475 = vmul.f32 %v4315, %v4411
        %v4476 = vmul.f32 %v4316, %v4426
        %v4477 = vmul.f32 %v4317, %v4441
        %v4478 = vmul.f32 %v4318, %v4456
        %v4479 = vmul.f32 %v4319, %v4471
        %v4480 = vld [vmem:[#allocation2 + $0x8] sm:$0x1]
        %v4481 = vrot.slane %v4472, 7
        %v4482 = vrot.slane %v4473, 7
        %v4483 = vrot.slane %v4474, 7
        %v4484 = vrot.slane %v4475, 7
        %v4485 = vrot.slane %v4476, 7
        %v4486 = vrot.slane %v4477, 7
        %v4487 = vrot.slane %v4478, 7
        %v4488 = vrot.slane %v4479, 7
        %v4489 = vsel %vm841, %v4487, %v4488
        %v4490 = vsel %vm841, %v4486, %v4487
        %v4491 = vsel %vm841, %v4485, %v4486
        %v4492 = vsel %vm841, %v4484, %v4485
        %v4493 = vsel %vm841, %v4483, %v4484
        %v4494 = vsel %vm841, %v4482, %v4483
        %v4495 = vsel %vm841, %v4481, %v4482
        %v4496 = vsel %vm841, %v4488, %v4481
        %v4497 = vsel %vm858, %v4489, 0.0
        %v4498 = vsel %vm859, %v4496, 0.0
        %v4499 = vsel %vm860, %v4495, 0.0
        %v4500 = vsel %vm861, %v4494, 0.0
        %v4501 = vsel %vm862, %v4493, 0.0
        %v4502 = vsel %vm863, %v4492, 0.0
        %v4503 = vsel %vm864, %v4491, 0.0
        %v4504 = vsel %vm865, %v4490, 0.0
        %v4505 = vpack.c.bf16 %v4497, %v4497
        %v4506 = vpack.c.bf16 %v4498, %v4498
        %v4507 = vpack.c.bf16 %v4499, %v4499
        %v4508 = vpack.c.bf16 %v4500, %v4500
        %v4509 = vpack.c.bf16 %v4501, %v4501
        %v4510 = vpack.c.bf16 %v4502, %v4502
        %v4511 = vpack.c.bf16 %v4503, %v4503
        %v4512 = vpack.c.bf16 %v4504, %v4504
        %v4513 = vsel %vm890, %v4479, 0.0
        %v4514 = vsel %vm891, %v4472, 0.0
        %v4515 = vsel %vm892, %v4473, 0.0
        %v4516 = vsel %vm893, %v4474, 0.0
        %v4517 = vsel %vm894, %v4475, 0.0
        %v4518 = vsel %vm895, %v4476, 0.0
        %v4519 = vsel %vm896, %v4477, 0.0
        %v4520 = vsel %vm897, %v4478, 0.0
        %v4521 = vpack.c.bf16 %v4513, %v4513
        %v4522 = vpack.c.bf16 %v4514, %v4514
        %v4523 = vpack.c.bf16 %v4515, %v4515
        %v4524 = vpack.c.bf16 %v4516, %v4516
        %v4525 = vpack.c.bf16 %v4517, %v4517
        %v4526 = vpack.c.bf16 %v4518, %v4518
        %v4527 = vpack.c.bf16 %v4519, %v4519
        %v4528 = vpack.c.bf16 %v4520, %v4520
        %v4529 = vrot.slane %v4472, 1
        %v4530 = vrot.slane %v4473, 1
        %v4531 = vrot.slane %v4474, 1
        %v4532 = vrot.slane %v4475, 1
        %v4533 = vrot.slane %v4476, 1
        %v4534 = vrot.slane %v4477, 1
        %v4535 = vrot.slane %v4478, 1
        %v4536 = vrot.slane %v4479, 1
        %v4537 = vsel %vm922, %v4535, %v4536
        %v4538 = vsel %vm922, %v4534, %v4535
        %v4539 = vsel %vm922, %v4533, %v4534
        %v4540 = vsel %vm922, %v4532, %v4533
        %v4541 = vsel %vm922, %v4531, %v4532
        %v4542 = vsel %vm922, %v4530, %v4531
        %v4543 = vsel %vm922, %v4529, %v4530
        %v4544 = vsel %vm922, %v4536, %v4529
        %v4545 = vsel %vm939, %v4544, 0.0
        %v4546 = vsel %vm940, %v4543, 0.0
        %v4547 = vsel %vm941, %v4542, 0.0
        %v4548 = vsel %vm942, %v4541, 0.0
        %v4549 = vsel %vm943, %v4540, 0.0
        %v4550 = vsel %vm944, %v4539, 0.0
        %v4551 = vsel %vm945, %v4538, 0.0
        %v4552 = vsel %vm946, %v4537, 0.0
        %v4553 = vpack.c.bf16 %v4545, %v4545
        %v4554 = vpack.c.bf16 %v4546, %v4546
        %v4555 = vpack.c.bf16 %v4547, %v4547
        %v4556 = vpack.c.bf16 %v4548, %v4548
        %v4557 = vpack.c.bf16 %v4549, %v4549
        %v4558 = vpack.c.bf16 %v4550, %v4550
        %v4559 = vpack.c.bf16 %v4551, %v4551
        %v4560 = vpack.c.bf16 %v4552, %v4552
        %v4561 = vsel %vm971, %v4496, 0.0
        %v4562 = vsel %vm972, %v4495, 0.0
        %v4563 = vsel %vm973, %v4494, 0.0
        %v4564 = vsel %vm974, %v4493, 0.0
        %v4565 = vsel %vm975, %v4492, 0.0
        %v4566 = vsel %vm976, %v4491, 0.0
        %v4567 = vsel %vm977, %v4490, 0.0
        %v4568 = vsel %vm978, %v4489, 0.0
        %v4569 = vpack.c.bf16 %v4561, %v4561
        %v4570 = vpack.c.bf16 %v4562, %v4562
        %v4571 = vpack.c.bf16 %v4563, %v4563
        %v4572 = vpack.c.bf16 %v4564, %v4564
        %v4573 = vpack.c.bf16 %v4565, %v4565
        %v4574 = vpack.c.bf16 %v4566, %v4566
        %v4575 = vpack.c.bf16 %v4567, %v4567
        %v4576 = vpack.c.bf16 %v4568, %v4568
        %v4577 = vpack.c.bf16 %v4472, %v4472
        %v4578 = vpack.c.bf16 %v4473, %v4473
        %v4579 = vpack.c.bf16 %v4474, %v4474
        %v4580 = vpack.c.bf16 %v4475, %v4475
        %v4581 = vpack.c.bf16 %v4476, %v4476
        %v4582 = vpack.c.bf16 %v4477, %v4477
        %v4583 = vpack.c.bf16 %v4478, %v4478
        %v4584 = vpack.c.bf16 %v4479, %v4479
        %v4585 = vsel %vm1011, %v4543, 0.0
        %v4586 = vsel %vm1012, %v4542, 0.0
        %v4587 = vsel %vm1013, %v4541, 0.0
        %v4588 = vsel %vm1014, %v4540, 0.0
        %v4589 = vsel %vm1015, %v4539, 0.0
        %v4590 = vsel %vm1016, %v4538, 0.0
        %v4591 = vsel %vm1017, %v4537, 0.0
        %v4592 = vsel %vm1018, %v4544, 0.0
        %v4593 = vpack.c.bf16 %v4585, %v4585
        %v4594 = vpack.c.bf16 %v4586, %v4586
        %v4595 = vpack.c.bf16 %v4587, %v4587
        %v4596 = vpack.c.bf16 %v4588, %v4588
        %v4597 = vpack.c.bf16 %v4589, %v4589
        %v4598 = vpack.c.bf16 %v4590, %v4590
        %v4599 = vpack.c.bf16 %v4591, %v4591
        %v4600 = vpack.c.bf16 %v4592, %v4592
        %v4601 = vsel %vm1043, %v4495, 0.0
        %v4602 = vsel %vm1044, %v4494, 0.0
        %v4603 = vsel %vm1045, %v4493, 0.0
        %v4604 = vsel %vm1046, %v4492, 0.0
        %v4605 = vsel %vm1047, %v4491, 0.0
        %v4606 = vsel %vm1048, %v4490, 0.0
        %v4607 = vsel %vm1049, %v4489, 0.0
        %v4608 = vsel %vm1050, %v4496, 0.0
        %v4609 = vpack.c.bf16 %v4601, %v4601
        %v4610 = vpack.c.bf16 %v4602, %v4602
        %v4611 = vpack.c.bf16 %v4603, %v4603
        %v4612 = vpack.c.bf16 %v4604, %v4604
        %v4613 = vpack.c.bf16 %v4605, %v4605
        %v4614 = vpack.c.bf16 %v4606, %v4606
        %v4615 = vpack.c.bf16 %v4607, %v4607
        %v4616 = vpack.c.bf16 %v4608, %v4608
        %v4617 = vsel %vm1075, %v4473, 0.0
        %v4618 = vsel %vm1076, %v4474, 0.0
        %v4619 = vsel %vm1077, %v4475, 0.0
        %v4620 = vsel %vm1078, %v4476, 0.0
        %v4621 = vsel %vm1079, %v4477, 0.0
        %v4622 = vsel %vm1080, %v4478, 0.0
        %v4623 = vsel %vm1081, %v4479, 0.0
        %v4624 = vsel %vm1082, %v4472, 0.0
        %v4625 = vpack.c.bf16 %v4617, %v4617
        %v4626 = vpack.c.bf16 %v4618, %v4618
        %v4627 = vpack.c.bf16 %v4619, %v4619
        %v4628 = vpack.c.bf16 %v4620, %v4620
        %v4629 = vpack.c.bf16 %v4621, %v4621
        %v4630 = vpack.c.bf16 %v4622, %v4622
        %v4631 = vpack.c.bf16 %v4623, %v4623
        %v4632 = vpack.c.bf16 %v4624, %v4624
        %v4633 = vsel %vm1107, %v4542, 0.0
        %v4634 = vsel %vm1108, %v4541, 0.0
        %v4635 = vsel %vm1109, %v4540, 0.0
        %v4636 = vsel %vm1110, %v4539, 0.0
        %v4637 = vsel %vm1111, %v4538, 0.0
        %v4638 = vsel %vm1112, %v4537, 0.0
        %v4639 = vsel %vm1113, %v4544, 0.0
        %v4640 = vsel %vm1114, %v4543, 0.0
        %v4641 = vpack.c.bf16 %v4633, %v4633
        %v4642 = vpack.c.bf16 %v4634, %v4634
        %v4643 = vpack.c.bf16 %v4635, %v4635
        %v4644 = vpack.c.bf16 %v4636, %v4636
        %v4645 = vpack.c.bf16 %v4637, %v4637
        %v4646 = vpack.c.bf16 %v4638, %v4638
        %v4647 = vpack.c.bf16 %v4639, %v4639
        %v4648 = vpack.c.bf16 %v4640, %v4640
        %v4657 = vunpack.c.l.b16 %v4505
        %v4658 = vunpack.c.l.b16 %v4506
        %v4659 = vunpack.c.l.b16 %v4507
        %v4660 = vunpack.c.l.b16 %v4508
        %v4661 = vunpack.c.l.b16 %v4509
        %v4662 = vunpack.c.l.b16 %v4510
        %v4663 = vunpack.c.l.b16 %v4511
        %v4664 = vunpack.c.l.b16 %v4512
        %v4665 = vpack.c.b16 %v4658, %v4657
        %v4666 = vpack.c.b16 %v4660, %v4659
        %v4667 = vpack.c.b16 %v4662, %v4661
        %v4668 = vpack.c.b16 %v4664, %v4663
        %v4681 = vunpack.c.l.b16 %v4521
        %v4682 = vunpack.c.l.b16 %v4522
        %v4683 = vunpack.c.l.b16 %v4523
        %v4684 = vunpack.c.l.b16 %v4524
        %v4685 = vunpack.c.l.b16 %v4525
        %v4686 = vunpack.c.l.b16 %v4526
        %v4687 = vunpack.c.l.b16 %v4527
        %v4688 = vunpack.c.l.b16 %v4528
        %v4689 = vpack.c.b16 %v4682, %v4681
        %v4690 = vpack.c.b16 %v4684, %v4683
        %v4691 = vpack.c.b16 %v4686, %v4685
        %v4692 = vpack.c.b16 %v4688, %v4687
        %v4705 = vunpack.c.l.b16 %v4553
        %v4706 = vunpack.c.l.b16 %v4554
        %v4707 = vunpack.c.l.b16 %v4555
        %v4708 = vunpack.c.l.b16 %v4556
        %v4709 = vunpack.c.l.b16 %v4557
        %v4710 = vunpack.c.l.b16 %v4558
        %v4711 = vunpack.c.l.b16 %v4559
        %v4712 = vunpack.c.l.b16 %v4560
        %v4713 = vpack.c.b16 %v4706, %v4705
        %v4714 = vpack.c.b16 %v4708, %v4707
        %v4715 = vpack.c.b16 %v4710, %v4709
        %v4716 = vpack.c.b16 %v4712, %v4711
        %v4729 = vunpack.c.l.b16 %v4569
        %v4730 = vunpack.c.l.b16 %v4570
        %v4731 = vunpack.c.l.b16 %v4571
        %v4732 = vunpack.c.l.b16 %v4572
        %v4733 = vunpack.c.l.b16 %v4573
        %v4734 = vunpack.c.l.b16 %v4574
        %v4735 = vunpack.c.l.b16 %v4575
        %v4736 = vunpack.c.l.b16 %v4576
        %v4737 = vpack.c.b16 %v4730, %v4729
        %v4738 = vpack.c.b16 %v4732, %v4731
        %v4739 = vpack.c.b16 %v4734, %v4733
        %v4740 = vpack.c.b16 %v4736, %v4735
        %v4753 = vunpack.c.l.b16 %v4577
        %v4754 = vunpack.c.l.b16 %v4578
        %v4755 = vunpack.c.l.b16 %v4579
        %v4756 = vunpack.c.l.b16 %v4580
        %v4757 = vunpack.c.l.b16 %v4581
        %v4758 = vunpack.c.l.b16 %v4582
        %v4759 = vunpack.c.l.b16 %v4583
        %v4760 = vunpack.c.l.b16 %v4584
        %v4761 = vpack.c.b16 %v4754, %v4753
        %v4762 = vpack.c.b16 %v4756, %v4755
        %v4763 = vpack.c.b16 %v4758, %v4757
        %v4764 = vpack.c.b16 %v4760, %v4759
        %v4777 = vunpack.c.l.b16 %v4593
        %v4778 = vunpack.c.l.b16 %v4594
        %v4779 = vunpack.c.l.b16 %v4595
        %v4780 = vunpack.c.l.b16 %v4596
        %v4781 = vunpack.c.l.b16 %v4597
        %v4782 = vunpack.c.l.b16 %v4598
        %v4783 = vunpack.c.l.b16 %v4599
        %v4784 = vunpack.c.l.b16 %v4600
        %v4785 = vpack.c.b16 %v4778, %v4777
        %v4786 = vpack.c.b16 %v4780, %v4779
        %v4787 = vpack.c.b16 %v4782, %v4781
        %v4788 = vpack.c.b16 %v4784, %v4783
        %v4801 = vunpack.c.l.b16 %v4609
        %v4802 = vunpack.c.l.b16 %v4610
        %v4803 = vunpack.c.l.b16 %v4611
        %v4804 = vunpack.c.l.b16 %v4612
        %v4805 = vunpack.c.l.b16 %v4613
        %v4806 = vunpack.c.l.b16 %v4614
        %v4807 = vunpack.c.l.b16 %v4615
        %v4808 = vunpack.c.l.b16 %v4616
        %v4809 = vpack.c.b16 %v4802, %v4801
        %v4810 = vpack.c.b16 %v4804, %v4803
        %v4811 = vpack.c.b16 %v4806, %v4805
        %v4812 = vpack.c.b16 %v4808, %v4807
        %v4825 = vunpack.c.l.b16 %v4625
        %v4826 = vunpack.c.l.b16 %v4626
        %v4827 = vunpack.c.l.b16 %v4627
        %v4828 = vunpack.c.l.b16 %v4628
        %v4829 = vunpack.c.l.b16 %v4629
        %v4830 = vunpack.c.l.b16 %v4630
        %v4831 = vunpack.c.l.b16 %v4631
        %v4832 = vunpack.c.l.b16 %v4632
        %v4833 = vpack.c.b16 %v4826, %v4825
        %v4834 = vpack.c.b16 %v4828, %v4827
        %v4835 = vpack.c.b16 %v4830, %v4829
        %v4836 = vpack.c.b16 %v4832, %v4831
        %v4849 = vunpack.c.l.b16 %v4641
        %v4850 = vunpack.c.l.b16 %v4642
        %v4851 = vunpack.c.l.b16 %v4643
        %v4852 = vunpack.c.l.b16 %v4644
        %v4853 = vunpack.c.l.b16 %v4645
        %v4854 = vunpack.c.l.b16 %v4646
        %v4855 = vunpack.c.l.b16 %v4647
        %v4856 = vunpack.c.l.b16 %v4648
        %v4857 = vpack.c.b16 %v4850, %v4849
        %v4858 = vpack.c.b16 %v4852, %v4851
        %v4859 = vpack.c.b16 %v4854, %v4853
        %v4860 = vpack.c.b16 %v4856, %v4855
        %s4865 = scalar_lea.vmem [#allocation4], 1152
        %v4866 = vld [vmem:[%s4865] sm:$0xf]
        %v4867 = vld [vmem:[%s4865 + $0x4] sm:$0xf]
        %v4868 = vld [vmem:[%s4865 + $0x8] sm:$0xf]
        %v4869 = vld [vmem:[%s4865 + $0xc] sm:$0xf]
        %v4870 = vld [vmem:[%s4865 + $0x10] sm:$0xf]
        %v4871 = vld [vmem:[%s4865 + $0x14] sm:$0xf]
        %v4872 = vld [vmem:[%s4865 + $0x18] sm:$0xf]
        %v4873 = vld [vmem:[%s4865 + $0x1c] sm:$0xf]
        %v4874 = vld [vmem:[%s4865 + $0x20] sm:$0xf]
        %v4875 = vld [vmem:[%s4865 + $0x24] sm:$0xf]
        %v4876 = vld [vmem:[%s4865 + $0x28] sm:$0xf]
        %v4877 = vld [vmem:[%s4865 + $0x2c] sm:$0xf]
        %v4878 = vld [vmem:[%s4865 + $0x30] sm:$0xf]
        %v4879 = vld [vmem:[%s4865 + $0x34] sm:$0xf]
        %v4880 = vld [vmem:[%s4865 + $0x38] sm:$0xf]
        %v4881 = vld [vmem:[%s4865 + $0x3c] sm:$0xf]
        %v4882 = vld [vmem:[%s4865 + $0x40] sm:$0xf]
        %v4883 = vld [vmem:[%s4865 + $0x44] sm:$0xf]
        %v4884 = vld [vmem:[%s4865 + $0x48] sm:$0xf]
        %v4885 = vld [vmem:[%s4865 + $0x4c] sm:$0xf]
        %v4886 = vld [vmem:[%s4865 + $0x50] sm:$0xf]
        %v4887 = vld [vmem:[%s4865 + $0x54] sm:$0xf]
        %v4888 = vld [vmem:[%s4865 + $0x58] sm:$0xf]
        %v4889 = vld [vmem:[%s4865 + $0x5c] sm:$0xf]
        %v4890 = vld [vmem:[%s4865 + $0x60] sm:$0xf]
        %v4891 = vld [vmem:[%s4865 + $0x64] sm:$0xf]
        %v4892 = vld [vmem:[%s4865 + $0x68] sm:$0xf]
        %v4893 = vld [vmem:[%s4865 + $0x6c] sm:$0xf]
        %v4894 = vld [vmem:[%s4865 + $0x70] sm:$0xf]
        %v4895 = vld [vmem:[%s4865 + $0x74] sm:$0xf]
        %v4896 = vld [vmem:[%s4865 + $0x78] sm:$0xf]
        %v4897 = vld [vmem:[%s4865 + $0x7c] sm:$0xf]
        %v4898 = vld [vmem:[%s4865 + $0x80] sm:$0xf]
        %v4899 = vld [vmem:[%s4865 + $0x84] sm:$0xf]
        %v4900 = vld [vmem:[%s4865 + $0x88] sm:$0xf]
        %v4901 = vld [vmem:[%s4865 + $0x8c] sm:$0xf]
        %v4902 = vld [vmem:[%s4865 + $0x90] sm:$0xf]
        %v4903 = vld [vmem:[%s4865 + $0x94] sm:$0xf]
        %v4904 = vld [vmem:[%s4865 + $0x98] sm:$0xf]
        %v4905 = vld [vmem:[%s4865 + $0x9c] sm:$0xf]
        %v4906 = vld [vmem:[%s4865 + $0xa0] sm:$0xf]
        %v4907 = vld [vmem:[%s4865 + $0xa4] sm:$0xf]
        %v4908 = vld [vmem:[%s4865 + $0xa8] sm:$0xf]
        %v4909 = vld [vmem:[%s4865 + $0xac] sm:$0xf]
        %v4910 = vld [vmem:[%s4865 + $0xb0] sm:$0xf]
        %v4911 = vld [vmem:[%s4865 + $0xb4] sm:$0xf]
        %v4912 = vld [vmem:[%s4865 + $0xb8] sm:$0xf]
        %v4913 = vld [vmem:[%s4865 + $0xbc] sm:$0xf]
        %v4914 = vld [vmem:[%s4865 + $0xc0] sm:$0xf]
        %v4915 = vld [vmem:[%s4865 + $0xc4] sm:$0xf]
        %v4916 = vld [vmem:[%s4865 + $0xc8] sm:$0xf]
        %v4917 = vld [vmem:[%s4865 + $0xcc] sm:$0xf]
        %v4918 = vld [vmem:[%s4865 + $0xd0] sm:$0xf]
        %v4919 = vld [vmem:[%s4865 + $0xd4] sm:$0xf]
        %v4920 = vld [vmem:[%s4865 + $0xd8] sm:$0xf]
        %v4921 = vld [vmem:[%s4865 + $0xdc] sm:$0xf]
        %v4922 = vld [vmem:[%s4865 + $0xe0] sm:$0xf]
        %v4923 = vld [vmem:[%s4865 + $0xe4] sm:$0xf]
        %v4924 = vld [vmem:[%s4865 + $0xe8] sm:$0xf]
        %v4925 = vld [vmem:[%s4865 + $0xec] sm:$0xf]
        %v4926 = vld [vmem:[%s4865 + $0xf0] sm:$0xf]
        %v4927 = vld [vmem:[%s4865 + $0xf4] sm:$0xf]
        %v4928 = vld [vmem:[%s4865 + $0xf8] sm:$0xf]
        %v4929 = vld [vmem:[%s4865 + $0xfc] sm:$0xf]
        %v4930 = vld [vmem:[%s4865 + $0x100] sm:$0xf]
        %v4931 = vld [vmem:[%s4865 + $0x104] sm:$0xf]
        %v4932 = vld [vmem:[%s4865 + $0x108] sm:$0xf]
        %v4933 = vld [vmem:[%s4865 + $0x10c] sm:$0xf]
        %v4934 = vld [vmem:[%s4865 + $0x110] sm:$0xf]
        %v4935 = vld [vmem:[%s4865 + $0x114] sm:$0xf]
        %v4936 = vld [vmem:[%s4865 + $0x118] sm:$0xf]
        %v4937 = vld [vmem:[%s4865 + $0x11c] sm:$0xf]
        %v4938 = vld [vmem:[%s4865 + $0x120] sm:$0xf]
        %v4939 = vld [vmem:[%s4865 + $0x124] sm:$0xf]
        %v4940 = vld [vmem:[%s4865 + $0x128] sm:$0xf]
        %v4941 = vld [vmem:[%s4865 + $0x12c] sm:$0xf]
        %v4942 = vld [vmem:[%s4865 + $0x130] sm:$0xf]
        %v4943 = vld [vmem:[%s4865 + $0x134] sm:$0xf]
        %v4944 = vld [vmem:[%s4865 + $0x138] sm:$0xf]
        %v4945 = vld [vmem:[%s4865 + $0x13c] sm:$0xf]
        %v4946 = vld [vmem:[%s4865 + $0x140] sm:$0xf]
        %v4947 = vld [vmem:[%s4865 + $0x144] sm:$0xf]
        %v4948 = vld [vmem:[%s4865 + $0x148] sm:$0xf]
        %v4949 = vld [vmem:[%s4865 + $0x14c] sm:$0xf]
        %v4950 = vld [vmem:[%s4865 + $0x150] sm:$0xf]
        %v4951 = vld [vmem:[%s4865 + $0x154] sm:$0xf]
        %v4952 = vld [vmem:[%s4865 + $0x158] sm:$0xf]
        %v4953 = vld [vmem:[%s4865 + $0x15c] sm:$0xf]
        %v4954 = vld [vmem:[%s4865 + $0x160] sm:$0xf]
        %v4955 = vld [vmem:[%s4865 + $0x164] sm:$0xf]
        %v4956 = vld [vmem:[%s4865 + $0x168] sm:$0xf]
        %v4957 = vld [vmem:[%s4865 + $0x16c] sm:$0xf]
        %v4958 = vld [vmem:[%s4865 + $0x170] sm:$0xf]
        %v4959 = vld [vmem:[%s4865 + $0x174] sm:$0xf]
        %v4960 = vld [vmem:[%s4865 + $0x178] sm:$0xf]
        %v4961 = vld [vmem:[%s4865 + $0x17c] sm:$0xf]
        %v4962 = vld [vmem:[%s4865 + $0x180] sm:$0xf]
        %v4963 = vld [vmem:[%s4865 + $0x184] sm:$0xf]
        %v4964 = vld [vmem:[%s4865 + $0x188] sm:$0xf]
        %v4965 = vld [vmem:[%s4865 + $0x18c] sm:$0xf]
        %v4966 = vld [vmem:[%s4865 + $0x190] sm:$0xf]
        %v4967 = vld [vmem:[%s4865 + $0x194] sm:$0xf]
        %v4968 = vld [vmem:[%s4865 + $0x198] sm:$0xf]
        %v4969 = vld [vmem:[%s4865 + $0x19c] sm:$0xf]
        %v4970 = vld [vmem:[%s4865 + $0x1a0] sm:$0xf]
        %v4971 = vld [vmem:[%s4865 + $0x1a4] sm:$0xf]
        %v4972 = vld [vmem:[%s4865 + $0x1a8] sm:$0xf]
        %v4973 = vld [vmem:[%s4865 + $0x1ac] sm:$0xf]
        %v4974 = vld [vmem:[%s4865 + $0x1b0] sm:$0xf]
        %v4975 = vld [vmem:[%s4865 + $0x1b4] sm:$0xf]
        %v4976 = vld [vmem:[%s4865 + $0x1b8] sm:$0xf]
        %v4977 = vld [vmem:[%s4865 + $0x1bc] sm:$0xf]
        %v4978 = vld [vmem:[%s4865 + $0x1c0] sm:$0xf]
        %v4979 = vld [vmem:[%s4865 + $0x1c4] sm:$0xf]
        %v4980 = vld [vmem:[%s4865 + $0x1c8] sm:$0xf]
        %v4981 = vld [vmem:[%s4865 + $0x1cc] sm:$0xf]
        %v4982 = vld [vmem:[%s4865 + $0x1d0] sm:$0xf]
        %v4983 = vld [vmem:[%s4865 + $0x1d4] sm:$0xf]
        %v4984 = vld [vmem:[%s4865 + $0x1d8] sm:$0xf]
        %v4985 = vld [vmem:[%s4865 + $0x1dc] sm:$0xf]
        %v4986 = vld [vmem:[%s4865 + $0x1e0] sm:$0xf]
        %v4987 = vld [vmem:[%s4865 + $0x1e4] sm:$0xf]
        %v4988 = vld [vmem:[%s4865 + $0x1e8] sm:$0xf]
        %v4989 = vld [vmem:[%s4865 + $0x1ec] sm:$0xf]
        %v4990 = vld [vmem:[%s4865 + $0x1f0] sm:$0xf]
        %v4991 = vld [vmem:[%s4865 + $0x1f4] sm:$0xf]
        %v4992 = vld [vmem:[%s4865 + $0x1f8] sm:$0xf]
        %v4993 = vld [vmem:[%s4865 + $0x1fc] sm:$0xf]
        %v4994 = vld [vmem:[%s4865 + $0x200] sm:$0xf]
        %v4995 = vld [vmem:[%s4865 + $0x204] sm:$0xf]
        %v4996 = vld [vmem:[%s4865 + $0x208] sm:$0xf]
        %v4997 = vld [vmem:[%s4865 + $0x20c] sm:$0xf]
        %v4998 = vld [vmem:[%s4865 + $0x210] sm:$0xf]
        %v4999 = vld [vmem:[%s4865 + $0x214] sm:$0xf]
        %v5000 = vld [vmem:[%s4865 + $0x218] sm:$0xf]
        %v5001 = vld [vmem:[%s4865 + $0x21c] sm:$0xf]
        %v5002 = vld [vmem:[%s4865 + $0x220] sm:$0xf]
        %v5003 = vld [vmem:[%s4865 + $0x224] sm:$0xf]
        %v5004 = vld [vmem:[%s4865 + $0x228] sm:$0xf]
        %v5005 = vld [vmem:[%s4865 + $0x22c] sm:$0xf]
        %v5006 = vld [vmem:[%s4865 + $0x230] sm:$0xf]
        %v5007 = vld [vmem:[%s4865 + $0x234] sm:$0xf]
        %v5008 = vld [vmem:[%s4865 + $0x238] sm:$0xf]
        %v5009 = vld [vmem:[%s4865 + $0x23c] sm:$0xf]
        %v5010 = vperm.slane %v4480, 0
        %v5155 = vunpack.c.l.b16 %v4866
        %v5156 = vunpack.c.l.b16 %v4867
        %v5157 = vunpack.c.l.b16 %v4868
        %v5158 = vunpack.c.l.b16 %v4869
        %v5159 = vunpack.c.l.b16 %v4870
        %v5160 = vunpack.c.l.b16 %v4871
        %v5161 = vunpack.c.l.b16 %v4872
        %v5162 = vunpack.c.l.b16 %v4873
        %v5163 = vunpack.c.l.b16 %v4874
        %v5164 = vunpack.c.l.b16 %v4875
        %v5165 = vunpack.c.l.b16 %v4876
        %v5166 = vunpack.c.l.b16 %v4877
        %v5167 = vunpack.c.l.b16 %v4878
        %v5168 = vunpack.c.l.b16 %v4879
        %v5169 = vunpack.c.l.b16 %v4880
        %v5170 = vunpack.c.l.b16 %v4881
        %v5171 = vunpack.c.l.b16 %v4882
        %v5172 = vunpack.c.l.b16 %v4883
        %v5173 = vunpack.c.l.b16 %v4884
        %v5174 = vunpack.c.l.b16 %v4885
        %v5175 = vunpack.c.l.b16 %v4886
        %v5176 = vunpack.c.l.b16 %v4887
        %v5177 = vunpack.c.l.b16 %v4888
        %v5178 = vunpack.c.l.b16 %v4889
        %v5179 = vunpack.c.l.b16 %v4890
        %v5180 = vunpack.c.l.b16 %v4891
        %v5181 = vunpack.c.l.b16 %v4892
        %v5182 = vunpack.c.l.b16 %v4893
        %v5183 = vunpack.c.l.b16 %v4894
        %v5184 = vunpack.c.l.b16 %v4895
        %v5185 = vunpack.c.l.b16 %v4896
        %v5186 = vunpack.c.l.b16 %v4897
        %v5187 = vunpack.c.l.b16 %v4898
        %v5188 = vunpack.c.l.b16 %v4899
        %v5189 = vunpack.c.l.b16 %v4900
        %v5190 = vunpack.c.l.b16 %v4901
        %v5191 = vunpack.c.l.b16 %v4902
        %v5192 = vunpack.c.l.b16 %v4903
        %v5193 = vunpack.c.l.b16 %v4904
        %v5194 = vunpack.c.l.b16 %v4905
        %v5195 = vunpack.c.l.b16 %v4906
        %v5196 = vunpack.c.l.b16 %v4907
        %v5197 = vunpack.c.l.b16 %v4908
        %v5198 = vunpack.c.l.b16 %v4909
        %v5199 = vunpack.c.l.b16 %v4910
        %v5200 = vunpack.c.l.b16 %v4911
        %v5201 = vunpack.c.l.b16 %v4912
        %v5202 = vunpack.c.l.b16 %v4913
        %v5203 = vunpack.c.l.b16 %v4914
        %v5204 = vunpack.c.l.b16 %v4915
        %v5205 = vunpack.c.l.b16 %v4916
        %v5206 = vunpack.c.l.b16 %v4917
        %v5207 = vunpack.c.l.b16 %v4918
        %v5208 = vunpack.c.l.b16 %v4919
        %v5209 = vunpack.c.l.b16 %v4920
        %v5210 = vunpack.c.l.b16 %v4921
        %v5211 = vunpack.c.l.b16 %v4922
        %v5212 = vunpack.c.l.b16 %v4923
        %v5213 = vunpack.c.l.b16 %v4924
        %v5214 = vunpack.c.l.b16 %v4925
        %v5215 = vunpack.c.l.b16 %v4926
        %v5216 = vunpack.c.l.b16 %v4927
        %v5217 = vunpack.c.l.b16 %v4928
        %v5218 = vunpack.c.l.b16 %v4929
        %v5219 = vunpack.c.l.b16 %v4930
        %v5220 = vunpack.c.l.b16 %v4931
        %v5221 = vunpack.c.l.b16 %v4932
        %v5222 = vunpack.c.l.b16 %v4933
        %v5223 = vunpack.c.l.b16 %v4934
        %v5224 = vunpack.c.l.b16 %v4935
        %v5225 = vunpack.c.l.b16 %v4936
        %v5226 = vunpack.c.l.b16 %v4937
        %v5227 = vunpack.c.l.b16 %v4938
        %v5228 = vunpack.c.l.b16 %v4939
        %v5229 = vunpack.c.l.b16 %v4940
        %v5230 = vunpack.c.l.b16 %v4941
        %v5231 = vunpack.c.l.b16 %v4942
        %v5232 = vunpack.c.l.b16 %v4943
        %v5233 = vunpack.c.l.b16 %v4944
        %v5234 = vunpack.c.l.b16 %v4945
        %v5235 = vunpack.c.l.b16 %v4946
        %v5236 = vunpack.c.l.b16 %v4947
        %v5237 = vunpack.c.l.b16 %v4948
        %v5238 = vunpack.c.l.b16 %v4949
        %v5239 = vunpack.c.l.b16 %v4950
        %v5240 = vunpack.c.l.b16 %v4951
        %v5241 = vunpack.c.l.b16 %v4952
        %v5242 = vunpack.c.l.b16 %v4953
        %v5243 = vunpack.c.l.b16 %v4954
        %v5244 = vunpack.c.l.b16 %v4955
        %v5245 = vunpack.c.l.b16 %v4956
        %v5246 = vunpack.c.l.b16 %v4957
        %v5247 = vunpack.c.l.b16 %v4958
        %v5248 = vunpack.c.l.b16 %v4959
        %v5249 = vunpack.c.l.b16 %v4960
        %v5250 = vunpack.c.l.b16 %v4961
        %v5251 = vunpack.c.l.b16 %v4962
        %v5252 = vunpack.c.l.b16 %v4963
        %v5253 = vunpack.c.l.b16 %v4964
        %v5254 = vunpack.c.l.b16 %v4965
        %v5255 = vunpack.c.l.b16 %v4966
        %v5256 = vunpack.c.l.b16 %v4967
        %v5257 = vunpack.c.l.b16 %v4968
        %v5258 = vunpack.c.l.b16 %v4969
        %v5259 = vunpack.c.l.b16 %v4970
        %v5260 = vunpack.c.l.b16 %v4971
        %v5261 = vunpack.c.l.b16 %v4972
        %v5262 = vunpack.c.l.b16 %v4973
        %v5263 = vunpack.c.l.b16 %v4974
        %v5264 = vunpack.c.l.b16 %v4975
        %v5265 = vunpack.c.l.b16 %v4976
        %v5266 = vunpack.c.l.b16 %v4977
        %v5267 = vunpack.c.l.b16 %v4978
        %v5268 = vunpack.c.l.b16 %v4979
        %v5269 = vunpack.c.l.b16 %v4980
        %v5270 = vunpack.c.l.b16 %v4981
        %v5271 = vunpack.c.l.b16 %v4982
        %v5272 = vunpack.c.l.b16 %v4983
        %v5273 = vunpack.c.l.b16 %v4984
        %v5274 = vunpack.c.l.b16 %v4985
        %v5275 = vunpack.c.l.b16 %v4986
        %v5276 = vunpack.c.l.b16 %v4987
        %v5277 = vunpack.c.l.b16 %v4988
        %v5278 = vunpack.c.l.b16 %v4989
        %v5279 = vunpack.c.l.b16 %v4990
        %v5280 = vunpack.c.l.b16 %v4991
        %v5281 = vunpack.c.l.b16 %v4992
        %v5282 = vunpack.c.l.b16 %v4993
        %v5283 = vunpack.c.l.b16 %v4994
        %v5284 = vunpack.c.l.b16 %v4995
        %v5285 = vunpack.c.l.b16 %v4996
        %v5286 = vunpack.c.l.b16 %v4997
        %v5287 = vunpack.c.l.b16 %v4998
        %v5288 = vunpack.c.l.b16 %v4999
        %v5289 = vunpack.c.l.b16 %v5000
        %v5290 = vunpack.c.l.b16 %v5001
        %v5291 = vunpack.c.l.b16 %v5002
        %v5292 = vunpack.c.l.b16 %v5003
        %v5293 = vunpack.c.l.b16 %v5004
        %v5294 = vunpack.c.l.b16 %v5005
        %v5295 = vunpack.c.l.b16 %v5006
        %v5296 = vunpack.c.l.b16 %v5007
        %v5297 = vunpack.c.l.b16 %v5008
        %v5298 = vunpack.c.l.b16 %v5009
        %v5299 = vpack.c.b16 %v5156, %v5155
        %v5300 = vpack.c.b16 %v5158, %v5157
        %v5301 = vpack.c.b16 %v5160, %v5159
        %v5302 = vpack.c.b16 %v5162, %v5161
        %v5303 = vpack.c.b16 %v5164, %v5163
        %v5304 = vpack.c.b16 %v5166, %v5165
        %v5305 = vpack.c.b16 %v5168, %v5167
        %v5306 = vpack.c.b16 %v5170, %v5169
        %v5307 = vpack.c.b16 %v5172, %v5171
        %v5308 = vpack.c.b16 %v5174, %v5173
        %v5309 = vpack.c.b16 %v5176, %v5175
        %v5310 = vpack.c.b16 %v5178, %v5177
        %v5311 = vpack.c.b16 %v5180, %v5179
        %v5312 = vpack.c.b16 %v5182, %v5181
        %v5313 = vpack.c.b16 %v5184, %v5183
        %v5314 = vpack.c.b16 %v5186, %v5185
        %v5315 = vpack.c.b16 %v5188, %v5187
        %v5316 = vpack.c.b16 %v5190, %v5189
        %v5317 = vpack.c.b16 %v5192, %v5191
        %v5318 = vpack.c.b16 %v5194, %v5193
        %v5319 = vpack.c.b16 %v5196, %v5195
        %v5320 = vpack.c.b16 %v5198, %v5197
        %v5321 = vpack.c.b16 %v5200, %v5199
        %v5322 = vpack.c.b16 %v5202, %v5201
        %v5323 = vpack.c.b16 %v5204, %v5203
        %v5324 = vpack.c.b16 %v5206, %v5205
        %v5325 = vpack.c.b16 %v5208, %v5207
        %v5326 = vpack.c.b16 %v5210, %v5209
        %v5327 = vpack.c.b16 %v5212, %v5211
        %v5328 = vpack.c.b16 %v5214, %v5213
        %v5329 = vpack.c.b16 %v5216, %v5215
        %v5330 = vpack.c.b16 %v5218, %v5217
        %v5331 = vpack.c.b16 %v5220, %v5219
        %v5332 = vpack.c.b16 %v5222, %v5221
        %v5333 = vpack.c.b16 %v5224, %v5223
        %v5334 = vpack.c.b16 %v5226, %v5225
        %v5335 = vpack.c.b16 %v5228, %v5227
        %v5336 = vpack.c.b16 %v5230, %v5229
        %v5337 = vpack.c.b16 %v5232, %v5231
        %v5338 = vpack.c.b16 %v5234, %v5233
        %v5339 = vpack.c.b16 %v5236, %v5235
        %v5340 = vpack.c.b16 %v5238, %v5237
        %v5341 = vpack.c.b16 %v5240, %v5239
        %v5342 = vpack.c.b16 %v5242, %v5241
        %v5343 = vpack.c.b16 %v5244, %v5243
        %v5344 = vpack.c.b16 %v5246, %v5245
        %v5345 = vpack.c.b16 %v5248, %v5247
        %v5346 = vpack.c.b16 %v5250, %v5249
        %v5347 = vpack.c.b16 %v5252, %v5251
        %v5348 = vpack.c.b16 %v5254, %v5253
        %v5349 = vpack.c.b16 %v5256, %v5255
        %v5350 = vpack.c.b16 %v5258, %v5257
        %v5351 = vpack.c.b16 %v5260, %v5259
        %v5352 = vpack.c.b16 %v5262, %v5261
        %v5353 = vpack.c.b16 %v5264, %v5263
        %v5354 = vpack.c.b16 %v5266, %v5265
        %v5355 = vpack.c.b16 %v5268, %v5267
        %v5356 = vpack.c.b16 %v5270, %v5269
        %v5357 = vpack.c.b16 %v5272, %v5271
        %v5358 = vpack.c.b16 %v5274, %v5273
        %v5359 = vpack.c.b16 %v5276, %v5275
        %v5360 = vpack.c.b16 %v5278, %v5277
        %v5361 = vpack.c.b16 %v5280, %v5279
        %v5362 = vpack.c.b16 %v5282, %v5281
        %v5363 = vpack.c.b16 %v5284, %v5283
        %v5364 = vpack.c.b16 %v5286, %v5285
        %v5365 = vpack.c.b16 %v5288, %v5287
        %v5366 = vpack.c.b16 %v5290, %v5289
        %v5367 = vpack.c.b16 %v5292, %v5291
        %v5368 = vpack.c.b16 %v5294, %v5293
        %v5369 = vpack.c.b16 %v5296, %v5295
        %v5370 = vpack.c.b16 %v5298, %v5297
        %5443 = vmatpush.bf16.msra.mxu0 %v5306
        %5444 = vmatpush.bf16.msra.mxu0 %v5305
        %5445 = vmatpush.bf16.msra.mxu0 %v5304
        %5446 = vmatpush.bf16.msra.mxu0 %v5303
        %5447 = vmatpush.bf16.msra.mxu0 %v5302
        %5448 = vmatpush.bf16.msra.mxu0 %v5301
        %5449 = vmatpush.bf16.msra.mxu0 %v5300
        %5450 = vmatpush.bf16.msra.mxu0 %v5299
        %5451 = vmatmul.bf16.gmra.mxu0 %v4665
        %v5452 = vpop.f32.mrf.mxu0
        %v5453 = vadd.f32 %v5010, %v5452
        %v5454 = vpop.f32.mrf.mxu0
        %v5455 = vadd.f32 %v5010, %v5454
        %5456 = vmatmul.bf16.gmra.mxu0 %v4666
        %v5457 = vpop.f32.mrf.mxu0
        %v5458 = vadd.f32 %v5010, %v5457
        %v5459 = vpop.f32.mrf.mxu0
        %v5460 = vadd.f32 %v5010, %v5459
        %5461 = vmatmul.bf16.gmra.mxu0 %v4667
        %v5462 = vpop.f32.mrf.mxu0
        %v5463 = vadd.f32 %v5010, %v5462
        %v5464 = vpop.f32.mrf.mxu0
        %v5465 = vadd.f32 %v5010, %v5464
        %5466 = vmatmul.bf16.gmra.mxu0 %v4668
        %v5467 = vpop.f32.mrf.mxu0
        %v5468 = vadd.f32 %v5010, %v5467
        %v5469 = vpop.f32.mrf.mxu0
        %v5470 = vadd.f32 %v5010, %v5469
        %5471 = vdwg.mxu0
        %5472 = vmatpush.bf16.msra.mxu0 %v5314
        %5473 = vmatpush.bf16.msra.mxu0 %v5313
        %5474 = vmatpush.bf16.msra.mxu0 %v5312
        %5475 = vmatpush.bf16.msra.mxu0 %v5311
        %5476 = vmatpush.bf16.msra.mxu0 %v5310
        %5477 = vmatpush.bf16.msra.mxu0 %v5309
        %5478 = vmatpush.bf16.msra.mxu0 %v5308
        %5479 = vmatpush.bf16.msra.mxu0 %v5307
        %5480 = vmatmul.bf16.gmra.mxu0 %v4689
        %v5481 = vpop.f32.mrf.mxu0
        %v5482 = vadd.f32 %v5453, %v5481
        %v5483 = vpop.f32.mrf.mxu0
        %v5484 = vadd.f32 %v5455, %v5483
        %5485 = vmatmul.bf16.gmra.mxu0 %v4690
        %v5486 = vpop.f32.mrf.mxu0
        %v5487 = vadd.f32 %v5458, %v5486
        %v5488 = vpop.f32.mrf.mxu0
        %v5489 = vadd.f32 %v5460, %v5488
        %5490 = vmatmul.bf16.gmra.mxu0 %v4691
        %v5491 = vpop.f32.mrf.mxu0
        %v5492 = vadd.f32 %v5463, %v5491
        %v5493 = vpop.f32.mrf.mxu0
        %v5494 = vadd.f32 %v5465, %v5493
        %5495 = vmatmul.bf16.gmra.mxu0 %v4692
        %v5496 = vpop.f32.mrf.mxu0
        %v5497 = vadd.f32 %v5468, %v5496
        %v5498 = vpop.f32.mrf.mxu0
        %v5499 = vadd.f32 %v5470, %v5498
        %5500 = vdwg.mxu0
        %5501 = vmatpush.bf16.msra.mxu0 %v5322
        %5502 = vmatpush.bf16.msra.mxu0 %v5321
        %5503 = vmatpush.bf16.msra.mxu0 %v5320
        %5504 = vmatpush.bf16.msra.mxu0 %v5319
        %5505 = vmatpush.bf16.msra.mxu0 %v5318
        %5506 = vmatpush.bf16.msra.mxu0 %v5317
        %5507 = vmatpush.bf16.msra.mxu0 %v5316
        %5508 = vmatpush.bf16.msra.mxu0 %v5315
        %5509 = vmatmul.bf16.gmra.mxu0 %v4713
        %v5510 = vpop.f32.mrf.mxu0
        %v5511 = vadd.f32 %v5482, %v5510
        %v5512 = vpop.f32.mrf.mxu0
        %v5513 = vadd.f32 %v5484, %v5512
        %5514 = vmatmul.bf16.gmra.mxu0 %v4714
        %v5515 = vpop.f32.mrf.mxu0
        %v5516 = vadd.f32 %v5487, %v5515
        %v5517 = vpop.f32.mrf.mxu0
        %v5518 = vadd.f32 %v5489, %v5517
        %5519 = vmatmul.bf16.gmra.mxu0 %v4715
        %v5520 = vpop.f32.mrf.mxu0
        %v5521 = vadd.f32 %v5492, %v5520
        %v5522 = vpop.f32.mrf.mxu0
        %v5523 = vadd.f32 %v5494, %v5522
        %5524 = vmatmul.bf16.gmra.mxu0 %v4716
        %v5525 = vpop.f32.mrf.mxu0
        %v5526 = vadd.f32 %v5497, %v5525
        %v5527 = vpop.f32.mrf.mxu0
        %v5528 = vadd.f32 %v5499, %v5527
        %5529 = vdwg.mxu0
        %5530 = vmatpush.bf16.msra.mxu0 %v5330
        %5531 = vmatpush.bf16.msra.mxu0 %v5329
        %5532 = vmatpush.bf16.msra.mxu0 %v5328
        %5533 = vmatpush.bf16.msra.mxu0 %v5327
        %5534 = vmatpush.bf16.msra.mxu0 %v5326
        %5535 = vmatpush.bf16.msra.mxu0 %v5325
        %5536 = vmatpush.bf16.msra.mxu0 %v5324
        %5537 = vmatpush.bf16.msra.mxu0 %v5323
        %5538 = vmatmul.bf16.gmra.mxu0 %v4737
        %v5539 = vpop.f32.mrf.mxu0
        %v5540 = vadd.f32 %v5511, %v5539
        %v5541 = vpop.f32.mrf.mxu0
        %v5542 = vadd.f32 %v5513, %v5541
        %5543 = vmatmul.bf16.gmra.mxu0 %v4738
        %v5544 = vpop.f32.mrf.mxu0
        %v5545 = vadd.f32 %v5516, %v5544
        %v5546 = vpop.f32.mrf.mxu0
        %v5547 = vadd.f32 %v5518, %v5546
        %5548 = vmatmul.bf16.gmra.mxu0 %v4739
        %v5549 = vpop.f32.mrf.mxu0
        %v5550 = vadd.f32 %v5521, %v5549
        %v5551 = vpop.f32.mrf.mxu0
        %v5552 = vadd.f32 %v5523, %v5551
        %5553 = vmatmul.bf16.gmra.mxu0 %v4740
        %v5554 = vpop.f32.mrf.mxu0
        %v5555 = vadd.f32 %v5526, %v5554
        %v5556 = vpop.f32.mrf.mxu0
        %v5557 = vadd.f32 %v5528, %v5556
        %5558 = vdwg.mxu0
        %5559 = vmatpush.bf16.msra.mxu0 %v5338
        %5560 = vmatpush.bf16.msra.mxu0 %v5337
        %5561 = vmatpush.bf16.msra.mxu0 %v5336
        %5562 = vmatpush.bf16.msra.mxu0 %v5335
        %5563 = vmatpush.bf16.msra.mxu0 %v5334
        %5564 = vmatpush.bf16.msra.mxu0 %v5333
        %5565 = vmatpush.bf16.msra.mxu0 %v5332
        %5566 = vmatpush.bf16.msra.mxu0 %v5331
        %5567 = vmatmul.bf16.gmra.mxu0 %v4761
        %v5568 = vpop.f32.mrf.mxu0
        %v5569 = vadd.f32 %v5540, %v5568
        %v5570 = vpop.f32.mrf.mxu0
        %v5571 = vadd.f32 %v5542, %v5570
        %5572 = vmatmul.bf16.gmra.mxu0 %v4762
        %v5573 = vpop.f32.mrf.mxu0
        %v5574 = vadd.f32 %v5545, %v5573
        %v5575 = vpop.f32.mrf.mxu0
        %v5576 = vadd.f32 %v5547, %v5575
        %5577 = vmatmul.bf16.gmra.mxu0 %v4763
        %v5578 = vpop.f32.mrf.mxu0
        %v5579 = vadd.f32 %v5550, %v5578
        %v5580 = vpop.f32.mrf.mxu0
        %v5581 = vadd.f32 %v5552, %v5580
        %5582 = vmatmul.bf16.gmra.mxu0 %v4764
        %v5583 = vpop.f32.mrf.mxu0
        %v5584 = vadd.f32 %v5555, %v5583
        %v5585 = vpop.f32.mrf.mxu0
        %v5586 = vadd.f32 %v5557, %v5585
        %5587 = vdwg.mxu0
        %5588 = vmatpush.bf16.msra.mxu0 %v5346
        %5589 = vmatpush.bf16.msra.mxu0 %v5345
        %5590 = vmatpush.bf16.msra.mxu0 %v5344
        %5591 = vmatpush.bf16.msra.mxu0 %v5343
        %5592 = vmatpush.bf16.msra.mxu0 %v5342
        %5593 = vmatpush.bf16.msra.mxu0 %v5341
        %5594 = vmatpush.bf16.msra.mxu0 %v5340
        %5595 = vmatpush.bf16.msra.mxu0 %v5339
        %5596 = vmatmul.bf16.gmra.mxu0 %v4785
        %v5597 = vpop.f32.mrf.mxu0
        %v5598 = vadd.f32 %v5569, %v5597
        %v5599 = vpop.f32.mrf.mxu0
        %v5600 = vadd.f32 %v5571, %v5599
        %5601 = vmatmul.bf16.gmra.mxu0 %v4786
        %v5602 = vpop.f32.mrf.mxu0
        %v5603 = vadd.f32 %v5574, %v5602
        %v5604 = vpop.f32.mrf.mxu0
        %v5605 = vadd.f32 %v5576, %v5604
        %5606 = vmatmul.bf16.gmra.mxu0 %v4787
        %v5607 = vpop.f32.mrf.mxu0
        %v5608 = vadd.f32 %v5579, %v5607
        %v5609 = vpop.f32.mrf.mxu0
        %v5610 = vadd.f32 %v5581, %v5609
        %5611 = vmatmul.bf16.gmra.mxu0 %v4788
        %v5612 = vpop.f32.mrf.mxu0
        %v5613 = vadd.f32 %v5584, %v5612
        %v5614 = vpop.f32.mrf.mxu0
        %v5615 = vadd.f32 %v5586, %v5614
        %5616 = vdwg.mxu0
        %5617 = vmatpush.bf16.msra.mxu0 %v5354
        %5618 = vmatpush.bf16.msra.mxu0 %v5353
        %5619 = vmatpush.bf16.msra.mxu0 %v5352
        %5620 = vmatpush.bf16.msra.mxu0 %v5351
        %5621 = vmatpush.bf16.msra.mxu0 %v5350
        %5622 = vmatpush.bf16.msra.mxu0 %v5349
        %5623 = vmatpush.bf16.msra.mxu0 %v5348
        %5624 = vmatpush.bf16.msra.mxu0 %v5347
        %5625 = vmatmul.bf16.gmra.mxu0 %v4809
        %v5626 = vpop.f32.mrf.mxu0
        %v5627 = vadd.f32 %v5598, %v5626
        %v5628 = vpop.f32.mrf.mxu0
        %v5629 = vadd.f32 %v5600, %v5628
        %5630 = vmatmul.bf16.gmra.mxu0 %v4810
        %v5631 = vpop.f32.mrf.mxu0
        %v5632 = vadd.f32 %v5603, %v5631
        %v5633 = vpop.f32.mrf.mxu0
        %v5634 = vadd.f32 %v5605, %v5633
        %5635 = vmatmul.bf16.gmra.mxu0 %v4811
        %v5636 = vpop.f32.mrf.mxu0
        %v5637 = vadd.f32 %v5608, %v5636
        %v5638 = vpop.f32.mrf.mxu0
        %v5639 = vadd.f32 %v5610, %v5638
        %5640 = vmatmul.bf16.gmra.mxu0 %v4812
        %v5641 = vpop.f32.mrf.mxu0
        %v5642 = vadd.f32 %v5613, %v5641
        %v5643 = vpop.f32.mrf.mxu0
        %v5644 = vadd.f32 %v5615, %v5643
        %5645 = vdwg.mxu0
        %5646 = vmatpush.bf16.msra.mxu0 %v5362
        %5647 = vmatpush.bf16.msra.mxu0 %v5361
        %5648 = vmatpush.bf16.msra.mxu0 %v5360
        %5649 = vmatpush.bf16.msra.mxu0 %v5359
        %5650 = vmatpush.bf16.msra.mxu0 %v5358
        %5651 = vmatpush.bf16.msra.mxu0 %v5357
        %5652 = vmatpush.bf16.msra.mxu0 %v5356
        %5653 = vmatpush.bf16.msra.mxu0 %v5355
        %5654 = vmatmul.bf16.gmra.mxu0 %v4833
        %v5655 = vpop.f32.mrf.mxu0
        %v5656 = vadd.f32 %v5627, %v5655
        %v5657 = vpop.f32.mrf.mxu0
        %v5658 = vadd.f32 %v5629, %v5657
        %5659 = vmatmul.bf16.gmra.mxu0 %v4834
        %v5660 = vpop.f32.mrf.mxu0
        %v5661 = vadd.f32 %v5632, %v5660
        %v5662 = vpop.f32.mrf.mxu0
        %v5663 = vadd.f32 %v5634, %v5662
        %5664 = vmatmul.bf16.gmra.mxu0 %v4835
        %v5665 = vpop.f32.mrf.mxu0
        %v5666 = vadd.f32 %v5637, %v5665
        %v5667 = vpop.f32.mrf.mxu0
        %v5668 = vadd.f32 %v5639, %v5667
        %5669 = vmatmul.bf16.gmra.mxu0 %v4836
        %v5670 = vpop.f32.mrf.mxu0
        %v5671 = vadd.f32 %v5642, %v5670
        %v5672 = vpop.f32.mrf.mxu0
        %v5673 = vadd.f32 %v5644, %v5672
        %5674 = vdwg.mxu0
        %5675 = vmatpush.bf16.msra.mxu0 %v5370
        %5676 = vmatpush.bf16.msra.mxu0 %v5369
        %5677 = vmatpush.bf16.msra.mxu0 %v5368
        %5678 = vmatpush.bf16.msra.mxu0 %v5367
        %5679 = vmatpush.bf16.msra.mxu0 %v5366
        %5680 = vmatpush.bf16.msra.mxu0 %v5365
        %5681 = vmatpush.bf16.msra.mxu0 %v5364
        %5682 = vmatpush.bf16.msra.mxu0 %v5363
        %5683 = vmatmul.bf16.gmra.mxu0 %v4857
        %v5684 = vpop.f32.mrf.mxu0
        %v5685 = vadd.f32 %v5656, %v5684
        %v5686 = vpop.f32.mrf.mxu0
        %v5687 = vadd.f32 %v5658, %v5686
        %5688 = vmatmul.bf16.gmra.mxu0 %v4858
        %v5689 = vpop.f32.mrf.mxu0
        %v5690 = vadd.f32 %v5661, %v5689
        %v5691 = vpop.f32.mrf.mxu0
        %v5692 = vadd.f32 %v5663, %v5691
        %5693 = vmatmul.bf16.gmra.mxu0 %v4859
        %v5694 = vpop.f32.mrf.mxu0
        %v5695 = vadd.f32 %v5666, %v5694
        %v5696 = vpop.f32.mrf.mxu0
        %v5697 = vadd.f32 %v5668, %v5696
        %5698 = vmatmul.bf16.gmra.mxu0 %v4860
        %v5699 = vpop.f32.mrf.mxu0
        %v5700 = vadd.f32 %v5671, %v5699
        %v5701 = vpop.f32.mrf.mxu0
        %v5702 = vadd.f32 %v5673, %v5701
        %5703 = vdwg.mxu0
        %v5704 = vperm.slane %v572, 1
        %v5705 = vadd.f32 %v5685, %v5704
        %v5706 = vadd.f32 %v5687, %v5704
        %v5707 = vadd.f32 %v5690, %v5704
        %v5708 = vadd.f32 %v5692, %v5704
        %v5709 = vadd.f32 %v5695, %v5704
        %v5710 = vadd.f32 %v5697, %v5704
        %v5711 = vadd.f32 %v5700, %v5704
        %v5712 = vadd.f32 %v5702, %v5704
        %v5713 = vld [vmem:[#allocation2 + $0x9] sm:$0x1]
        %v5714 = vld [vmem:[#allocation2 + $0xa] sm:$0x1]
        %v5715 = vadd.f32 %v5705, %v5706
        %v5716 = vadd.f32 %v5715, %v5707
        %v5717 = vadd.f32 %v5716, %v5708
        %v5718 = vadd.f32 %v5717, %v5709
        %v5719 = vadd.f32 %v5718, %v5710
        %v5720 = vadd.f32 %v5719, %v5711
        %v5721 = vadd.f32 %v5720, %v5712
        %v5722 = vrot.slane %v5721, 4
        %v5723 = vadd.f32 %v5721, %v5722
        %v5724 = vrot.slane %v5723, 2
        %v5725 = vadd.f32 %v5723, %v5724
        %v5726 = vrot.slane %v5725, 1
        %v5727 = vadd.f32 %v5725, %v5726
        %5728 = vrot.lane.b32.xlu0 %v5727, 127
        %v5729 = vpop.permute.xlu0 %5728
        %v5730 = vadd.f32 %v5727, %v5729
        %v5731 = vsel %vm394, %v5730, 0.0
        %5732 = vrot.lane.b32.xlu0 %v5731, 1
        %v5733 = vpop.permute.xlu0 %5732
        %v5734 = vadd.f32 %v5731, %v5733
        %v5735 = vmul.f32 %v5734, 0.0078125
        %v5736 = vperm.slane %v5735, 0
        %v5737 = vsub.f32 %v5705, %v5736
        %v5738 = vsub.f32 %v5706, %v5736
        %v5739 = vsub.f32 %v5707, %v5736
        %v5740 = vsub.f32 %v5708, %v5736
        %v5741 = vsub.f32 %v5709, %v5736
        %v5742 = vsub.f32 %v5710, %v5736
        %v5743 = vsub.f32 %v5711, %v5736
        %v5744 = vsub.f32 %v5712, %v5736
        %v5745 = vmul.f32 %v5737, %v5737
        %v5746 = vmul.f32 %v5738, %v5738
        %v5747 = vmul.f32 %v5739, %v5739
        %v5748 = vmul.f32 %v5740, %v5740
        %v5749 = vmul.f32 %v5741, %v5741
        %v5750 = vmul.f32 %v5742, %v5742
        %v5751 = vmul.f32 %v5743, %v5743
        %v5752 = vmul.f32 %v5744, %v5744
        %v5753 = vadd.f32 %v5745, %v5746
        %v5754 = vadd.f32 %v5753, %v5747
        %v5755 = vadd.f32 %v5754, %v5748
        %v5756 = vadd.f32 %v5755, %v5749
        %v5757 = vadd.f32 %v5756, %v5750
        %v5758 = vadd.f32 %v5757, %v5751
        %v5759 = vadd.f32 %v5758, %v5752
        %v5760 = vrot.slane %v5759, 4
        %v5761 = vadd.f32 %v5759, %v5760
        %v5762 = vrot.slane %v5761, 2
        %v5763 = vadd.f32 %v5761, %v5762
        %v5764 = vrot.slane %v5763, 1
        %v5765 = vadd.f32 %v5763, %v5764
        %5766 = vrot.lane.b32.xlu0 %v5765, 127
        %v5767 = vpop.permute.xlu0 %5766
        %v5768 = vadd.f32 %v5765, %v5767
        %v5769 = vsel %vm394, %v5768, 0.0
        %5770 = vrot.lane.b32.xlu0 %v5769, 1
        %v5771 = vpop.permute.xlu0 %5770
        %v5772 = vadd.f32 %v5769, %v5771
        %v5773 = vmul.f32 %v5772, 0.0078125
        %v5774 = vadd.f32 %v5773, 1e-05
        %v5775 = vrsqrt.pop %v5774
        %v5776 = vmul.f32 %v5775, %v5774
        %v5777 = vmul.f32 %v5776, %v5775
        %v5778 = vmul.f32 0.5, %v5777
        %v5779 = vsub.f32 1.5, %v5778
        %v5780 = vmul.f32 %v5775, %v5779
        %vm5781 = vweird.f32 %v5774
        %vm5782 = vweird.f32 %v5775
        %vm5783 = vmor %vm5781, %vm5782
        %v5784 = vsel %vm5783, %v5775, %v5780
        %v5785 = vperm.slane %v5784, 0
        %v5786 = vmul.f32 %v5737, %v5785
        %v5787 = vmul.f32 %v5738, %v5785
        %v5788 = vmul.f32 %v5739, %v5785
        %v5789 = vmul.f32 %v5740, %v5785
        %v5790 = vmul.f32 %v5741, %v5785
        %v5791 = vmul.f32 %v5742, %v5785
        %v5792 = vmul.f32 %v5743, %v5785
        %v5793 = vmul.f32 %v5744, %v5785
        %v5794 = vperm.slane %v5713, 0
        %v5795 = vmul.f32 %v5786, %v5794
        %v5796 = vmul.f32 %v5787, %v5794
        %v5797 = vmul.f32 %v5788, %v5794
        %v5798 = vmul.f32 %v5789, %v5794
        %v5799 = vmul.f32 %v5790, %v5794
        %v5800 = vmul.f32 %v5791, %v5794
        %v5801 = vmul.f32 %v5792, %v5794
        %v5802 = vmul.f32 %v5793, %v5794
        %v5803 = vperm.slane %v5714, 0
        %v5804 = vadd.f32 %v5795, %v5803
        %v5805 = vadd.f32 %v5796, %v5803
        %v5806 = vadd.f32 %v5797, %v5803
        %v5807 = vadd.f32 %v5798, %v5803
        %v5808 = vadd.f32 %v5799, %v5803
        %v5809 = vadd.f32 %v5800, %v5803
        %v5810 = vadd.f32 %v5801, %v5803
        %v5811 = vadd.f32 %v5802, %v5803
        %v5812 = vxor.u32 %v5804, 2147483648
        %v5813 = vxor.u32 %v5805, 2147483648
        %v5814 = vxor.u32 %v5806, 2147483648
        %v5815 = vxor.u32 %v5807, 2147483648
        %v5816 = vxor.u32 %v5808, 2147483648
        %v5817 = vxor.u32 %v5809, 2147483648
        %v5818 = vxor.u32 %v5810, 2147483648
        %v5819 = vxor.u32 %v5811, 2147483648
        %v5820 = vmul.f32 %v5812, 1.442695
        %v5821 = vpow.pop %v5820
        %v5822 = vmul.f32 %v5813, 1.442695
        %v5823 = vpow.pop %v5822
        %v5824 = vmul.f32 %v5814, 1.442695
        %v5825 = vpow.pop %v5824
        %v5826 = vmul.f32 %v5815, 1.442695
        %v5827 = vpow.pop %v5826
        %v5828 = vmul.f32 %v5816, 1.442695
        %v5829 = vpow.pop %v5828
        %v5830 = vmul.f32 %v5817, 1.442695
        %v5831 = vpow.pop %v5830
        %v5832 = vmul.f32 %v5818, 1.442695
        %v5833 = vpow.pop %v5832
        %v5834 = vmul.f32 %v5819, 1.442695
        %v5835 = vpow.pop %v5834
        %v5836 = vadd.f32 %v5821, 1.0
        %v5837 = vadd.f32 %v5823, 1.0
        %v5838 = vadd.f32 %v5825, 1.0
        %v5839 = vadd.f32 %v5827, 1.0
        %v5840 = vadd.f32 %v5829, 1.0
        %v5841 = vadd.f32 %v5831, 1.0
        %v5842 = vadd.f32 %v5833, 1.0
        %v5843 = vadd.f32 %v5835, 1.0
        %v5844 = vrcp.pop %v5836
        %v5845 = vmul.f32 %v5836, %v5844
        %v5846 = vsub.f32 1.0, %v5845
        %v5847 = vmul.f32 %v5844, %v5846
        %v5848 = vadd.f32 %v5844, %v5847
        %vm5849 = vweird.f32 %v5836
        %vm5850 = vweird.f32 %v5844
        %vm5851 = vmor %vm5849, %vm5850
        %v5852 = vsel %vm5851, %v5844, %v5848
        %v5853 = vand.u32 2147483647, %v5836
        %vm5854 = vcmp.eq.f32.partialorder %v5853, 8.507059e+37
        %v5855 = vand.u32 %v5836, 2147483648
        %v5856 = vor.u32 1.1754944e-38, %v5855
        %v5857 = vsel %vm5854, %v5856, %v5852
        %v5858 = vmul.f32 1.0, %v5857
        %v5859 = vrcp.pop %v5837
        %v5860 = vmul.f32 %v5837, %v5859
        %v5861 = vsub.f32 1.0, %v5860
        %v5862 = vmul.f32 %v5859, %v5861
        %v5863 = vadd.f32 %v5859, %v5862
        %vm5864 = vweird.f32 %v5837
        %vm5865 = vweird.f32 %v5859
        %vm5866 = vmor %vm5864, %vm5865
        %v5867 = vsel %vm5866, %v5859, %v5863
        %v5868 = vand.u32 2147483647, %v5837
        %vm5869 = vcmp.eq.f32.partialorder %v5868, 8.507059e+37
        %v5870 = vand.u32 %v5837, 2147483648
        %v5871 = vor.u32 1.1754944e-38, %v5870
        %v5872 = vsel %vm5869, %v5871, %v5867
        %v5873 = vmul.f32 1.0, %v5872
        %v5874 = vrcp.pop %v5838
        %v5875 = vmul.f32 %v5838, %v5874
        %v5876 = vsub.f32 1.0, %v5875
        %v5877 = vmul.f32 %v5874, %v5876
        %v5878 = vadd.f32 %v5874, %v5877
        %vm5879 = vweird.f32 %v5838
        %vm5880 = vweird.f32 %v5874
        %vm5881 = vmor %vm5879, %vm5880
        %v5882 = vsel %vm5881, %v5874, %v5878
        %v5883 = vand.u32 2147483647, %v5838
        %vm5884 = vcmp.eq.f32.partialorder %v5883, 8.507059e+37
        %v5885 = vand.u32 %v5838, 2147483648
        %v5886 = vor.u32 1.1754944e-38, %v5885
        %v5887 = vsel %vm5884, %v5886, %v5882
        %v5888 = vmul.f32 1.0, %v5887
        %v5889 = vrcp.pop %v5839
        %v5890 = vmul.f32 %v5839, %v5889
        %v5891 = vsub.f32 1.0, %v5890
        %v5892 = vmul.f32 %v5889, %v5891
        %v5893 = vadd.f32 %v5889, %v5892
        %vm5894 = vweird.f32 %v5839
        %vm5895 = vweird.f32 %v5889
        %vm5896 = vmor %vm5894, %vm5895
        %v5897 = vsel %vm5896, %v5889, %v5893
        %v5898 = vand.u32 2147483647, %v5839
        %vm5899 = vcmp.eq.f32.partialorder %v5898, 8.507059e+37
        %v5900 = vand.u32 %v5839, 2147483648
        %v5901 = vor.u32 1.1754944e-38, %v5900
        %v5902 = vsel %vm5899, %v5901, %v5897
        %v5903 = vmul.f32 1.0, %v5902
        %v5904 = vrcp.pop %v5840
        %v5905 = vmul.f32 %v5840, %v5904
        %v5906 = vsub.f32 1.0, %v5905
        %v5907 = vmul.f32 %v5904, %v5906
        %v5908 = vadd.f32 %v5904, %v5907
        %vm5909 = vweird.f32 %v5840
        %vm5910 = vweird.f32 %v5904
        %vm5911 = vmor %vm5909, %vm5910
        %v5912 = vsel %vm5911, %v5904, %v5908
        %v5913 = vand.u32 2147483647, %v5840
        %vm5914 = vcmp.eq.f32.partialorder %v5913, 8.507059e+37
        %v5915 = vand.u32 %v5840, 2147483648
        %v5916 = vor.u32 1.1754944e-38, %v5915
        %v5917 = vsel %vm5914, %v5916, %v5912
        %v5918 = vmul.f32 1.0, %v5917
        %v5919 = vrcp.pop %v5841
        %v5920 = vmul.f32 %v5841, %v5919
        %v5921 = vsub.f32 1.0, %v5920
        %v5922 = vmul.f32 %v5919, %v5921
        %v5923 = vadd.f32 %v5919, %v5922
        %vm5924 = vweird.f32 %v5841
        %vm5925 = vweird.f32 %v5919
        %vm5926 = vmor %vm5924, %vm5925
        %v5927 = vsel %vm5926, %v5919, %v5923
        %v5928 = vand.u32 2147483647, %v5841
        %vm5929 = vcmp.eq.f32.partialorder %v5928, 8.507059e+37
        %v5930 = vand.u32 %v5841, 2147483648
        %v5931 = vor.u32 1.1754944e-38, %v5930
        %v5932 = vsel %vm5929, %v5931, %v5927
        %v5933 = vmul.f32 1.0, %v5932
        %v5934 = vrcp.pop %v5842
        %v5935 = vmul.f32 %v5842, %v5934
        %v5936 = vsub.f32 1.0, %v5935
        %v5937 = vmul.f32 %v5934, %v5936
        %v5938 = vadd.f32 %v5934, %v5937
        %vm5939 = vweird.f32 %v5842
        %vm5940 = vweird.f32 %v5934
        %vm5941 = vmor %vm5939, %vm5940
        %v5942 = vsel %vm5941, %v5934, %v5938
        %v5943 = vand.u32 2147483647, %v5842
        %vm5944 = vcmp.eq.f32.partialorder %v5943, 8.507059e+37
        %v5945 = vand.u32 %v5842, 2147483648
        %v5946 = vor.u32 1.1754944e-38, %v5945
        %v5947 = vsel %vm5944, %v5946, %v5942
        %v5948 = vmul.f32 1.0, %v5947
        %v5949 = vrcp.pop %v5843
        %v5950 = vmul.f32 %v5843, %v5949
        %v5951 = vsub.f32 1.0, %v5950
        %v5952 = vmul.f32 %v5949, %v5951
        %v5953 = vadd.f32 %v5949, %v5952
        %vm5954 = vweird.f32 %v5843
        %vm5955 = vweird.f32 %v5949
        %vm5956 = vmor %vm5954, %vm5955
        %v5957 = vsel %vm5956, %v5949, %v5953
        %v5958 = vand.u32 2147483647, %v5843
        %vm5959 = vcmp.eq.f32.partialorder %v5958, 8.507059e+37
        %v5960 = vand.u32 %v5843, 2147483648
        %v5961 = vor.u32 1.1754944e-38, %v5960
        %v5962 = vsel %vm5959, %v5961, %v5957
        %v5963 = vmul.f32 1.0, %v5962
        %v5964 = vmul.f32 %v5804, %v5858
        %v5965 = vmul.f32 %v5805, %v5873
        %v5966 = vmul.f32 %v5806, %v5888
        %v5967 = vmul.f32 %v5807, %v5903
        %v5968 = vmul.f32 %v5808, %v5918
        %v5969 = vmul.f32 %v5809, %v5933
        %v5970 = vmul.f32 %v5810, %v5948
        %v5971 = vmul.f32 %v5811, %v5963
        %v5972 = vld [vmem:[#allocation2 + $0xb] sm:$0x1]
        %v5973 = vrot.slane %v5964, 7
        %v5974 = vrot.slane %v5965, 7
        %v5975 = vrot.slane %v5966, 7
        %v5976 = vrot.slane %v5967, 7
        %v5977 = vrot.slane %v5968, 7
        %v5978 = vrot.slane %v5969, 7
        %v5979 = vrot.slane %v5970, 7
        %v5980 = vrot.slane %v5971, 7
        %v5981 = vsel %vm841, %v5979, %v5980
        %v5982 = vsel %vm841, %v5978, %v5979
        %v5983 = vsel %vm841, %v5977, %v5978
        %v5984 = vsel %vm841, %v5976, %v5977
        %v5985 = vsel %vm841, %v5975, %v5976
        %v5986 = vsel %vm841, %v5974, %v5975
        %v5987 = vsel %vm841, %v5973, %v5974
        %v5988 = vsel %vm841, %v5980, %v5973
        %v5989 = vsel %vm858, %v5981, 0.0
        %v5990 = vsel %vm859, %v5988, 0.0
        %v5991 = vsel %vm860, %v5987, 0.0
        %v5992 = vsel %vm861, %v5986, 0.0
        %v5993 = vsel %vm862, %v5985, 0.0
        %v5994 = vsel %vm863, %v5984, 0.0
        %v5995 = vsel %vm864, %v5983, 0.0
        %v5996 = vsel %vm865, %v5982, 0.0
        %v5997 = vpack.c.bf16 %v5989, %v5989
        %v5998 = vpack.c.bf16 %v5990, %v5990
        %v5999 = vpack.c.bf16 %v5991, %v5991
        %v6000 = vpack.c.bf16 %v5992, %v5992
        %v6001 = vpack.c.bf16 %v5993, %v5993
        %v6002 = vpack.c.bf16 %v5994, %v5994
        %v6003 = vpack.c.bf16 %v5995, %v5995
        %v6004 = vpack.c.bf16 %v5996, %v5996
        %v6005 = vsel %vm890, %v5971, 0.0
        %v6006 = vsel %vm891, %v5964, 0.0
        %v6007 = vsel %vm892, %v5965, 0.0
        %v6008 = vsel %vm893, %v5966, 0.0
        %v6009 = vsel %vm894, %v5967, 0.0
        %v6010 = vsel %vm895, %v5968, 0.0
        %v6011 = vsel %vm896, %v5969, 0.0
        %v6012 = vsel %vm897, %v5970, 0.0
        %v6013 = vpack.c.bf16 %v6005, %v6005
        %v6014 = vpack.c.bf16 %v6006, %v6006
        %v6015 = vpack.c.bf16 %v6007, %v6007
        %v6016 = vpack.c.bf16 %v6008, %v6008
        %v6017 = vpack.c.bf16 %v6009, %v6009
        %v6018 = vpack.c.bf16 %v6010, %v6010
        %v6019 = vpack.c.bf16 %v6011, %v6011
        %v6020 = vpack.c.bf16 %v6012, %v6012
        %v6021 = vrot.slane %v5964, 1
        %v6022 = vrot.slane %v5965, 1
        %v6023 = vrot.slane %v5966, 1
        %v6024 = vrot.slane %v5967, 1
        %v6025 = vrot.slane %v5968, 1
        %v6026 = vrot.slane %v5969, 1
        %v6027 = vrot.slane %v5970, 1
        %v6028 = vrot.slane %v5971, 1
        %v6029 = vsel %vm922, %v6027, %v6028
        %v6030 = vsel %vm922, %v6026, %v6027
        %v6031 = vsel %vm922, %v6025, %v6026
        %v6032 = vsel %vm922, %v6024, %v6025
        %v6033 = vsel %vm922, %v6023, %v6024
        %v6034 = vsel %vm922, %v6022, %v6023
        %v6035 = vsel %vm922, %v6021, %v6022
        %v6036 = vsel %vm922, %v6028, %v6021
        %v6037 = vsel %vm939, %v6036, 0.0
        %v6038 = vsel %vm940, %v6035, 0.0
        %v6039 = vsel %vm941, %v6034, 0.0
        %v6040 = vsel %vm942, %v6033, 0.0
        %v6041 = vsel %vm943, %v6032, 0.0
        %v6042 = vsel %vm944, %v6031, 0.0
        %v6043 = vsel %vm945, %v6030, 0.0
        %v6044 = vsel %vm946, %v6029, 0.0
        %v6045 = vpack.c.bf16 %v6037, %v6037
        %v6046 = vpack.c.bf16 %v6038, %v6038
        %v6047 = vpack.c.bf16 %v6039, %v6039
        %v6048 = vpack.c.bf16 %v6040, %v6040
        %v6049 = vpack.c.bf16 %v6041, %v6041
        %v6050 = vpack.c.bf16 %v6042, %v6042
        %v6051 = vpack.c.bf16 %v6043, %v6043
        %v6052 = vpack.c.bf16 %v6044, %v6044
        %v6053 = vsel %vm971, %v5988, 0.0
        %v6054 = vsel %vm972, %v5987, 0.0
        %v6055 = vsel %vm973, %v5986, 0.0
        %v6056 = vsel %vm974, %v5985, 0.0
        %v6057 = vsel %vm975, %v5984, 0.0
        %v6058 = vsel %vm976, %v5983, 0.0
        %v6059 = vsel %vm977, %v5982, 0.0
        %v6060 = vsel %vm978, %v5981, 0.0
        %v6061 = vpack.c.bf16 %v6053, %v6053
        %v6062 = vpack.c.bf16 %v6054, %v6054
        %v6063 = vpack.c.bf16 %v6055, %v6055
        %v6064 = vpack.c.bf16 %v6056, %v6056
        %v6065 = vpack.c.bf16 %v6057, %v6057
        %v6066 = vpack.c.bf16 %v6058, %v6058
        %v6067 = vpack.c.bf16 %v6059, %v6059
        %v6068 = vpack.c.bf16 %v6060, %v6060
        %v6069 = vpack.c.bf16 %v5964, %v5964
        %v6070 = vpack.c.bf16 %v5965, %v5965
        %v6071 = vpack.c.bf16 %v5966, %v5966
        %v6072 = vpack.c.bf16 %v5967, %v5967
        %v6073 = vpack.c.bf16 %v5968, %v5968
        %v6074 = vpack.c.bf16 %v5969, %v5969
        %v6075 = vpack.c.bf16 %v5970, %v5970
        %v6076 = vpack.c.bf16 %v5971, %v5971
        %v6077 = vsel %vm1011, %v6035, 0.0
        %v6078 = vsel %vm1012, %v6034, 0.0
        %v6079 = vsel %vm1013, %v6033, 0.0
        %v6080 = vsel %vm1014, %v6032, 0.0
        %v6081 = vsel %vm1015, %v6031, 0.0
        %v6082 = vsel %vm1016, %v6030, 0.0
        %v6083 = vsel %vm1017, %v6029, 0.0
        %v6084 = vsel %vm1018, %v6036, 0.0
        %v6085 = vpack.c.bf16 %v6077, %v6077
        %v6086 = vpack.c.bf16 %v6078, %v6078
        %v6087 = vpack.c.bf16 %v6079, %v6079
        %v6088 = vpack.c.bf16 %v6080, %v6080
        %v6089 = vpack.c.bf16 %v6081, %v6081
        %v6090 = vpack.c.bf16 %v6082, %v6082
        %v6091 = vpack.c.bf16 %v6083, %v6083
        %v6092 = vpack.c.bf16 %v6084, %v6084
        %v6093 = vsel %vm1043, %v5987, 0.0
        %v6094 = vsel %vm1044, %v5986, 0.0
        %v6095 = vsel %vm1045, %v5985, 0.0
        %v6096 = vsel %vm1046, %v5984, 0.0
        %v6097 = vsel %vm1047, %v5983, 0.0
        %v6098 = vsel %vm1048, %v5982, 0.0
        %v6099 = vsel %vm1049, %v5981, 0.0
        %v6100 = vsel %vm1050, %v5988, 0.0
        %v6101 = vpack.c.bf16 %v6093, %v6093
        %v6102 = vpack.c.bf16 %v6094, %v6094
        %v6103 = vpack.c.bf16 %v6095, %v6095
        %v6104 = vpack.c.bf16 %v6096, %v6096
        %v6105 = vpack.c.bf16 %v6097, %v6097
        %v6106 = vpack.c.bf16 %v6098, %v6098
        %v6107 = vpack.c.bf16 %v6099, %v6099
        %v6108 = vpack.c.bf16 %v6100, %v6100
        %v6109 = vsel %vm1075, %v5965, 0.0
        %v6110 = vsel %vm1076, %v5966, 0.0
        %v6111 = vsel %vm1077, %v5967, 0.0
        %v6112 = vsel %vm1078, %v5968, 0.0
        %v6113 = vsel %vm1079, %v5969, 0.0
        %v6114 = vsel %vm1080, %v5970, 0.0
        %v6115 = vsel %vm1081, %v5971, 0.0
        %v6116 = vsel %vm1082, %v5964, 0.0
        %v6117 = vpack.c.bf16 %v6109, %v6109
        %v6118 = vpack.c.bf16 %v6110, %v6110
        %v6119 = vpack.c.bf16 %v6111, %v6111
        %v6120 = vpack.c.bf16 %v6112, %v6112
        %v6121 = vpack.c.bf16 %v6113, %v6113
        %v6122 = vpack.c.bf16 %v6114, %v6114
        %v6123 = vpack.c.bf16 %v6115, %v6115
        %v6124 = vpack.c.bf16 %v6116, %v6116
        %v6125 = vsel %vm1107, %v6034, 0.0
        %v6126 = vsel %vm1108, %v6033, 0.0
        %v6127 = vsel %vm1109, %v6032, 0.0
        %v6128 = vsel %vm1110, %v6031, 0.0
        %v6129 = vsel %vm1111, %v6030, 0.0
        %v6130 = vsel %vm1112, %v6029, 0.0
        %v6131 = vsel %vm1113, %v6036, 0.0
        %v6132 = vsel %vm1114, %v6035, 0.0
        %v6133 = vpack.c.bf16 %v6125, %v6125
        %v6134 = vpack.c.bf16 %v6126, %v6126
        %v6135 = vpack.c.bf16 %v6127, %v6127
        %v6136 = vpack.c.bf16 %v6128, %v6128
        %v6137 = vpack.c.bf16 %v6129, %v6129
        %v6138 = vpack.c.bf16 %v6130, %v6130
        %v6139 = vpack.c.bf16 %v6131, %v6131
        %v6140 = vpack.c.bf16 %v6132, %v6132
        %v6149 = vunpack.c.l.b16 %v5997
        %v6150 = vunpack.c.l.b16 %v5998
        %v6151 = vunpack.c.l.b16 %v5999
        %v6152 = vunpack.c.l.b16 %v6000
        %v6153 = vunpack.c.l.b16 %v6001
        %v6154 = vunpack.c.l.b16 %v6002
        %v6155 = vunpack.c.l.b16 %v6003
        %v6156 = vunpack.c.l.b16 %v6004
        %v6157 = vpack.c.b16 %v6150, %v6149
        %v6158 = vpack.c.b16 %v6152, %v6151
        %v6159 = vpack.c.b16 %v6154, %v6153
        %v6160 = vpack.c.b16 %v6156, %v6155
        %v6173 = vunpack.c.l.b16 %v6013
        %v6174 = vunpack.c.l.b16 %v6014
        %v6175 = vunpack.c.l.b16 %v6015
        %v6176 = vunpack.c.l.b16 %v6016
        %v6177 = vunpack.c.l.b16 %v6017
        %v6178 = vunpack.c.l.b16 %v6018
        %v6179 = vunpack.c.l.b16 %v6019
        %v6180 = vunpack.c.l.b16 %v6020
        %v6181 = vpack.c.b16 %v6174, %v6173
        %v6182 = vpack.c.b16 %v6176, %v6175
        %v6183 = vpack.c.b16 %v6178, %v6177
        %v6184 = vpack.c.b16 %v6180, %v6179
        %v6197 = vunpack.c.l.b16 %v6045
        %v6198 = vunpack.c.l.b16 %v6046
        %v6199 = vunpack.c.l.b16 %v6047
        %v6200 = vunpack.c.l.b16 %v6048
        %v6201 = vunpack.c.l.b16 %v6049
        %v6202 = vunpack.c.l.b16 %v6050
        %v6203 = vunpack.c.l.b16 %v6051
        %v6204 = vunpack.c.l.b16 %v6052
        %v6205 = vpack.c.b16 %v6198, %v6197
        %v6206 = vpack.c.b16 %v6200, %v6199
        %v6207 = vpack.c.b16 %v6202, %v6201
        %v6208 = vpack.c.b16 %v6204, %v6203
        %v6221 = vunpack.c.l.b16 %v6061
        %v6222 = vunpack.c.l.b16 %v6062
        %v6223 = vunpack.c.l.b16 %v6063
        %v6224 = vunpack.c.l.b16 %v6064
        %v6225 = vunpack.c.l.b16 %v6065
        %v6226 = vunpack.c.l.b16 %v6066
        %v6227 = vunpack.c.l.b16 %v6067
        %v6228 = vunpack.c.l.b16 %v6068
        %v6229 = vpack.c.b16 %v6222, %v6221
        %v6230 = vpack.c.b16 %v6224, %v6223
        %v6231 = vpack.c.b16 %v6226, %v6225
        %v6232 = vpack.c.b16 %v6228, %v6227
        %v6245 = vunpack.c.l.b16 %v6069
        %v6246 = vunpack.c.l.b16 %v6070
        %v6247 = vunpack.c.l.b16 %v6071
        %v6248 = vunpack.c.l.b16 %v6072
        %v6249 = vunpack.c.l.b16 %v6073
        %v6250 = vunpack.c.l.b16 %v6074
        %v6251 = vunpack.c.l.b16 %v6075
        %v6252 = vunpack.c.l.b16 %v6076
        %v6253 = vpack.c.b16 %v6246, %v6245
        %v6254 = vpack.c.b16 %v6248, %v6247
        %v6255 = vpack.c.b16 %v6250, %v6249
        %v6256 = vpack.c.b16 %v6252, %v6251
        %v6269 = vunpack.c.l.b16 %v6085
        %v6270 = vunpack.c.l.b16 %v6086
        %v6271 = vunpack.c.l.b16 %v6087
        %v6272 = vunpack.c.l.b16 %v6088
        %v6273 = vunpack.c.l.b16 %v6089
        %v6274 = vunpack.c.l.b16 %v6090
        %v6275 = vunpack.c.l.b16 %v6091
        %v6276 = vunpack.c.l.b16 %v6092
        %v6277 = vpack.c.b16 %v6270, %v6269
        %v6278 = vpack.c.b16 %v6272, %v6271
        %v6279 = vpack.c.b16 %v6274, %v6273
        %v6280 = vpack.c.b16 %v6276, %v6275
        %v6293 = vunpack.c.l.b16 %v6101
        %v6294 = vunpack.c.l.b16 %v6102
        %v6295 = vunpack.c.l.b16 %v6103
        %v6296 = vunpack.c.l.b16 %v6104
        %v6297 = vunpack.c.l.b16 %v6105
        %v6298 = vunpack.c.l.b16 %v6106
        %v6299 = vunpack.c.l.b16 %v6107
        %v6300 = vunpack.c.l.b16 %v6108
        %v6301 = vpack.c.b16 %v6294, %v6293
        %v6302 = vpack.c.b16 %v6296, %v6295
        %v6303 = vpack.c.b16 %v6298, %v6297
        %v6304 = vpack.c.b16 %v6300, %v6299
        %v6317 = vunpack.c.l.b16 %v6117
        %v6318 = vunpack.c.l.b16 %v6118
        %v6319 = vunpack.c.l.b16 %v6119
        %v6320 = vunpack.c.l.b16 %v6120
        %v6321 = vunpack.c.l.b16 %v6121
        %v6322 = vunpack.c.l.b16 %v6122
        %v6323 = vunpack.c.l.b16 %v6123
        %v6324 = vunpack.c.l.b16 %v6124
        %v6325 = vpack.c.b16 %v6318, %v6317
        %v6326 = vpack.c.b16 %v6320, %v6319
        %v6327 = vpack.c.b16 %v6322, %v6321
        %v6328 = vpack.c.b16 %v6324, %v6323
        %v6341 = vunpack.c.l.b16 %v6133
        %v6342 = vunpack.c.l.b16 %v6134
        %v6343 = vunpack.c.l.b16 %v6135
        %v6344 = vunpack.c.l.b16 %v6136
        %v6345 = vunpack.c.l.b16 %v6137
        %v6346 = vunpack.c.l.b16 %v6138
        %v6347 = vunpack.c.l.b16 %v6139
        %v6348 = vunpack.c.l.b16 %v6140
        %v6349 = vpack.c.b16 %v6342, %v6341
        %v6350 = vpack.c.b16 %v6344, %v6343
        %v6351 = vpack.c.b16 %v6346, %v6345
        %v6352 = vpack.c.b16 %v6348, %v6347
        %s6357 = scalar_lea.vmem [#allocation4], 1728
        %v6358 = vld [vmem:[%s6357] sm:$0xf]
        %v6359 = vld [vmem:[%s6357 + $0x4] sm:$0xf]
        %v6360 = vld [vmem:[%s6357 + $0x8] sm:$0xf]
        %v6361 = vld [vmem:[%s6357 + $0xc] sm:$0xf]
        %v6362 = vld [vmem:[%s6357 + $0x10] sm:$0xf]
        %v6363 = vld [vmem:[%s6357 + $0x14] sm:$0xf]
        %v6364 = vld [vmem:[%s6357 + $0x18] sm:$0xf]
        %v6365 = vld [vmem:[%s6357 + $0x1c] sm:$0xf]
        %v6366 = vld [vmem:[%s6357 + $0x20] sm:$0xf]
        %v6367 = vld [vmem:[%s6357 + $0x24] sm:$0xf]
        %v6368 = vld [vmem:[%s6357 + $0x28] sm:$0xf]
        %v6369 = vld [vmem:[%s6357 + $0x2c] sm:$0xf]
        %v6370 = vld [vmem:[%s6357 + $0x30] sm:$0xf]
        %v6371 = vld [vmem:[%s6357 + $0x34] sm:$0xf]
        %v6372 = vld [vmem:[%s6357 + $0x38] sm:$0xf]
        %v6373 = vld [vmem:[%s6357 + $0x3c] sm:$0xf]
        %v6374 = vld [vmem:[%s6357 + $0x40] sm:$0xf]
        %v6375 = vld [vmem:[%s6357 + $0x44] sm:$0xf]
        %v6376 = vld [vmem:[%s6357 + $0x48] sm:$0xf]
        %v6377 = vld [vmem:[%s6357 + $0x4c] sm:$0xf]
        %v6378 = vld [vmem:[%s6357 + $0x50] sm:$0xf]
        %v6379 = vld [vmem:[%s6357 + $0x54] sm:$0xf]
        %v6380 = vld [vmem:[%s6357 + $0x58] sm:$0xf]
        %v6381 = vld [vmem:[%s6357 + $0x5c] sm:$0xf]
        %v6382 = vld [vmem:[%s6357 + $0x60] sm:$0xf]
        %v6383 = vld [vmem:[%s6357 + $0x64] sm:$0xf]
        %v6384 = vld [vmem:[%s6357 + $0x68] sm:$0xf]
        %v6385 = vld [vmem:[%s6357 + $0x6c] sm:$0xf]
        %v6386 = vld [vmem:[%s6357 + $0x70] sm:$0xf]
        %v6387 = vld [vmem:[%s6357 + $0x74] sm:$0xf]
        %v6388 = vld [vmem:[%s6357 + $0x78] sm:$0xf]
        %v6389 = vld [vmem:[%s6357 + $0x7c] sm:$0xf]
        %v6390 = vld [vmem:[%s6357 + $0x80] sm:$0xf]
        %v6391 = vld [vmem:[%s6357 + $0x84] sm:$0xf]
        %v6392 = vld [vmem:[%s6357 + $0x88] sm:$0xf]
        %v6393 = vld [vmem:[%s6357 + $0x8c] sm:$0xf]
        %v6394 = vld [vmem:[%s6357 + $0x90] sm:$0xf]
        %v6395 = vld [vmem:[%s6357 + $0x94] sm:$0xf]
        %v6396 = vld [vmem:[%s6357 + $0x98] sm:$0xf]
        %v6397 = vld [vmem:[%s6357 + $0x9c] sm:$0xf]
        %v6398 = vld [vmem:[%s6357 + $0xa0] sm:$0xf]
        %v6399 = vld [vmem:[%s6357 + $0xa4] sm:$0xf]
        %v6400 = vld [vmem:[%s6357 + $0xa8] sm:$0xf]
        %v6401 = vld [vmem:[%s6357 + $0xac] sm:$0xf]
        %v6402 = vld [vmem:[%s6357 + $0xb0] sm:$0xf]
        %v6403 = vld [vmem:[%s6357 + $0xb4] sm:$0xf]
        %v6404 = vld [vmem:[%s6357 + $0xb8] sm:$0xf]
        %v6405 = vld [vmem:[%s6357 + $0xbc] sm:$0xf]
        %v6406 = vld [vmem:[%s6357 + $0xc0] sm:$0xf]
        %v6407 = vld [vmem:[%s6357 + $0xc4] sm:$0xf]
        %v6408 = vld [vmem:[%s6357 + $0xc8] sm:$0xf]
        %v6409 = vld [vmem:[%s6357 + $0xcc] sm:$0xf]
        %v6410 = vld [vmem:[%s6357 + $0xd0] sm:$0xf]
        %v6411 = vld [vmem:[%s6357 + $0xd4] sm:$0xf]
        %v6412 = vld [vmem:[%s6357 + $0xd8] sm:$0xf]
        %v6413 = vld [vmem:[%s6357 + $0xdc] sm:$0xf]
        %v6414 = vld [vmem:[%s6357 + $0xe0] sm:$0xf]
        %v6415 = vld [vmem:[%s6357 + $0xe4] sm:$0xf]
        %v6416 = vld [vmem:[%s6357 + $0xe8] sm:$0xf]
        %v6417 = vld [vmem:[%s6357 + $0xec] sm:$0xf]
        %v6418 = vld [vmem:[%s6357 + $0xf0] sm:$0xf]
        %v6419 = vld [vmem:[%s6357 + $0xf4] sm:$0xf]
        %v6420 = vld [vmem:[%s6357 + $0xf8] sm:$0xf]
        %v6421 = vld [vmem:[%s6357 + $0xfc] sm:$0xf]
        %v6422 = vld [vmem:[%s6357 + $0x100] sm:$0xf]
        %v6423 = vld [vmem:[%s6357 + $0x104] sm:$0xf]
        %v6424 = vld [vmem:[%s6357 + $0x108] sm:$0xf]
        %v6425 = vld [vmem:[%s6357 + $0x10c] sm:$0xf]
        %v6426 = vld [vmem:[%s6357 + $0x110] sm:$0xf]
        %v6427 = vld [vmem:[%s6357 + $0x114] sm:$0xf]
        %v6428 = vld [vmem:[%s6357 + $0x118] sm:$0xf]
        %v6429 = vld [vmem:[%s6357 + $0x11c] sm:$0xf]
        %v6430 = vld [vmem:[%s6357 + $0x120] sm:$0xf]
        %v6431 = vld [vmem:[%s6357 + $0x124] sm:$0xf]
        %v6432 = vld [vmem:[%s6357 + $0x128] sm:$0xf]
        %v6433 = vld [vmem:[%s6357 + $0x12c] sm:$0xf]
        %v6434 = vld [vmem:[%s6357 + $0x130] sm:$0xf]
        %v6435 = vld [vmem:[%s6357 + $0x134] sm:$0xf]
        %v6436 = vld [vmem:[%s6357 + $0x138] sm:$0xf]
        %v6437 = vld [vmem:[%s6357 + $0x13c] sm:$0xf]
        %v6438 = vld [vmem:[%s6357 + $0x140] sm:$0xf]
        %v6439 = vld [vmem:[%s6357 + $0x144] sm:$0xf]
        %v6440 = vld [vmem:[%s6357 + $0x148] sm:$0xf]
        %v6441 = vld [vmem:[%s6357 + $0x14c] sm:$0xf]
        %v6442 = vld [vmem:[%s6357 + $0x150] sm:$0xf]
        %v6443 = vld [vmem:[%s6357 + $0x154] sm:$0xf]
        %v6444 = vld [vmem:[%s6357 + $0x158] sm:$0xf]
        %v6445 = vld [vmem:[%s6357 + $0x15c] sm:$0xf]
        %v6446 = vld [vmem:[%s6357 + $0x160] sm:$0xf]
        %v6447 = vld [vmem:[%s6357 + $0x164] sm:$0xf]
        %v6448 = vld [vmem:[%s6357 + $0x168] sm:$0xf]
        %v6449 = vld [vmem:[%s6357 + $0x16c] sm:$0xf]
        %v6450 = vld [vmem:[%s6357 + $0x170] sm:$0xf]
        %v6451 = vld [vmem:[%s6357 + $0x174] sm:$0xf]
        %v6452 = vld [vmem:[%s6357 + $0x178] sm:$0xf]
        %v6453 = vld [vmem:[%s6357 + $0x17c] sm:$0xf]
        %v6454 = vld [vmem:[%s6357 + $0x180] sm:$0xf]
        %v6455 = vld [vmem:[%s6357 + $0x184] sm:$0xf]
        %v6456 = vld [vmem:[%s6357 + $0x188] sm:$0xf]
        %v6457 = vld [vmem:[%s6357 + $0x18c] sm:$0xf]
        %v6458 = vld [vmem:[%s6357 + $0x190] sm:$0xf]
        %v6459 = vld [vmem:[%s6357 + $0x194] sm:$0xf]
        %v6460 = vld [vmem:[%s6357 + $0x198] sm:$0xf]
        %v6461 = vld [vmem:[%s6357 + $0x19c] sm:$0xf]
        %v6462 = vld [vmem:[%s6357 + $0x1a0] sm:$0xf]
        %v6463 = vld [vmem:[%s6357 + $0x1a4] sm:$0xf]
        %v6464 = vld [vmem:[%s6357 + $0x1a8] sm:$0xf]
        %v6465 = vld [vmem:[%s6357 + $0x1ac] sm:$0xf]
        %v6466 = vld [vmem:[%s6357 + $0x1b0] sm:$0xf]
        %v6467 = vld [vmem:[%s6357 + $0x1b4] sm:$0xf]
        %v6468 = vld [vmem:[%s6357 + $0x1b8] sm:$0xf]
        %v6469 = vld [vmem:[%s6357 + $0x1bc] sm:$0xf]
        %v6470 = vld [vmem:[%s6357 + $0x1c0] sm:$0xf]
        %v6471 = vld [vmem:[%s6357 + $0x1c4] sm:$0xf]
        %v6472 = vld [vmem:[%s6357 + $0x1c8] sm:$0xf]
        %v6473 = vld [vmem:[%s6357 + $0x1cc] sm:$0xf]
        %v6474 = vld [vmem:[%s6357 + $0x1d0] sm:$0xf]
        %v6475 = vld [vmem:[%s6357 + $0x1d4] sm:$0xf]
        %v6476 = vld [vmem:[%s6357 + $0x1d8] sm:$0xf]
        %v6477 = vld [vmem:[%s6357 + $0x1dc] sm:$0xf]
        %v6478 = vld [vmem:[%s6357 + $0x1e0] sm:$0xf]
        %v6479 = vld [vmem:[%s6357 + $0x1e4] sm:$0xf]
        %v6480 = vld [vmem:[%s6357 + $0x1e8] sm:$0xf]
        %v6481 = vld [vmem:[%s6357 + $0x1ec] sm:$0xf]
        %v6482 = vld [vmem:[%s6357 + $0x1f0] sm:$0xf]
        %v6483 = vld [vmem:[%s6357 + $0x1f4] sm:$0xf]
        %v6484 = vld [vmem:[%s6357 + $0x1f8] sm:$0xf]
        %v6485 = vld [vmem:[%s6357 + $0x1fc] sm:$0xf]
        %v6486 = vld [vmem:[%s6357 + $0x200] sm:$0xf]
        %v6487 = vld [vmem:[%s6357 + $0x204] sm:$0xf]
        %v6488 = vld [vmem:[%s6357 + $0x208] sm:$0xf]
        %v6489 = vld [vmem:[%s6357 + $0x20c] sm:$0xf]
        %v6490 = vld [vmem:[%s6357 + $0x210] sm:$0xf]
        %v6491 = vld [vmem:[%s6357 + $0x214] sm:$0xf]
        %v6492 = vld [vmem:[%s6357 + $0x218] sm:$0xf]
        %v6493 = vld [vmem:[%s6357 + $0x21c] sm:$0xf]
        %v6494 = vld [vmem:[%s6357 + $0x220] sm:$0xf]
        %v6495 = vld [vmem:[%s6357 + $0x224] sm:$0xf]
        %v6496 = vld [vmem:[%s6357 + $0x228] sm:$0xf]
        %v6497 = vld [vmem:[%s6357 + $0x22c] sm:$0xf]
        %v6498 = vld [vmem:[%s6357 + $0x230] sm:$0xf]
        %v6499 = vld [vmem:[%s6357 + $0x234] sm:$0xf]
        %v6500 = vld [vmem:[%s6357 + $0x238] sm:$0xf]
        %v6501 = vld [vmem:[%s6357 + $0x23c] sm:$0xf]
        %v6502 = vperm.slane %v5972, 0
        %v6647 = vunpack.c.l.b16 %v6358
        %v6648 = vunpack.c.l.b16 %v6359
        %v6649 = vunpack.c.l.b16 %v6360
        %v6650 = vunpack.c.l.b16 %v6361
        %v6651 = vunpack.c.l.b16 %v6362
        %v6652 = vunpack.c.l.b16 %v6363
        %v6653 = vunpack.c.l.b16 %v6364
        %v6654 = vunpack.c.l.b16 %v6365
        %v6655 = vunpack.c.l.b16 %v6366
        %v6656 = vunpack.c.l.b16 %v6367
        %v6657 = vunpack.c.l.b16 %v6368
        %v6658 = vunpack.c.l.b16 %v6369
        %v6659 = vunpack.c.l.b16 %v6370
        %v6660 = vunpack.c.l.b16 %v6371
        %v6661 = vunpack.c.l.b16 %v6372
        %v6662 = vunpack.c.l.b16 %v6373
        %v6663 = vunpack.c.l.b16 %v6374
        %v6664 = vunpack.c.l.b16 %v6375
        %v6665 = vunpack.c.l.b16 %v6376
        %v6666 = vunpack.c.l.b16 %v6377
        %v6667 = vunpack.c.l.b16 %v6378
        %v6668 = vunpack.c.l.b16 %v6379
        %v6669 = vunpack.c.l.b16 %v6380
        %v6670 = vunpack.c.l.b16 %v6381
        %v6671 = vunpack.c.l.b16 %v6382
        %v6672 = vunpack.c.l.b16 %v6383
        %v6673 = vunpack.c.l.b16 %v6384
        %v6674 = vunpack.c.l.b16 %v6385
        %v6675 = vunpack.c.l.b16 %v6386
        %v6676 = vunpack.c.l.b16 %v6387
        %v6677 = vunpack.c.l.b16 %v6388
        %v6678 = vunpack.c.l.b16 %v6389
        %v6679 = vunpack.c.l.b16 %v6390
        %v6680 = vunpack.c.l.b16 %v6391
        %v6681 = vunpack.c.l.b16 %v6392
        %v6682 = vunpack.c.l.b16 %v6393
        %v6683 = vunpack.c.l.b16 %v6394
        %v6684 = vunpack.c.l.b16 %v6395
        %v6685 = vunpack.c.l.b16 %v6396
        %v6686 = vunpack.c.l.b16 %v6397
        %v6687 = vunpack.c.l.b16 %v6398
        %v6688 = vunpack.c.l.b16 %v6399
        %v6689 = vunpack.c.l.b16 %v6400
        %v6690 = vunpack.c.l.b16 %v6401
        %v6691 = vunpack.c.l.b16 %v6402
        %v6692 = vunpack.c.l.b16 %v6403
        %v6693 = vunpack.c.l.b16 %v6404
        %v6694 = vunpack.c.l.b16 %v6405
        %v6695 = vunpack.c.l.b16 %v6406
        %v6696 = vunpack.c.l.b16 %v6407
        %v6697 = vunpack.c.l.b16 %v6408
        %v6698 = vunpack.c.l.b16 %v6409
        %v6699 = vunpack.c.l.b16 %v6410
        %v6700 = vunpack.c.l.b16 %v6411
        %v6701 = vunpack.c.l.b16 %v6412
        %v6702 = vunpack.c.l.b16 %v6413
        %v6703 = vunpack.c.l.b16 %v6414
        %v6704 = vunpack.c.l.b16 %v6415
        %v6705 = vunpack.c.l.b16 %v6416
        %v6706 = vunpack.c.l.b16 %v6417
        %v6707 = vunpack.c.l.b16 %v6418
        %v6708 = vunpack.c.l.b16 %v6419
        %v6709 = vunpack.c.l.b16 %v6420
        %v6710 = vunpack.c.l.b16 %v6421
        %v6711 = vunpack.c.l.b16 %v6422
        %v6712 = vunpack.c.l.b16 %v6423
        %v6713 = vunpack.c.l.b16 %v6424
        %v6714 = vunpack.c.l.b16 %v6425
        %v6715 = vunpack.c.l.b16 %v6426
        %v6716 = vunpack.c.l.b16 %v6427
        %v6717 = vunpack.c.l.b16 %v6428
        %v6718 = vunpack.c.l.b16 %v6429
        %v6719 = vunpack.c.l.b16 %v6430
        %v6720 = vunpack.c.l.b16 %v6431
        %v6721 = vunpack.c.l.b16 %v6432
        %v6722 = vunpack.c.l.b16 %v6433
        %v6723 = vunpack.c.l.b16 %v6434
        %v6724 = vunpack.c.l.b16 %v6435
        %v6725 = vunpack.c.l.b16 %v6436
        %v6726 = vunpack.c.l.b16 %v6437
        %v6727 = vunpack.c.l.b16 %v6438
        %v6728 = vunpack.c.l.b16 %v6439
        %v6729 = vunpack.c.l.b16 %v6440
        %v6730 = vunpack.c.l.b16 %v6441
        %v6731 = vunpack.c.l.b16 %v6442
        %v6732 = vunpack.c.l.b16 %v6443
        %v6733 = vunpack.c.l.b16 %v6444
        %v6734 = vunpack.c.l.b16 %v6445
        %v6735 = vunpack.c.l.b16 %v6446
        %v6736 = vunpack.c.l.b16 %v6447
        %v6737 = vunpack.c.l.b16 %v6448
        %v6738 = vunpack.c.l.b16 %v6449
        %v6739 = vunpack.c.l.b16 %v6450
        %v6740 = vunpack.c.l.b16 %v6451
        %v6741 = vunpack.c.l.b16 %v6452
        %v6742 = vunpack.c.l.b16 %v6453
        %v6743 = vunpack.c.l.b16 %v6454
        %v6744 = vunpack.c.l.b16 %v6455
        %v6745 = vunpack.c.l.b16 %v6456
        %v6746 = vunpack.c.l.b16 %v6457
        %v6747 = vunpack.c.l.b16 %v6458
        %v6748 = vunpack.c.l.b16 %v6459
        %v6749 = vunpack.c.l.b16 %v6460
        %v6750 = vunpack.c.l.b16 %v6461
        %v6751 = vunpack.c.l.b16 %v6462
        %v6752 = vunpack.c.l.b16 %v6463
        %v6753 = vunpack.c.l.b16 %v6464
        %v6754 = vunpack.c.l.b16 %v6465
        %v6755 = vunpack.c.l.b16 %v6466
        %v6756 = vunpack.c.l.b16 %v6467
        %v6757 = vunpack.c.l.b16 %v6468
        %v6758 = vunpack.c.l.b16 %v6469
        %v6759 = vunpack.c.l.b16 %v6470
        %v6760 = vunpack.c.l.b16 %v6471
        %v6761 = vunpack.c.l.b16 %v6472
        %v6762 = vunpack.c.l.b16 %v6473
        %v6763 = vunpack.c.l.b16 %v6474
        %v6764 = vunpack.c.l.b16 %v6475
        %v6765 = vunpack.c.l.b16 %v6476
        %v6766 = vunpack.c.l.b16 %v6477
        %v6767 = vunpack.c.l.b16 %v6478
        %v6768 = vunpack.c.l.b16 %v6479
        %v6769 = vunpack.c.l.b16 %v6480
        %v6770 = vunpack.c.l.b16 %v6481
        %v6771 = vunpack.c.l.b16 %v6482
        %v6772 = vunpack.c.l.b16 %v6483
        %v6773 = vunpack.c.l.b16 %v6484
        %v6774 = vunpack.c.l.b16 %v6485
        %v6775 = vunpack.c.l.b16 %v6486
        %v6776 = vunpack.c.l.b16 %v6487
        %v6777 = vunpack.c.l.b16 %v6488
        %v6778 = vunpack.c.l.b16 %v6489
        %v6779 = vunpack.c.l.b16 %v6490
        %v6780 = vunpack.c.l.b16 %v6491
        %v6781 = vunpack.c.l.b16 %v6492
        %v6782 = vunpack.c.l.b16 %v6493
        %v6783 = vunpack.c.l.b16 %v6494
        %v6784 = vunpack.c.l.b16 %v6495
        %v6785 = vunpack.c.l.b16 %v6496
        %v6786 = vunpack.c.l.b16 %v6497
        %v6787 = vunpack.c.l.b16 %v6498
        %v6788 = vunpack.c.l.b16 %v6499
        %v6789 = vunpack.c.l.b16 %v6500
        %v6790 = vunpack.c.l.b16 %v6501
        %v6791 = vpack.c.b16 %v6648, %v6647
        %v6792 = vpack.c.b16 %v6650, %v6649
        %v6793 = vpack.c.b16 %v6652, %v6651
        %v6794 = vpack.c.b16 %v6654, %v6653
        %v6795 = vpack.c.b16 %v6656, %v6655
        %v6796 = vpack.c.b16 %v6658, %v6657
        %v6797 = vpack.c.b16 %v6660, %v6659
        %v6798 = vpack.c.b16 %v6662, %v6661
        %v6799 = vpack.c.b16 %v6664, %v6663
        %v6800 = vpack.c.b16 %v6666, %v6665
        %v6801 = vpack.c.b16 %v6668, %v6667
        %v6802 = vpack.c.b16 %v6670, %v6669
        %v6803 = vpack.c.b16 %v6672, %v6671
        %v6804 = vpack.c.b16 %v6674, %v6673
        %v6805 = vpack.c.b16 %v6676, %v6675
        %v6806 = vpack.c.b16 %v6678, %v6677
        %v6807 = vpack.c.b16 %v6680, %v6679
        %v6808 = vpack.c.b16 %v6682, %v6681
        %v6809 = vpack.c.b16 %v6684, %v6683
        %v6810 = vpack.c.b16 %v6686, %v6685
        %v6811 = vpack.c.b16 %v6688, %v6687
        %v6812 = vpack.c.b16 %v6690, %v6689
        %v6813 = vpack.c.b16 %v6692, %v6691
        %v6814 = vpack.c.b16 %v6694, %v6693
        %v6815 = vpack.c.b16 %v6696, %v6695
        %v6816 = vpack.c.b16 %v6698, %v6697
        %v6817 = vpack.c.b16 %v6700, %v6699
        %v6818 = vpack.c.b16 %v6702, %v6701
        %v6819 = vpack.c.b16 %v6704, %v6703
        %v6820 = vpack.c.b16 %v6706, %v6705
        %v6821 = vpack.c.b16 %v6708, %v6707
        %v6822 = vpack.c.b16 %v6710, %v6709
        %v6823 = vpack.c.b16 %v6712, %v6711
        %v6824 = vpack.c.b16 %v6714, %v6713
        %v6825 = vpack.c.b16 %v6716, %v6715
        %v6826 = vpack.c.b16 %v6718, %v6717
        %v6827 = vpack.c.b16 %v6720, %v6719
        %v6828 = vpack.c.b16 %v6722, %v6721
        %v6829 = vpack.c.b16 %v6724, %v6723
        %v6830 = vpack.c.b16 %v6726, %v6725
        %v6831 = vpack.c.b16 %v6728, %v6727
        %v6832 = vpack.c.b16 %v6730, %v6729
        %v6833 = vpack.c.b16 %v6732, %v6731
        %v6834 = vpack.c.b16 %v6734, %v6733
        %v6835 = vpack.c.b16 %v6736, %v6735
        %v6836 = vpack.c.b16 %v6738, %v6737
        %v6837 = vpack.c.b16 %v6740, %v6739
        %v6838 = vpack.c.b16 %v6742, %v6741
        %v6839 = vpack.c.b16 %v6744, %v6743
        %v6840 = vpack.c.b16 %v6746, %v6745
        %v6841 = vpack.c.b16 %v6748, %v6747
        %v6842 = vpack.c.b16 %v6750, %v6749
        %v6843 = vpack.c.b16 %v6752, %v6751
        %v6844 = vpack.c.b16 %v6754, %v6753
        %v6845 = vpack.c.b16 %v6756, %v6755
        %v6846 = vpack.c.b16 %v6758, %v6757
        %v6847 = vpack.c.b16 %v6760, %v6759
        %v6848 = vpack.c.b16 %v6762, %v6761
        %v6849 = vpack.c.b16 %v6764, %v6763
        %v6850 = vpack.c.b16 %v6766, %v6765
        %v6851 = vpack.c.b16 %v6768, %v6767
        %v6852 = vpack.c.b16 %v6770, %v6769
        %v6853 = vpack.c.b16 %v6772, %v6771
        %v6854 = vpack.c.b16 %v6774, %v6773
        %v6855 = vpack.c.b16 %v6776, %v6775
        %v6856 = vpack.c.b16 %v6778, %v6777
        %v6857 = vpack.c.b16 %v6780, %v6779
        %v6858 = vpack.c.b16 %v6782, %v6781
        %v6859 = vpack.c.b16 %v6784, %v6783
        %v6860 = vpack.c.b16 %v6786, %v6785
        %v6861 = vpack.c.b16 %v6788, %v6787
        %v6862 = vpack.c.b16 %v6790, %v6789
        %6935 = vmatpush.bf16.msra.mxu0 %v6798
        %6936 = vmatpush.bf16.msra.mxu0 %v6797
        %6937 = vmatpush.bf16.msra.mxu0 %v6796
        %6938 = vmatpush.bf16.msra.mxu0 %v6795
        %6939 = vmatpush.bf16.msra.mxu0 %v6794
        %6940 = vmatpush.bf16.msra.mxu0 %v6793
        %6941 = vmatpush.bf16.msra.mxu0 %v6792
        %6942 = vmatpush.bf16.msra.mxu0 %v6791
        %6943 = vmatmul.bf16.gmra.mxu0 %v6157
        %v6944 = vpop.f32.mrf.mxu0
        %v6945 = vadd.f32 %v6502, %v6944
        %v6946 = vpop.f32.mrf.mxu0
        %v6947 = vadd.f32 %v6502, %v6946
        %6948 = vmatmul.bf16.gmra.mxu0 %v6158
        %v6949 = vpop.f32.mrf.mxu0
        %v6950 = vadd.f32 %v6502, %v6949
        %v6951 = vpop.f32.mrf.mxu0
        %v6952 = vadd.f32 %v6502, %v6951
        %6953 = vmatmul.bf16.gmra.mxu0 %v6159
        %v6954 = vpop.f32.mrf.mxu0
        %v6955 = vadd.f32 %v6502, %v6954
        %v6956 = vpop.f32.mrf.mxu0
        %v6957 = vadd.f32 %v6502, %v6956
        %6958 = vmatmul.bf16.gmra.mxu0 %v6160
        %v6959 = vpop.f32.mrf.mxu0
        %v6960 = vadd.f32 %v6502, %v6959
        %v6961 = vpop.f32.mrf.mxu0
        %v6962 = vadd.f32 %v6502, %v6961
        %6963 = vdwg.mxu0
        %6964 = vmatpush.bf16.msra.mxu0 %v6806
        %6965 = vmatpush.bf16.msra.mxu0 %v6805
        %6966 = vmatpush.bf16.msra.mxu0 %v6804
        %6967 = vmatpush.bf16.msra.mxu0 %v6803
        %6968 = vmatpush.bf16.msra.mxu0 %v6802
        %6969 = vmatpush.bf16.msra.mxu0 %v6801
        %6970 = vmatpush.bf16.msra.mxu0 %v6800
        %6971 = vmatpush.bf16.msra.mxu0 %v6799
        %6972 = vmatmul.bf16.gmra.mxu0 %v6181
        %v6973 = vpop.f32.mrf.mxu0
        %v6974 = vadd.f32 %v6945, %v6973
        %v6975 = vpop.f32.mrf.mxu0
        %v6976 = vadd.f32 %v6947, %v6975
        %6977 = vmatmul.bf16.gmra.mxu0 %v6182
        %v6978 = vpop.f32.mrf.mxu0
        %v6979 = vadd.f32 %v6950, %v6978
        %v6980 = vpop.f32.mrf.mxu0
        %v6981 = vadd.f32 %v6952, %v6980
        %6982 = vmatmul.bf16.gmra.mxu0 %v6183
        %v6983 = vpop.f32.mrf.mxu0
        %v6984 = vadd.f32 %v6955, %v6983
        %v6985 = vpop.f32.mrf.mxu0
        %v6986 = vadd.f32 %v6957, %v6985
        %6987 = vmatmul.bf16.gmra.mxu0 %v6184
        %v6988 = vpop.f32.mrf.mxu0
        %v6989 = vadd.f32 %v6960, %v6988
        %v6990 = vpop.f32.mrf.mxu0
        %v6991 = vadd.f32 %v6962, %v6990
        %6992 = vdwg.mxu0
        %6993 = vmatpush.bf16.msra.mxu0 %v6814
        %6994 = vmatpush.bf16.msra.mxu0 %v6813
        %6995 = vmatpush.bf16.msra.mxu0 %v6812
        %6996 = vmatpush.bf16.msra.mxu0 %v6811
        %6997 = vmatpush.bf16.msra.mxu0 %v6810
        %6998 = vmatpush.bf16.msra.mxu0 %v6809
        %6999 = vmatpush.bf16.msra.mxu0 %v6808
        %7000 = vmatpush.bf16.msra.mxu0 %v6807
        %7001 = vmatmul.bf16.gmra.mxu0 %v6205
        %v7002 = vpop.f32.mrf.mxu0
        %v7003 = vadd.f32 %v6974, %v7002
        %v7004 = vpop.f32.mrf.mxu0
        %v7005 = vadd.f32 %v6976, %v7004
        %7006 = vmatmul.bf16.gmra.mxu0 %v6206
        %v7007 = vpop.f32.mrf.mxu0
        %v7008 = vadd.f32 %v6979, %v7007
        %v7009 = vpop.f32.mrf.mxu0
        %v7010 = vadd.f32 %v6981, %v7009
        %7011 = vmatmul.bf16.gmra.mxu0 %v6207
        %v7012 = vpop.f32.mrf.mxu0
        %v7013 = vadd.f32 %v6984, %v7012
        %v7014 = vpop.f32.mrf.mxu0
        %v7015 = vadd.f32 %v6986, %v7014
        %7016 = vmatmul.bf16.gmra.mxu0 %v6208
        %v7017 = vpop.f32.mrf.mxu0
        %v7018 = vadd.f32 %v6989, %v7017
        %v7019 = vpop.f32.mrf.mxu0
        %v7020 = vadd.f32 %v6991, %v7019
        %7021 = vdwg.mxu0
        %7022 = vmatpush.bf16.msra.mxu0 %v6822
        %7023 = vmatpush.bf16.msra.mxu0 %v6821
        %7024 = vmatpush.bf16.msra.mxu0 %v6820
        %7025 = vmatpush.bf16.msra.mxu0 %v6819
        %7026 = vmatpush.bf16.msra.mxu0 %v6818
        %7027 = vmatpush.bf16.msra.mxu0 %v6817
        %7028 = vmatpush.bf16.msra.mxu0 %v6816
        %7029 = vmatpush.bf16.msra.mxu0 %v6815
        %7030 = vmatmul.bf16.gmra.mxu0 %v6229
        %v7031 = vpop.f32.mrf.mxu0
        %v7032 = vadd.f32 %v7003, %v7031
        %v7033 = vpop.f32.mrf.mxu0
        %v7034 = vadd.f32 %v7005, %v7033
        %7035 = vmatmul.bf16.gmra.mxu0 %v6230
        %v7036 = vpop.f32.mrf.mxu0
        %v7037 = vadd.f32 %v7008, %v7036
        %v7038 = vpop.f32.mrf.mxu0
        %v7039 = vadd.f32 %v7010, %v7038
        %7040 = vmatmul.bf16.gmra.mxu0 %v6231
        %v7041 = vpop.f32.mrf.mxu0
        %v7042 = vadd.f32 %v7013, %v7041
        %v7043 = vpop.f32.mrf.mxu0
        %v7044 = vadd.f32 %v7015, %v7043
        %7045 = vmatmul.bf16.gmra.mxu0 %v6232
        %v7046 = vpop.f32.mrf.mxu0
        %v7047 = vadd.f32 %v7018, %v7046
        %v7048 = vpop.f32.mrf.mxu0
        %v7049 = vadd.f32 %v7020, %v7048
        %7050 = vdwg.mxu0
        %7051 = vmatpush.bf16.msra.mxu0 %v6830
        %7052 = vmatpush.bf16.msra.mxu0 %v6829
        %7053 = vmatpush.bf16.msra.mxu0 %v6828
        %7054 = vmatpush.bf16.msra.mxu0 %v6827
        %7055 = vmatpush.bf16.msra.mxu0 %v6826
        %7056 = vmatpush.bf16.msra.mxu0 %v6825
        %7057 = vmatpush.bf16.msra.mxu0 %v6824
        %7058 = vmatpush.bf16.msra.mxu0 %v6823
        %7059 = vmatmul.bf16.gmra.mxu0 %v6253
        %v7060 = vpop.f32.mrf.mxu0
        %v7061 = vadd.f32 %v7032, %v7060
        %v7062 = vpop.f32.mrf.mxu0
        %v7063 = vadd.f32 %v7034, %v7062
        %7064 = vmatmul.bf16.gmra.mxu0 %v6254
        %v7065 = vpop.f32.mrf.mxu0
        %v7066 = vadd.f32 %v7037, %v7065
        %v7067 = vpop.f32.mrf.mxu0
        %v7068 = vadd.f32 %v7039, %v7067
        %7069 = vmatmul.bf16.gmra.mxu0 %v6255
        %v7070 = vpop.f32.mrf.mxu0
        %v7071 = vadd.f32 %v7042, %v7070
        %v7072 = vpop.f32.mrf.mxu0
        %v7073 = vadd.f32 %v7044, %v7072
        %7074 = vmatmul.bf16.gmra.mxu0 %v6256
        %v7075 = vpop.f32.mrf.mxu0
        %v7076 = vadd.f32 %v7047, %v7075
        %v7077 = vpop.f32.mrf.mxu0
        %v7078 = vadd.f32 %v7049, %v7077
        %7079 = vdwg.mxu0
        %7080 = vmatpush.bf16.msra.mxu0 %v6838
        %7081 = vmatpush.bf16.msra.mxu0 %v6837
        %7082 = vmatpush.bf16.msra.mxu0 %v6836
        %7083 = vmatpush.bf16.msra.mxu0 %v6835
        %7084 = vmatpush.bf16.msra.mxu0 %v6834
        %7085 = vmatpush.bf16.msra.mxu0 %v6833
        %7086 = vmatpush.bf16.msra.mxu0 %v6832
        %7087 = vmatpush.bf16.msra.mxu0 %v6831
        %7088 = vmatmul.bf16.gmra.mxu0 %v6277
        %v7089 = vpop.f32.mrf.mxu0
        %v7090 = vadd.f32 %v7061, %v7089
        %v7091 = vpop.f32.mrf.mxu0
        %v7092 = vadd.f32 %v7063, %v7091
        %7093 = vmatmul.bf16.gmra.mxu0 %v6278
        %v7094 = vpop.f32.mrf.mxu0
        %v7095 = vadd.f32 %v7066, %v7094
        %v7096 = vpop.f32.mrf.mxu0
        %v7097 = vadd.f32 %v7068, %v7096
        %7098 = vmatmul.bf16.gmra.mxu0 %v6279
        %v7099 = vpop.f32.mrf.mxu0
        %v7100 = vadd.f32 %v7071, %v7099
        %v7101 = vpop.f32.mrf.mxu0
        %v7102 = vadd.f32 %v7073, %v7101
        %7103 = vmatmul.bf16.gmra.mxu0 %v6280
        %v7104 = vpop.f32.mrf.mxu0
        %v7105 = vadd.f32 %v7076, %v7104
        %v7106 = vpop.f32.mrf.mxu0
        %v7107 = vadd.f32 %v7078, %v7106
        %7108 = vdwg.mxu0
        %7109 = vmatpush.bf16.msra.mxu0 %v6846
        %7110 = vmatpush.bf16.msra.mxu0 %v6845
        %7111 = vmatpush.bf16.msra.mxu0 %v6844
        %7112 = vmatpush.bf16.msra.mxu0 %v6843
        %7113 = vmatpush.bf16.msra.mxu0 %v6842
        %7114 = vmatpush.bf16.msra.mxu0 %v6841
        %7115 = vmatpush.bf16.msra.mxu0 %v6840
        %7116 = vmatpush.bf16.msra.mxu0 %v6839
        %7117 = vmatmul.bf16.gmra.mxu0 %v6301
        %v7118 = vpop.f32.mrf.mxu0
        %v7119 = vadd.f32 %v7090, %v7118
        %v7120 = vpop.f32.mrf.mxu0
        %v7121 = vadd.f32 %v7092, %v7120
        %7122 = vmatmul.bf16.gmra.mxu0 %v6302
        %v7123 = vpop.f32.mrf.mxu0
        %v7124 = vadd.f32 %v7095, %v7123
        %v7125 = vpop.f32.mrf.mxu0
        %v7126 = vadd.f32 %v7097, %v7125
        %7127 = vmatmul.bf16.gmra.mxu0 %v6303
        %v7128 = vpop.f32.mrf.mxu0
        %v7129 = vadd.f32 %v7100, %v7128
        %v7130 = vpop.f32.mrf.mxu0
        %v7131 = vadd.f32 %v7102, %v7130
        %7132 = vmatmul.bf16.gmra.mxu0 %v6304
        %v7133 = vpop.f32.mrf.mxu0
        %v7134 = vadd.f32 %v7105, %v7133
        %v7135 = vpop.f32.mrf.mxu0
        %v7136 = vadd.f32 %v7107, %v7135
        %7137 = vdwg.mxu0
        %7138 = vmatpush.bf16.msra.mxu0 %v6854
        %7139 = vmatpush.bf16.msra.mxu0 %v6853
        %7140 = vmatpush.bf16.msra.mxu0 %v6852
        %7141 = vmatpush.bf16.msra.mxu0 %v6851
        %7142 = vmatpush.bf16.msra.mxu0 %v6850
        %7143 = vmatpush.bf16.msra.mxu0 %v6849
        %7144 = vmatpush.bf16.msra.mxu0 %v6848
        %7145 = vmatpush.bf16.msra.mxu0 %v6847
        %7146 = vmatmul.bf16.gmra.mxu0 %v6325
        %v7147 = vpop.f32.mrf.mxu0
        %v7148 = vadd.f32 %v7119, %v7147
        %v7149 = vpop.f32.mrf.mxu0
        %v7150 = vadd.f32 %v7121, %v7149
        %7151 = vmatmul.bf16.gmra.mxu0 %v6326
        %v7152 = vpop.f32.mrf.mxu0
        %v7153 = vadd.f32 %v7124, %v7152
        %v7154 = vpop.f32.mrf.mxu0
        %v7155 = vadd.f32 %v7126, %v7154
        %7156 = vmatmul.bf16.gmra.mxu0 %v6327
        %v7157 = vpop.f32.mrf.mxu0
        %v7158 = vadd.f32 %v7129, %v7157
        %v7159 = vpop.f32.mrf.mxu0
        %v7160 = vadd.f32 %v7131, %v7159
        %7161 = vmatmul.bf16.gmra.mxu0 %v6328
        %v7162 = vpop.f32.mrf.mxu0
        %v7163 = vadd.f32 %v7134, %v7162
        %v7164 = vpop.f32.mrf.mxu0
        %v7165 = vadd.f32 %v7136, %v7164
        %7166 = vdwg.mxu0
        %7167 = vmatpush.bf16.msra.mxu0 %v6862
        %7168 = vmatpush.bf16.msra.mxu0 %v6861
        %7169 = vmatpush.bf16.msra.mxu0 %v6860
        %7170 = vmatpush.bf16.msra.mxu0 %v6859
        %7171 = vmatpush.bf16.msra.mxu0 %v6858
        %7172 = vmatpush.bf16.msra.mxu0 %v6857
        %7173 = vmatpush.bf16.msra.mxu0 %v6856
        %7174 = vmatpush.bf16.msra.mxu0 %v6855
        %7175 = vmatmul.bf16.gmra.mxu0 %v6349
        %v7176 = vpop.f32.mrf.mxu0
        %v7177 = vadd.f32 %v7148, %v7176
        %v7178 = vpop.f32.mrf.mxu0
        %v7179 = vadd.f32 %v7150, %v7178
        %7180 = vmatmul.bf16.gmra.mxu0 %v6350
        %v7181 = vpop.f32.mrf.mxu0
        %v7182 = vadd.f32 %v7153, %v7181
        %v7183 = vpop.f32.mrf.mxu0
        %v7184 = vadd.f32 %v7155, %v7183
        %7185 = vmatmul.bf16.gmra.mxu0 %v6351
        %v7186 = vpop.f32.mrf.mxu0
        %v7187 = vadd.f32 %v7158, %v7186
        %v7188 = vpop.f32.mrf.mxu0
        %v7189 = vadd.f32 %v7160, %v7188
        %7190 = vmatmul.bf16.gmra.mxu0 %v6352
        %v7191 = vpop.f32.mrf.mxu0
        %v7192 = vadd.f32 %v7163, %v7191
        %v7193 = vpop.f32.mrf.mxu0
        %v7194 = vadd.f32 %v7165, %v7193
        %7195 = vdwg.mxu0
        %v7196 = vadd.f32 %v7177, %v4213
        %v7197 = vadd.f32 %v7179, %v4214
        %v7198 = vadd.f32 %v7182, %v4215
        %v7199 = vadd.f32 %v7184, %v4216
        %v7200 = vadd.f32 %v7187, %v4217
        %v7201 = vadd.f32 %v7189, %v4218
        %v7202 = vadd.f32 %v7192, %v4219
        %v7203 = vadd.f32 %v7194, %v4220
        %7204 = vst [vmem:[%s376] sm:$0xff] %v7196
        %7205 = vst [vmem:[%s376 + $0x8] sm:$0xff] %v7197
        %7206 = vst [vmem:[%s376 + $0x10] sm:$0xff] %v7198
        %7207 = vst [vmem:[%s376 + $0x18] sm:$0xff] %v7199
        %7208 = vst [vmem:[%s376 + $0x20] sm:$0xff] %v7200
        %7209 = vst [vmem:[%s376 + $0x28] sm:$0xff] %v7201
        %7210 = vst [vmem:[%s376 + $0x30] sm:$0xff] %v7202
        %7211 = vst [vmem:[%s376 + $0x38] sm:$0xff] %v7203
        %p7212 = scmp.lt.s32.totalorder %s21, 1
        %s7213 = scalar_select %p7212, %s21, 1
        %s7214 = smul.addr %s7213, 8
        %s7215 = smul.addr %s7214, 8
        %s7216 = scalar_lea.vmem %s7, %s7215
        // Predicated region
        $region69: #{middle_block.1} parent=47 // pred_check
          %p7217 = pneg %p196
        $region70: #{middle_block.1} parent=47 // pred_check_branch
          %7219 = sbr.rel (%p7217) target = $region72
        $region71: #{middle_block.1} parent=47 // pred_region
          _
        $region72: #{middle_block.1} parent=47 // pred_fallthru
          _
      $region48: #{middle_block.1} parent=5 // pred_fallthru
        _
      %p7220 = scmp.le.s32.totalorder 2, %s16
      // Predicated region
      $region73: #{middle_block.1} parent=5 // pred_check
        %p7221 = pneg %p7220
      $region74: #{middle_block.1} parent=5 // pred_check_branch
        %7223 = sbr.rel (%p7221) target = $region76
      $region75: #{middle_block.1} parent=5 // pred_region
        %s7224 = ssub.s32 %s16, 2
        // Predicated region
        $region77: #{middle_block.1} parent=75 // pred_check
          %p7225 = pneg %p202
        $region78: #{middle_block.1} parent=75 // pred_check_branch
          %7227 = sbr.rel (%p7225) target = $region80
        $region79: #{middle_block.1} parent=75 // pred_region
          %p7228 = scmp.lt.s32.totalorder %s22, 1
          %s7229 = scalar_select %p7228, %s22, 1
          %s7230 = smul.addr %s7229, 8
          %s7231 = smul.addr %s7230, 8
          %s7232 = scalar_lea.vmem %s7, %s7231
        $region80: #{middle_block.1} parent=75 // pred_fallthru
          _
      $region76: #{middle_block.1} parent=5 // pred_fallthru
        _
    $region6: #{middle_block.1} parent=1 // loop_footer
      %s20 = sadd.s32 1, %s16
    $region7: #{middle_block.1} parent=1 // loop_footer_branch
      %15 = sbr.rel target = $region3
    $region8: #{middle_block.1} parent=1 // loop_exit
      _
    %7233 = vsyncpa [#allocation3], 1
    %s7234 = scalar_lea.sflag [#allocation3], 1
    %7235 = vsyncpa %s7234, 1
    %7236 = vsyncpa [#allocation5], 1
    %7237 = vsyncpa [#allocation8], 1

</llo_original>
